<compile_context>
chip_gen: v7x
topology: tpu7x:2x2x1
jax: 0.10.0
libtpu: 0.0.40
codegen_flags: <defaults>
</compile_context>

<pallas_src>
import functools
import numpy as np
import jax
import jax.numpy as jnp
from jax.experimental import pallas as pl
from jax.experimental.pallas import tpu as pltpu

BN_EPS = 1e-5


def _mdconv_kernel(x_ref, s_ref, t_ref, w_ref, b_ref, o_ref, pad_ref, slab_ref,
                   *, dilations, pad):
    """Fused MDConv2d for one batch element.

    x_ref    : (d, H, W, C)        f32   branch inputs (channels-last)
    s_ref    : (d, 1, C)           f32   folded eval-BatchNorm scale per branch
    t_ref    : (d, 1, C)           f32   folded eval-BatchNorm shift per branch
    w_ref    : (d*9*C, C)          bf16  im2col weight, rows ordered (i, kh, kw, ci)
    b_ref    : (1, C)              f32   sum of branch conv biases
    o_ref    : (1, H*W, C)         f32   output (sum over branches)
    pad_ref  : (H+2P, W+2P, C)     bf16  zero-padded activation scratch (reused per branch)
    slab_ref : (H*W, d*9*C)        bf16  im2col slab (single fused MXU dot)
    """
    d = x_ref.shape[0]
    H, W, C = x_ref.shape[1], x_ref.shape[2], x_ref.shape[3]
    P = pad
    Hp, Wp = H + 2 * P, W + 2 * P

    # Zero only the border strips every grid step (grid axis is "parallel", so
    # no cross-step scratch state may be assumed); the interior is fully
    # overwritten per branch, so the border stays zero => 'same' padding free.
    pad_ref[0:P, :, :] = jnp.zeros((P, Wp, C), jnp.bfloat16)
    pad_ref[P + H:Hp, :, :] = jnp.zeros((P, Wp, C), jnp.bfloat16)
    pad_ref[P:P + H, 0:P, :] = jnp.zeros((H, P, C), jnp.bfloat16)
    pad_ref[P:P + H, P + W:Wp, :] = jnp.zeros((H, P, C), jnp.bfloat16)

    for i in range(d):
        di = dilations[i]
        # Fused eval-mode BatchNorm (per-channel affine) + ReLU prologue (f32
        # VPU math), cast to bf16 once and written into the padded plane.
        a = jnp.maximum(x_ref[i] * s_ref[i] + t_ref[i], 0.0)          # (H, W, C)
        pad_ref[P:P + H, P:P + W, :] = a.astype(jnp.bfloat16)
        # Scatter the 9 dilated tap windows of this branch into their C-wide
        # column blocks of the im2col slab (static offsets; reshape is
        # layout-free for W % 8 == 0).
        for kh in range(3):
            for kw in range(3):
                r0 = P + (kh - 1) * di
                c0 = P + (kw - 1) * di
                off = (i * 9 + kh * 3 + kw) * C
                win = pad_ref[r0:r0 + H, c0:c0 + W, :]                # (H, W, C) bf16
                slab_ref[:, off:off + C] = win.reshape(H * W, C)

    # Single fused MXU contraction over all branches and taps: K = d*9*C.
    out = jnp.dot(slab_ref[...], w_ref[...],
                  preferred_element_type=jnp.float32)                 # (H*W, C) f32
    o_ref[...] = (out + b_ref[...]).reshape(1, H * W, C).astype(o_ref.dtype)


def mdconv2d(x_branches, params, *, dilations):
    """MDConv2d forward.

    x_branches: (d, B, C, H, W) float32 — the `[d x (B C H W)]` input, stacked.
    Returns (B, C, H, W) float32.
    """
    d, B, C, H, W = x_branches.shape
    assert d == len(dilations)
    P = max(int(v) for v in dilations)
    Hp, Wp = H + 2 * P, W + 2 * P

    # Channels-last so C sits on the TPU lane dimension; group the d branches of
    # each batch element contiguously so one BlockSpec block fetches all of them.
    x_nhwc = jnp.transpose(x_branches, (1, 0, 3, 4, 2)).astype(jnp.float32)
    x_nhwc = x_nhwc.reshape(B * d, H, W, C)                  # rows: b*d + i

    scale = params['bn_scale'].reshape(d, 1, C).astype(jnp.float32)
    shift = params['bn_shift'].reshape(d, 1, C).astype(jnp.float32)
    # Pre-reshape weights to the fused im2col layout (d*9*C, C), rows ordered
    # (branch, kh, kw, cin) to match the slab column blocks; bf16 at MXU boundary.
    w = params['conv_w'].astype(jnp.bfloat16).reshape(d * 9 * C, C)
    bias_sum = jnp.sum(params['conv_b'], axis=0).reshape(1, C).astype(jnp.float32)

    kernel = functools.partial(_mdconv_kernel,
                               dilations=tuple(int(v) for v in dilations),
                               pad=P)
    out = pl.pallas_call(
        kernel,
        out_shape=jax.ShapeDtypeStruct((B, H * W, C), jnp.float32),
        grid=(B,),
        in_specs=[
            pl.BlockSpec((d, H, W, C), lambda b: (b, 0, 0, 0)),   # d branches of batch b
            pl.BlockSpec((d, 1, C), lambda b: (0, 0, 0)),
            pl.BlockSpec((d, 1, C), lambda b: (0, 0, 0)),
            pl.BlockSpec((d * 9 * C, C), lambda b: (0, 0)),
            pl.BlockSpec((1, C), lambda b: (0, 0)),
        ],
        out_specs=pl.BlockSpec((1, H * W, C), lambda b: (b, 0, 0)),
        scratch_shapes=[
            pltpu.VMEM((Hp, Wp, C), jnp.bfloat16),        # padded activation plane
            pltpu.VMEM((H * W, d * 9 * C), jnp.bfloat16), # im2col slab
        ],
        compiler_params=pltpu.CompilerParams(
            dimension_semantics=("parallel",),
            vmem_limit_bytes=32 * 1024 * 1024),
    )(x_nhwc, scale, shift, w, bias_sum)
    out = out.reshape(B, H, W, C)
    return jnp.transpose(out, (0, 3, 1, 2))                  # back to NCHW


# ----------------------------------------------------------------------------
# Deterministic parameter init (shapes follow the PyTorch __init__):
#   per branch: BatchNorm2d(conv_dim) [eval, default running stats, folded],
#   Conv2d(conv_dim, conv_dim, 3x3, dilation=d_i) with kaiming_uniform_ weight
#   (relu gain) and zero bias.
# ----------------------------------------------------------------------------
def init_params(key, conv_dim, dilations):
    d = len(dilations)
    keys = jax.random.split(key, d)
    bn_scale = jnp.full((d, conv_dim), 1.0 / np.sqrt(1.0 + BN_EPS), jnp.float32)
    bn_shift = jnp.zeros((d, conv_dim), jnp.float32)
    fan_in = 9 * conv_dim
    bound = float(np.sqrt(6.0 / fan_in))        # kaiming_uniform_, nonlinearity='relu'
    conv_w = jnp.stack([
        jax.random.uniform(keys[i], (3, 3, conv_dim, conv_dim),
                           jnp.float32, -bound, bound)        # HWIO
        for i in range(d)])
    conv_b = jnp.zeros((d, conv_dim), jnp.float32)
    return {'bn_scale': bn_scale, 'bn_shift': bn_shift,
            'conv_w': conv_w, 'conv_b': conv_b}


# ----------------------------------------------------------------------------
# Pure-JAX reference (independent path: lax.conv for the dilated convolutions).
# ----------------------------------------------------------------------------
def mdconv2d_ref(x_branches, params, *, dilations):
    d, B, C, H, W = x_branches.shape
    x = jnp.transpose(x_branches, (0, 1, 3, 4, 2)).astype(jnp.float32)  # (d,B,H,W,C)
    out = 0.0
    for i, dil in enumerate(dilations):
        a = jnp.maximum(x[i] * params['bn_scale'][i] + params['bn_shift'][i], 0.0)
        y = jax.lax.conv_general_dilated(
            a, params['conv_w'][i], window_strides=(1, 1), padding='SAME',
            rhs_dilation=(int(dil), int(dil)),
            dimension_numbers=('NHWC', 'HWIO', 'NHWC')) + params['conv_b'][i]
        out = out + y
    return jnp.transpose(out, (0, 3, 1, 2))


if __name__ == "__main__":
    B, C, H, W = 2, 32, 16, 16
    DIL = (1, 2, 4)                     # one BN+ReLU+Conv branch per dilation

    root = jax.random.PRNGKey(0)
    pkey, xkey = jax.random.split(root)
    params = init_params(pkey, C, DIL)
    # The module takes a list of d tensors (B, C, H, W); stack them on axis 0.
    x = jax.random.normal(xkey, (len(DIL), B, C, H, W), dtype=jnp.float32)

    fwd = jax.jit(functools.partial(mdconv2d, params=params, dilations=DIL))
    out = jax.block_until_ready(fwd(x))
    assert out.shape == (B, C, H, W), out.shape

    ref_fn = jax.jit(functools.partial(mdconv2d_ref, params=params, dilations=DIL))
    ref = jax.block_until_ready(ref_fn(x))
    np.testing.assert_allclose(np.asarray(out), np.asarray(ref), rtol=2e-2, atol=2e-2)
    print("KERNEL_OK")
</pallas_src>

<mosaic_0001>
module attributes {stable_mosaic.version = 11 : i64} {
  func.func @_mdconv_kernel(%arg0: i32, %arg1: memref<3x16x16x32xf32, #tpu.memory_space<vmem>>, %arg2: memref<3x1x32xf32, #tpu.memory_space<vmem>>, %arg3: memref<3x1x32xf32, #tpu.memory_space<vmem>>, %arg4: memref<864x32xbf16, #tpu.memory_space<vmem>>, %arg5: memref<1x32xf32, #tpu.memory_space<vmem>>, %arg6: memref<1x256x32xf32, #tpu.memory_space<vmem>>, %arg7: memref<24x24x32xbf16, #tpu.memory_space<vmem>>, %arg8: memref<256x864xbf16, #tpu.memory_space<vmem>>) attributes {dimension_semantics = [#tpu.dimension_semantics<parallel>], iteration_bounds = array<i64: 2>, scalar_prefetch = 0 : i64, scratch_operands = 2 : i64, tpu.core_type = #tpu.core_type<tc>, window_params = [{transform_indices = @transform_0, window_bounds = array<i64: 3, 16, 16, 32>}, {pipeline_mode = #tpu.pipeline_mode<synchronous>, transform_indices = @transform_1, window_bounds = array<i64: 3, 1, 32>}, {pipeline_mode = #tpu.pipeline_mode<synchronous>, transform_indices = @transform_2, window_bounds = array<i64: 3, 1, 32>}, {pipeline_mode = #tpu.pipeline_mode<synchronous>, transform_indices = @transform_3, window_bounds = array<i64: 864, 32>}, {pipeline_mode = #tpu.pipeline_mode<synchronous>, transform_indices = @transform_4, window_bounds = array<i64: 1, 32>}, {transform_indices = @transform_5, window_bounds = array<i64: 1, 256, 32>}]} {
    %cst = arith.constant 0.000000e+00 : bf16
    %0 = vector.broadcast %cst : bf16 to vector<4x24x32xbf16>
    %c0 = arith.constant 0 : index
    %c0_0 = arith.constant 0 : index
    %c0_1 = arith.constant 0 : index
    %1 = vector.load %arg7[%c0, %c0_0, %c0_1] : memref<24x24x32xbf16, #tpu.memory_space<vmem>>, vector<4x24x32xbf16>
    tpu.vector_store %arg7[%c0, %c0_0, %c0_1], %0 {strides = array<i32>} : memref<24x24x32xbf16, #tpu.memory_space<vmem>>, vector<4x24x32xbf16>,
    %cst_2 = arith.constant 0.000000e+00 : bf16
    %2 = vector.broadcast %cst_2 : bf16 to vector<4x24x32xbf16>
    %c20 = arith.constant 20 : index
    %c0_3 = arith.constant 0 : index
    %c0_4 = arith.constant 0 : index
    %3 = vector.load %arg7[%c20, %c0_3, %c0_4] : memref<24x24x32xbf16, #tpu.memory_space<vmem>>, vector<4x24x32xbf16>
    tpu.vector_store %arg7[%c20, %c0_3, %c0_4], %2 {strides = array<i32>} : memref<24x24x32xbf16, #tpu.memory_space<vmem>>, vector<4x24x32xbf16>,
    %cst_5 = arith.constant 0.000000e+00 : bf16
    %4 = vector.broadcast %cst_5 : bf16 to vector<16x4x32xbf16>
    %c4 = arith.constant 4 : index
    %c0_6 = arith.constant 0 : index
    %c0_7 = arith.constant 0 : index
    %5 = vector.load %arg7[%c4, %c0_6, %c0_7] : memref<24x24x32xbf16, #tpu.memory_space<vmem>>, vector<16x4x32xbf16>
    tpu.vector_store %arg7[%c4, %c0_6, %c0_7], %4 {strides = array<i32>} : memref<24x24x32xbf16, #tpu.memory_space<vmem>>, vector<16x4x32xbf16>,
    %cst_8 = arith.constant 0.000000e+00 : bf16
    %6 = vector.broadcast %cst_8 : bf16 to vector<16x4x32xbf16>
    %c4_9 = arith.constant 4 : index
    %c20_10 = arith.constant 20 : index
    %c0_11 = arith.constant 0 : index
    %7 = vector.load %arg7[%c4_9, %c20_10, %c0_11] : memref<24x24x32xbf16, #tpu.memory_space<vmem>>, vector<16x4x32xbf16>
    tpu.vector_store %arg7[%c4_9, %c20_10, %c0_11], %6 {strides = array<i32>} : memref<24x24x32xbf16, #tpu.memory_space<vmem>>, vector<16x4x32xbf16>,
    %c0_12 = arith.constant 0 : index
    %c0_13 = arith.constant 0 : index
    %c0_14 = arith.constant 0 : index
    %c0_15 = arith.constant 0 : index
    %8 = vector.load %arg1[%c0_12, %c0_13, %c0_14, %c0_15] : memref<3x16x16x32xf32, #tpu.memory_space<vmem>>, vector<1x16x16x32xf32>
    %9 = vector.shape_cast %8 : vector<1x16x16x32xf32> to vector<16x16x32xf32>
    %c0_16 = arith.constant 0 : index
    %c0_17 = arith.constant 0 : index
    %c0_18 = arith.constant 0 : index
    %10 = vector.load %arg2[%c0_16, %c0_17, %c0_18] : memref<3x1x32xf32, #tpu.memory_space<vmem>>, vector<1x1x32xf32>
    %11 = vector.shape_cast %10 : vector<1x1x32xf32> to vector<1x32xf32>
    %12 = vector.shape_cast %11 : vector<1x32xf32> to vector<1x1x32xf32>
    %13 = vector.broadcast %12 : vector<1x1x32xf32> to vector<16x16x32xf32>
    %14 = arith.mulf %9, %13 : vector<16x16x32xf32>
    %c0_19 = arith.constant 0 : index
    %c0_20 = arith.constant 0 : index
    %c0_21 = arith.constant 0 : index
    %15 = vector.load %arg3[%c0_19, %c0_20, %c0_21] : memref<3x1x32xf32, #tpu.memory_space<vmem>>, vector<1x1x32xf32>
    %16 = vector.shape_cast %15 : vector<1x1x32xf32> to vector<1x32xf32>
    %17 = vector.shape_cast %16 : vector<1x32xf32> to vector<1x1x32xf32>
    %18 = vector.broadcast %17 : vector<1x1x32xf32> to vector<16x16x32xf32>
    %19 = arith.addf %14, %18 : vector<16x16x32xf32>
    %cst_22 = arith.constant 0.000000e+00 : f32
    %20 = vector.broadcast %cst_22 : f32 to vector<16x16x32xf32>
    %21 = arith.maximumf %19, %20 : vector<16x16x32xf32>
    %22 = arith.truncf %21 : vector<16x16x32xf32> to vector<16x16x32xbf16>
    %c4_23 = arith.constant 4 : index
    %c4_24 = arith.constant 4 : index
    %c0_25 = arith.constant 0 : index
    %23 = vector.load %arg7[%c4_23, %c4_24, %c0_25] : memref<24x24x32xbf16, #tpu.memory_space<vmem>>, vector<16x16x32xbf16>
    tpu.vector_store %arg7[%c4_23, %c4_24, %c0_25], %22 {strides = array<i32>} : memref<24x24x32xbf16, #tpu.memory_space<vmem>>, vector<16x16x32xbf16>,
    %c3 = arith.constant 3 : index
    %c3_26 = arith.constant 3 : index
    %c0_27 = arith.constant 0 : index
    %24 = vector.load %arg7[%c3, %c3_26, %c0_27] : memref<24x24x32xbf16, #tpu.memory_space<vmem>>, vector<16x16x32xbf16>
    %25 = vector.shape_cast %24 : vector<16x16x32xbf16> to vector<256x32xbf16>
    %c0_28 = arith.constant 0 : index
    %c0_29 = arith.constant 0 : index
    %26 = vector.load %arg8[%c0_28, %c0_29] : memref<256x864xbf16, #tpu.memory_space<vmem>>, vector<256x32xbf16>
    tpu.vector_store %arg8[%c0_28, %c0_29], %25 {strides = array<i32>} : memref<256x864xbf16, #tpu.memory_space<vmem>>, vector<256x32xbf16>,
    %c3_30 = arith.constant 3 : index
    %c4_31 = arith.constant 4 : index
    %c0_32 = arith.constant 0 : index
    %27 = vector.load %arg7[%c3_30, %c4_31, %c0_32] : memref<24x24x32xbf16, #tpu.memory_space<vmem>>, vector<16x16x32xbf16>
    %28 = vector.shape_cast %27 : vector<16x16x32xbf16> to vector<256x32xbf16>
    %c0_33 = arith.constant 0 : index
    %c32 = arith.constant 32 : index
    %29 = vector.load %arg8[%c0_33, %c32] : memref<256x864xbf16, #tpu.memory_space<vmem>>, vector<256x32xbf16>
    tpu.vector_store %arg8[%c0_33, %c32], %28 {strides = array<i32>} : memref<256x864xbf16, #tpu.memory_space<vmem>>, vector<256x32xbf16>,
    %c3_34 = arith.constant 3 : index
    %c5 = arith.constant 5 : index
    %c0_35 = arith.constant 0 : index
    %30 = vector.load %arg7[%c3_34, %c5, %c0_35] : memref<24x24x32xbf16, #tpu.memory_space<vmem>>, vector<16x16x32xbf16>
    %31 = vector.shape_cast %30 : vector<16x16x32xbf16> to vector<256x32xbf16>
    %c0_36 = arith.constant 0 : index
    %c64 = arith.constant 64 : index
    %32 = vector.load %arg8[%c0_36, %c64] : memref<256x864xbf16, #tpu.memory_space<vmem>>, vector<256x32xbf16>
    tpu.vector_store %arg8[%c0_36, %c64], %31 {strides = array<i32>} : memref<256x864xbf16, #tpu.memory_space<vmem>>, vector<256x32xbf16>,
    %c4_37 = arith.constant 4 : index
    %c3_38 = arith.constant 3 : index
    %c0_39 = arith.constant 0 : index
    %33 = vector.load %arg7[%c4_37, %c3_38, %c0_39] : memref<24x24x32xbf16, #tpu.memory_space<vmem>>, vector<16x16x32xbf16>
    %34 = vector.shape_cast %33 : vector<16x16x32xbf16> to vector<256x32xbf16>
    %c0_40 = arith.constant 0 : index
    %c96 = arith.constant 96 : index
    %35 = vector.load %arg8[%c0_40, %c96] : memref<256x864xbf16, #tpu.memory_space<vmem>>, vector<256x32xbf16>
    tpu.vector_store %arg8[%c0_40, %c96], %34 {strides = array<i32>} : memref<256x864xbf16, #tpu.memory_space<vmem>>, vector<256x32xbf16>,
    %c4_41 = arith.constant 4 : index
    %c4_42 = arith.constant 4 : index
    %c0_43 = arith.constant 0 : index
    %36 = vector.load %arg7[%c4_41, %c4_42, %c0_43] : memref<24x24x32xbf16, #tpu.memory_space<vmem>>, vector<16x16x32xbf16>
    %37 = vector.shape_cast %36 : vector<16x16x32xbf16> to vector<256x32xbf16>
    %c0_44 = arith.constant 0 : index
    %c128 = arith.constant 128 : index
    %38 = vector.load %arg8[%c0_44, %c128] : memref<256x864xbf16, #tpu.memory_space<vmem>>, vector<256x32xbf16>
    tpu.vector_store %arg8[%c0_44, %c128], %37 {strides = array<i32>} : memref<256x864xbf16, #tpu.memory_space<vmem>>, vector<256x32xbf16>,
    %c4_45 = arith.constant 4 : index
    %c5_46 = arith.constant 5 : index
    %c0_47 = arith.constant 0 : index
    %39 = vector.load %arg7[%c4_45, %c5_46, %c0_47] : memref<24x24x32xbf16, #tpu.memory_space<vmem>>, vector<16x16x32xbf16>
    %40 = vector.shape_cast %39 : vector<16x16x32xbf16> to vector<256x32xbf16>
    %c0_48 = arith.constant 0 : index
    %c160 = arith.constant 160 : index
    %41 = vector.load %arg8[%c0_48, %c160] : memref<256x864xbf16, #tpu.memory_space<vmem>>, vector<256x32xbf16>
    tpu.vector_store %arg8[%c0_48, %c160], %40 {strides = array<i32>} : memref<256x864xbf16, #tpu.memory_space<vmem>>, vector<256x32xbf16>,
    %c5_49 = arith.constant 5 : index
    %c3_50 = arith.constant 3 : index
    %c0_51 = arith.constant 0 : index
    %42 = vector.load %arg7[%c5_49, %c3_50, %c0_51] : memref<24x24x32xbf16, #tpu.memory_space<vmem>>, vector<16x16x32xbf16>
    %43 = vector.shape_cast %42 : vector<16x16x32xbf16> to vector<256x32xbf16>
    %c0_52 = arith.constant 0 : index
    %c192 = arith.constant 192 : index
    %44 = vector.load %arg8[%c0_52, %c192] : memref<256x864xbf16, #tpu.memory_space<vmem>>, vector<256x32xbf16>
    tpu.vector_store %arg8[%c0_52, %c192], %43 {strides = array<i32>} : memref<256x864xbf16, #tpu.memory_space<vmem>>, vector<256x32xbf16>,
    %c5_53 = arith.constant 5 : index
    %c4_54 = arith.constant 4 : index
    %c0_55 = arith.constant 0 : index
    %45 = vector.load %arg7[%c5_53, %c4_54, %c0_55] : memref<24x24x32xbf16, #tpu.memory_space<vmem>>, vector<16x16x32xbf16>
    %46 = vector.shape_cast %45 : vector<16x16x32xbf16> to vector<256x32xbf16>
    %c0_56 = arith.constant 0 : index
    %c224 = arith.constant 224 : index
    %47 = vector.load %arg8[%c0_56, %c224] : memref<256x864xbf16, #tpu.memory_space<vmem>>, vector<256x32xbf16>
    tpu.vector_store %arg8[%c0_56, %c224], %46 {strides = array<i32>} : memref<256x864xbf16, #tpu.memory_space<vmem>>, vector<256x32xbf16>,
    %c5_57 = arith.constant 5 : index
    %c5_58 = arith.constant 5 : index
    %c0_59 = arith.constant 0 : index
    %48 = vector.load %arg7[%c5_57, %c5_58, %c0_59] : memref<24x24x32xbf16, #tpu.memory_space<vmem>>, vector<16x16x32xbf16>
    %49 = vector.shape_cast %48 : vector<16x16x32xbf16> to vector<256x32xbf16>
    %c0_60 = arith.constant 0 : index
    %c256 = arith.constant 256 : index
    %50 = vector.load %arg8[%c0_60, %c256] : memref<256x864xbf16, #tpu.memory_space<vmem>>, vector<256x32xbf16>
    tpu.vector_store %arg8[%c0_60, %c256], %49 {strides = array<i32>} : memref<256x864xbf16, #tpu.memory_space<vmem>>, vector<256x32xbf16>,
    %c1 = arith.constant 1 : index
    %c0_61 = arith.constant 0 : index
    %c0_62 = arith.constant 0 : index
    %c0_63 = arith.constant 0 : index
    %51 = vector.load %arg1[%c1, %c0_61, %c0_62, %c0_63] : memref<3x16x16x32xf32, #tpu.memory_space<vmem>>, vector<1x16x16x32xf32>
    %52 = vector.shape_cast %51 : vector<1x16x16x32xf32> to vector<16x16x32xf32>
    %c1_64 = arith.constant 1 : index
    %c0_65 = arith.constant 0 : index
    %c0_66 = arith.constant 0 : index
    %53 = vector.load %arg2[%c1_64, %c0_65, %c0_66] : memref<3x1x32xf32, #tpu.memory_space<vmem>>, vector<1x1x32xf32>
    %54 = vector.shape_cast %53 : vector<1x1x32xf32> to vector<1x32xf32>
    %55 = vector.shape_cast %54 : vector<1x32xf32> to vector<1x1x32xf32>
    %56 = vector.broadcast %55 : vector<1x1x32xf32> to vector<16x16x32xf32>
    %57 = arith.mulf %52, %56 : vector<16x16x32xf32>
    %c1_67 = arith.constant 1 : index
    %c0_68 = arith.constant 0 : index
    %c0_69 = arith.constant 0 : index
    %58 = vector.load %arg3[%c1_67, %c0_68, %c0_69] : memref<3x1x32xf32, #tpu.memory_space<vmem>>, vector<1x1x32xf32>
    %59 = vector.shape_cast %58 : vector<1x1x32xf32> to vector<1x32xf32>
    %60 = vector.shape_cast %59 : vector<1x32xf32> to vector<1x1x32xf32>
    %61 = vector.broadcast %60 : vector<1x1x32xf32> to vector<16x16x32xf32>
    %62 = arith.addf %57, %61 : vector<16x16x32xf32>
    %cst_70 = arith.constant 0.000000e+00 : f32
    %63 = vector.broadcast %cst_70 : f32 to vector<16x16x32xf32>
    %64 = arith.maximumf %62, %63 : vector<16x16x32xf32>
    %65 = arith.truncf %64 : vector<16x16x32xf32> to vector<16x16x32xbf16>
    %c4_71 = arith.constant 4 : index
    %c4_72 = arith.constant 4 : index
    %c0_73 = arith.constant 0 : index
    %66 = vector.load %arg7[%c4_71, %c4_72, %c0_73] : memref<24x24x32xbf16, #tpu.memory_space<vmem>>, vector<16x16x32xbf16>
    tpu.vector_store %arg7[%c4_71, %c4_72, %c0_73], %65 {strides = array<i32>} : memref<24x24x32xbf16, #tpu.memory_space<vmem>>, vector<16x16x32xbf16>,
    %c2 = arith.constant 2 : index
    %c2_74 = arith.constant 2 : index
    %c0_75 = arith.constant 0 : index
    %67 = vector.load %arg7[%c2, %c2_74, %c0_75] : memref<24x24x32xbf16, #tpu.memory_space<vmem>>, vector<16x16x32xbf16>
    %68 = vector.shape_cast %67 : vector<16x16x32xbf16> to vector<256x32xbf16>
    %c0_76 = arith.constant 0 : index
    %c288 = arith.constant 288 : index
    %69 = vector.load %arg8[%c0_76, %c288] : memref<256x864xbf16, #tpu.memory_space<vmem>>, vector<256x32xbf16>
    tpu.vector_store %arg8[%c0_76, %c288], %68 {strides = array<i32>} : memref<256x864xbf16, #tpu.memory_space<vmem>>, vector<256x32xbf16>,
    %c2_77 = arith.constant 2 : index
    %c4_78 = arith.constant 4 : index
    %c0_79 = arith.constant 0 : index
    %70 = vector.load %arg7[%c2_77, %c4_78, %c0_79] : memref<24x24x32xbf16, #tpu.memory_space<vmem>>, vector<16x16x32xbf16>
    %71 = vector.shape_cast %70 : vector<16x16x32xbf16> to vector<256x32xbf16>
    %c0_80 = arith.constant 0 : index
    %c320 = arith.constant 320 : index
    %72 = vector.load %arg8[%c0_80, %c320] : memref<256x864xbf16, #tpu.memory_space<vmem>>, vector<256x32xbf16>
    tpu.vector_store %arg8[%c0_80, %c320], %71 {strides = array<i32>} : memref<256x864xbf16, #tpu.memory_space<vmem>>, vector<256x32xbf16>,
    %c2_81 = arith.constant 2 : index
    %c6 = arith.constant 6 : index
    %c0_82 = arith.constant 0 : index
    %73 = vector.load %arg7[%c2_81, %c6, %c0_82] : memref<24x24x32xbf16, #tpu.memory_space<vmem>>, vector<16x16x32xbf16>
    %74 = vector.shape_cast %73 : vector<16x16x32xbf16> to vector<256x32xbf16>
    %c0_83 = arith.constant 0 : index
    %c352 = arith.constant 352 : index
    %75 = vector.load %arg8[%c0_83, %c352] : memref<256x864xbf16, #tpu.memory_space<vmem>>, vector<256x32xbf16>
    tpu.vector_store %arg8[%c0_83, %c352], %74 {strides = array<i32>} : memref<256x864xbf16, #tpu.memory_space<vmem>>, vector<256x32xbf16>,
    %c4_84 = arith.constant 4 : index
    %c2_85 = arith.constant 2 : index
    %c0_86 = arith.constant 0 : index
    %76 = vector.load %arg7[%c4_84, %c2_85, %c0_86] : memref<24x24x32xbf16, #tpu.memory_space<vmem>>, vector<16x16x32xbf16>
    %77 = vector.shape_cast %76 : vector<16x16x32xbf16> to vector<256x32xbf16>
    %c0_87 = arith.constant 0 : index
    %c384 = arith.constant 384 : index
    %78 = vector.load %arg8[%c0_87, %c384] : memref<256x864xbf16, #tpu.memory_space<vmem>>, vector<256x32xbf16>
    tpu.vector_store %arg8[%c0_87, %c384], %77 {strides = array<i32>} : memref<256x864xbf16, #tpu.memory_space<vmem>>, vector<256x32xbf16>,
    %c4_88 = arith.constant 4 : index
    %c4_89 = arith.constant 4 : index
    %c0_90 = arith.constant 0 : index
    %79 = vector.load %arg7[%c4_88, %c4_89, %c0_90] : memref<24x24x32xbf16, #tpu.memory_space<vmem>>, vector<16x16x32xbf16>
    %80 = vector.shape_cast %79 : vector<16x16x32xbf16> to vector<256x32xbf16>
    %c0_91 = arith.constant 0 : index
    %c416 = arith.constant 416 : index
    %81 = vector.load %arg8[%c0_91, %c416] : memref<256x864xbf16, #tpu.memory_space<vmem>>, vector<256x32xbf16>
    tpu.vector_store %arg8[%c0_91, %c416], %80 {strides = array<i32>} : memref<256x864xbf16, #tpu.memory_space<vmem>>, vector<256x32xbf16>,
    %c4_92 = arith.constant 4 : index
    %c6_93 = arith.constant 6 : index
    %c0_94 = arith.constant 0 : index
    %82 = vector.load %arg7[%c4_92, %c6_93, %c0_94] : memref<24x24x32xbf16, #tpu.memory_space<vmem>>, vector<16x16x32xbf16>
    %83 = vector.shape_cast %82 : vector<16x16x32xbf16> to vector<256x32xbf16>
    %c0_95 = arith.constant 0 : index
    %c448 = arith.constant 448 : index
    %84 = vector.load %arg8[%c0_95, %c448] : memref<256x864xbf16, #tpu.memory_space<vmem>>, vector<256x32xbf16>
    tpu.vector_store %arg8[%c0_95, %c448], %83 {strides = array<i32>} : memref<256x864xbf16, #tpu.memory_space<vmem>>, vector<256x32xbf16>,
    %c6_96 = arith.constant 6 : index
    %c2_97 = arith.constant 2 : index
    %c0_98 = arith.constant 0 : index
    %85 = vector.load %arg7[%c6_96, %c2_97, %c0_98] : memref<24x24x32xbf16, #tpu.memory_space<vmem>>, vector<16x16x32xbf16>
    %86 = vector.shape_cast %85 : vector<16x16x32xbf16> to vector<256x32xbf16>
    %c0_99 = arith.constant 0 : index
    %c480 = arith.constant 480 : index
    %87 = vector.load %arg8[%c0_99, %c480] : memref<256x864xbf16, #tpu.memory_space<vmem>>, vector<256x32xbf16>
    tpu.vector_store %arg8[%c0_99, %c480], %86 {strides = array<i32>} : memref<256x864xbf16, #tpu.memory_space<vmem>>, vector<256x32xbf16>,
    %c6_100 = arith.constant 6 : index
    %c4_101 = arith.constant 4 : index
    %c0_102 = arith.constant 0 : index
    %88 = vector.load %arg7[%c6_100, %c4_101, %c0_102] : memref<24x24x32xbf16, #tpu.memory_space<vmem>>, vector<16x16x32xbf16>
    %89 = vector.shape_cast %88 : vector<16x16x32xbf16> to vector<256x32xbf16>
    %c0_103 = arith.constant 0 : index
    %c512 = arith.constant 512 : index
    %90 = vector.load %arg8[%c0_103, %c512] : memref<256x864xbf16, #tpu.memory_space<vmem>>, vector<256x32xbf16>
    tpu.vector_store %arg8[%c0_103, %c512], %89 {strides = array<i32>} : memref<256x864xbf16, #tpu.memory_space<vmem>>, vector<256x32xbf16>,
    %c6_104 = arith.constant 6 : index
    %c6_105 = arith.constant 6 : index
    %c0_106 = arith.constant 0 : index
    %91 = vector.load %arg7[%c6_104, %c6_105, %c0_106] : memref<24x24x32xbf16, #tpu.memory_space<vmem>>, vector<16x16x32xbf16>
    %92 = vector.shape_cast %91 : vector<16x16x32xbf16> to vector<256x32xbf16>
    %c0_107 = arith.constant 0 : index
    %c544 = arith.constant 544 : index
    %93 = vector.load %arg8[%c0_107, %c544] : memref<256x864xbf16, #tpu.memory_space<vmem>>, vector<256x32xbf16>
    tpu.vector_store %arg8[%c0_107, %c544], %92 {strides = array<i32>} : memref<256x864xbf16, #tpu.memory_space<vmem>>, vector<256x32xbf16>,
    %c2_108 = arith.constant 2 : index
    %c0_109 = arith.constant 0 : index
    %c0_110 = arith.constant 0 : index
    %c0_111 = arith.constant 0 : index
    %94 = vector.load %arg1[%c2_108, %c0_109, %c0_110, %c0_111] : memref<3x16x16x32xf32, #tpu.memory_space<vmem>>, vector<1x16x16x32xf32>
    %95 = vector.shape_cast %94 : vector<1x16x16x32xf32> to vector<16x16x32xf32>
    %c2_112 = arith.constant 2 : index
    %c0_113 = arith.constant 0 : index
    %c0_114 = arith.constant 0 : index
    %96 = vector.load %arg2[%c2_112, %c0_113, %c0_114] : memref<3x1x32xf32, #tpu.memory_space<vmem>>, vector<1x1x32xf32>
    %97 = vector.shape_cast %96 : vector<1x1x32xf32> to vector<1x32xf32>
    %98 = vector.shape_cast %97 : vector<1x32xf32> to vector<1x1x32xf32>
    %99 = vector.broadcast %98 : vector<1x1x32xf32> to vector<16x16x32xf32>
    %100 = arith.mulf %95, %99 : vector<16x16x32xf32>
    %c2_115 = arith.constant 2 : index
    %c0_116 = arith.constant 0 : index
    %c0_117 = arith.constant 0 : index
    %101 = vector.load %arg3[%c2_115, %c0_116, %c0_117] : memref<3x1x32xf32, #tpu.memory_space<vmem>>, vector<1x1x32xf32>
    %102 = vector.shape_cast %101 : vector<1x1x32xf32> to vector<1x32xf32>
    %103 = vector.shape_cast %102 : vector<1x32xf32> to vector<1x1x32xf32>
    %104 = vector.broadcast %103 : vector<1x1x32xf32> to vector<16x16x32xf32>
    %105 = arith.addf %100, %104 : vector<16x16x32xf32>
    %cst_118 = arith.constant 0.000000e+00 : f32
    %106 = vector.broadcast %cst_118 : f32 to vector<16x16x32xf32>
    %107 = arith.maximumf %105, %106 : vector<16x16x32xf32>
    %108 = arith.truncf %107 : vector<16x16x32xf32> to vector<16x16x32xbf16>
    %c4_119 = arith.constant 4 : index
    %c4_120 = arith.constant 4 : index
    %c0_121 = arith.constant 0 : index
    %109 = vector.load %arg7[%c4_119, %c4_120, %c0_121] : memref<24x24x32xbf16, #tpu.memory_space<vmem>>, vector<16x16x32xbf16>
    tpu.vector_store %arg7[%c4_119, %c4_120, %c0_121], %108 {strides = array<i32>} : memref<24x24x32xbf16, #tpu.memory_space<vmem>>, vector<16x16x32xbf16>,
    %c0_122 = arith.constant 0 : index
    %c0_123 = arith.constant 0 : index
    %c0_124 = arith.constant 0 : index
    %110 = vector.load %arg7[%c0_122, %c0_123, %c0_124] : memref<24x24x32xbf16, #tpu.memory_space<vmem>>, vector<16x16x32xbf16>
    %111 = vector.shape_cast %110 : vector<16x16x32xbf16> to vector<256x32xbf16>
    %c0_125 = arith.constant 0 : index
    %c576 = arith.constant 576 : index
    %112 = vector.load %arg8[%c0_125, %c576] : memref<256x864xbf16, #tpu.memory_space<vmem>>, vector<256x32xbf16>
    tpu.vector_store %arg8[%c0_125, %c576], %111 {strides = array<i32>} : memref<256x864xbf16, #tpu.memory_space<vmem>>, vector<256x32xbf16>,
    %c0_126 = arith.constant 0 : index
    %c4_127 = arith.constant 4 : index
    %c0_128 = arith.constant 0 : index
    %113 = vector.load %arg7[%c0_126, %c4_127, %c0_128] : memref<24x24x32xbf16, #tpu.memory_space<vmem>>, vector<16x16x32xbf16>
    %114 = vector.shape_cast %113 : vector<16x16x32xbf16> to vector<256x32xbf16>
    %c0_129 = arith.constant 0 : index
    %c608 = arith.constant 608 : index
    %115 = vector.load %arg8[%c0_129, %c608] : memref<256x864xbf16, #tpu.memory_space<vmem>>, vector<256x32xbf16>
    tpu.vector_store %arg8[%c0_129, %c608], %114 {strides = array<i32>} : memref<256x864xbf16, #tpu.memory_space<vmem>>, vector<256x32xbf16>,
    %c0_130 = arith.constant 0 : index
    %c8 = arith.constant 8 : index
    %c0_131 = arith.constant 0 : index
    %116 = vector.load %arg7[%c0_130, %c8, %c0_131] : memref<24x24x32xbf16, #tpu.memory_space<vmem>>, vector<16x16x32xbf16>
    %117 = vector.shape_cast %116 : vector<16x16x32xbf16> to vector<256x32xbf16>
    %c0_132 = arith.constant 0 : index
    %c640 = arith.constant 640 : index
    %118 = vector.load %arg8[%c0_132, %c640] : memref<256x864xbf16, #tpu.memory_space<vmem>>, vector<256x32xbf16>
    tpu.vector_store %arg8[%c0_132, %c640], %117 {strides = array<i32>} : memref<256x864xbf16, #tpu.memory_space<vmem>>, vector<256x32xbf16>,
    %c4_133 = arith.constant 4 : index
    %c0_134 = arith.constant 0 : index
    %c0_135 = arith.constant 0 : index
    %119 = vector.load %arg7[%c4_133, %c0_134, %c0_135] : memref<24x24x32xbf16, #tpu.memory_space<vmem>>, vector<16x16x32xbf16>
    %120 = vector.shape_cast %119 : vector<16x16x32xbf16> to vector<256x32xbf16>
    %c0_136 = arith.constant 0 : index
    %c672 = arith.constant 672 : index
    %121 = vector.load %arg8[%c0_136, %c672] : memref<256x864xbf16, #tpu.memory_space<vmem>>, vector<256x32xbf16>
    tpu.vector_store %arg8[%c0_136, %c672], %120 {strides = array<i32>} : memref<256x864xbf16, #tpu.memory_space<vmem>>, vector<256x32xbf16>,
    %c4_137 = arith.constant 4 : index
    %c4_138 = arith.constant 4 : index
    %c0_139 = arith.constant 0 : index
    %122 = vector.load %arg7[%c4_137, %c4_138, %c0_139] : memref<24x24x32xbf16, #tpu.memory_space<vmem>>, vector<16x16x32xbf16>
    %123 = vector.shape_cast %122 : vector<16x16x32xbf16> to vector<256x32xbf16>
    %c0_140 = arith.constant 0 : index
    %c704 = arith.constant 704 : index
    %124 = vector.load %arg8[%c0_140, %c704] : memref<256x864xbf16, #tpu.memory_space<vmem>>, vector<256x32xbf16>
    tpu.vector_store %arg8[%c0_140, %c704], %123 {strides = array<i32>} : memref<256x864xbf16, #tpu.memory_space<vmem>>, vector<256x32xbf16>,
    %c4_141 = arith.constant 4 : index
    %c8_142 = arith.constant 8 : index
    %c0_143 = arith.constant 0 : index
    %125 = vector.load %arg7[%c4_141, %c8_142, %c0_143] : memref<24x24x32xbf16, #tpu.memory_space<vmem>>, vector<16x16x32xbf16>
    %126 = vector.shape_cast %125 : vector<16x16x32xbf16> to vector<256x32xbf16>
    %c0_144 = arith.constant 0 : index
    %c736 = arith.constant 736 : index
    %127 = vector.load %arg8[%c0_144, %c736] : memref<256x864xbf16, #tpu.memory_space<vmem>>, vector<256x32xbf16>
    tpu.vector_store %arg8[%c0_144, %c736], %126 {strides = array<i32>} : memref<256x864xbf16, #tpu.memory_space<vmem>>, vector<256x32xbf16>,
    %c8_145 = arith.constant 8 : index
    %c0_146 = arith.constant 0 : index
    %c0_147 = arith.constant 0 : index
    %128 = vector.load %arg7[%c8_145, %c0_146, %c0_147] : memref<24x24x32xbf16, #tpu.memory_space<vmem>>, vector<16x16x32xbf16>
    %129 = vector.shape_cast %128 : vector<16x16x32xbf16> to vector<256x32xbf16>
    %c0_148 = arith.constant 0 : index
    %c768 = arith.constant 768 : index
    %130 = vector.load %arg8[%c0_148, %c768] : memref<256x864xbf16, #tpu.memory_space<vmem>>, vector<256x32xbf16>
    tpu.vector_store %arg8[%c0_148, %c768], %129 {strides = array<i32>} : memref<256x864xbf16, #tpu.memory_space<vmem>>, vector<256x32xbf16>,
    %c8_149 = arith.constant 8 : index
    %c4_150 = arith.constant 4 : index
    %c0_151 = arith.constant 0 : index
    %131 = vector.load %arg7[%c8_149, %c4_150, %c0_151] : memref<24x24x32xbf16, #tpu.memory_space<vmem>>, vector<16x16x32xbf16>
    %132 = vector.shape_cast %131 : vector<16x16x32xbf16> to vector<256x32xbf16>
    %c0_152 = arith.constant 0 : index
    %c800 = arith.constant 800 : index
    %133 = vector.load %arg8[%c0_152, %c800] : memref<256x864xbf16, #tpu.memory_space<vmem>>, vector<256x32xbf16>
    tpu.vector_store %arg8[%c0_152, %c800], %132 {strides = array<i32>} : memref<256x864xbf16, #tpu.memory_space<vmem>>, vector<256x32xbf16>,
    %c8_153 = arith.constant 8 : index
    %c8_154 = arith.constant 8 : index
    %c0_155 = arith.constant 0 : index
    %134 = vector.load %arg7[%c8_153, %c8_154, %c0_155] : memref<24x24x32xbf16, #tpu.memory_space<vmem>>, vector<16x16x32xbf16>
    %135 = vector.shape_cast %134 : vector<16x16x32xbf16> to vector<256x32xbf16>
    %c0_156 = arith.constant 0 : index
    %c832 = arith.constant 832 : index
    %136 = vector.load %arg8[%c0_156, %c832] : memref<256x864xbf16, #tpu.memory_space<vmem>>, vector<256x32xbf16>
    tpu.vector_store %arg8[%c0_156, %c832], %135 {strides = array<i32>} : memref<256x864xbf16, #tpu.memory_space<vmem>>, vector<256x32xbf16>,
    %c0_157 = arith.constant 0 : index
    %c0_158 = arith.constant 0 : index
    %137 = vector.load %arg8[%c0_157, %c0_158] : memref<256x864xbf16, #tpu.memory_space<vmem>>, vector<256x864xbf16>
    %c0_159 = arith.constant 0 : index
    %c0_160 = arith.constant 0 : index
    %138 = vector.load %arg4[%c0_159, %c0_160] : memref<864x32xbf16, #tpu.memory_space<vmem>>, vector<864x32xbf16>
    %cst_161 = arith.constant dense<0.000000e+00> : vector<256x32xf32>
    %139 = tpu.matmul %137, %138, %cst_161 {dimension_numbers = #tpu.dot_dimension_numbers<[1], [0], [0], [1], [0, 0, 1, 1], [], []>} : vector<256x864xbf16>, vector<864x32xbf16>, vector<256x32xf32> -> vector<256x32xf32>
    %c0_162 = arith.constant 0 : index
    %c0_163 = arith.constant 0 : index
    %140 = vector.load %arg5[%c0_162, %c0_163] : memref<1x32xf32, #tpu.memory_space<vmem>>, vector<1x32xf32>
    %141 = vector.broadcast %140 : vector<1x32xf32> to vector<256x32xf32>
    %142 = arith.addf %139, %141 : vector<256x32xf32>
    %143 = vector.shape_cast %142 : vector<256x32xf32> to vector<1x256x32xf32>
    %c0_164 = arith.constant 0 : index
    %c0_165 = arith.constant 0 : index
    %c0_166 = arith.constant 0 : index
    %144 = vector.load %arg6[%c0_164, %c0_165, %c0_166] : memref<1x256x32xf32, #tpu.memory_space<vmem>>, vector<1x256x32xf32>
    tpu.vector_store %arg6[%c0_164, %c0_165, %c0_166], %143 {strides = array<i32>} : memref<1x256x32xf32, #tpu.memory_space<vmem>>, vector<1x256x32xf32>,
    return
  }
  func.func @transform_0(%arg0: i32) -> (i32, i32, i32, i32) {
    %c0_i32 = arith.constant 0 : i32
    %c0_i32_0 = arith.constant 0 : i32
    %c0_i32_1 = arith.constant 0 : i32
    %c0_i32_2 = arith.constant 0 : i32
    return %arg0, %c0_i32, %c0_i32_0, %c0_i32_1 : i32, i32, i32, i32
  }
  func.func @transform_1(%arg0: i32) -> (i32, i32, i32) {
    %c0_i32 = arith.constant 0 : i32
    %c0_i32_0 = arith.constant 0 : i32
    %c0_i32_1 = arith.constant 0 : i32
    %c0_i32_2 = arith.constant 0 : i32
    return %c0_i32, %c0_i32_0, %c0_i32_1 : i32, i32, i32
  }
  func.func @transform_2(%arg0: i32) -> (i32, i32, i32) {
    %c0_i32 = arith.constant 0 : i32
    %c0_i32_0 = arith.constant 0 : i32
    %c0_i32_1 = arith.constant 0 : i32
    %c0_i32_2 = arith.constant 0 : i32
    return %c0_i32, %c0_i32_0, %c0_i32_1 : i32, i32, i32
  }
  func.func @transform_3(%arg0: i32) -> (i32, i32) {
    %c0_i32 = arith.constant 0 : i32
    %c0_i32_0 = arith.constant 0 : i32
    %c0_i32_1 = arith.constant 0 : i32
    return %c0_i32, %c0_i32_0 : i32, i32
  }
  func.func @transform_4(%arg0: i32) -> (i32, i32) {
    %c0_i32 = arith.constant 0 : i32
    %c0_i32_0 = arith.constant 0 : i32
    %c0_i32_1 = arith.constant 0 : i32
    return %c0_i32, %c0_i32_0 : i32, i32
  }
  func.func @transform_5(%arg0: i32) -> (i32, i32, i32) {
    %c0_i32 = arith.constant 0 : i32
    %c0_i32_0 = arith.constant 0 : i32
    %c0_i32_1 = arith.constant 0 : i32
    return %arg0, %c0_i32, %c0_i32_0 : i32, i32, i32
  }
}

</mosaic_0001>

<llo_original>
// kernel: mdconv2d.1
$region0: #{mdconv2d.1}
  #allocation0 [shape = 'u32[]', space=smem, size = 0x4, offset = 0x4, fixed_abs, tag = 'smem constant byte address 0x4 - core index']
  #allocation1 [shape = 'u32[144,128]{1,0:T(1,128)}', space=vmem, size = 0x12000, scoped, tag = 'internal scratch']
  #allocation2 [shape = 'bf16[24,24,32]{2,1,0:T(8,128)(2,1)}', space=vmem, size = 0x24000, scoped, tag = 'scratch operand']
  #allocation3 [shape = 'bf16[256,864]{1,0:T(16,128)(2,1)}', space=vmem, size = 0x70000, scoped, tag = 'scratch operand']
  %s0 = inlined_call_operand.vmem [shape: f32[6,16,16,32], index: 0, kind: input, shape index: {}]
  %s1 = inlined_call_operand.vmem [shape: f32[3,1,32], index: 1, kind: input, shape index: {}]
  %s2 = inlined_call_operand.vmem [shape: f32[3,1,32], index: 2, kind: input, shape index: {}]
  %s3 = inlined_call_operand.vmem [shape: bf16[864,32], index: 3, kind: input, shape index: {}]
  %s4 = inlined_call_operand.vmem [shape: f32[1,32], index: 4, kind: input, shape index: {}]
  %s5 = inlined_call_operand.hbm [shape: f32[2,256,32], index: 5, kind: output, shape index: {}]
  %s6 = sld [smem:[#allocation0]]
  $region53: #{mdconv2d.1} parent=0
    _
  %s8 = ssub.s32 1, %s6
  %s9 = scalar_select 0, %s8, %s6
  $region1: #{mdconv2d.1} parent=0
    #allocation4 [shape = 'u8[262144]{0}', space=vmem, size = 0x40000, scoped, tag = 'output window, operand 0']
    #allocation5 [shape = 's32[2]{0}', space=sflag, size = 0x8, scoped, tag = 'scoped memory for mdconv2d.1']
    %10 = vsyncpa [#allocation5], 0
    %s11 = scalar_lea.sflag [#allocation5], 1
    %12 = vsyncpa %s11, 0
    loop: start=0, step=1, limit=4
    $region2: #{mdconv2d.1} parent=1 // loop_pre_header
      _
    $region3: #{mdconv2d.1} parent=1 // loop_header
      %s14 = sphi 0, %s18
      %p15 = scmp.ge.s32.totalorder %s14, 4
      %s24 = sphi 0, %s26
      %s27 = sphi 0, %s24
      %s28 = sphi 0, %s27
      %s44 = sphi 0, %s28
      %s48 = sphi 0, %s48
      %s50 = sphi 0, %s48
      %s51 = sphi 0, %s50
      %s65 = sphi 0, %s51
      %s69 = sphi 0, %s69
      %s71 = sphi 0, %s69
      %s72 = sphi 0, %s71
      %s86 = sphi 0, %s72
      %s90 = sphi 0, %s90
      %s92 = sphi 0, %s90
      %s93 = sphi 0, %s92
      %s107 = sphi 0, %s93
      %s111 = sphi 0, %s111
      %s113 = sphi 0, %s111
      %s114 = sphi 0, %s113
      %s128 = sphi 0, %s114
      %s134 = sphi 0, %s136
      %s137 = sphi 0, %s134
      %s138 = sphi 0, %s137
      %s154 = sphi 0, %s138
    $region4: #{mdconv2d.1} parent=1 // loop_header_branch
      %17 = sbr.rel (%p15) target = $region8
    $region5: #{mdconv2d.1} parent=1 // loop_body
      %s19 = ssub.s32 %s14, 1
      %s20 = ssub.s32 %s14, 2
      %s21 = sadd.s32 %s14, 1
      %s22 = ssub.s32 %s14, %s21
      %p23 = scmp.eq.s32.totalorder %s22, 0
      %s25 = sadd.s32 %s24, 1
      %s26 = scalar_select %p23, %s24, %s25
      %p29 = pneg %p23
      %p30 = scmp.eq.s32.totalorder %s14, 1
      %p31 = por %p29, %p30
      %p32 = scmp.ne.s32.totalorder %s24, %s27
      %p33 = scmp.eq.s32.totalorder %s14, 0
      %p34 = por %p32, %p33
      %p35 = scmp.ne.s32.totalorder %s24, %s27
      %p36 = scmp.eq.s32.totalorder %s19, 1
      %p37 = por %p35, %p36
      %p38 = scmp.ne.s32.totalorder %s27, %s28
      %p39 = scmp.eq.s32.totalorder %s19, 0
      %p40 = por %p38, %p39
      %p41 = scmp.ne.s32.totalorder %s27, %s28
      %p42 = scmp.eq.s32.totalorder %s20, 1
      %p43 = por %p41, %p42
      %p45 = scmp.ne.s32.totalorder %s28, %s44
      %p46 = scmp.eq.s32.totalorder %s20, 0
      %p47 = por %p45, %p46
      %s49 = sadd.s32 %s48, 1
      %p52 = scmp.eq.s32.totalorder %s14, 1
      %p53 = scmp.ne.s32.totalorder %s48, %s50
      %p54 = scmp.eq.s32.totalorder %s14, 0
      %p55 = por %p53, %p54
      %p56 = scmp.ne.s32.totalorder %s48, %s50
      %p57 = scmp.eq.s32.totalorder %s19, 1
      %p58 = por %p56, %p57
      %p59 = scmp.ne.s32.totalorder %s50, %s51
      %p60 = scmp.eq.s32.totalorder %s19, 0
      %p61 = por %p59, %p60
      %p62 = scmp.ne.s32.totalorder %s50, %s51
      %p63 = scmp.eq.s32.totalorder %s20, 1
      %p64 = por %p62, %p63
      %p66 = scmp.ne.s32.totalorder %s51, %s65
      %p67 = scmp.eq.s32.totalorder %s20, 0
      %p68 = por %p66, %p67
      %s70 = sadd.s32 %s69, 1
      %p73 = scmp.eq.s32.totalorder %s14, 1
      %p74 = scmp.ne.s32.totalorder %s69, %s71
      %p75 = scmp.eq.s32.totalorder %s14, 0
      %p76 = por %p74, %p75
      %p77 = scmp.ne.s32.totalorder %s69, %s71
      %p78 = scmp.eq.s32.totalorder %s19, 1
      %p79 = por %p77, %p78
      %p80 = scmp.ne.s32.totalorder %s71, %s72
      %p81 = scmp.eq.s32.totalorder %s19, 0
      %p82 = por %p80, %p81
      %p83 = scmp.ne.s32.totalorder %s71, %s72
      %p84 = scmp.eq.s32.totalorder %s20, 1
      %p85 = por %p83, %p84
      %p87 = scmp.ne.s32.totalorder %s72, %s86
      %p88 = scmp.eq.s32.totalorder %s20, 0
      %p89 = por %p87, %p88
      %s91 = sadd.s32 %s90, 1
      %p94 = scmp.eq.s32.totalorder %s14, 1
      %p95 = scmp.ne.s32.totalorder %s90, %s92
      %p96 = scmp.eq.s32.totalorder %s14, 0
      %p97 = por %p95, %p96
      %p98 = scmp.ne.s32.totalorder %s90, %s92
      %p99 = scmp.eq.s32.totalorder %s19, 1
      %p100 = por %p98, %p99
      %p101 = scmp.ne.s32.totalorder %s92, %s93
      %p102 = scmp.eq.s32.totalorder %s19, 0
      %p103 = por %p101, %p102
      %p104 = scmp.ne.s32.totalorder %s92, %s93
      %p105 = scmp.eq.s32.totalorder %s20, 1
      %p106 = por %p104, %p105
      %p108 = scmp.ne.s32.totalorder %s93, %s107
      %p109 = scmp.eq.s32.totalorder %s20, 0
      %p110 = por %p108, %p109
      %s112 = sadd.s32 %s111, 1
      %p115 = scmp.eq.s32.totalorder %s14, 1
      %p116 = scmp.ne.s32.totalorder %s111, %s113
      %p117 = scmp.eq.s32.totalorder %s14, 0
      %p118 = por %p116, %p117
      %p119 = scmp.ne.s32.totalorder %s111, %s113
      %p120 = scmp.eq.s32.totalorder %s19, 1
      %p121 = por %p119, %p120
      %p122 = scmp.ne.s32.totalorder %s113, %s114
      %p123 = scmp.eq.s32.totalorder %s19, 0
      %p124 = por %p122, %p123
      %p125 = scmp.ne.s32.totalorder %s113, %s114
      %p126 = scmp.eq.s32.totalorder %s20, 1
      %p127 = por %p125, %p126
      %p129 = scmp.ne.s32.totalorder %s114, %s128
      %p130 = scmp.eq.s32.totalorder %s20, 0
      %p131 = por %p129, %p130
      %s132 = ssub.s32 %s14, %s21
      %p133 = scmp.eq.s32.totalorder %s132, 0
      %s135 = sadd.s32 %s134, 1
      %s136 = scalar_select %p133, %s134, %s135
      %p139 = pneg %p133
      %p140 = scmp.eq.s32.totalorder %s14, 1
      %p141 = por %p139, %p140
      %p142 = scmp.ne.s32.totalorder %s134, %s137
      %p143 = scmp.eq.s32.totalorder %s14, 0
      %p144 = por %p142, %p143
      %p145 = scmp.ne.s32.totalorder %s134, %s137
      %p146 = scmp.eq.s32.totalorder %s19, 1
      %p147 = por %p145, %p146
      %p148 = scmp.ne.s32.totalorder %s137, %s138
      %p149 = scmp.eq.s32.totalorder %s19, 0
      %p150 = por %p148, %p149
      %p151 = scmp.ne.s32.totalorder %s137, %s138
      %p152 = scmp.eq.s32.totalorder %s20, 1
      %p153 = por %p151, %p152
      %p155 = scmp.ne.s32.totalorder %s138, %s154
      %p156 = scmp.eq.s32.totalorder %s20, 0
      %p157 = por %p155, %p156
      %p158 = scmp.le.s32.totalorder 1, %s14
      %p159 = scmp.lt.s32.totalorder %s14, 3
      %p160 = pnand %p158, %p159
      %p161 = pneg %p160
      // Predicated region
      $region9: #{mdconv2d.1} parent=5 // pred_check
        _
      $region10: #{mdconv2d.1} parent=5 // pred_check_branch
        %163 = sbr.rel (%p160) target = $region12
      $region11: #{mdconv2d.1} parent=5 // pred_region
        %s164 = ssub.s32 %s14, 1
        // Predicated region
        $region13: #{mdconv2d.1} parent=11 // pred_check
          %p165 = pneg %p61
        $region14: #{mdconv2d.1} parent=11 // pred_check_branch
          %167 = sbr.rel (%p165) target = $region16
        $region15: #{mdconv2d.1} parent=11 // pred_region
          _
        $region16: #{mdconv2d.1} parent=11 // pred_fallthru
          _
        // Predicated region
        $region17: #{mdconv2d.1} parent=11 // pred_check
          %p168 = pneg %p82
        $region18: #{mdconv2d.1} parent=11 // pred_check_branch
          %170 = sbr.rel (%p168) target = $region20
        $region19: #{mdconv2d.1} parent=11 // pred_region
          _
        $region20: #{mdconv2d.1} parent=11 // pred_fallthru
          _
        // Predicated region
        $region21: #{mdconv2d.1} parent=11 // pred_check
          %p171 = pneg %p103
        $region22: #{mdconv2d.1} parent=11 // pred_check_branch
          %173 = sbr.rel (%p171) target = $region24
        $region23: #{mdconv2d.1} parent=11 // pred_region
          _
        $region24: #{mdconv2d.1} parent=11 // pred_fallthru
          _
        // Predicated region
        $region25: #{mdconv2d.1} parent=11 // pred_check
          %p174 = pneg %p124
        $region26: #{mdconv2d.1} parent=11 // pred_check_branch
          %176 = sbr.rel (%p174) target = $region28
        $region27: #{mdconv2d.1} parent=11 // pred_region
          _
        $region28: #{mdconv2d.1} parent=11 // pred_fallthru
          _
      $region12: #{mdconv2d.1} parent=5 // pred_fallthru
        _
      %p177 = scmp.lt.s32.totalorder %s14, 2
      // Predicated region
      $region29: #{mdconv2d.1} parent=5 // pred_check
        %p178 = pneg %p177
      $region30: #{mdconv2d.1} parent=5 // pred_check_branch
        %180 = sbr.rel (%p178) target = $region32
      $region31: #{mdconv2d.1} parent=5 // pred_region
        // Predicated region
        $region33: #{mdconv2d.1} parent=31 // pred_check
          %p181 = pneg %p34
        $region34: #{mdconv2d.1} parent=31 // pred_check_branch
          %183 = sbr.rel (%p181) target = $region36
        $region35: #{mdconv2d.1} parent=31 // pred_region
          %s184 = smul.u32 3, %s14
          %p185 = scmp.lt.s32.totalorder %s184, 5
          %s186 = scalar_select %p185, %s184, 5
          %s187 = smul.addr %s186, 32
          %s188 = smul.addr %s187, 8
          %s189 = scalar_lea.vmem %s0, %s188
          %s190 = smul.u32 3, %s14
        $region36: #{mdconv2d.1} parent=31 // pred_fallthru
          _
      $region32: #{mdconv2d.1} parent=5 // pred_fallthru
        _
      %p191 = scmp.le.s32.totalorder 1, %s14
      %p192 = scmp.lt.s32.totalorder %s14, 3
      %p193 = pnand %p191, %p192
      %p194 = pneg %p193
      // Predicated region
      $region37: #{mdconv2d.1} parent=5 // pred_check
        _
      $region38: #{mdconv2d.1} parent=5 // pred_check_branch
        %196 = sbr.rel (%p193) target = $region40
      $region39: #{mdconv2d.1} parent=5 // pred_region
        %s197 = ssub.s32 %s14, 1
        %s198 = smul.u32 3, %s19
        %p199 = scmp.lt.s32.totalorder %s198, 5
        %s200 = scalar_select %p199, %s198, 5
        %s201 = smul.addr %s200, 32
        %s202 = smul.addr %s201, 8
        %s203 = scalar_lea.vmem %s0, %s202
        %p204 = pneg %p40
        %p205 = pneg %p37
        %p206 = pneg %p61
        %p207 = pneg %p58
        %p208 = pneg %p82
        %p209 = pneg %p79
        %p210 = pneg %p103
        %p211 = pneg %p100
        %p212 = pneg %p124
        %p213 = pneg %p121
        %p214 = pneg %p150
        %p215 = pneg %p147
        %s216 = sand.u32 %s137, 1
        %s217 = scalar_lea.sflag [#allocation5], %s216
        %s218 = sand.u32 %s137, 1
        %s219 = smul.addr %s218, 256
        %s220 = scalar_lea.vmem [#allocation4], %s219
        %s221 = smul.u32 3, %s19
        %p222 = scmp.lt.s32.totalorder %s221, 5
        %s223 = scalar_select %p222, %s221, 5
        %s224 = smul.addr %s223, 32
        %s225 = smul.addr %s224, 8
        %s226 = scalar_lea.vmem %s0, %s225
        %s227 = smul.u32 3, %s19
        %vm229 = vcmask 257024
        %230 = vst.msk [vmem:[#allocation2] sm:$0xf] %vm229, 0
        %231 = vst.msk [vmem:[#allocation2 + $0x4] sm:$0xf] %vm229, 0
        %232 = vst.msk [vmem:[#allocation2 + $0x8] sm:$0xf] %vm229, 0
        %233 = vst.msk [vmem:[#allocation2 + $0xc] sm:$0xf] %vm229, 0
        %234 = vst.msk [vmem:[#allocation2 + $0x10] sm:$0xf] %vm229, 0
        %235 = vst.msk [vmem:[#allocation2 + $0x14] sm:$0xf] %vm229, 0
        %236 = vst.msk [vmem:[#allocation2 + $0x18] sm:$0xf] %vm229, 0
        %237 = vst.msk [vmem:[#allocation2 + $0x1c] sm:$0xf] %vm229, 0
        %238 = vst.msk [vmem:[#allocation2 + $0x20] sm:$0xf] %vm229, 0
        %239 = vst.msk [vmem:[#allocation2 + $0x24] sm:$0xf] %vm229, 0
        %240 = vst.msk [vmem:[#allocation2 + $0x28] sm:$0xf] %vm229, 0
        %241 = vst.msk [vmem:[#allocation2 + $0x2c] sm:$0xf] %vm229, 0
        %s242 = scalar_lea.vmem [#allocation2], 240
        %243 = vst.msk [vmem:[%s242] sm:$0xf] %vm229, 0
        %244 = vst.msk [vmem:[%s242 + $0x4] sm:$0xf] %vm229, 0
        %245 = vst.msk [vmem:[%s242 + $0x8] sm:$0xf] %vm229, 0
        %246 = vst.msk [vmem:[%s242 + $0xc] sm:$0xf] %vm229, 0
        %247 = vst.msk [vmem:[%s242 + $0x10] sm:$0xf] %vm229, 0
        %248 = vst.msk [vmem:[%s242 + $0x14] sm:$0xf] %vm229, 0
        %249 = vst.msk [vmem:[%s242 + $0x18] sm:$0xf] %vm229, 0
        %250 = vst.msk [vmem:[%s242 + $0x1c] sm:$0xf] %vm229, 0
        %251 = vst.msk [vmem:[%s242 + $0x20] sm:$0xf] %vm229, 0
        %252 = vst.msk [vmem:[%s242 + $0x24] sm:$0xf] %vm229, 0
        %253 = vst.msk [vmem:[%s242 + $0x28] sm:$0xf] %vm229, 0
        %254 = vst.msk [vmem:[%s242 + $0x2c] sm:$0xf] %vm229, 0
        %s255 = scalar_lea.vmem [#allocation2], 48
        %vm256 = vcmask 254976
        %257 = vst.msk [vmem:[%s255] sm:$0x3] %vm256, 0
        %258 = vst.msk [vmem:[%s255 + $0xc] sm:$0x3] %vm256, 0
        %259 = vst.msk [vmem:[%s255 + $0x18] sm:$0x3] %vm256, 0
        %260 = vst.msk [vmem:[%s255 + $0x24] sm:$0x3] %vm256, 0
        %261 = vst.msk [vmem:[%s255 + $0x30] sm:$0x3] %vm256, 0
        %262 = vst.msk [vmem:[%s255 + $0x3c] sm:$0x3] %vm256, 0
        %263 = vst.msk [vmem:[%s255 + $0x48] sm:$0x3] %vm256, 0
        %264 = vst.msk [vmem:[%s255 + $0x54] sm:$0x3] %vm256, 0
        %265 = vst.msk [vmem:[%s255 + $0x60] sm:$0x3] %vm256, 0
        %266 = vst.msk [vmem:[%s255 + $0x6c] sm:$0x3] %vm256, 0
        %267 = vst.msk [vmem:[%s255 + $0x78] sm:$0x3] %vm256, 0
        %268 = vst.msk [vmem:[%s255 + $0x84] sm:$0x3] %vm256, 0
        %269 = vst.msk [vmem:[%s255 + $0x90] sm:$0x3] %vm256, 0
        %270 = vst.msk [vmem:[%s255 + $0x9c] sm:$0x3] %vm256, 0
        %271 = vst.msk [vmem:[%s255 + $0xa8] sm:$0x3] %vm256, 0
        %272 = vst.msk [vmem:[%s255 + $0xb4] sm:$0x3] %vm256, 0
        %vm273 = vcmask 257026
        %274 = vst.msk [vmem:[%s255 + $0x8] sm:$0xc] %vm273, 0
        %275 = vst.msk [vmem:[%s255 + $0x14] sm:$0xc] %vm273, 0
        %276 = vst.msk [vmem:[%s255 + $0x20] sm:$0xc] %vm273, 0
        %277 = vst.msk [vmem:[%s255 + $0x2c] sm:$0xc] %vm273, 0
        %278 = vst.msk [vmem:[%s255 + $0x38] sm:$0xc] %vm273, 0
        %279 = vst.msk [vmem:[%s255 + $0x44] sm:$0xc] %vm273, 0
        %280 = vst.msk [vmem:[%s255 + $0x50] sm:$0xc] %vm273, 0
        %281 = vst.msk [vmem:[%s255 + $0x5c] sm:$0xc] %vm273, 0
        %282 = vst.msk [vmem:[%s255 + $0x68] sm:$0xc] %vm273, 0
        %283 = vst.msk [vmem:[%s255 + $0x74] sm:$0xc] %vm273, 0
        %284 = vst.msk [vmem:[%s255 + $0x80] sm:$0xc] %vm273, 0
        %285 = vst.msk [vmem:[%s255 + $0x8c] sm:$0xc] %vm273, 0
        %286 = vst.msk [vmem:[%s255 + $0x98] sm:$0xc] %vm273, 0
        %287 = vst.msk [vmem:[%s255 + $0xa4] sm:$0xc] %vm273, 0
        %288 = vst.msk [vmem:[%s255 + $0xb0] sm:$0xc] %vm273, 0
        %289 = vst.msk [vmem:[%s255 + $0xbc] sm:$0xc] %vm273, 0
        %v290 = vld [vmem:[%s226] sm:$0xff]
        %v291 = vld [vmem:[%s226 + $0x8] sm:$0xff]
        %v292 = vld [vmem:[%s226 + $0x10] sm:$0xff]
        %v293 = vld [vmem:[%s226 + $0x18] sm:$0xff]
        %v294 = vld [vmem:[%s226 + $0x20] sm:$0xff]
        %v295 = vld [vmem:[%s226 + $0x28] sm:$0xff]
        %v296 = vld [vmem:[%s226 + $0x30] sm:$0xff]
        %v297 = vld [vmem:[%s226 + $0x38] sm:$0xff]
        %v298 = vld [vmem:[%s226 + $0x40] sm:$0xff]
        %v299 = vld [vmem:[%s226 + $0x48] sm:$0xff]
        %v300 = vld [vmem:[%s226 + $0x50] sm:$0xff]
        %v301 = vld [vmem:[%s226 + $0x58] sm:$0xff]
        %v302 = vld [vmem:[%s226 + $0x60] sm:$0xff]
        %v303 = vld [vmem:[%s226 + $0x68] sm:$0xff]
        %v304 = vld [vmem:[%s226 + $0x70] sm:$0xff]
        %v305 = vld [vmem:[%s226 + $0x78] sm:$0xff]
        %v306 = vld [vmem:[%s226 + $0x80] sm:$0xff]
        %v307 = vld [vmem:[%s226 + $0x88] sm:$0xff]
        %v308 = vld [vmem:[%s226 + $0x90] sm:$0xff]
        %v309 = vld [vmem:[%s226 + $0x98] sm:$0xff]
        %v310 = vld [vmem:[%s226 + $0xa0] sm:$0xff]
        %v311 = vld [vmem:[%s226 + $0xa8] sm:$0xff]
        %v312 = vld [vmem:[%s226 + $0xb0] sm:$0xff]
        %v313 = vld [vmem:[%s226 + $0xb8] sm:$0xff]
        %v314 = vld [vmem:[%s226 + $0xc0] sm:$0xff]
        %v315 = vld [vmem:[%s226 + $0xc8] sm:$0xff]
        %v316 = vld [vmem:[%s226 + $0xd0] sm:$0xff]
        %v317 = vld [vmem:[%s226 + $0xd8] sm:$0xff]
        %v318 = vld [vmem:[%s226 + $0xe0] sm:$0xff]
        %v319 = vld [vmem:[%s226 + $0xe8] sm:$0xff]
        %v320 = vld [vmem:[%s226 + $0xf0] sm:$0xff]
        %v321 = vld [vmem:[%s226 + $0xf8] sm:$0xff]
        %v322 = vld [vmem:[%s1] sm:$0x1]
        %v324 = vlaneseq
        %v325 = vshrl.u32 %v324, 7
        %v326 = vsub.s32 0, %v325
        %v327 = vrot.slane %v322, %v326
        %v329 = vmul.f32 %v290, %v327
        %v330 = vmul.f32 %v291, %v327
        %v331 = vmul.f32 %v292, %v327
        %v332 = vmul.f32 %v293, %v327
        %v333 = vmul.f32 %v294, %v327
        %v334 = vmul.f32 %v295, %v327
        %v335 = vmul.f32 %v296, %v327
        %v336 = vmul.f32 %v297, %v327
        %v337 = vmul.f32 %v298, %v327
        %v338 = vmul.f32 %v299, %v327
        %v339 = vmul.f32 %v300, %v327
        %v340 = vmul.f32 %v301, %v327
        %v341 = vmul.f32 %v302, %v327
        %v342 = vmul.f32 %v303, %v327
        %v343 = vmul.f32 %v304, %v327
        %v344 = vmul.f32 %v305, %v327
        %v345 = vmul.f32 %v306, %v327
        %v346 = vmul.f32 %v307, %v327
        %v347 = vmul.f32 %v308, %v327
        %v348 = vmul.f32 %v309, %v327
        %v349 = vmul.f32 %v310, %v327
        %v350 = vmul.f32 %v311, %v327
        %v351 = vmul.f32 %v312, %v327
        %v352 = vmul.f32 %v313, %v327
        %v353 = vmul.f32 %v314, %v327
        %v354 = vmul.f32 %v315, %v327
        %v355 = vmul.f32 %v316, %v327
        %v356 = vmul.f32 %v317, %v327
        %v357 = vmul.f32 %v318, %v327
        %v358 = vmul.f32 %v319, %v327
        %v359 = vmul.f32 %v320, %v327
        %v360 = vmul.f32 %v321, %v327
        %v361 = vld [vmem:[%s2] sm:$0x1]
        %v363 = vlaneseq
        %v364 = vshrl.u32 %v363, 7
        %v365 = vsub.s32 0, %v364
        %v366 = vrot.slane %v361, %v365
        %v368 = vadd.f32 %v329, %v366
        %v369 = vadd.f32 %v330, %v366
        %v370 = vadd.f32 %v331, %v366
        %v371 = vadd.f32 %v332, %v366
        %v372 = vadd.f32 %v333, %v366
        %v373 = vadd.f32 %v334, %v366
        %v374 = vadd.f32 %v335, %v366
        %v375 = vadd.f32 %v336, %v366
        %v376 = vadd.f32 %v337, %v366
        %v377 = vadd.f32 %v338, %v366
        %v378 = vadd.f32 %v339, %v366
        %v379 = vadd.f32 %v340, %v366
        %v380 = vadd.f32 %v341, %v366
        %v381 = vadd.f32 %v342, %v366
        %v382 = vadd.f32 %v343, %v366
        %v383 = vadd.f32 %v344, %v366
        %v384 = vadd.f32 %v345, %v366
        %v385 = vadd.f32 %v346, %v366
        %v386 = vadd.f32 %v347, %v366
        %v387 = vadd.f32 %v348, %v366
        %v388 = vadd.f32 %v349, %v366
        %v389 = vadd.f32 %v350, %v366
        %v390 = vadd.f32 %v351, %v366
        %v391 = vadd.f32 %v352, %v366
        %v392 = vadd.f32 %v353, %v366
        %v393 = vadd.f32 %v354, %v366
        %v394 = vadd.f32 %v355, %v366
        %v395 = vadd.f32 %v356, %v366
        %v396 = vadd.f32 %v357, %v366
        %v397 = vadd.f32 %v358, %v366
        %v398 = vadd.f32 %v359, %v366
        %v399 = vadd.f32 %v360, %v366
        %v400 = vmax.f32 %v368, 0.0
        %v401 = vmax.f32 %v369, 0.0
        %v402 = vmax.f32 %v370, 0.0
        %v403 = vmax.f32 %v371, 0.0
        %v404 = vmax.f32 %v372, 0.0
        %v405 = vmax.f32 %v373, 0.0
        %v406 = vmax.f32 %v374, 0.0
        %v407 = vmax.f32 %v375, 0.0
        %v408 = vmax.f32 %v376, 0.0
        %v409 = vmax.f32 %v377, 0.0
        %v410 = vmax.f32 %v378, 0.0
        %v411 = vmax.f32 %v379, 0.0
        %v412 = vmax.f32 %v380, 0.0
        %v413 = vmax.f32 %v381, 0.0
        %v414 = vmax.f32 %v382, 0.0
        %v415 = vmax.f32 %v383, 0.0
        %v416 = vmax.f32 %v384, 0.0
        %v417 = vmax.f32 %v385, 0.0
        %v418 = vmax.f32 %v386, 0.0
        %v419 = vmax.f32 %v387, 0.0
        %v420 = vmax.f32 %v388, 0.0
        %v421 = vmax.f32 %v389, 0.0
        %v422 = vmax.f32 %v390, 0.0
        %v423 = vmax.f32 %v391, 0.0
        %v424 = vmax.f32 %v392, 0.0
        %v425 = vmax.f32 %v393, 0.0
        %v426 = vmax.f32 %v394, 0.0
        %v427 = vmax.f32 %v395, 0.0
        %v428 = vmax.f32 %v396, 0.0
        %v429 = vmax.f32 %v397, 0.0
        %v430 = vmax.f32 %v398, 0.0
        %v431 = vmax.f32 %v399, 0.0
        %v432 = vpack.c.bf16 %v401, %v400
        %v433 = vpack.c.bf16 %v403, %v402
        %v434 = vpack.c.bf16 %v405, %v404
        %v435 = vpack.c.bf16 %v407, %v406
        %v436 = vpack.c.bf16 %v409, %v408
        %v437 = vpack.c.bf16 %v411, %v410
        %v438 = vpack.c.bf16 %v413, %v412
        %v439 = vpack.c.bf16 %v415, %v414
        %v440 = vpack.c.bf16 %v417, %v416
        %v441 = vpack.c.bf16 %v419, %v418
        %v442 = vpack.c.bf16 %v421, %v420
        %v443 = vpack.c.bf16 %v423, %v422
        %v444 = vpack.c.bf16 %v425, %v424
        %v445 = vpack.c.bf16 %v427, %v426
        %v446 = vpack.c.bf16 %v429, %v428
        %v447 = vpack.c.bf16 %v431, %v430
        %v464 = vunpack.c.l.b16 %v432
        %v465 = vunpack.c.h.b16 %v432
        %v466 = vunpack.c.l.b16 %v433
        %v467 = vunpack.c.h.b16 %v433
        %v468 = vunpack.c.l.b16 %v434
        %v469 = vunpack.c.h.b16 %v434
        %v470 = vunpack.c.l.b16 %v435
        %v471 = vunpack.c.h.b16 %v435
        %v472 = vunpack.c.l.b16 %v436
        %v473 = vunpack.c.h.b16 %v436
        %v474 = vunpack.c.l.b16 %v437
        %v475 = vunpack.c.h.b16 %v437
        %v476 = vunpack.c.l.b16 %v438
        %v477 = vunpack.c.h.b16 %v438
        %v478 = vunpack.c.l.b16 %v439
        %v479 = vunpack.c.h.b16 %v439
        %v480 = vunpack.c.l.b16 %v440
        %v481 = vunpack.c.h.b16 %v440
        %v482 = vunpack.c.l.b16 %v441
        %v483 = vunpack.c.h.b16 %v441
        %v484 = vunpack.c.l.b16 %v442
        %v485 = vunpack.c.h.b16 %v442
        %v486 = vunpack.c.l.b16 %v443
        %v487 = vunpack.c.h.b16 %v443
        %v488 = vunpack.c.l.b16 %v444
        %v489 = vunpack.c.h.b16 %v444
        %v490 = vunpack.c.l.b16 %v445
        %v491 = vunpack.c.h.b16 %v445
        %v492 = vunpack.c.l.b16 %v446
        %v493 = vunpack.c.h.b16 %v446
        %v494 = vunpack.c.l.b16 %v447
        %v495 = vunpack.c.h.b16 %v447
        %v496 = vpack.c.b16 %v464, %v464
        %v497 = vpack.c.b16 %v465, %v465
        %v498 = vpack.c.b16 %v466, %v466
        %v499 = vpack.c.b16 %v467, %v467
        %v500 = vpack.c.b16 %v468, %v468
        %v501 = vpack.c.b16 %v469, %v469
        %v502 = vpack.c.b16 %v470, %v470
        %v503 = vpack.c.b16 %v471, %v471
        %v504 = vpack.c.b16 %v472, %v472
        %v505 = vpack.c.b16 %v473, %v473
        %v506 = vpack.c.b16 %v474, %v474
        %v507 = vpack.c.b16 %v475, %v475
        %v508 = vpack.c.b16 %v476, %v476
        %v509 = vpack.c.b16 %v477, %v477
        %v510 = vpack.c.b16 %v478, %v478
        %v511 = vpack.c.b16 %v479, %v479
        %v512 = vpack.c.b16 %v480, %v480
        %v513 = vpack.c.b16 %v481, %v481
        %v514 = vpack.c.b16 %v482, %v482
        %v515 = vpack.c.b16 %v483, %v483
        %v516 = vpack.c.b16 %v484, %v484
        %v517 = vpack.c.b16 %v485, %v485
        %v518 = vpack.c.b16 %v486, %v486
        %v519 = vpack.c.b16 %v487, %v487
        %v520 = vpack.c.b16 %v488, %v488
        %v521 = vpack.c.b16 %v489, %v489
        %v522 = vpack.c.b16 %v490, %v490
        %v523 = vpack.c.b16 %v491, %v491
        %v524 = vpack.c.b16 %v492, %v492
        %v525 = vpack.c.b16 %v493, %v493
        %v526 = vpack.c.b16 %v494, %v494
        %v527 = vpack.c.b16 %v495, %v495
        %vm528 = vcmask 1041408
        %vm529 = vcmask 1045508
        %vm530 = vmor %vm528, %vm529
        %v531 = vrot.slane %v496, 6
        %v532 = vrot.slane %v531, 4
        %v533 = vrot.slane %v497, 6
        %v534 = vsel %vm530, %v532, %v533
        %v535 = vrot.slane %v533, 4
        %v536 = vrot.slane %v498, 6
        %v537 = vrot.slane %v536, 4
        %v538 = vrot.slane %v499, 6
        %v539 = vsel %vm530, %v537, %v538
        %v540 = vrot.slane %v538, 4
        %v541 = vrot.slane %v500, 6
        %v542 = vrot.slane %v541, 4
        %v543 = vrot.slane %v501, 6
        %v544 = vsel %vm530, %v542, %v543
        %v545 = vrot.slane %v543, 4
        %v546 = vrot.slane %v502, 6
        %v547 = vrot.slane %v546, 4
        %v548 = vrot.slane %v503, 6
        %v549 = vsel %vm530, %v547, %v548
        %v550 = vrot.slane %v548, 4
        %v551 = vrot.slane %v504, 6
        %v552 = vrot.slane %v551, 4
        %v553 = vrot.slane %v505, 6
        %v554 = vsel %vm530, %v552, %v553
        %v555 = vrot.slane %v553, 4
        %v556 = vrot.slane %v506, 6
        %v557 = vrot.slane %v556, 4
        %v558 = vrot.slane %v507, 6
        %v559 = vsel %vm530, %v557, %v558
        %v560 = vrot.slane %v558, 4
        %v561 = vrot.slane %v508, 6
        %v562 = vrot.slane %v561, 4
        %v563 = vrot.slane %v509, 6
        %v564 = vsel %vm530, %v562, %v563
        %v565 = vrot.slane %v563, 4
        %v566 = vrot.slane %v510, 6
        %v567 = vrot.slane %v566, 4
        %v568 = vrot.slane %v511, 6
        %v569 = vsel %vm530, %v567, %v568
        %v570 = vrot.slane %v568, 4
        %v571 = vrot.slane %v512, 6
        %v572 = vrot.slane %v571, 4
        %v573 = vrot.slane %v513, 6
        %v574 = vsel %vm530, %v572, %v573
        %v575 = vrot.slane %v573, 4
        %v576 = vrot.slane %v514, 6
        %v577 = vrot.slane %v576, 4
        %v578 = vrot.slane %v515, 6
        %v579 = vsel %vm530, %v577, %v578
        %v580 = vrot.slane %v578, 4
        %v581 = vrot.slane %v516, 6
        %v582 = vrot.slane %v581, 4
        %v583 = vrot.slane %v517, 6
        %v584 = vsel %vm530, %v582, %v583
        %v585 = vrot.slane %v583, 4
        %v586 = vrot.slane %v518, 6
        %v587 = vrot.slane %v586, 4
        %v588 = vrot.slane %v519, 6
        %v589 = vsel %vm530, %v587, %v588
        %v590 = vrot.slane %v588, 4
        %v591 = vrot.slane %v520, 6
        %v592 = vrot.slane %v591, 4
        %v593 = vrot.slane %v521, 6
        %v594 = vsel %vm530, %v592, %v593
        %v595 = vrot.slane %v593, 4
        %v596 = vrot.slane %v522, 6
        %v597 = vrot.slane %v596, 4
        %v598 = vrot.slane %v523, 6
        %v599 = vsel %vm530, %v597, %v598
        %v600 = vrot.slane %v598, 4
        %v601 = vrot.slane %v524, 6
        %v602 = vrot.slane %v601, 4
        %v603 = vrot.slane %v525, 6
        %v604 = vsel %vm530, %v602, %v603
        %v605 = vrot.slane %v603, 4
        %v606 = vrot.slane %v526, 6
        %v607 = vrot.slane %v606, 4
        %v608 = vrot.slane %v527, 6
        %v609 = vsel %vm530, %v607, %v608
        %v610 = vrot.slane %v608, 4
        %659 = vst.msk [vmem:[%s255] sm:$0xc] %vm273, %v531
        %660 = vst.msk [vmem:[%s255 + $0x4] sm:$0xf] %vm229, %v534
        %661 = vst.msk [vmem:[%s255 + $0x8] sm:$0x3] %vm256, %v535
        %662 = vst.msk [vmem:[%s255 + $0xc] sm:$0xc] %vm273, %v536
        %663 = vst.msk [vmem:[%s255 + $0x10] sm:$0xf] %vm229, %v539
        %664 = vst.msk [vmem:[%s255 + $0x14] sm:$0x3] %vm256, %v540
        %665 = vst.msk [vmem:[%s255 + $0x18] sm:$0xc] %vm273, %v541
        %666 = vst.msk [vmem:[%s255 + $0x1c] sm:$0xf] %vm229, %v544
        %667 = vst.msk [vmem:[%s255 + $0x20] sm:$0x3] %vm256, %v545
        %668 = vst.msk [vmem:[%s255 + $0x24] sm:$0xc] %vm273, %v546
        %669 = vst.msk [vmem:[%s255 + $0x28] sm:$0xf] %vm229, %v549
        %670 = vst.msk [vmem:[%s255 + $0x2c] sm:$0x3] %vm256, %v550
        %671 = vst.msk [vmem:[%s255 + $0x30] sm:$0xc] %vm273, %v551
        %672 = vst.msk [vmem:[%s255 + $0x34] sm:$0xf] %vm229, %v554
        %673 = vst.msk [vmem:[%s255 + $0x38] sm:$0x3] %vm256, %v555
        %674 = vst.msk [vmem:[%s255 + $0x3c] sm:$0xc] %vm273, %v556
        %675 = vst.msk [vmem:[%s255 + $0x40] sm:$0xf] %vm229, %v559
        %676 = vst.msk [vmem:[%s255 + $0x44] sm:$0x3] %vm256, %v560
        %677 = vst.msk [vmem:[%s255 + $0x48] sm:$0xc] %vm273, %v561
        %678 = vst.msk [vmem:[%s255 + $0x4c] sm:$0xf] %vm229, %v564
        %679 = vst.msk [vmem:[%s255 + $0x50] sm:$0x3] %vm256, %v565
        %680 = vst.msk [vmem:[%s255 + $0x54] sm:$0xc] %vm273, %v566
        %681 = vst.msk [vmem:[%s255 + $0x58] sm:$0xf] %vm229, %v569
        %682 = vst.msk [vmem:[%s255 + $0x5c] sm:$0x3] %vm256, %v570
        %683 = vst.msk [vmem:[%s255 + $0x60] sm:$0xc] %vm273, %v571
        %684 = vst.msk [vmem:[%s255 + $0x64] sm:$0xf] %vm229, %v574
        %685 = vst.msk [vmem:[%s255 + $0x68] sm:$0x3] %vm256, %v575
        %686 = vst.msk [vmem:[%s255 + $0x6c] sm:$0xc] %vm273, %v576
        %687 = vst.msk [vmem:[%s255 + $0x70] sm:$0xf] %vm229, %v579
        %688 = vst.msk [vmem:[%s255 + $0x74] sm:$0x3] %vm256, %v580
        %689 = vst.msk [vmem:[%s255 + $0x78] sm:$0xc] %vm273, %v581
        %690 = vst.msk [vmem:[%s255 + $0x7c] sm:$0xf] %vm229, %v584
        %691 = vst.msk [vmem:[%s255 + $0x80] sm:$0x3] %vm256, %v585
        %692 = vst.msk [vmem:[%s255 + $0x84] sm:$0xc] %vm273, %v586
        %693 = vst.msk [vmem:[%s255 + $0x88] sm:$0xf] %vm229, %v589
        %694 = vst.msk [vmem:[%s255 + $0x8c] sm:$0x3] %vm256, %v590
        %695 = vst.msk [vmem:[%s255 + $0x90] sm:$0xc] %vm273, %v591
        %696 = vst.msk [vmem:[%s255 + $0x94] sm:$0xf] %vm229, %v594
        %697 = vst.msk [vmem:[%s255 + $0x98] sm:$0x3] %vm256, %v595
        %698 = vst.msk [vmem:[%s255 + $0x9c] sm:$0xc] %vm273, %v596
        %699 = vst.msk [vmem:[%s255 + $0xa0] sm:$0xf] %vm229, %v599
        %700 = vst.msk [vmem:[%s255 + $0xa4] sm:$0x3] %vm256, %v600
        %701 = vst.msk [vmem:[%s255 + $0xa8] sm:$0xc] %vm273, %v601
        %702 = vst.msk [vmem:[%s255 + $0xac] sm:$0xf] %vm229, %v604
        %703 = vst.msk [vmem:[%s255 + $0xb0] sm:$0x3] %vm256, %v605
        %704 = vst.msk [vmem:[%s255 + $0xb4] sm:$0xc] %vm273, %v606
        %705 = vst.msk [vmem:[%s255 + $0xb8] sm:$0xf] %vm229, %v609
        %706 = vst.msk [vmem:[%s255 + $0xbc] sm:$0x3] %vm256, %v610
        %s707 = scalar_lea.vmem [#allocation2], 36
        %v708 = vld [vmem:[%s707] sm:$0xe]
        %v709 = vld [vmem:[%s707 + $0x4] sm:$0xf]
        %v710 = vld [vmem:[%s707 + $0x8] sm:$0x3]
        %v711 = vld [vmem:[%s707 + $0xc] sm:$0xe]
        %v712 = vld [vmem:[%s707 + $0x10] sm:$0xf]
        %v713 = vld [vmem:[%s707 + $0x14] sm:$0x3]
        %v714 = vld [vmem:[%s707 + $0x18] sm:$0xe]
        %v715 = vld [vmem:[%s707 + $0x1c] sm:$0xf]
        %v716 = vld [vmem:[%s707 + $0x20] sm:$0x3]
        %v717 = vld [vmem:[%s707 + $0x24] sm:$0xe]
        %v718 = vld [vmem:[%s707 + $0x28] sm:$0xf]
        %v719 = vld [vmem:[%s707 + $0x2c] sm:$0x3]
        %v720 = vld [vmem:[%s707 + $0x30] sm:$0xe]
        %v721 = vld [vmem:[%s707 + $0x34] sm:$0xf]
        %v722 = vld [vmem:[%s707 + $0x38] sm:$0x3]
        %v723 = vld [vmem:[%s707 + $0x3c] sm:$0xe]
        %v724 = vld [vmem:[%s707 + $0x40] sm:$0xf]
        %v725 = vld [vmem:[%s707 + $0x44] sm:$0x3]
        %v726 = vld [vmem:[%s707 + $0x48] sm:$0xe]
        %v727 = vld [vmem:[%s707 + $0x4c] sm:$0xf]
        %v728 = vld [vmem:[%s707 + $0x50] sm:$0x3]
        %v729 = vld [vmem:[%s707 + $0x54] sm:$0xe]
        %v730 = vld [vmem:[%s707 + $0x58] sm:$0xf]
        %v731 = vld [vmem:[%s707 + $0x5c] sm:$0x3]
        %v732 = vld [vmem:[%s707 + $0x60] sm:$0xe]
        %v733 = vld [vmem:[%s707 + $0x64] sm:$0xf]
        %v734 = vld [vmem:[%s707 + $0x68] sm:$0x3]
        %v735 = vld [vmem:[%s707 + $0x6c] sm:$0xe]
        %v736 = vld [vmem:[%s707 + $0x70] sm:$0xf]
        %v737 = vld [vmem:[%s707 + $0x74] sm:$0x3]
        %v738 = vld [vmem:[%s707 + $0x78] sm:$0xe]
        %v739 = vld [vmem:[%s707 + $0x7c] sm:$0xf]
        %v740 = vld [vmem:[%s707 + $0x80] sm:$0x3]
        %v741 = vld [vmem:[%s707 + $0x84] sm:$0xe]
        %v742 = vld [vmem:[%s707 + $0x88] sm:$0xf]
        %v743 = vld [vmem:[%s707 + $0x8c] sm:$0x3]
        %v744 = vld [vmem:[%s707 + $0x90] sm:$0xe]
        %v745 = vld [vmem:[%s707 + $0x94] sm:$0xf]
        %v746 = vld [vmem:[%s707 + $0x98] sm:$0x3]
        %v747 = vld [vmem:[%s707 + $0x9c] sm:$0xe]
        %v748 = vld [vmem:[%s707 + $0xa0] sm:$0xf]
        %v749 = vld [vmem:[%s707 + $0xa4] sm:$0x3]
        %v750 = vld [vmem:[%s707 + $0xa8] sm:$0xe]
        %v751 = vld [vmem:[%s707 + $0xac] sm:$0xf]
        %v752 = vld [vmem:[%s707 + $0xb0] sm:$0x3]
        %v753 = vld [vmem:[%s707 + $0xb4] sm:$0xe]
        %v754 = vld [vmem:[%s707 + $0xb8] sm:$0xf]
        %v755 = vld [vmem:[%s707 + $0xbc] sm:$0x3]
        %vm756 = vsmask.f32 2304
        %vm757 = vsmask.f32 6416
        %vm758 = vmor %vm756, %vm757
        %v760 = vshrl.u32 %v708, 16
        %v762 = vrot.slane %v760, 5
        %v763 = vshll.u32 %v708, 16
        %v765 = vrot.slane %v763, 6
        %v766 = vor.u32 %v762, %v765
        %v767 = vrot.slane %v766, 4
        %v769 = vshrl.u32 %v709, 16
        %v771 = vrot.slane %v769, 5
        %v772 = vshll.u32 %v709, 16
        %v774 = vrot.slane %v772, 6
        %v775 = vor.u32 %v771, %v774
        %v776 = vsel %vm758, %v767, %v775
        %v777 = vrot.slane %v775, 4
        %v779 = vshrl.u32 %v710, 16
        %v781 = vrot.slane %v779, 5
        %v782 = vshll.u32 %v710, 16
        %v784 = vrot.slane %v782, 6
        %v785 = vor.u32 %v781, %v784
        %v786 = vsel %vm758, %v777, %v785
        %v788 = vshrl.u32 %v711, 16
        %v790 = vrot.slane %v788, 5
        %v791 = vshll.u32 %v711, 16
        %v793 = vrot.slane %v791, 6
        %v794 = vor.u32 %v790, %v793
        %v795 = vrot.slane %v794, 4
        %v797 = vshrl.u32 %v712, 16
        %v799 = vrot.slane %v797, 5
        %v800 = vshll.u32 %v712, 16
        %v802 = vrot.slane %v800, 6
        %v803 = vor.u32 %v799, %v802
        %v804 = vsel %vm758, %v795, %v803
        %v805 = vrot.slane %v803, 4
        %v807 = vshrl.u32 %v713, 16
        %v809 = vrot.slane %v807, 5
        %v810 = vshll.u32 %v713, 16
        %v812 = vrot.slane %v810, 6
        %v813 = vor.u32 %v809, %v812
        %v814 = vsel %vm758, %v805, %v813
        %v816 = vshrl.u32 %v714, 16
        %v818 = vrot.slane %v816, 5
        %v819 = vshll.u32 %v714, 16
        %v821 = vrot.slane %v819, 6
        %v822 = vor.u32 %v818, %v821
        %v823 = vrot.slane %v822, 4
        %v825 = vshrl.u32 %v715, 16
        %v827 = vrot.slane %v825, 5
        %v828 = vshll.u32 %v715, 16
        %v830 = vrot.slane %v828, 6
        %v831 = vor.u32 %v827, %v830
        %v832 = vsel %vm758, %v823, %v831
        %v833 = vrot.slane %v831, 4
        %v835 = vshrl.u32 %v716, 16
        %v837 = vrot.slane %v835, 5
        %v838 = vshll.u32 %v716, 16
        %v840 = vrot.slane %v838, 6
        %v841 = vor.u32 %v837, %v840
        %v842 = vsel %vm758, %v833, %v841
        %v844 = vshrl.u32 %v717, 16
        %v846 = vrot.slane %v844, 5
        %v847 = vshll.u32 %v717, 16
        %v849 = vrot.slane %v847, 6
        %v850 = vor.u32 %v846, %v849
        %v851 = vrot.slane %v850, 4
        %v853 = vshrl.u32 %v718, 16
        %v855 = vrot.slane %v853, 5
        %v856 = vshll.u32 %v718, 16
        %v858 = vrot.slane %v856, 6
        %v859 = vor.u32 %v855, %v858
        %v860 = vsel %vm758, %v851, %v859
        %v861 = vrot.slane %v859, 4
        %v863 = vshrl.u32 %v719, 16
        %v865 = vrot.slane %v863, 5
        %v866 = vshll.u32 %v719, 16
        %v868 = vrot.slane %v866, 6
        %v869 = vor.u32 %v865, %v868
        %v870 = vsel %vm758, %v861, %v869
        %v872 = vshrl.u32 %v720, 16
        %v874 = vrot.slane %v872, 5
        %v875 = vshll.u32 %v720, 16
        %v877 = vrot.slane %v875, 6
        %v878 = vor.u32 %v874, %v877
        %v879 = vrot.slane %v878, 4
        %v881 = vshrl.u32 %v721, 16
        %v883 = vrot.slane %v881, 5
        %v884 = vshll.u32 %v721, 16
        %v886 = vrot.slane %v884, 6
        %v887 = vor.u32 %v883, %v886
        %v888 = vsel %vm758, %v879, %v887
        %v889 = vrot.slane %v887, 4
        %v891 = vshrl.u32 %v722, 16
        %v893 = vrot.slane %v891, 5
        %v894 = vshll.u32 %v722, 16
        %v896 = vrot.slane %v894, 6
        %v897 = vor.u32 %v893, %v896
        %v898 = vsel %vm758, %v889, %v897
        %v900 = vshrl.u32 %v723, 16
        %v902 = vrot.slane %v900, 5
        %v903 = vshll.u32 %v723, 16
        %v905 = vrot.slane %v903, 6
        %v906 = vor.u32 %v902, %v905
        %v907 = vrot.slane %v906, 4
        %v909 = vshrl.u32 %v724, 16
        %v911 = vrot.slane %v909, 5
        %v912 = vshll.u32 %v724, 16
        %v914 = vrot.slane %v912, 6
        %v915 = vor.u32 %v911, %v914
        %v916 = vsel %vm758, %v907, %v915
        %v917 = vrot.slane %v915, 4
        %v919 = vshrl.u32 %v725, 16
        %v921 = vrot.slane %v919, 5
        %v922 = vshll.u32 %v725, 16
        %v924 = vrot.slane %v922, 6
        %v925 = vor.u32 %v921, %v924
        %v926 = vsel %vm758, %v917, %v925
        %v928 = vshrl.u32 %v726, 16
        %v930 = vrot.slane %v928, 5
        %v931 = vshll.u32 %v726, 16
        %v933 = vrot.slane %v931, 6
        %v934 = vor.u32 %v930, %v933
        %v935 = vrot.slane %v934, 4
        %v937 = vshrl.u32 %v727, 16
        %v939 = vrot.slane %v937, 5
        %v940 = vshll.u32 %v727, 16
        %v942 = vrot.slane %v940, 6
        %v943 = vor.u32 %v939, %v942
        %v944 = vsel %vm758, %v935, %v943
        %v945 = vrot.slane %v943, 4
        %v947 = vshrl.u32 %v728, 16
        %v949 = vrot.slane %v947, 5
        %v950 = vshll.u32 %v728, 16
        %v952 = vrot.slane %v950, 6
        %v953 = vor.u32 %v949, %v952
        %v954 = vsel %vm758, %v945, %v953
        %v956 = vshrl.u32 %v729, 16
        %v958 = vrot.slane %v956, 5
        %v959 = vshll.u32 %v729, 16
        %v961 = vrot.slane %v959, 6
        %v962 = vor.u32 %v958, %v961
        %v963 = vrot.slane %v962, 4
        %v965 = vshrl.u32 %v730, 16
        %v967 = vrot.slane %v965, 5
        %v968 = vshll.u32 %v730, 16
        %v970 = vrot.slane %v968, 6
        %v971 = vor.u32 %v967, %v970
        %v972 = vsel %vm758, %v963, %v971
        %v973 = vrot.slane %v971, 4
        %v975 = vshrl.u32 %v731, 16
        %v977 = vrot.slane %v975, 5
        %v978 = vshll.u32 %v731, 16
        %v980 = vrot.slane %v978, 6
        %v981 = vor.u32 %v977, %v980
        %v982 = vsel %vm758, %v973, %v981
        %v984 = vshrl.u32 %v732, 16
        %v986 = vrot.slane %v984, 5
        %v987 = vshll.u32 %v732, 16
        %v989 = vrot.slane %v987, 6
        %v990 = vor.u32 %v986, %v989
        %v991 = vrot.slane %v990, 4
        %v993 = vshrl.u32 %v733, 16
        %v995 = vrot.slane %v993, 5
        %v996 = vshll.u32 %v733, 16
        %v998 = vrot.slane %v996, 6
        %v999 = vor.u32 %v995, %v998
        %v1000 = vsel %vm758, %v991, %v999
        %v1001 = vrot.slane %v999, 4
        %v1003 = vshrl.u32 %v734, 16
        %v1005 = vrot.slane %v1003, 5
        %v1006 = vshll.u32 %v734, 16
        %v1008 = vrot.slane %v1006, 6
        %v1009 = vor.u32 %v1005, %v1008
        %v1010 = vsel %vm758, %v1001, %v1009
        %v1012 = vshrl.u32 %v735, 16
        %v1014 = vrot.slane %v1012, 5
        %v1015 = vshll.u32 %v735, 16
        %v1017 = vrot.slane %v1015, 6
        %v1018 = vor.u32 %v1014, %v1017
        %v1019 = vrot.slane %v1018, 4
        %v1021 = vshrl.u32 %v736, 16
        %v1023 = vrot.slane %v1021, 5
        %v1024 = vshll.u32 %v736, 16
        %v1026 = vrot.slane %v1024, 6
        %v1027 = vor.u32 %v1023, %v1026
        %v1028 = vsel %vm758, %v1019, %v1027
        %v1029 = vrot.slane %v1027, 4
        %v1031 = vshrl.u32 %v737, 16
        %v1033 = vrot.slane %v1031, 5
        %v1034 = vshll.u32 %v737, 16
        %v1036 = vrot.slane %v1034, 6
        %v1037 = vor.u32 %v1033, %v1036
        %v1038 = vsel %vm758, %v1029, %v1037
        %v1040 = vshrl.u32 %v738, 16
        %v1042 = vrot.slane %v1040, 5
        %v1043 = vshll.u32 %v738, 16
        %v1045 = vrot.slane %v1043, 6
        %v1046 = vor.u32 %v1042, %v1045
        %v1047 = vrot.slane %v1046, 4
        %v1049 = vshrl.u32 %v739, 16
        %v1051 = vrot.slane %v1049, 5
        %v1052 = vshll.u32 %v739, 16
        %v1054 = vrot.slane %v1052, 6
        %v1055 = vor.u32 %v1051, %v1054
        %v1056 = vsel %vm758, %v1047, %v1055
        %v1057 = vrot.slane %v1055, 4
        %v1059 = vshrl.u32 %v740, 16
        %v1061 = vrot.slane %v1059, 5
        %v1062 = vshll.u32 %v740, 16
        %v1064 = vrot.slane %v1062, 6
        %v1065 = vor.u32 %v1061, %v1064
        %v1066 = vsel %vm758, %v1057, %v1065
        %v1068 = vshrl.u32 %v741, 16
        %v1070 = vrot.slane %v1068, 5
        %v1071 = vshll.u32 %v741, 16
        %v1073 = vrot.slane %v1071, 6
        %v1074 = vor.u32 %v1070, %v1073
        %v1075 = vrot.slane %v1074, 4
        %v1077 = vshrl.u32 %v742, 16
        %v1079 = vrot.slane %v1077, 5
        %v1080 = vshll.u32 %v742, 16
        %v1082 = vrot.slane %v1080, 6
        %v1083 = vor.u32 %v1079, %v1082
        %v1084 = vsel %vm758, %v1075, %v1083
        %v1085 = vrot.slane %v1083, 4
        %v1087 = vshrl.u32 %v743, 16
        %v1089 = vrot.slane %v1087, 5
        %v1090 = vshll.u32 %v743, 16
        %v1092 = vrot.slane %v1090, 6
        %v1093 = vor.u32 %v1089, %v1092
        %v1094 = vsel %vm758, %v1085, %v1093
        %v1096 = vshrl.u32 %v744, 16
        %v1098 = vrot.slane %v1096, 5
        %v1099 = vshll.u32 %v744, 16
        %v1101 = vrot.slane %v1099, 6
        %v1102 = vor.u32 %v1098, %v1101
        %v1103 = vrot.slane %v1102, 4
        %v1105 = vshrl.u32 %v745, 16
        %v1107 = vrot.slane %v1105, 5
        %v1108 = vshll.u32 %v745, 16
        %v1110 = vrot.slane %v1108, 6
        %v1111 = vor.u32 %v1107, %v1110
        %v1112 = vsel %vm758, %v1103, %v1111
        %v1113 = vrot.slane %v1111, 4
        %v1115 = vshrl.u32 %v746, 16
        %v1117 = vrot.slane %v1115, 5
        %v1118 = vshll.u32 %v746, 16
        %v1120 = vrot.slane %v1118, 6
        %v1121 = vor.u32 %v1117, %v1120
        %v1122 = vsel %vm758, %v1113, %v1121
        %v1124 = vshrl.u32 %v747, 16
        %v1126 = vrot.slane %v1124, 5
        %v1127 = vshll.u32 %v747, 16
        %v1129 = vrot.slane %v1127, 6
        %v1130 = vor.u32 %v1126, %v1129
        %v1131 = vrot.slane %v1130, 4
        %v1133 = vshrl.u32 %v748, 16
        %v1135 = vrot.slane %v1133, 5
        %v1136 = vshll.u32 %v748, 16
        %v1138 = vrot.slane %v1136, 6
        %v1139 = vor.u32 %v1135, %v1138
        %v1140 = vsel %vm758, %v1131, %v1139
        %v1141 = vrot.slane %v1139, 4
        %v1143 = vshrl.u32 %v749, 16
        %v1145 = vrot.slane %v1143, 5
        %v1146 = vshll.u32 %v749, 16
        %v1148 = vrot.slane %v1146, 6
        %v1149 = vor.u32 %v1145, %v1148
        %v1150 = vsel %vm758, %v1141, %v1149
        %v1152 = vshrl.u32 %v750, 16
        %v1154 = vrot.slane %v1152, 5
        %v1155 = vshll.u32 %v750, 16
        %v1157 = vrot.slane %v1155, 6
        %v1158 = vor.u32 %v1154, %v1157
        %v1159 = vrot.slane %v1158, 4
        %v1161 = vshrl.u32 %v751, 16
        %v1163 = vrot.slane %v1161, 5
        %v1164 = vshll.u32 %v751, 16
        %v1166 = vrot.slane %v1164, 6
        %v1167 = vor.u32 %v1163, %v1166
        %v1168 = vsel %vm758, %v1159, %v1167
        %v1169 = vrot.slane %v1167, 4
        %v1171 = vshrl.u32 %v752, 16
        %v1173 = vrot.slane %v1171, 5
        %v1174 = vshll.u32 %v752, 16
        %v1176 = vrot.slane %v1174, 6
        %v1177 = vor.u32 %v1173, %v1176
        %v1178 = vsel %vm758, %v1169, %v1177
        %v1180 = vshrl.u32 %v753, 16
        %v1182 = vrot.slane %v1180, 5
        %v1183 = vshll.u32 %v753, 16
        %v1185 = vrot.slane %v1183, 6
        %v1186 = vor.u32 %v1182, %v1185
        %v1187 = vrot.slane %v1186, 4
        %v1189 = vshrl.u32 %v754, 16
        %v1191 = vrot.slane %v1189, 5
        %v1192 = vshll.u32 %v754, 16
        %v1194 = vrot.slane %v1192, 6
        %v1195 = vor.u32 %v1191, %v1194
        %v1196 = vsel %vm758, %v1187, %v1195
        %v1197 = vrot.slane %v1195, 4
        %v1199 = vshrl.u32 %v755, 16
        %v1201 = vrot.slane %v1199, 5
        %v1202 = vshll.u32 %v755, 16
        %v1204 = vrot.slane %v1202, 6
        %v1205 = vor.u32 %v1201, %v1204
        %v1206 = vsel %vm758, %v1197, %v1205
        %v1207 = vunpack.c.l.b16 %v776
        %v1208 = vunpack.c.l.b16 %v786
        %v1209 = vunpack.c.l.b16 %v804
        %v1210 = vunpack.c.l.b16 %v814
        %v1211 = vunpack.c.l.b16 %v832
        %v1212 = vunpack.c.l.b16 %v842
        %v1213 = vunpack.c.l.b16 %v860
        %v1214 = vunpack.c.l.b16 %v870
        %v1215 = vunpack.c.l.b16 %v888
        %v1216 = vunpack.c.l.b16 %v898
        %v1217 = vunpack.c.l.b16 %v916
        %v1218 = vunpack.c.l.b16 %v926
        %v1219 = vunpack.c.l.b16 %v944
        %v1220 = vunpack.c.l.b16 %v954
        %v1221 = vunpack.c.l.b16 %v972
        %v1222 = vunpack.c.l.b16 %v982
        %v1223 = vunpack.c.l.b16 %v1000
        %v1224 = vunpack.c.l.b16 %v1010
        %v1225 = vunpack.c.l.b16 %v1028
        %v1226 = vunpack.c.l.b16 %v1038
        %v1227 = vunpack.c.l.b16 %v1056
        %v1228 = vunpack.c.l.b16 %v1066
        %v1229 = vunpack.c.l.b16 %v1084
        %v1230 = vunpack.c.l.b16 %v1094
        %v1231 = vunpack.c.l.b16 %v1112
        %v1232 = vunpack.c.l.b16 %v1122
        %v1233 = vunpack.c.l.b16 %v1140
        %v1234 = vunpack.c.l.b16 %v1150
        %v1235 = vunpack.c.l.b16 %v1168
        %v1236 = vunpack.c.l.b16 %v1178
        %v1237 = vunpack.c.l.b16 %v1196
        %v1238 = vunpack.c.l.b16 %v1206
        %v1239 = vpack.c.b16 %v1208, %v1207
        %v1240 = vpack.c.b16 %v1210, %v1209
        %v1241 = vpack.c.b16 %v1212, %v1211
        %v1242 = vpack.c.b16 %v1214, %v1213
        %v1243 = vpack.c.b16 %v1216, %v1215
        %v1244 = vpack.c.b16 %v1218, %v1217
        %v1245 = vpack.c.b16 %v1220, %v1219
        %v1246 = vpack.c.b16 %v1222, %v1221
        %v1247 = vpack.c.b16 %v1224, %v1223
        %v1248 = vpack.c.b16 %v1226, %v1225
        %v1249 = vpack.c.b16 %v1228, %v1227
        %v1250 = vpack.c.b16 %v1230, %v1229
        %v1251 = vpack.c.b16 %v1232, %v1231
        %v1252 = vpack.c.b16 %v1234, %v1233
        %v1253 = vpack.c.b16 %v1236, %v1235
        %v1254 = vpack.c.b16 %v1238, %v1237
        %vm1271 = vcmask 261120
        %1272 = vst.msk [vmem:[#allocation3] sm:$0xff] %vm1271, %v1239
        %1273 = vst.msk [vmem:[#allocation3 + $0x38] sm:$0xff] %vm1271, %v1240
        %1274 = vst.msk [vmem:[#allocation3 + $0x70] sm:$0xff] %vm1271, %v1241
        %1275 = vst.msk [vmem:[#allocation3 + $0xa8] sm:$0xff] %vm1271, %v1242
        %1276 = vst.msk [vmem:[#allocation3 + $0xe0] sm:$0xff] %vm1271, %v1243
        %1277 = vst.msk [vmem:[#allocation3 + $0x118] sm:$0xff] %vm1271, %v1244
        %1278 = vst.msk [vmem:[#allocation3 + $0x150] sm:$0xff] %vm1271, %v1245
        %1279 = vst.msk [vmem:[#allocation3 + $0x188] sm:$0xff] %vm1271, %v1246
        %1280 = vst.msk [vmem:[#allocation3 + $0x1c0] sm:$0xff] %vm1271, %v1247
        %1281 = vst.msk [vmem:[#allocation3 + $0x1f8] sm:$0xff] %vm1271, %v1248
        %1282 = vst.msk [vmem:[#allocation3 + $0x230] sm:$0xff] %vm1271, %v1249
        %1283 = vst.msk [vmem:[#allocation3 + $0x268] sm:$0xff] %vm1271, %v1250
        %1284 = vst.msk [vmem:[#allocation3 + $0x2a0] sm:$0xff] %vm1271, %v1251
        %1285 = vst.msk [vmem:[#allocation3 + $0x2d8] sm:$0xff] %vm1271, %v1252
        %1286 = vst.msk [vmem:[#allocation3 + $0x310] sm:$0xff] %vm1271, %v1253
        %1287 = vst.msk [vmem:[#allocation3 + $0x348] sm:$0xff] %vm1271, %v1254
        %v1288 = vld [vmem:[%s707] sm:$0xc]
        %v1289 = vld [vmem:[%s707 + $0x4] sm:$0xf]
        %v1290 = vld [vmem:[%s707 + $0x8] sm:$0x3]
        %v1291 = vld [vmem:[%s707 + $0xc] sm:$0xc]
        %v1292 = vld [vmem:[%s707 + $0x10] sm:$0xf]
        %v1293 = vld [vmem:[%s707 + $0x14] sm:$0x3]
        %v1294 = vld [vmem:[%s707 + $0x18] sm:$0xc]
        %v1295 = vld [vmem:[%s707 + $0x1c] sm:$0xf]
        %v1296 = vld [vmem:[%s707 + $0x20] sm:$0x3]
        %v1297 = vld [vmem:[%s707 + $0x24] sm:$0xc]
        %v1298 = vld [vmem:[%s707 + $0x28] sm:$0xf]
        %v1299 = vld [vmem:[%s707 + $0x2c] sm:$0x3]
        %v1300 = vld [vmem:[%s707 + $0x30] sm:$0xc]
        %v1301 = vld [vmem:[%s707 + $0x34] sm:$0xf]
        %v1302 = vld [vmem:[%s707 + $0x38] sm:$0x3]
        %v1303 = vld [vmem:[%s707 + $0x3c] sm:$0xc]
        %v1304 = vld [vmem:[%s707 + $0x40] sm:$0xf]
        %v1305 = vld [vmem:[%s707 + $0x44] sm:$0x3]
        %v1306 = vld [vmem:[%s707 + $0x48] sm:$0xc]
        %v1307 = vld [vmem:[%s707 + $0x4c] sm:$0xf]
        %v1308 = vld [vmem:[%s707 + $0x50] sm:$0x3]
        %v1309 = vld [vmem:[%s707 + $0x54] sm:$0xc]
        %v1310 = vld [vmem:[%s707 + $0x58] sm:$0xf]
        %v1311 = vld [vmem:[%s707 + $0x5c] sm:$0x3]
        %v1312 = vld [vmem:[%s707 + $0x60] sm:$0xc]
        %v1313 = vld [vmem:[%s707 + $0x64] sm:$0xf]
        %v1314 = vld [vmem:[%s707 + $0x68] sm:$0x3]
        %v1315 = vld [vmem:[%s707 + $0x6c] sm:$0xc]
        %v1316 = vld [vmem:[%s707 + $0x70] sm:$0xf]
        %v1317 = vld [vmem:[%s707 + $0x74] sm:$0x3]
        %v1318 = vld [vmem:[%s707 + $0x78] sm:$0xc]
        %v1319 = vld [vmem:[%s707 + $0x7c] sm:$0xf]
        %v1320 = vld [vmem:[%s707 + $0x80] sm:$0x3]
        %v1321 = vld [vmem:[%s707 + $0x84] sm:$0xc]
        %v1322 = vld [vmem:[%s707 + $0x88] sm:$0xf]
        %v1323 = vld [vmem:[%s707 + $0x8c] sm:$0x3]
        %v1324 = vld [vmem:[%s707 + $0x90] sm:$0xc]
        %v1325 = vld [vmem:[%s707 + $0x94] sm:$0xf]
        %v1326 = vld [vmem:[%s707 + $0x98] sm:$0x3]
        %v1327 = vld [vmem:[%s707 + $0x9c] sm:$0xc]
        %v1328 = vld [vmem:[%s707 + $0xa0] sm:$0xf]
        %v1329 = vld [vmem:[%s707 + $0xa4] sm:$0x3]
        %v1330 = vld [vmem:[%s707 + $0xa8] sm:$0xc]
        %v1331 = vld [vmem:[%s707 + $0xac] sm:$0xf]
        %v1332 = vld [vmem:[%s707 + $0xb0] sm:$0x3]
        %v1333 = vld [vmem:[%s707 + $0xb4] sm:$0xc]
        %v1334 = vld [vmem:[%s707 + $0xb8] sm:$0xf]
        %v1335 = vld [vmem:[%s707 + $0xbc] sm:$0x3]
        %v1384 = vrot.slane %v1288, 6
        %v1385 = vrot.slane %v1384, 4
        %v1386 = vrot.slane %v1289, 6
        %v1387 = vsel %vm530, %v1385, %v1386
        %v1388 = vrot.slane %v1386, 4
        %v1389 = vrot.slane %v1290, 6
        %v1390 = vsel %vm530, %v1388, %v1389
        %v1391 = vrot.slane %v1291, 6
        %v1392 = vrot.slane %v1391, 4
        %v1393 = vrot.slane %v1292, 6
        %v1394 = vsel %vm530, %v1392, %v1393
        %v1395 = vrot.slane %v1393, 4
        %v1396 = vrot.slane %v1293, 6
        %v1397 = vsel %vm530, %v1395, %v1396
        %v1398 = vrot.slane %v1294, 6
        %v1399 = vrot.slane %v1398, 4
        %v1400 = vrot.slane %v1295, 6
        %v1401 = vsel %vm530, %v1399, %v1400
        %v1402 = vrot.slane %v1400, 4
        %v1403 = vrot.slane %v1296, 6
        %v1404 = vsel %vm530, %v1402, %v1403
        %v1405 = vrot.slane %v1297, 6
        %v1406 = vrot.slane %v1405, 4
        %v1407 = vrot.slane %v1298, 6
        %v1408 = vsel %vm530, %v1406, %v1407
        %v1409 = vrot.slane %v1407, 4
        %v1410 = vrot.slane %v1299, 6
        %v1411 = vsel %vm530, %v1409, %v1410
        %v1412 = vrot.slane %v1300, 6
        %v1413 = vrot.slane %v1412, 4
        %v1414 = vrot.slane %v1301, 6
        %v1415 = vsel %vm530, %v1413, %v1414
        %v1416 = vrot.slane %v1414, 4
        %v1417 = vrot.slane %v1302, 6
        %v1418 = vsel %vm530, %v1416, %v1417
        %v1419 = vrot.slane %v1303, 6
        %v1420 = vrot.slane %v1419, 4
        %v1421 = vrot.slane %v1304, 6
        %v1422 = vsel %vm530, %v1420, %v1421
        %v1423 = vrot.slane %v1421, 4
        %v1424 = vrot.slane %v1305, 6
        %v1425 = vsel %vm530, %v1423, %v1424
        %v1426 = vrot.slane %v1306, 6
        %v1427 = vrot.slane %v1426, 4
        %v1428 = vrot.slane %v1307, 6
        %v1429 = vsel %vm530, %v1427, %v1428
        %v1430 = vrot.slane %v1428, 4
        %v1431 = vrot.slane %v1308, 6
        %v1432 = vsel %vm530, %v1430, %v1431
        %v1433 = vrot.slane %v1309, 6
        %v1434 = vrot.slane %v1433, 4
        %v1435 = vrot.slane %v1310, 6
        %v1436 = vsel %vm530, %v1434, %v1435
        %v1437 = vrot.slane %v1435, 4
        %v1438 = vrot.slane %v1311, 6
        %v1439 = vsel %vm530, %v1437, %v1438
        %v1440 = vrot.slane %v1312, 6
        %v1441 = vrot.slane %v1440, 4
        %v1442 = vrot.slane %v1313, 6
        %v1443 = vsel %vm530, %v1441, %v1442
        %v1444 = vrot.slane %v1442, 4
        %v1445 = vrot.slane %v1314, 6
        %v1446 = vsel %vm530, %v1444, %v1445
        %v1447 = vrot.slane %v1315, 6
        %v1448 = vrot.slane %v1447, 4
        %v1449 = vrot.slane %v1316, 6
        %v1450 = vsel %vm530, %v1448, %v1449
        %v1451 = vrot.slane %v1449, 4
        %v1452 = vrot.slane %v1317, 6
        %v1453 = vsel %vm530, %v1451, %v1452
        %v1454 = vrot.slane %v1318, 6
        %v1455 = vrot.slane %v1454, 4
        %v1456 = vrot.slane %v1319, 6
        %v1457 = vsel %vm530, %v1455, %v1456
        %v1458 = vrot.slane %v1456, 4
        %v1459 = vrot.slane %v1320, 6
        %v1460 = vsel %vm530, %v1458, %v1459
        %v1461 = vrot.slane %v1321, 6
        %v1462 = vrot.slane %v1461, 4
        %v1463 = vrot.slane %v1322, 6
        %v1464 = vsel %vm530, %v1462, %v1463
        %v1465 = vrot.slane %v1463, 4
        %v1466 = vrot.slane %v1323, 6
        %v1467 = vsel %vm530, %v1465, %v1466
        %v1468 = vrot.slane %v1324, 6
        %v1469 = vrot.slane %v1468, 4
        %v1470 = vrot.slane %v1325, 6
        %v1471 = vsel %vm530, %v1469, %v1470
        %v1472 = vrot.slane %v1470, 4
        %v1473 = vrot.slane %v1326, 6
        %v1474 = vsel %vm530, %v1472, %v1473
        %v1475 = vrot.slane %v1327, 6
        %v1476 = vrot.slane %v1475, 4
        %v1477 = vrot.slane %v1328, 6
        %v1478 = vsel %vm530, %v1476, %v1477
        %v1479 = vrot.slane %v1477, 4
        %v1480 = vrot.slane %v1329, 6
        %v1481 = vsel %vm530, %v1479, %v1480
        %v1482 = vrot.slane %v1330, 6
        %v1483 = vrot.slane %v1482, 4
        %v1484 = vrot.slane %v1331, 6
        %v1485 = vsel %vm530, %v1483, %v1484
        %v1486 = vrot.slane %v1484, 4
        %v1487 = vrot.slane %v1332, 6
        %v1488 = vsel %vm530, %v1486, %v1487
        %v1489 = vrot.slane %v1333, 6
        %v1490 = vrot.slane %v1489, 4
        %v1491 = vrot.slane %v1334, 6
        %v1492 = vsel %vm530, %v1490, %v1491
        %v1493 = vrot.slane %v1491, 4
        %v1494 = vrot.slane %v1335, 6
        %v1495 = vsel %vm530, %v1493, %v1494
        %v1496 = vunpack.c.l.b16 %v1387
        %v1497 = vunpack.c.l.b16 %v1390
        %v1498 = vunpack.c.l.b16 %v1394
        %v1499 = vunpack.c.l.b16 %v1397
        %v1500 = vunpack.c.l.b16 %v1401
        %v1501 = vunpack.c.l.b16 %v1404
        %v1502 = vunpack.c.l.b16 %v1408
        %v1503 = vunpack.c.l.b16 %v1411
        %v1504 = vunpack.c.l.b16 %v1415
        %v1505 = vunpack.c.l.b16 %v1418
        %v1506 = vunpack.c.l.b16 %v1422
        %v1507 = vunpack.c.l.b16 %v1425
        %v1508 = vunpack.c.l.b16 %v1429
        %v1509 = vunpack.c.l.b16 %v1432
        %v1510 = vunpack.c.l.b16 %v1436
        %v1511 = vunpack.c.l.b16 %v1439
        %v1512 = vunpack.c.l.b16 %v1443
        %v1513 = vunpack.c.l.b16 %v1446
        %v1514 = vunpack.c.l.b16 %v1450
        %v1515 = vunpack.c.l.b16 %v1453
        %v1516 = vunpack.c.l.b16 %v1457
        %v1517 = vunpack.c.l.b16 %v1460
        %v1518 = vunpack.c.l.b16 %v1464
        %v1519 = vunpack.c.l.b16 %v1467
        %v1520 = vunpack.c.l.b16 %v1471
        %v1521 = vunpack.c.l.b16 %v1474
        %v1522 = vunpack.c.l.b16 %v1478
        %v1523 = vunpack.c.l.b16 %v1481
        %v1524 = vunpack.c.l.b16 %v1485
        %v1525 = vunpack.c.l.b16 %v1488
        %v1526 = vunpack.c.l.b16 %v1492
        %v1527 = vunpack.c.l.b16 %v1495
        %v1528 = vpack.c.b16 %v1497, %v1496
        %v1529 = vpack.c.b16 %v1499, %v1498
        %v1530 = vpack.c.b16 %v1501, %v1500
        %v1531 = vpack.c.b16 %v1503, %v1502
        %v1532 = vpack.c.b16 %v1505, %v1504
        %v1533 = vpack.c.b16 %v1507, %v1506
        %v1534 = vpack.c.b16 %v1509, %v1508
        %v1535 = vpack.c.b16 %v1511, %v1510
        %v1536 = vpack.c.b16 %v1513, %v1512
        %v1537 = vpack.c.b16 %v1515, %v1514
        %v1538 = vpack.c.b16 %v1517, %v1516
        %v1539 = vpack.c.b16 %v1519, %v1518
        %v1540 = vpack.c.b16 %v1521, %v1520
        %v1541 = vpack.c.b16 %v1523, %v1522
        %v1542 = vpack.c.b16 %v1525, %v1524
        %v1543 = vpack.c.b16 %v1527, %v1526
        %1544 = vrot.lane.b32.xlu0 %v1528, 32
        %v1545 = vpop.permute.xlu0 %1544
        %1546 = vrot.lane.b32.xlu0 %v1529, 32
        %v1547 = vpop.permute.xlu0 %1546
        %1548 = vrot.lane.b32.xlu0 %v1530, 32
        %v1549 = vpop.permute.xlu0 %1548
        %1550 = vrot.lane.b32.xlu0 %v1531, 32
        %v1551 = vpop.permute.xlu0 %1550
        %1552 = vrot.lane.b32.xlu0 %v1532, 32
        %v1553 = vpop.permute.xlu0 %1552
        %1554 = vrot.lane.b32.xlu0 %v1533, 32
        %v1555 = vpop.permute.xlu0 %1554
        %1556 = vrot.lane.b32.xlu0 %v1534, 32
        %v1557 = vpop.permute.xlu0 %1556
        %1558 = vrot.lane.b32.xlu0 %v1535, 32
        %v1559 = vpop.permute.xlu0 %1558
        %1560 = vrot.lane.b32.xlu0 %v1536, 32
        %v1561 = vpop.permute.xlu0 %1560
        %1562 = vrot.lane.b32.xlu0 %v1537, 32
        %v1563 = vpop.permute.xlu0 %1562
        %1564 = vrot.lane.b32.xlu0 %v1538, 32
        %v1565 = vpop.permute.xlu0 %1564
        %1566 = vrot.lane.b32.xlu0 %v1539, 32
        %v1567 = vpop.permute.xlu0 %1566
        %1568 = vrot.lane.b32.xlu0 %v1540, 32
        %v1569 = vpop.permute.xlu0 %1568
        %1570 = vrot.lane.b32.xlu0 %v1541, 32
        %v1571 = vpop.permute.xlu0 %1570
        %1572 = vrot.lane.b32.xlu0 %v1542, 32
        %v1573 = vpop.permute.xlu0 %1572
        %1574 = vrot.lane.b32.xlu0 %v1543, 32
        %v1575 = vpop.permute.xlu0 %1574
        %vm1592 = vcmask 523520
        %1593 = vst.msk [vmem:[#allocation3] sm:$0xff] %vm1592, %v1545
        %1594 = vst.msk [vmem:[#allocation3 + $0x38] sm:$0xff] %vm1592, %v1547
        %1595 = vst.msk [vmem:[#allocation3 + $0x70] sm:$0xff] %vm1592, %v1549
        %1596 = vst.msk [vmem:[#allocation3 + $0xa8] sm:$0xff] %vm1592, %v1551
        %1597 = vst.msk [vmem:[#allocation3 + $0xe0] sm:$0xff] %vm1592, %v1553
        %1598 = vst.msk [vmem:[#allocation3 + $0x118] sm:$0xff] %vm1592, %v1555
        %1599 = vst.msk [vmem:[#allocation3 + $0x150] sm:$0xff] %vm1592, %v1557
        %1600 = vst.msk [vmem:[#allocation3 + $0x188] sm:$0xff] %vm1592, %v1559
        %1601 = vst.msk [vmem:[#allocation3 + $0x1c0] sm:$0xff] %vm1592, %v1561
        %1602 = vst.msk [vmem:[#allocation3 + $0x1f8] sm:$0xff] %vm1592, %v1563
        %1603 = vst.msk [vmem:[#allocation3 + $0x230] sm:$0xff] %vm1592, %v1565
        %1604 = vst.msk [vmem:[#allocation3 + $0x268] sm:$0xff] %vm1592, %v1567
        %1605 = vst.msk [vmem:[#allocation3 + $0x2a0] sm:$0xff] %vm1592, %v1569
        %1606 = vst.msk [vmem:[#allocation3 + $0x2d8] sm:$0xff] %vm1592, %v1571
        %1607 = vst.msk [vmem:[#allocation3 + $0x310] sm:$0xff] %vm1592, %v1573
        %1608 = vst.msk [vmem:[#allocation3 + $0x348] sm:$0xff] %vm1592, %v1575
        %v1609 = vld [vmem:[%s707] sm:$0xc]
        %v1610 = vld [vmem:[%s707 + $0x4] sm:$0xf]
        %v1611 = vld [vmem:[%s707 + $0x8] sm:$0x7]
        %v1612 = vld [vmem:[%s707 + $0xc] sm:$0xc]
        %v1613 = vld [vmem:[%s707 + $0x10] sm:$0xf]
        %v1614 = vld [vmem:[%s707 + $0x14] sm:$0x7]
        %v1615 = vld [vmem:[%s707 + $0x18] sm:$0xc]
        %v1616 = vld [vmem:[%s707 + $0x1c] sm:$0xf]
        %v1617 = vld [vmem:[%s707 + $0x20] sm:$0x7]
        %v1618 = vld [vmem:[%s707 + $0x24] sm:$0xc]
        %v1619 = vld [vmem:[%s707 + $0x28] sm:$0xf]
        %v1620 = vld [vmem:[%s707 + $0x2c] sm:$0x7]
        %v1621 = vld [vmem:[%s707 + $0x30] sm:$0xc]
        %v1622 = vld [vmem:[%s707 + $0x34] sm:$0xf]
        %v1623 = vld [vmem:[%s707 + $0x38] sm:$0x7]
        %v1624 = vld [vmem:[%s707 + $0x3c] sm:$0xc]
        %v1625 = vld [vmem:[%s707 + $0x40] sm:$0xf]
        %v1626 = vld [vmem:[%s707 + $0x44] sm:$0x7]
        %v1627 = vld [vmem:[%s707 + $0x48] sm:$0xc]
        %v1628 = vld [vmem:[%s707 + $0x4c] sm:$0xf]
        %v1629 = vld [vmem:[%s707 + $0x50] sm:$0x7]
        %v1630 = vld [vmem:[%s707 + $0x54] sm:$0xc]
        %v1631 = vld [vmem:[%s707 + $0x58] sm:$0xf]
        %v1632 = vld [vmem:[%s707 + $0x5c] sm:$0x7]
        %v1633 = vld [vmem:[%s707 + $0x60] sm:$0xc]
        %v1634 = vld [vmem:[%s707 + $0x64] sm:$0xf]
        %v1635 = vld [vmem:[%s707 + $0x68] sm:$0x7]
        %v1636 = vld [vmem:[%s707 + $0x6c] sm:$0xc]
        %v1637 = vld [vmem:[%s707 + $0x70] sm:$0xf]
        %v1638 = vld [vmem:[%s707 + $0x74] sm:$0x7]
        %v1639 = vld [vmem:[%s707 + $0x78] sm:$0xc]
        %v1640 = vld [vmem:[%s707 + $0x7c] sm:$0xf]
        %v1641 = vld [vmem:[%s707 + $0x80] sm:$0x7]
        %v1642 = vld [vmem:[%s707 + $0x84] sm:$0xc]
        %v1643 = vld [vmem:[%s707 + $0x88] sm:$0xf]
        %v1644 = vld [vmem:[%s707 + $0x8c] sm:$0x7]
        %v1645 = vld [vmem:[%s707 + $0x90] sm:$0xc]
        %v1646 = vld [vmem:[%s707 + $0x94] sm:$0xf]
        %v1647 = vld [vmem:[%s707 + $0x98] sm:$0x7]
        %v1648 = vld [vmem:[%s707 + $0x9c] sm:$0xc]
        %v1649 = vld [vmem:[%s707 + $0xa0] sm:$0xf]
        %v1650 = vld [vmem:[%s707 + $0xa4] sm:$0x7]
        %v1651 = vld [vmem:[%s707 + $0xa8] sm:$0xc]
        %v1652 = vld [vmem:[%s707 + $0xac] sm:$0xf]
        %v1653 = vld [vmem:[%s707 + $0xb0] sm:$0x7]
        %v1654 = vld [vmem:[%s707 + $0xb4] sm:$0xc]
        %v1655 = vld [vmem:[%s707 + $0xb8] sm:$0xf]
        %v1656 = vld [vmem:[%s707 + $0xbc] sm:$0x7]
        %vm1657 = vsmask.f32 1280
        %vm1658 = vsmask.f32 5392
        %vm1659 = vmor %vm1657, %vm1658
        %v1661 = vshrl.u32 %v1609, 16
        %v1663 = vrot.slane %v1661, 6
        %v1664 = vshll.u32 %v1609, 16
        %v1666 = vrot.slane %v1664, 7
        %v1667 = vor.u32 %v1663, %v1666
        %v1668 = vrot.slane %v1667, 4
        %v1670 = vshrl.u32 %v1610, 16
        %v1672 = vrot.slane %v1670, 6
        %v1673 = vshll.u32 %v1610, 16
        %v1675 = vrot.slane %v1673, 7
        %v1676 = vor.u32 %v1672, %v1675
        %v1677 = vsel %vm1659, %v1668, %v1676
        %v1678 = vrot.slane %v1676, 4
        %v1680 = vshrl.u32 %v1611, 16
        %v1682 = vrot.slane %v1680, 6
        %v1683 = vshll.u32 %v1611, 16
        %v1685 = vrot.slane %v1683, 7
        %v1686 = vor.u32 %v1682, %v1685
        %v1687 = vsel %vm1659, %v1678, %v1686
        %v1689 = vshrl.u32 %v1612, 16
        %v1691 = vrot.slane %v1689, 6
        %v1692 = vshll.u32 %v1612, 16
        %v1694 = vrot.slane %v1692, 7
        %v1695 = vor.u32 %v1691, %v1694
        %v1696 = vrot.slane %v1695, 4
        %v1698 = vshrl.u32 %v1613, 16
        %v1700 = vrot.slane %v1698, 6
        %v1701 = vshll.u32 %v1613, 16
        %v1703 = vrot.slane %v1701, 7
        %v1704 = vor.u32 %v1700, %v1703
        %v1705 = vsel %vm1659, %v1696, %v1704
        %v1706 = vrot.slane %v1704, 4
        %v1708 = vshrl.u32 %v1614, 16
        %v1710 = vrot.slane %v1708, 6
        %v1711 = vshll.u32 %v1614, 16
        %v1713 = vrot.slane %v1711, 7
        %v1714 = vor.u32 %v1710, %v1713
        %v1715 = vsel %vm1659, %v1706, %v1714
        %v1717 = vshrl.u32 %v1615, 16
        %v1719 = vrot.slane %v1717, 6
        %v1720 = vshll.u32 %v1615, 16
        %v1722 = vrot.slane %v1720, 7
        %v1723 = vor.u32 %v1719, %v1722
        %v1724 = vrot.slane %v1723, 4
        %v1726 = vshrl.u32 %v1616, 16
        %v1728 = vrot.slane %v1726, 6
        %v1729 = vshll.u32 %v1616, 16
        %v1731 = vrot.slane %v1729, 7
        %v1732 = vor.u32 %v1728, %v1731
        %v1733 = vsel %vm1659, %v1724, %v1732
        %v1734 = vrot.slane %v1732, 4
        %v1736 = vshrl.u32 %v1617, 16
        %v1738 = vrot.slane %v1736, 6
        %v1739 = vshll.u32 %v1617, 16
        %v1741 = vrot.slane %v1739, 7
        %v1742 = vor.u32 %v1738, %v1741
        %v1743 = vsel %vm1659, %v1734, %v1742
        %v1745 = vshrl.u32 %v1618, 16
        %v1747 = vrot.slane %v1745, 6
        %v1748 = vshll.u32 %v1618, 16
        %v1750 = vrot.slane %v1748, 7
        %v1751 = vor.u32 %v1747, %v1750
        %v1752 = vrot.slane %v1751, 4
        %v1754 = vshrl.u32 %v1619, 16
        %v1756 = vrot.slane %v1754, 6
        %v1757 = vshll.u32 %v1619, 16
        %v1759 = vrot.slane %v1757, 7
        %v1760 = vor.u32 %v1756, %v1759
        %v1761 = vsel %vm1659, %v1752, %v1760
        %v1762 = vrot.slane %v1760, 4
        %v1764 = vshrl.u32 %v1620, 16
        %v1766 = vrot.slane %v1764, 6
        %v1767 = vshll.u32 %v1620, 16
        %v1769 = vrot.slane %v1767, 7
        %v1770 = vor.u32 %v1766, %v1769
        %v1771 = vsel %vm1659, %v1762, %v1770
        %v1773 = vshrl.u32 %v1621, 16
        %v1775 = vrot.slane %v1773, 6
        %v1776 = vshll.u32 %v1621, 16
        %v1778 = vrot.slane %v1776, 7
        %v1779 = vor.u32 %v1775, %v1778
        %v1780 = vrot.slane %v1779, 4
        %v1782 = vshrl.u32 %v1622, 16
        %v1784 = vrot.slane %v1782, 6
        %v1785 = vshll.u32 %v1622, 16
        %v1787 = vrot.slane %v1785, 7
        %v1788 = vor.u32 %v1784, %v1787
        %v1789 = vsel %vm1659, %v1780, %v1788
        %v1790 = vrot.slane %v1788, 4
        %v1792 = vshrl.u32 %v1623, 16
        %v1794 = vrot.slane %v1792, 6
        %v1795 = vshll.u32 %v1623, 16
        %v1797 = vrot.slane %v1795, 7
        %v1798 = vor.u32 %v1794, %v1797
        %v1799 = vsel %vm1659, %v1790, %v1798
        %v1801 = vshrl.u32 %v1624, 16
        %v1803 = vrot.slane %v1801, 6
        %v1804 = vshll.u32 %v1624, 16
        %v1806 = vrot.slane %v1804, 7
        %v1807 = vor.u32 %v1803, %v1806
        %v1808 = vrot.slane %v1807, 4
        %v1810 = vshrl.u32 %v1625, 16
        %v1812 = vrot.slane %v1810, 6
        %v1813 = vshll.u32 %v1625, 16
        %v1815 = vrot.slane %v1813, 7
        %v1816 = vor.u32 %v1812, %v1815
        %v1817 = vsel %vm1659, %v1808, %v1816
        %v1818 = vrot.slane %v1816, 4
        %v1820 = vshrl.u32 %v1626, 16
        %v1822 = vrot.slane %v1820, 6
        %v1823 = vshll.u32 %v1626, 16
        %v1825 = vrot.slane %v1823, 7
        %v1826 = vor.u32 %v1822, %v1825
        %v1827 = vsel %vm1659, %v1818, %v1826
        %v1829 = vshrl.u32 %v1627, 16
        %v1831 = vrot.slane %v1829, 6
        %v1832 = vshll.u32 %v1627, 16
        %v1834 = vrot.slane %v1832, 7
        %v1835 = vor.u32 %v1831, %v1834
        %v1836 = vrot.slane %v1835, 4
        %v1838 = vshrl.u32 %v1628, 16
        %v1840 = vrot.slane %v1838, 6
        %v1841 = vshll.u32 %v1628, 16
        %v1843 = vrot.slane %v1841, 7
        %v1844 = vor.u32 %v1840, %v1843
        %v1845 = vsel %vm1659, %v1836, %v1844
        %v1846 = vrot.slane %v1844, 4
        %v1848 = vshrl.u32 %v1629, 16
        %v1850 = vrot.slane %v1848, 6
        %v1851 = vshll.u32 %v1629, 16
        %v1853 = vrot.slane %v1851, 7
        %v1854 = vor.u32 %v1850, %v1853
        %v1855 = vsel %vm1659, %v1846, %v1854
        %v1857 = vshrl.u32 %v1630, 16
        %v1859 = vrot.slane %v1857, 6
        %v1860 = vshll.u32 %v1630, 16
        %v1862 = vrot.slane %v1860, 7
        %v1863 = vor.u32 %v1859, %v1862
        %v1864 = vrot.slane %v1863, 4
        %v1866 = vshrl.u32 %v1631, 16
        %v1868 = vrot.slane %v1866, 6
        %v1869 = vshll.u32 %v1631, 16
        %v1871 = vrot.slane %v1869, 7
        %v1872 = vor.u32 %v1868, %v1871
        %v1873 = vsel %vm1659, %v1864, %v1872
        %v1874 = vrot.slane %v1872, 4
        %v1876 = vshrl.u32 %v1632, 16
        %v1878 = vrot.slane %v1876, 6
        %v1879 = vshll.u32 %v1632, 16
        %v1881 = vrot.slane %v1879, 7
        %v1882 = vor.u32 %v1878, %v1881
        %v1883 = vsel %vm1659, %v1874, %v1882
        %v1885 = vshrl.u32 %v1633, 16
        %v1887 = vrot.slane %v1885, 6
        %v1888 = vshll.u32 %v1633, 16
        %v1890 = vrot.slane %v1888, 7
        %v1891 = vor.u32 %v1887, %v1890
        %v1892 = vrot.slane %v1891, 4
        %v1894 = vshrl.u32 %v1634, 16
        %v1896 = vrot.slane %v1894, 6
        %v1897 = vshll.u32 %v1634, 16
        %v1899 = vrot.slane %v1897, 7
        %v1900 = vor.u32 %v1896, %v1899
        %v1901 = vsel %vm1659, %v1892, %v1900
        %v1902 = vrot.slane %v1900, 4
        %v1904 = vshrl.u32 %v1635, 16
        %v1906 = vrot.slane %v1904, 6
        %v1907 = vshll.u32 %v1635, 16
        %v1909 = vrot.slane %v1907, 7
        %v1910 = vor.u32 %v1906, %v1909
        %v1911 = vsel %vm1659, %v1902, %v1910
        %v1913 = vshrl.u32 %v1636, 16
        %v1915 = vrot.slane %v1913, 6
        %v1916 = vshll.u32 %v1636, 16
        %v1918 = vrot.slane %v1916, 7
        %v1919 = vor.u32 %v1915, %v1918
        %v1920 = vrot.slane %v1919, 4
        %v1922 = vshrl.u32 %v1637, 16
        %v1924 = vrot.slane %v1922, 6
        %v1925 = vshll.u32 %v1637, 16
        %v1927 = vrot.slane %v1925, 7
        %v1928 = vor.u32 %v1924, %v1927
        %v1929 = vsel %vm1659, %v1920, %v1928
        %v1930 = vrot.slane %v1928, 4
        %v1932 = vshrl.u32 %v1638, 16
        %v1934 = vrot.slane %v1932, 6
        %v1935 = vshll.u32 %v1638, 16
        %v1937 = vrot.slane %v1935, 7
        %v1938 = vor.u32 %v1934, %v1937
        %v1939 = vsel %vm1659, %v1930, %v1938
        %v1941 = vshrl.u32 %v1639, 16
        %v1943 = vrot.slane %v1941, 6
        %v1944 = vshll.u32 %v1639, 16
        %v1946 = vrot.slane %v1944, 7
        %v1947 = vor.u32 %v1943, %v1946
        %v1948 = vrot.slane %v1947, 4
        %v1950 = vshrl.u32 %v1640, 16
        %v1952 = vrot.slane %v1950, 6
        %v1953 = vshll.u32 %v1640, 16
        %v1955 = vrot.slane %v1953, 7
        %v1956 = vor.u32 %v1952, %v1955
        %v1957 = vsel %vm1659, %v1948, %v1956
        %v1958 = vrot.slane %v1956, 4
        %v1960 = vshrl.u32 %v1641, 16
        %v1962 = vrot.slane %v1960, 6
        %v1963 = vshll.u32 %v1641, 16
        %v1965 = vrot.slane %v1963, 7
        %v1966 = vor.u32 %v1962, %v1965
        %v1967 = vsel %vm1659, %v1958, %v1966
        %v1969 = vshrl.u32 %v1642, 16
        %v1971 = vrot.slane %v1969, 6
        %v1972 = vshll.u32 %v1642, 16
        %v1974 = vrot.slane %v1972, 7
        %v1975 = vor.u32 %v1971, %v1974
        %v1976 = vrot.slane %v1975, 4
        %v1978 = vshrl.u32 %v1643, 16
        %v1980 = vrot.slane %v1978, 6
        %v1981 = vshll.u32 %v1643, 16
        %v1983 = vrot.slane %v1981, 7
        %v1984 = vor.u32 %v1980, %v1983
        %v1985 = vsel %vm1659, %v1976, %v1984
        %v1986 = vrot.slane %v1984, 4
        %v1988 = vshrl.u32 %v1644, 16
        %v1990 = vrot.slane %v1988, 6
        %v1991 = vshll.u32 %v1644, 16
        %v1993 = vrot.slane %v1991, 7
        %v1994 = vor.u32 %v1990, %v1993
        %v1995 = vsel %vm1659, %v1986, %v1994
        %v1997 = vshrl.u32 %v1645, 16
        %v1999 = vrot.slane %v1997, 6
        %v2000 = vshll.u32 %v1645, 16
        %v2002 = vrot.slane %v2000, 7
        %v2003 = vor.u32 %v1999, %v2002
        %v2004 = vrot.slane %v2003, 4
        %v2006 = vshrl.u32 %v1646, 16
        %v2008 = vrot.slane %v2006, 6
        %v2009 = vshll.u32 %v1646, 16
        %v2011 = vrot.slane %v2009, 7
        %v2012 = vor.u32 %v2008, %v2011
        %v2013 = vsel %vm1659, %v2004, %v2012
        %v2014 = vrot.slane %v2012, 4
        %v2016 = vshrl.u32 %v1647, 16
        %v2018 = vrot.slane %v2016, 6
        %v2019 = vshll.u32 %v1647, 16
        %v2021 = vrot.slane %v2019, 7
        %v2022 = vor.u32 %v2018, %v2021
        %v2023 = vsel %vm1659, %v2014, %v2022
        %v2025 = vshrl.u32 %v1648, 16
        %v2027 = vrot.slane %v2025, 6
        %v2028 = vshll.u32 %v1648, 16
        %v2030 = vrot.slane %v2028, 7
        %v2031 = vor.u32 %v2027, %v2030
        %v2032 = vrot.slane %v2031, 4
        %v2034 = vshrl.u32 %v1649, 16
        %v2036 = vrot.slane %v2034, 6
        %v2037 = vshll.u32 %v1649, 16
        %v2039 = vrot.slane %v2037, 7
        %v2040 = vor.u32 %v2036, %v2039
        %v2041 = vsel %vm1659, %v2032, %v2040
        %v2042 = vrot.slane %v2040, 4
        %v2044 = vshrl.u32 %v1650, 16
        %v2046 = vrot.slane %v2044, 6
        %v2047 = vshll.u32 %v1650, 16
        %v2049 = vrot.slane %v2047, 7
        %v2050 = vor.u32 %v2046, %v2049
        %v2051 = vsel %vm1659, %v2042, %v2050
        %v2053 = vshrl.u32 %v1651, 16
        %v2055 = vrot.slane %v2053, 6
        %v2056 = vshll.u32 %v1651, 16
        %v2058 = vrot.slane %v2056, 7
        %v2059 = vor.u32 %v2055, %v2058
        %v2060 = vrot.slane %v2059, 4
        %v2062 = vshrl.u32 %v1652, 16
        %v2064 = vrot.slane %v2062, 6
        %v2065 = vshll.u32 %v1652, 16
        %v2067 = vrot.slane %v2065, 7
        %v2068 = vor.u32 %v2064, %v2067
        %v2069 = vsel %vm1659, %v2060, %v2068
        %v2070 = vrot.slane %v2068, 4
        %v2072 = vshrl.u32 %v1653, 16
        %v2074 = vrot.slane %v2072, 6
        %v2075 = vshll.u32 %v1653, 16
        %v2077 = vrot.slane %v2075, 7
        %v2078 = vor.u32 %v2074, %v2077
        %v2079 = vsel %vm1659, %v2070, %v2078
        %v2081 = vshrl.u32 %v1654, 16
        %v2083 = vrot.slane %v2081, 6
        %v2084 = vshll.u32 %v1654, 16
        %v2086 = vrot.slane %v2084, 7
        %v2087 = vor.u32 %v2083, %v2086
        %v2088 = vrot.slane %v2087, 4
        %v2090 = vshrl.u32 %v1655, 16
        %v2092 = vrot.slane %v2090, 6
        %v2093 = vshll.u32 %v1655, 16
        %v2095 = vrot.slane %v2093, 7
        %v2096 = vor.u32 %v2092, %v2095
        %v2097 = vsel %vm1659, %v2088, %v2096
        %v2098 = vrot.slane %v2096, 4
        %v2100 = vshrl.u32 %v1656, 16
        %v2102 = vrot.slane %v2100, 6
        %v2103 = vshll.u32 %v1656, 16
        %v2105 = vrot.slane %v2103, 7
        %v2106 = vor.u32 %v2102, %v2105
        %v2107 = vsel %vm1659, %v2098, %v2106
        %v2108 = vunpack.c.l.b16 %v1677
        %v2109 = vunpack.c.l.b16 %v1687
        %v2110 = vunpack.c.l.b16 %v1705
        %v2111 = vunpack.c.l.b16 %v1715
        %v2112 = vunpack.c.l.b16 %v1733
        %v2113 = vunpack.c.l.b16 %v1743
        %v2114 = vunpack.c.l.b16 %v1761
        %v2115 = vunpack.c.l.b16 %v1771
        %v2116 = vunpack.c.l.b16 %v1789
        %v2117 = vunpack.c.l.b16 %v1799
        %v2118 = vunpack.c.l.b16 %v1817
        %v2119 = vunpack.c.l.b16 %v1827
        %v2120 = vunpack.c.l.b16 %v1845
        %v2121 = vunpack.c.l.b16 %v1855
        %v2122 = vunpack.c.l.b16 %v1873
        %v2123 = vunpack.c.l.b16 %v1883
        %v2124 = vunpack.c.l.b16 %v1901
        %v2125 = vunpack.c.l.b16 %v1911
        %v2126 = vunpack.c.l.b16 %v1929
        %v2127 = vunpack.c.l.b16 %v1939
        %v2128 = vunpack.c.l.b16 %v1957
        %v2129 = vunpack.c.l.b16 %v1967
        %v2130 = vunpack.c.l.b16 %v1985
        %v2131 = vunpack.c.l.b16 %v1995
        %v2132 = vunpack.c.l.b16 %v2013
        %v2133 = vunpack.c.l.b16 %v2023
        %v2134 = vunpack.c.l.b16 %v2041
        %v2135 = vunpack.c.l.b16 %v2051
        %v2136 = vunpack.c.l.b16 %v2069
        %v2137 = vunpack.c.l.b16 %v2079
        %v2138 = vunpack.c.l.b16 %v2097
        %v2139 = vunpack.c.l.b16 %v2107
        %v2140 = vpack.c.b16 %v2109, %v2108
        %v2141 = vpack.c.b16 %v2111, %v2110
        %v2142 = vpack.c.b16 %v2113, %v2112
        %v2143 = vpack.c.b16 %v2115, %v2114
        %v2144 = vpack.c.b16 %v2117, %v2116
        %v2145 = vpack.c.b16 %v2119, %v2118
        %v2146 = vpack.c.b16 %v2121, %v2120
        %v2147 = vpack.c.b16 %v2123, %v2122
        %v2148 = vpack.c.b16 %v2125, %v2124
        %v2149 = vpack.c.b16 %v2127, %v2126
        %v2150 = vpack.c.b16 %v2129, %v2128
        %v2151 = vpack.c.b16 %v2131, %v2130
        %v2152 = vpack.c.b16 %v2133, %v2132
        %v2153 = vpack.c.b16 %v2135, %v2134
        %v2154 = vpack.c.b16 %v2137, %v2136
        %v2155 = vpack.c.b16 %v2139, %v2138
        %2156 = vrot.lane.b32.xlu0 %v2140, 64
        %v2157 = vpop.permute.xlu0 %2156
        %2158 = vrot.lane.b32.xlu0 %v2141, 64
        %v2159 = vpop.permute.xlu0 %2158
        %2160 = vrot.lane.b32.xlu0 %v2142, 64
        %v2161 = vpop.permute.xlu0 %2160
        %2162 = vrot.lane.b32.xlu0 %v2143, 64
        %v2163 = vpop.permute.xlu0 %2162
        %2164 = vrot.lane.b32.xlu0 %v2144, 64
        %v2165 = vpop.permute.xlu0 %2164
        %2166 = vrot.lane.b32.xlu0 %v2145, 64
        %v2167 = vpop.permute.xlu0 %2166
        %2168 = vrot.lane.b32.xlu0 %v2146, 64
        %v2169 = vpop.permute.xlu0 %2168
        %2170 = vrot.lane.b32.xlu0 %v2147, 64
        %v2171 = vpop.permute.xlu0 %2170
        %2172 = vrot.lane.b32.xlu0 %v2148, 64
        %v2173 = vpop.permute.xlu0 %2172
        %2174 = vrot.lane.b32.xlu0 %v2149, 64
        %v2175 = vpop.permute.xlu0 %2174
        %2176 = vrot.lane.b32.xlu0 %v2150, 64
        %v2177 = vpop.permute.xlu0 %2176
        %2178 = vrot.lane.b32.xlu0 %v2151, 64
        %v2179 = vpop.permute.xlu0 %2178
        %2180 = vrot.lane.b32.xlu0 %v2152, 64
        %v2181 = vpop.permute.xlu0 %2180
        %2182 = vrot.lane.b32.xlu0 %v2153, 64
        %v2183 = vpop.permute.xlu0 %2182
        %2184 = vrot.lane.b32.xlu0 %v2154, 64
        %v2185 = vpop.permute.xlu0 %2184
        %2186 = vrot.lane.b32.xlu0 %v2155, 64
        %v2187 = vpop.permute.xlu0 %2186
        %vm2204 = vcmask 785920
        %2205 = vst.msk [vmem:[#allocation3] sm:$0xff] %vm2204, %v2157
        %2206 = vst.msk [vmem:[#allocation3 + $0x38] sm:$0xff] %vm2204, %v2159
        %2207 = vst.msk [vmem:[#allocation3 + $0x70] sm:$0xff] %vm2204, %v2161
        %2208 = vst.msk [vmem:[#allocation3 + $0xa8] sm:$0xff] %vm2204, %v2163
        %2209 = vst.msk [vmem:[#allocation3 + $0xe0] sm:$0xff] %vm2204, %v2165
        %2210 = vst.msk [vmem:[#allocation3 + $0x118] sm:$0xff] %vm2204, %v2167
        %2211 = vst.msk [vmem:[#allocation3 + $0x150] sm:$0xff] %vm2204, %v2169
        %2212 = vst.msk [vmem:[#allocation3 + $0x188] sm:$0xff] %vm2204, %v2171
        %2213 = vst.msk [vmem:[#allocation3 + $0x1c0] sm:$0xff] %vm2204, %v2173
        %2214 = vst.msk [vmem:[#allocation3 + $0x1f8] sm:$0xff] %vm2204, %v2175
        %2215 = vst.msk [vmem:[#allocation3 + $0x230] sm:$0xff] %vm2204, %v2177
        %2216 = vst.msk [vmem:[#allocation3 + $0x268] sm:$0xff] %vm2204, %v2179
        %2217 = vst.msk [vmem:[#allocation3 + $0x2a0] sm:$0xff] %vm2204, %v2181
        %2218 = vst.msk [vmem:[#allocation3 + $0x2d8] sm:$0xff] %vm2204, %v2183
        %2219 = vst.msk [vmem:[#allocation3 + $0x310] sm:$0xff] %vm2204, %v2185
        %2220 = vst.msk [vmem:[#allocation3 + $0x348] sm:$0xff] %vm2204, %v2187
        %v2221 = vld [vmem:[%s255] sm:$0xe]
        %v2222 = vld [vmem:[%s255 + $0x4] sm:$0xf]
        %v2223 = vld [vmem:[%s255 + $0x8] sm:$0x3]
        %v2224 = vld [vmem:[%s255 + $0xc] sm:$0xe]
        %v2225 = vld [vmem:[%s255 + $0x10] sm:$0xf]
        %v2226 = vld [vmem:[%s255 + $0x14] sm:$0x3]
        %v2227 = vld [vmem:[%s255 + $0x18] sm:$0xe]
        %v2228 = vld [vmem:[%s255 + $0x1c] sm:$0xf]
        %v2229 = vld [vmem:[%s255 + $0x20] sm:$0x3]
        %v2230 = vld [vmem:[%s255 + $0x24] sm:$0xe]
        %v2231 = vld [vmem:[%s255 + $0x28] sm:$0xf]
        %v2232 = vld [vmem:[%s255 + $0x2c] sm:$0x3]
        %v2233 = vld [vmem:[%s255 + $0x30] sm:$0xe]
        %v2234 = vld [vmem:[%s255 + $0x34] sm:$0xf]
        %v2235 = vld [vmem:[%s255 + $0x38] sm:$0x3]
        %v2236 = vld [vmem:[%s255 + $0x3c] sm:$0xe]
        %v2237 = vld [vmem:[%s255 + $0x40] sm:$0xf]
        %v2238 = vld [vmem:[%s255 + $0x44] sm:$0x3]
        %v2239 = vld [vmem:[%s255 + $0x48] sm:$0xe]
        %v2240 = vld [vmem:[%s255 + $0x4c] sm:$0xf]
        %v2241 = vld [vmem:[%s255 + $0x50] sm:$0x3]
        %v2242 = vld [vmem:[%s255 + $0x54] sm:$0xe]
        %v2243 = vld [vmem:[%s255 + $0x58] sm:$0xf]
        %v2244 = vld [vmem:[%s255 + $0x5c] sm:$0x3]
        %v2245 = vld [vmem:[%s255 + $0x60] sm:$0xe]
        %v2246 = vld [vmem:[%s255 + $0x64] sm:$0xf]
        %v2247 = vld [vmem:[%s255 + $0x68] sm:$0x3]
        %v2248 = vld [vmem:[%s255 + $0x6c] sm:$0xe]
        %v2249 = vld [vmem:[%s255 + $0x70] sm:$0xf]
        %v2250 = vld [vmem:[%s255 + $0x74] sm:$0x3]
        %v2251 = vld [vmem:[%s255 + $0x78] sm:$0xe]
        %v2252 = vld [vmem:[%s255 + $0x7c] sm:$0xf]
        %v2253 = vld [vmem:[%s255 + $0x80] sm:$0x3]
        %v2254 = vld [vmem:[%s255 + $0x84] sm:$0xe]
        %v2255 = vld [vmem:[%s255 + $0x88] sm:$0xf]
        %v2256 = vld [vmem:[%s255 + $0x8c] sm:$0x3]
        %v2257 = vld [vmem:[%s255 + $0x90] sm:$0xe]
        %v2258 = vld [vmem:[%s255 + $0x94] sm:$0xf]
        %v2259 = vld [vmem:[%s255 + $0x98] sm:$0x3]
        %v2260 = vld [vmem:[%s255 + $0x9c] sm:$0xe]
        %v2261 = vld [vmem:[%s255 + $0xa0] sm:$0xf]
        %v2262 = vld [vmem:[%s255 + $0xa4] sm:$0x3]
        %v2263 = vld [vmem:[%s255 + $0xa8] sm:$0xe]
        %v2264 = vld [vmem:[%s255 + $0xac] sm:$0xf]
        %v2265 = vld [vmem:[%s255 + $0xb0] sm:$0x3]
        %v2266 = vld [vmem:[%s255 + $0xb4] sm:$0xe]
        %v2267 = vld [vmem:[%s255 + $0xb8] sm:$0xf]
        %v2268 = vld [vmem:[%s255 + $0xbc] sm:$0x3]
        %v2270 = vshrl.u32 %v2221, 16
        %v2272 = vrot.slane %v2270, 5
        %v2273 = vshll.u32 %v2221, 16
        %v2275 = vrot.slane %v2273, 6
        %v2276 = vor.u32 %v2272, %v2275
        %v2277 = vrot.slane %v2276, 4
        %v2279 = vshrl.u32 %v2222, 16
        %v2281 = vrot.slane %v2279, 5
        %v2282 = vshll.u32 %v2222, 16
        %v2284 = vrot.slane %v2282, 6
        %v2285 = vor.u32 %v2281, %v2284
        %v2286 = vsel %vm758, %v2277, %v2285
        %v2287 = vrot.slane %v2285, 4
        %v2289 = vshrl.u32 %v2223, 16
        %v2291 = vrot.slane %v2289, 5
        %v2292 = vshll.u32 %v2223, 16
        %v2294 = vrot.slane %v2292, 6
        %v2295 = vor.u32 %v2291, %v2294
        %v2296 = vsel %vm758, %v2287, %v2295
        %v2298 = vshrl.u32 %v2224, 16
        %v2300 = vrot.slane %v2298, 5
        %v2301 = vshll.u32 %v2224, 16
        %v2303 = vrot.slane %v2301, 6
        %v2304 = vor.u32 %v2300, %v2303
        %v2305 = vrot.slane %v2304, 4
        %v2307 = vshrl.u32 %v2225, 16
        %v2309 = vrot.slane %v2307, 5
        %v2310 = vshll.u32 %v2225, 16
        %v2312 = vrot.slane %v2310, 6
        %v2313 = vor.u32 %v2309, %v2312
        %v2314 = vsel %vm758, %v2305, %v2313
        %v2315 = vrot.slane %v2313, 4
        %v2317 = vshrl.u32 %v2226, 16
        %v2319 = vrot.slane %v2317, 5
        %v2320 = vshll.u32 %v2226, 16
        %v2322 = vrot.slane %v2320, 6
        %v2323 = vor.u32 %v2319, %v2322
        %v2324 = vsel %vm758, %v2315, %v2323
        %v2326 = vshrl.u32 %v2227, 16
        %v2328 = vrot.slane %v2326, 5
        %v2329 = vshll.u32 %v2227, 16
        %v2331 = vrot.slane %v2329, 6
        %v2332 = vor.u32 %v2328, %v2331
        %v2333 = vrot.slane %v2332, 4
        %v2335 = vshrl.u32 %v2228, 16
        %v2337 = vrot.slane %v2335, 5
        %v2338 = vshll.u32 %v2228, 16
        %v2340 = vrot.slane %v2338, 6
        %v2341 = vor.u32 %v2337, %v2340
        %v2342 = vsel %vm758, %v2333, %v2341
        %v2343 = vrot.slane %v2341, 4
        %v2345 = vshrl.u32 %v2229, 16
        %v2347 = vrot.slane %v2345, 5
        %v2348 = vshll.u32 %v2229, 16
        %v2350 = vrot.slane %v2348, 6
        %v2351 = vor.u32 %v2347, %v2350
        %v2352 = vsel %vm758, %v2343, %v2351
        %v2354 = vshrl.u32 %v2230, 16
        %v2356 = vrot.slane %v2354, 5
        %v2357 = vshll.u32 %v2230, 16
        %v2359 = vrot.slane %v2357, 6
        %v2360 = vor.u32 %v2356, %v2359
        %v2361 = vrot.slane %v2360, 4
        %v2363 = vshrl.u32 %v2231, 16
        %v2365 = vrot.slane %v2363, 5
        %v2366 = vshll.u32 %v2231, 16
        %v2368 = vrot.slane %v2366, 6
        %v2369 = vor.u32 %v2365, %v2368
        %v2370 = vsel %vm758, %v2361, %v2369
        %v2371 = vrot.slane %v2369, 4
        %v2373 = vshrl.u32 %v2232, 16
        %v2375 = vrot.slane %v2373, 5
        %v2376 = vshll.u32 %v2232, 16
        %v2378 = vrot.slane %v2376, 6
        %v2379 = vor.u32 %v2375, %v2378
        %v2380 = vsel %vm758, %v2371, %v2379
        %v2382 = vshrl.u32 %v2233, 16
        %v2384 = vrot.slane %v2382, 5
        %v2385 = vshll.u32 %v2233, 16
        %v2387 = vrot.slane %v2385, 6
        %v2388 = vor.u32 %v2384, %v2387
        %v2389 = vrot.slane %v2388, 4
        %v2391 = vshrl.u32 %v2234, 16
        %v2393 = vrot.slane %v2391, 5
        %v2394 = vshll.u32 %v2234, 16
        %v2396 = vrot.slane %v2394, 6
        %v2397 = vor.u32 %v2393, %v2396
        %v2398 = vsel %vm758, %v2389, %v2397
        %v2399 = vrot.slane %v2397, 4
        %v2401 = vshrl.u32 %v2235, 16
        %v2403 = vrot.slane %v2401, 5
        %v2404 = vshll.u32 %v2235, 16
        %v2406 = vrot.slane %v2404, 6
        %v2407 = vor.u32 %v2403, %v2406
        %v2408 = vsel %vm758, %v2399, %v2407
        %v2410 = vshrl.u32 %v2236, 16
        %v2412 = vrot.slane %v2410, 5
        %v2413 = vshll.u32 %v2236, 16
        %v2415 = vrot.slane %v2413, 6
        %v2416 = vor.u32 %v2412, %v2415
        %v2417 = vrot.slane %v2416, 4
        %v2419 = vshrl.u32 %v2237, 16
        %v2421 = vrot.slane %v2419, 5
        %v2422 = vshll.u32 %v2237, 16
        %v2424 = vrot.slane %v2422, 6
        %v2425 = vor.u32 %v2421, %v2424
        %v2426 = vsel %vm758, %v2417, %v2425
        %v2427 = vrot.slane %v2425, 4
        %v2429 = vshrl.u32 %v2238, 16
        %v2431 = vrot.slane %v2429, 5
        %v2432 = vshll.u32 %v2238, 16
        %v2434 = vrot.slane %v2432, 6
        %v2435 = vor.u32 %v2431, %v2434
        %v2436 = vsel %vm758, %v2427, %v2435
        %v2438 = vshrl.u32 %v2239, 16
        %v2440 = vrot.slane %v2438, 5
        %v2441 = vshll.u32 %v2239, 16
        %v2443 = vrot.slane %v2441, 6
        %v2444 = vor.u32 %v2440, %v2443
        %v2445 = vrot.slane %v2444, 4
        %v2447 = vshrl.u32 %v2240, 16
        %v2449 = vrot.slane %v2447, 5
        %v2450 = vshll.u32 %v2240, 16
        %v2452 = vrot.slane %v2450, 6
        %v2453 = vor.u32 %v2449, %v2452
        %v2454 = vsel %vm758, %v2445, %v2453
        %v2455 = vrot.slane %v2453, 4
        %v2457 = vshrl.u32 %v2241, 16
        %v2459 = vrot.slane %v2457, 5
        %v2460 = vshll.u32 %v2241, 16
        %v2462 = vrot.slane %v2460, 6
        %v2463 = vor.u32 %v2459, %v2462
        %v2464 = vsel %vm758, %v2455, %v2463
        %v2466 = vshrl.u32 %v2242, 16
        %v2468 = vrot.slane %v2466, 5
        %v2469 = vshll.u32 %v2242, 16
        %v2471 = vrot.slane %v2469, 6
        %v2472 = vor.u32 %v2468, %v2471
        %v2473 = vrot.slane %v2472, 4
        %v2475 = vshrl.u32 %v2243, 16
        %v2477 = vrot.slane %v2475, 5
        %v2478 = vshll.u32 %v2243, 16
        %v2480 = vrot.slane %v2478, 6
        %v2481 = vor.u32 %v2477, %v2480
        %v2482 = vsel %vm758, %v2473, %v2481
        %v2483 = vrot.slane %v2481, 4
        %v2485 = vshrl.u32 %v2244, 16
        %v2487 = vrot.slane %v2485, 5
        %v2488 = vshll.u32 %v2244, 16
        %v2490 = vrot.slane %v2488, 6
        %v2491 = vor.u32 %v2487, %v2490
        %v2492 = vsel %vm758, %v2483, %v2491
        %v2494 = vshrl.u32 %v2245, 16
        %v2496 = vrot.slane %v2494, 5
        %v2497 = vshll.u32 %v2245, 16
        %v2499 = vrot.slane %v2497, 6
        %v2500 = vor.u32 %v2496, %v2499
        %v2501 = vrot.slane %v2500, 4
        %v2503 = vshrl.u32 %v2246, 16
        %v2505 = vrot.slane %v2503, 5
        %v2506 = vshll.u32 %v2246, 16
        %v2508 = vrot.slane %v2506, 6
        %v2509 = vor.u32 %v2505, %v2508
        %v2510 = vsel %vm758, %v2501, %v2509
        %v2511 = vrot.slane %v2509, 4
        %v2513 = vshrl.u32 %v2247, 16
        %v2515 = vrot.slane %v2513, 5
        %v2516 = vshll.u32 %v2247, 16
        %v2518 = vrot.slane %v2516, 6
        %v2519 = vor.u32 %v2515, %v2518
        %v2520 = vsel %vm758, %v2511, %v2519
        %v2522 = vshrl.u32 %v2248, 16
        %v2524 = vrot.slane %v2522, 5
        %v2525 = vshll.u32 %v2248, 16
        %v2527 = vrot.slane %v2525, 6
        %v2528 = vor.u32 %v2524, %v2527
        %v2529 = vrot.slane %v2528, 4
        %v2531 = vshrl.u32 %v2249, 16
        %v2533 = vrot.slane %v2531, 5
        %v2534 = vshll.u32 %v2249, 16
        %v2536 = vrot.slane %v2534, 6
        %v2537 = vor.u32 %v2533, %v2536
        %v2538 = vsel %vm758, %v2529, %v2537
        %v2539 = vrot.slane %v2537, 4
        %v2541 = vshrl.u32 %v2250, 16
        %v2543 = vrot.slane %v2541, 5
        %v2544 = vshll.u32 %v2250, 16
        %v2546 = vrot.slane %v2544, 6
        %v2547 = vor.u32 %v2543, %v2546
        %v2548 = vsel %vm758, %v2539, %v2547
        %v2550 = vshrl.u32 %v2251, 16
        %v2552 = vrot.slane %v2550, 5
        %v2553 = vshll.u32 %v2251, 16
        %v2555 = vrot.slane %v2553, 6
        %v2556 = vor.u32 %v2552, %v2555
        %v2557 = vrot.slane %v2556, 4
        %v2559 = vshrl.u32 %v2252, 16
        %v2561 = vrot.slane %v2559, 5
        %v2562 = vshll.u32 %v2252, 16
        %v2564 = vrot.slane %v2562, 6
        %v2565 = vor.u32 %v2561, %v2564
        %v2566 = vsel %vm758, %v2557, %v2565
        %v2567 = vrot.slane %v2565, 4
        %v2569 = vshrl.u32 %v2253, 16
        %v2571 = vrot.slane %v2569, 5
        %v2572 = vshll.u32 %v2253, 16
        %v2574 = vrot.slane %v2572, 6
        %v2575 = vor.u32 %v2571, %v2574
        %v2576 = vsel %vm758, %v2567, %v2575
        %v2578 = vshrl.u32 %v2254, 16
        %v2580 = vrot.slane %v2578, 5
        %v2581 = vshll.u32 %v2254, 16
        %v2583 = vrot.slane %v2581, 6
        %v2584 = vor.u32 %v2580, %v2583
        %v2585 = vrot.slane %v2584, 4
        %v2587 = vshrl.u32 %v2255, 16
        %v2589 = vrot.slane %v2587, 5
        %v2590 = vshll.u32 %v2255, 16
        %v2592 = vrot.slane %v2590, 6
        %v2593 = vor.u32 %v2589, %v2592
        %v2594 = vsel %vm758, %v2585, %v2593
        %v2595 = vrot.slane %v2593, 4
        %v2597 = vshrl.u32 %v2256, 16
        %v2599 = vrot.slane %v2597, 5
        %v2600 = vshll.u32 %v2256, 16
        %v2602 = vrot.slane %v2600, 6
        %v2603 = vor.u32 %v2599, %v2602
        %v2604 = vsel %vm758, %v2595, %v2603
        %v2606 = vshrl.u32 %v2257, 16
        %v2608 = vrot.slane %v2606, 5
        %v2609 = vshll.u32 %v2257, 16
        %v2611 = vrot.slane %v2609, 6
        %v2612 = vor.u32 %v2608, %v2611
        %v2613 = vrot.slane %v2612, 4
        %v2615 = vshrl.u32 %v2258, 16
        %v2617 = vrot.slane %v2615, 5
        %v2618 = vshll.u32 %v2258, 16
        %v2620 = vrot.slane %v2618, 6
        %v2621 = vor.u32 %v2617, %v2620
        %v2622 = vsel %vm758, %v2613, %v2621
        %v2623 = vrot.slane %v2621, 4
        %v2625 = vshrl.u32 %v2259, 16
        %v2627 = vrot.slane %v2625, 5
        %v2628 = vshll.u32 %v2259, 16
        %v2630 = vrot.slane %v2628, 6
        %v2631 = vor.u32 %v2627, %v2630
        %v2632 = vsel %vm758, %v2623, %v2631
        %v2634 = vshrl.u32 %v2260, 16
        %v2636 = vrot.slane %v2634, 5
        %v2637 = vshll.u32 %v2260, 16
        %v2639 = vrot.slane %v2637, 6
        %v2640 = vor.u32 %v2636, %v2639
        %v2641 = vrot.slane %v2640, 4
        %v2643 = vshrl.u32 %v2261, 16
        %v2645 = vrot.slane %v2643, 5
        %v2646 = vshll.u32 %v2261, 16
        %v2648 = vrot.slane %v2646, 6
        %v2649 = vor.u32 %v2645, %v2648
        %v2650 = vsel %vm758, %v2641, %v2649
        %v2651 = vrot.slane %v2649, 4
        %v2653 = vshrl.u32 %v2262, 16
        %v2655 = vrot.slane %v2653, 5
        %v2656 = vshll.u32 %v2262, 16
        %v2658 = vrot.slane %v2656, 6
        %v2659 = vor.u32 %v2655, %v2658
        %v2660 = vsel %vm758, %v2651, %v2659
        %v2662 = vshrl.u32 %v2263, 16
        %v2664 = vrot.slane %v2662, 5
        %v2665 = vshll.u32 %v2263, 16
        %v2667 = vrot.slane %v2665, 6
        %v2668 = vor.u32 %v2664, %v2667
        %v2669 = vrot.slane %v2668, 4
        %v2671 = vshrl.u32 %v2264, 16
        %v2673 = vrot.slane %v2671, 5
        %v2674 = vshll.u32 %v2264, 16
        %v2676 = vrot.slane %v2674, 6
        %v2677 = vor.u32 %v2673, %v2676
        %v2678 = vsel %vm758, %v2669, %v2677
        %v2679 = vrot.slane %v2677, 4
        %v2681 = vshrl.u32 %v2265, 16
        %v2683 = vrot.slane %v2681, 5
        %v2684 = vshll.u32 %v2265, 16
        %v2686 = vrot.slane %v2684, 6
        %v2687 = vor.u32 %v2683, %v2686
        %v2688 = vsel %vm758, %v2679, %v2687
        %v2690 = vshrl.u32 %v2266, 16
        %v2692 = vrot.slane %v2690, 5
        %v2693 = vshll.u32 %v2266, 16
        %v2695 = vrot.slane %v2693, 6
        %v2696 = vor.u32 %v2692, %v2695
        %v2697 = vrot.slane %v2696, 4
        %v2699 = vshrl.u32 %v2267, 16
        %v2701 = vrot.slane %v2699, 5
        %v2702 = vshll.u32 %v2267, 16
        %v2704 = vrot.slane %v2702, 6
        %v2705 = vor.u32 %v2701, %v2704
        %v2706 = vsel %vm758, %v2697, %v2705
        %v2707 = vrot.slane %v2705, 4
        %v2709 = vshrl.u32 %v2268, 16
        %v2711 = vrot.slane %v2709, 5
        %v2712 = vshll.u32 %v2268, 16
        %v2714 = vrot.slane %v2712, 6
        %v2715 = vor.u32 %v2711, %v2714
        %v2716 = vsel %vm758, %v2707, %v2715
        %v2717 = vunpack.c.l.b16 %v2286
        %v2718 = vunpack.c.l.b16 %v2296
        %v2719 = vunpack.c.l.b16 %v2314
        %v2720 = vunpack.c.l.b16 %v2324
        %v2721 = vunpack.c.l.b16 %v2342
        %v2722 = vunpack.c.l.b16 %v2352
        %v2723 = vunpack.c.l.b16 %v2370
        %v2724 = vunpack.c.l.b16 %v2380
        %v2725 = vunpack.c.l.b16 %v2398
        %v2726 = vunpack.c.l.b16 %v2408
        %v2727 = vunpack.c.l.b16 %v2426
        %v2728 = vunpack.c.l.b16 %v2436
        %v2729 = vunpack.c.l.b16 %v2454
        %v2730 = vunpack.c.l.b16 %v2464
        %v2731 = vunpack.c.l.b16 %v2482
        %v2732 = vunpack.c.l.b16 %v2492
        %v2733 = vunpack.c.l.b16 %v2510
        %v2734 = vunpack.c.l.b16 %v2520
        %v2735 = vunpack.c.l.b16 %v2538
        %v2736 = vunpack.c.l.b16 %v2548
        %v2737 = vunpack.c.l.b16 %v2566
        %v2738 = vunpack.c.l.b16 %v2576
        %v2739 = vunpack.c.l.b16 %v2594
        %v2740 = vunpack.c.l.b16 %v2604
        %v2741 = vunpack.c.l.b16 %v2622
        %v2742 = vunpack.c.l.b16 %v2632
        %v2743 = vunpack.c.l.b16 %v2650
        %v2744 = vunpack.c.l.b16 %v2660
        %v2745 = vunpack.c.l.b16 %v2678
        %v2746 = vunpack.c.l.b16 %v2688
        %v2747 = vunpack.c.l.b16 %v2706
        %v2748 = vunpack.c.l.b16 %v2716
        %v2749 = vpack.c.b16 %v2718, %v2717
        %v2750 = vpack.c.b16 %v2720, %v2719
        %v2751 = vpack.c.b16 %v2722, %v2721
        %v2752 = vpack.c.b16 %v2724, %v2723
        %v2753 = vpack.c.b16 %v2726, %v2725
        %v2754 = vpack.c.b16 %v2728, %v2727
        %v2755 = vpack.c.b16 %v2730, %v2729
        %v2756 = vpack.c.b16 %v2732, %v2731
        %v2757 = vpack.c.b16 %v2734, %v2733
        %v2758 = vpack.c.b16 %v2736, %v2735
        %v2759 = vpack.c.b16 %v2738, %v2737
        %v2760 = vpack.c.b16 %v2740, %v2739
        %v2761 = vpack.c.b16 %v2742, %v2741
        %v2762 = vpack.c.b16 %v2744, %v2743
        %v2763 = vpack.c.b16 %v2746, %v2745
        %v2764 = vpack.c.b16 %v2748, %v2747
        %2765 = vrot.lane.b32.xlu0 %v2749, 96
        %v2766 = vpop.permute.xlu0 %2765
        %2767 = vrot.lane.b32.xlu0 %v2750, 96
        %v2768 = vpop.permute.xlu0 %2767
        %2769 = vrot.lane.b32.xlu0 %v2751, 96
        %v2770 = vpop.permute.xlu0 %2769
        %2771 = vrot.lane.b32.xlu0 %v2752, 96
        %v2772 = vpop.permute.xlu0 %2771
        %2773 = vrot.lane.b32.xlu0 %v2753, 96
        %v2774 = vpop.permute.xlu0 %2773
        %2775 = vrot.lane.b32.xlu0 %v2754, 96
        %v2776 = vpop.permute.xlu0 %2775
        %2777 = vrot.lane.b32.xlu0 %v2755, 96
        %v2778 = vpop.permute.xlu0 %2777
        %2779 = vrot.lane.b32.xlu0 %v2756, 96
        %v2780 = vpop.permute.xlu0 %2779
        %2781 = vrot.lane.b32.xlu0 %v2757, 96
        %v2782 = vpop.permute.xlu0 %2781
        %2783 = vrot.lane.b32.xlu0 %v2758, 96
        %v2784 = vpop.permute.xlu0 %2783
        %2785 = vrot.lane.b32.xlu0 %v2759, 96
        %v2786 = vpop.permute.xlu0 %2785
        %2787 = vrot.lane.b32.xlu0 %v2760, 96
        %v2788 = vpop.permute.xlu0 %2787
        %2789 = vrot.lane.b32.xlu0 %v2761, 96
        %v2790 = vpop.permute.xlu0 %2789
        %2791 = vrot.lane.b32.xlu0 %v2762, 96
        %v2792 = vpop.permute.xlu0 %2791
        %2793 = vrot.lane.b32.xlu0 %v2763, 96
        %v2794 = vpop.permute.xlu0 %2793
        %2795 = vrot.lane.b32.xlu0 %v2764, 96
        %v2796 = vpop.permute.xlu0 %2795
        %vm2813 = vcmask 1048320
        %2814 = vst.msk [vmem:[#allocation3] sm:$0xff] %vm2813, %v2766
        %2815 = vst.msk [vmem:[#allocation3 + $0x38] sm:$0xff] %vm2813, %v2768
        %2816 = vst.msk [vmem:[#allocation3 + $0x70] sm:$0xff] %vm2813, %v2770
        %2817 = vst.msk [vmem:[#allocation3 + $0xa8] sm:$0xff] %vm2813, %v2772
        %2818 = vst.msk [vmem:[#allocation3 + $0xe0] sm:$0xff] %vm2813, %v2774
        %2819 = vst.msk [vmem:[#allocation3 + $0x118] sm:$0xff] %vm2813, %v2776
        %2820 = vst.msk [vmem:[#allocation3 + $0x150] sm:$0xff] %vm2813, %v2778
        %2821 = vst.msk [vmem:[#allocation3 + $0x188] sm:$0xff] %vm2813, %v2780
        %2822 = vst.msk [vmem:[#allocation3 + $0x1c0] sm:$0xff] %vm2813, %v2782
        %2823 = vst.msk [vmem:[#allocation3 + $0x1f8] sm:$0xff] %vm2813, %v2784
        %2824 = vst.msk [vmem:[#allocation3 + $0x230] sm:$0xff] %vm2813, %v2786
        %2825 = vst.msk [vmem:[#allocation3 + $0x268] sm:$0xff] %vm2813, %v2788
        %2826 = vst.msk [vmem:[#allocation3 + $0x2a0] sm:$0xff] %vm2813, %v2790
        %2827 = vst.msk [vmem:[#allocation3 + $0x2d8] sm:$0xff] %vm2813, %v2792
        %2828 = vst.msk [vmem:[#allocation3 + $0x310] sm:$0xff] %vm2813, %v2794
        %2829 = vst.msk [vmem:[#allocation3 + $0x348] sm:$0xff] %vm2813, %v2796
        %v2830 = vld [vmem:[%s255] sm:$0xc]
        %v2831 = vld [vmem:[%s255 + $0x4] sm:$0xf]
        %v2832 = vld [vmem:[%s255 + $0x8] sm:$0x3]
        %v2833 = vld [vmem:[%s255 + $0xc] sm:$0xc]
        %v2834 = vld [vmem:[%s255 + $0x10] sm:$0xf]
        %v2835 = vld [vmem:[%s255 + $0x14] sm:$0x3]
        %v2836 = vld [vmem:[%s255 + $0x18] sm:$0xc]
        %v2837 = vld [vmem:[%s255 + $0x1c] sm:$0xf]
        %v2838 = vld [vmem:[%s255 + $0x20] sm:$0x3]
        %v2839 = vld [vmem:[%s255 + $0x24] sm:$0xc]
        %v2840 = vld [vmem:[%s255 + $0x28] sm:$0xf]
        %v2841 = vld [vmem:[%s255 + $0x2c] sm:$0x3]
        %v2842 = vld [vmem:[%s255 + $0x30] sm:$0xc]
        %v2843 = vld [vmem:[%s255 + $0x34] sm:$0xf]
        %v2844 = vld [vmem:[%s255 + $0x38] sm:$0x3]
        %v2845 = vld [vmem:[%s255 + $0x3c] sm:$0xc]
        %v2846 = vld [vmem:[%s255 + $0x40] sm:$0xf]
        %v2847 = vld [vmem:[%s255 + $0x44] sm:$0x3]
        %v2848 = vld [vmem:[%s255 + $0x48] sm:$0xc]
        %v2849 = vld [vmem:[%s255 + $0x4c] sm:$0xf]
        %v2850 = vld [vmem:[%s255 + $0x50] sm:$0x3]
        %v2851 = vld [vmem:[%s255 + $0x54] sm:$0xc]
        %v2852 = vld [vmem:[%s255 + $0x58] sm:$0xf]
        %v2853 = vld [vmem:[%s255 + $0x5c] sm:$0x3]
        %v2854 = vld [vmem:[%s255 + $0x60] sm:$0xc]
        %v2855 = vld [vmem:[%s255 + $0x64] sm:$0xf]
        %v2856 = vld [vmem:[%s255 + $0x68] sm:$0x3]
        %v2857 = vld [vmem:[%s255 + $0x6c] sm:$0xc]
        %v2858 = vld [vmem:[%s255 + $0x70] sm:$0xf]
        %v2859 = vld [vmem:[%s255 + $0x74] sm:$0x3]
        %v2860 = vld [vmem:[%s255 + $0x78] sm:$0xc]
        %v2861 = vld [vmem:[%s255 + $0x7c] sm:$0xf]
        %v2862 = vld [vmem:[%s255 + $0x80] sm:$0x3]
        %v2863 = vld [vmem:[%s255 + $0x84] sm:$0xc]
        %v2864 = vld [vmem:[%s255 + $0x88] sm:$0xf]
        %v2865 = vld [vmem:[%s255 + $0x8c] sm:$0x3]
        %v2866 = vld [vmem:[%s255 + $0x90] sm:$0xc]
        %v2867 = vld [vmem:[%s255 + $0x94] sm:$0xf]
        %v2868 = vld [vmem:[%s255 + $0x98] sm:$0x3]
        %v2869 = vld [vmem:[%s255 + $0x9c] sm:$0xc]
        %v2870 = vld [vmem:[%s255 + $0xa0] sm:$0xf]
        %v2871 = vld [vmem:[%s255 + $0xa4] sm:$0x3]
        %v2872 = vld [vmem:[%s255 + $0xa8] sm:$0xc]
        %v2873 = vld [vmem:[%s255 + $0xac] sm:$0xf]
        %v2874 = vld [vmem:[%s255 + $0xb0] sm:$0x3]
        %v2875 = vld [vmem:[%s255 + $0xb4] sm:$0xc]
        %v2876 = vld [vmem:[%s255 + $0xb8] sm:$0xf]
        %v2877 = vld [vmem:[%s255 + $0xbc] sm:$0x3]
        %v2926 = vrot.slane %v2830, 6
        %v2927 = vrot.slane %v2926, 4
        %v2928 = vrot.slane %v2831, 6
        %v2929 = vsel %vm530, %v2927, %v2928
        %v2930 = vrot.slane %v2928, 4
        %v2931 = vrot.slane %v2832, 6
        %v2932 = vsel %vm530, %v2930, %v2931
        %v2933 = vrot.slane %v2833, 6
        %v2934 = vrot.slane %v2933, 4
        %v2935 = vrot.slane %v2834, 6
        %v2936 = vsel %vm530, %v2934, %v2935
        %v2937 = vrot.slane %v2935, 4
        %v2938 = vrot.slane %v2835, 6
        %v2939 = vsel %vm530, %v2937, %v2938
        %v2940 = vrot.slane %v2836, 6
        %v2941 = vrot.slane %v2940, 4
        %v2942 = vrot.slane %v2837, 6
        %v2943 = vsel %vm530, %v2941, %v2942
        %v2944 = vrot.slane %v2942, 4
        %v2945 = vrot.slane %v2838, 6
        %v2946 = vsel %vm530, %v2944, %v2945
        %v2947 = vrot.slane %v2839, 6
        %v2948 = vrot.slane %v2947, 4
        %v2949 = vrot.slane %v2840, 6
        %v2950 = vsel %vm530, %v2948, %v2949
        %v2951 = vrot.slane %v2949, 4
        %v2952 = vrot.slane %v2841, 6
        %v2953 = vsel %vm530, %v2951, %v2952
        %v2954 = vrot.slane %v2842, 6
        %v2955 = vrot.slane %v2954, 4
        %v2956 = vrot.slane %v2843, 6
        %v2957 = vsel %vm530, %v2955, %v2956
        %v2958 = vrot.slane %v2956, 4
        %v2959 = vrot.slane %v2844, 6
        %v2960 = vsel %vm530, %v2958, %v2959
        %v2961 = vrot.slane %v2845, 6
        %v2962 = vrot.slane %v2961, 4
        %v2963 = vrot.slane %v2846, 6
        %v2964 = vsel %vm530, %v2962, %v2963
        %v2965 = vrot.slane %v2963, 4
        %v2966 = vrot.slane %v2847, 6
        %v2967 = vsel %vm530, %v2965, %v2966
        %v2968 = vrot.slane %v2848, 6
        %v2969 = vrot.slane %v2968, 4
        %v2970 = vrot.slane %v2849, 6
        %v2971 = vsel %vm530, %v2969, %v2970
        %v2972 = vrot.slane %v2970, 4
        %v2973 = vrot.slane %v2850, 6
        %v2974 = vsel %vm530, %v2972, %v2973
        %v2975 = vrot.slane %v2851, 6
        %v2976 = vrot.slane %v2975, 4
        %v2977 = vrot.slane %v2852, 6
        %v2978 = vsel %vm530, %v2976, %v2977
        %v2979 = vrot.slane %v2977, 4
        %v2980 = vrot.slane %v2853, 6
        %v2981 = vsel %vm530, %v2979, %v2980
        %v2982 = vrot.slane %v2854, 6
        %v2983 = vrot.slane %v2982, 4
        %v2984 = vrot.slane %v2855, 6
        %v2985 = vsel %vm530, %v2983, %v2984
        %v2986 = vrot.slane %v2984, 4
        %v2987 = vrot.slane %v2856, 6
        %v2988 = vsel %vm530, %v2986, %v2987
        %v2989 = vrot.slane %v2857, 6
        %v2990 = vrot.slane %v2989, 4
        %v2991 = vrot.slane %v2858, 6
        %v2992 = vsel %vm530, %v2990, %v2991
        %v2993 = vrot.slane %v2991, 4
        %v2994 = vrot.slane %v2859, 6
        %v2995 = vsel %vm530, %v2993, %v2994
        %v2996 = vrot.slane %v2860, 6
        %v2997 = vrot.slane %v2996, 4
        %v2998 = vrot.slane %v2861, 6
        %v2999 = vsel %vm530, %v2997, %v2998
        %v3000 = vrot.slane %v2998, 4
        %v3001 = vrot.slane %v2862, 6
        %v3002 = vsel %vm530, %v3000, %v3001
        %v3003 = vrot.slane %v2863, 6
        %v3004 = vrot.slane %v3003, 4
        %v3005 = vrot.slane %v2864, 6
        %v3006 = vsel %vm530, %v3004, %v3005
        %v3007 = vrot.slane %v3005, 4
        %v3008 = vrot.slane %v2865, 6
        %v3009 = vsel %vm530, %v3007, %v3008
        %v3010 = vrot.slane %v2866, 6
        %v3011 = vrot.slane %v3010, 4
        %v3012 = vrot.slane %v2867, 6
        %v3013 = vsel %vm530, %v3011, %v3012
        %v3014 = vrot.slane %v3012, 4
        %v3015 = vrot.slane %v2868, 6
        %v3016 = vsel %vm530, %v3014, %v3015
        %v3017 = vrot.slane %v2869, 6
        %v3018 = vrot.slane %v3017, 4
        %v3019 = vrot.slane %v2870, 6
        %v3020 = vsel %vm530, %v3018, %v3019
        %v3021 = vrot.slane %v3019, 4
        %v3022 = vrot.slane %v2871, 6
        %v3023 = vsel %vm530, %v3021, %v3022
        %v3024 = vrot.slane %v2872, 6
        %v3025 = vrot.slane %v3024, 4
        %v3026 = vrot.slane %v2873, 6
        %v3027 = vsel %vm530, %v3025, %v3026
        %v3028 = vrot.slane %v3026, 4
        %v3029 = vrot.slane %v2874, 6
        %v3030 = vsel %vm530, %v3028, %v3029
        %v3031 = vrot.slane %v2875, 6
        %v3032 = vrot.slane %v3031, 4
        %v3033 = vrot.slane %v2876, 6
        %v3034 = vsel %vm530, %v3032, %v3033
        %v3035 = vrot.slane %v3033, 4
        %v3036 = vrot.slane %v2877, 6
        %v3037 = vsel %vm530, %v3035, %v3036
        %v3038 = vunpack.c.l.b16 %v2929
        %v3039 = vunpack.c.l.b16 %v2932
        %v3040 = vunpack.c.l.b16 %v2936
        %v3041 = vunpack.c.l.b16 %v2939
        %v3042 = vunpack.c.l.b16 %v2943
        %v3043 = vunpack.c.l.b16 %v2946
        %v3044 = vunpack.c.l.b16 %v2950
        %v3045 = vunpack.c.l.b16 %v2953
        %v3046 = vunpack.c.l.b16 %v2957
        %v3047 = vunpack.c.l.b16 %v2960
        %v3048 = vunpack.c.l.b16 %v2964
        %v3049 = vunpack.c.l.b16 %v2967
        %v3050 = vunpack.c.l.b16 %v2971
        %v3051 = vunpack.c.l.b16 %v2974
        %v3052 = vunpack.c.l.b16 %v2978
        %v3053 = vunpack.c.l.b16 %v2981
        %v3054 = vunpack.c.l.b16 %v2985
        %v3055 = vunpack.c.l.b16 %v2988
        %v3056 = vunpack.c.l.b16 %v2992
        %v3057 = vunpack.c.l.b16 %v2995
        %v3058 = vunpack.c.l.b16 %v2999
        %v3059 = vunpack.c.l.b16 %v3002
        %v3060 = vunpack.c.l.b16 %v3006
        %v3061 = vunpack.c.l.b16 %v3009
        %v3062 = vunpack.c.l.b16 %v3013
        %v3063 = vunpack.c.l.b16 %v3016
        %v3064 = vunpack.c.l.b16 %v3020
        %v3065 = vunpack.c.l.b16 %v3023
        %v3066 = vunpack.c.l.b16 %v3027
        %v3067 = vunpack.c.l.b16 %v3030
        %v3068 = vunpack.c.l.b16 %v3034
        %v3069 = vunpack.c.l.b16 %v3037
        %v3070 = vpack.c.b16 %v3039, %v3038
        %v3071 = vpack.c.b16 %v3041, %v3040
        %v3072 = vpack.c.b16 %v3043, %v3042
        %v3073 = vpack.c.b16 %v3045, %v3044
        %v3074 = vpack.c.b16 %v3047, %v3046
        %v3075 = vpack.c.b16 %v3049, %v3048
        %v3076 = vpack.c.b16 %v3051, %v3050
        %v3077 = vpack.c.b16 %v3053, %v3052
        %v3078 = vpack.c.b16 %v3055, %v3054
        %v3079 = vpack.c.b16 %v3057, %v3056
        %v3080 = vpack.c.b16 %v3059, %v3058
        %v3081 = vpack.c.b16 %v3061, %v3060
        %v3082 = vpack.c.b16 %v3063, %v3062
        %v3083 = vpack.c.b16 %v3065, %v3064
        %v3084 = vpack.c.b16 %v3067, %v3066
        %v3085 = vpack.c.b16 %v3069, %v3068
        %3102 = vst.msk [vmem:[#allocation3 + $0x8] sm:$0xff] %vm1271, %v3070
        %3103 = vst.msk [vmem:[#allocation3 + $0x40] sm:$0xff] %vm1271, %v3071
        %3104 = vst.msk [vmem:[#allocation3 + $0x78] sm:$0xff] %vm1271, %v3072
        %3105 = vst.msk [vmem:[#allocation3 + $0xb0] sm:$0xff] %vm1271, %v3073
        %3106 = vst.msk [vmem:[#allocation3 + $0xe8] sm:$0xff] %vm1271, %v3074
        %3107 = vst.msk [vmem:[#allocation3 + $0x120] sm:$0xff] %vm1271, %v3075
        %3108 = vst.msk [vmem:[#allocation3 + $0x158] sm:$0xff] %vm1271, %v3076
        %3109 = vst.msk [vmem:[#allocation3 + $0x190] sm:$0xff] %vm1271, %v3077
        %3110 = vst.msk [vmem:[#allocation3 + $0x1c8] sm:$0xff] %vm1271, %v3078
        %3111 = vst.msk [vmem:[#allocation3 + $0x200] sm:$0xff] %vm1271, %v3079
        %3112 = vst.msk [vmem:[#allocation3 + $0x238] sm:$0xff] %vm1271, %v3080
        %3113 = vst.msk [vmem:[#allocation3 + $0x270] sm:$0xff] %vm1271, %v3081
        %3114 = vst.msk [vmem:[#allocation3 + $0x2a8] sm:$0xff] %vm1271, %v3082
        %3115 = vst.msk [vmem:[#allocation3 + $0x2e0] sm:$0xff] %vm1271, %v3083
        %3116 = vst.msk [vmem:[#allocation3 + $0x318] sm:$0xff] %vm1271, %v3084
        %3117 = vst.msk [vmem:[#allocation3 + $0x350] sm:$0xff] %vm1271, %v3085
        %v3118 = vld [vmem:[%s255] sm:$0xc]
        %v3119 = vld [vmem:[%s255 + $0x4] sm:$0xf]
        %v3120 = vld [vmem:[%s255 + $0x8] sm:$0x7]
        %v3121 = vld [vmem:[%s255 + $0xc] sm:$0xc]
        %v3122 = vld [vmem:[%s255 + $0x10] sm:$0xf]
        %v3123 = vld [vmem:[%s255 + $0x14] sm:$0x7]
        %v3124 = vld [vmem:[%s255 + $0x18] sm:$0xc]
        %v3125 = vld [vmem:[%s255 + $0x1c] sm:$0xf]
        %v3126 = vld [vmem:[%s255 + $0x20] sm:$0x7]
        %v3127 = vld [vmem:[%s255 + $0x24] sm:$0xc]
        %v3128 = vld [vmem:[%s255 + $0x28] sm:$0xf]
        %v3129 = vld [vmem:[%s255 + $0x2c] sm:$0x7]
        %v3130 = vld [vmem:[%s255 + $0x30] sm:$0xc]
        %v3131 = vld [vmem:[%s255 + $0x34] sm:$0xf]
        %v3132 = vld [vmem:[%s255 + $0x38] sm:$0x7]
        %v3133 = vld [vmem:[%s255 + $0x3c] sm:$0xc]
        %v3134 = vld [vmem:[%s255 + $0x40] sm:$0xf]
        %v3135 = vld [vmem:[%s255 + $0x44] sm:$0x7]
        %v3136 = vld [vmem:[%s255 + $0x48] sm:$0xc]
        %v3137 = vld [vmem:[%s255 + $0x4c] sm:$0xf]
        %v3138 = vld [vmem:[%s255 + $0x50] sm:$0x7]
        %v3139 = vld [vmem:[%s255 + $0x54] sm:$0xc]
        %v3140 = vld [vmem:[%s255 + $0x58] sm:$0xf]
        %v3141 = vld [vmem:[%s255 + $0x5c] sm:$0x7]
        %v3142 = vld [vmem:[%s255 + $0x60] sm:$0xc]
        %v3143 = vld [vmem:[%s255 + $0x64] sm:$0xf]
        %v3144 = vld [vmem:[%s255 + $0x68] sm:$0x7]
        %v3145 = vld [vmem:[%s255 + $0x6c] sm:$0xc]
        %v3146 = vld [vmem:[%s255 + $0x70] sm:$0xf]
        %v3147 = vld [vmem:[%s255 + $0x74] sm:$0x7]
        %v3148 = vld [vmem:[%s255 + $0x78] sm:$0xc]
        %v3149 = vld [vmem:[%s255 + $0x7c] sm:$0xf]
        %v3150 = vld [vmem:[%s255 + $0x80] sm:$0x7]
        %v3151 = vld [vmem:[%s255 + $0x84] sm:$0xc]
        %v3152 = vld [vmem:[%s255 + $0x88] sm:$0xf]
        %v3153 = vld [vmem:[%s255 + $0x8c] sm:$0x7]
        %v3154 = vld [vmem:[%s255 + $0x90] sm:$0xc]
        %v3155 = vld [vmem:[%s255 + $0x94] sm:$0xf]
        %v3156 = vld [vmem:[%s255 + $0x98] sm:$0x7]
        %v3157 = vld [vmem:[%s255 + $0x9c] sm:$0xc]
        %v3158 = vld [vmem:[%s255 + $0xa0] sm:$0xf]
        %v3159 = vld [vmem:[%s255 + $0xa4] sm:$0x7]
        %v3160 = vld [vmem:[%s255 + $0xa8] sm:$0xc]
        %v3161 = vld [vmem:[%s255 + $0xac] sm:$0xf]
        %v3162 = vld [vmem:[%s255 + $0xb0] sm:$0x7]
        %v3163 = vld [vmem:[%s255 + $0xb4] sm:$0xc]
        %v3164 = vld [vmem:[%s255 + $0xb8] sm:$0xf]
        %v3165 = vld [vmem:[%s255 + $0xbc] sm:$0x7]
        %v3167 = vshrl.u32 %v3118, 16
        %v3169 = vrot.slane %v3167, 6
        %v3170 = vshll.u32 %v3118, 16
        %v3172 = vrot.slane %v3170, 7
        %v3173 = vor.u32 %v3169, %v3172
        %v3174 = vrot.slane %v3173, 4
        %v3176 = vshrl.u32 %v3119, 16
        %v3178 = vrot.slane %v3176, 6
        %v3179 = vshll.u32 %v3119, 16
        %v3181 = vrot.slane %v3179, 7
        %v3182 = vor.u32 %v3178, %v3181
        %v3183 = vsel %vm1659, %v3174, %v3182
        %v3184 = vrot.slane %v3182, 4
        %v3186 = vshrl.u32 %v3120, 16
        %v3188 = vrot.slane %v3186, 6
        %v3189 = vshll.u32 %v3120, 16
        %v3191 = vrot.slane %v3189, 7
        %v3192 = vor.u32 %v3188, %v3191
        %v3193 = vsel %vm1659, %v3184, %v3192
        %v3195 = vshrl.u32 %v3121, 16
        %v3197 = vrot.slane %v3195, 6
        %v3198 = vshll.u32 %v3121, 16
        %v3200 = vrot.slane %v3198, 7
        %v3201 = vor.u32 %v3197, %v3200
        %v3202 = vrot.slane %v3201, 4
        %v3204 = vshrl.u32 %v3122, 16
        %v3206 = vrot.slane %v3204, 6
        %v3207 = vshll.u32 %v3122, 16
        %v3209 = vrot.slane %v3207, 7
        %v3210 = vor.u32 %v3206, %v3209
        %v3211 = vsel %vm1659, %v3202, %v3210
        %v3212 = vrot.slane %v3210, 4
        %v3214 = vshrl.u32 %v3123, 16
        %v3216 = vrot.slane %v3214, 6
        %v3217 = vshll.u32 %v3123, 16
        %v3219 = vrot.slane %v3217, 7
        %v3220 = vor.u32 %v3216, %v3219
        %v3221 = vsel %vm1659, %v3212, %v3220
        %v3223 = vshrl.u32 %v3124, 16
        %v3225 = vrot.slane %v3223, 6
        %v3226 = vshll.u32 %v3124, 16
        %v3228 = vrot.slane %v3226, 7
        %v3229 = vor.u32 %v3225, %v3228
        %v3230 = vrot.slane %v3229, 4
        %v3232 = vshrl.u32 %v3125, 16
        %v3234 = vrot.slane %v3232, 6
        %v3235 = vshll.u32 %v3125, 16
        %v3237 = vrot.slane %v3235, 7
        %v3238 = vor.u32 %v3234, %v3237
        %v3239 = vsel %vm1659, %v3230, %v3238
        %v3240 = vrot.slane %v3238, 4
        %v3242 = vshrl.u32 %v3126, 16
        %v3244 = vrot.slane %v3242, 6
        %v3245 = vshll.u32 %v3126, 16
        %v3247 = vrot.slane %v3245, 7
        %v3248 = vor.u32 %v3244, %v3247
        %v3249 = vsel %vm1659, %v3240, %v3248
        %v3251 = vshrl.u32 %v3127, 16
        %v3253 = vrot.slane %v3251, 6
        %v3254 = vshll.u32 %v3127, 16
        %v3256 = vrot.slane %v3254, 7
        %v3257 = vor.u32 %v3253, %v3256
        %v3258 = vrot.slane %v3257, 4
        %v3260 = vshrl.u32 %v3128, 16
        %v3262 = vrot.slane %v3260, 6
        %v3263 = vshll.u32 %v3128, 16
        %v3265 = vrot.slane %v3263, 7
        %v3266 = vor.u32 %v3262, %v3265
        %v3267 = vsel %vm1659, %v3258, %v3266
        %v3268 = vrot.slane %v3266, 4
        %v3270 = vshrl.u32 %v3129, 16
        %v3272 = vrot.slane %v3270, 6
        %v3273 = vshll.u32 %v3129, 16
        %v3275 = vrot.slane %v3273, 7
        %v3276 = vor.u32 %v3272, %v3275
        %v3277 = vsel %vm1659, %v3268, %v3276
        %v3279 = vshrl.u32 %v3130, 16
        %v3281 = vrot.slane %v3279, 6
        %v3282 = vshll.u32 %v3130, 16
        %v3284 = vrot.slane %v3282, 7
        %v3285 = vor.u32 %v3281, %v3284
        %v3286 = vrot.slane %v3285, 4
        %v3288 = vshrl.u32 %v3131, 16
        %v3290 = vrot.slane %v3288, 6
        %v3291 = vshll.u32 %v3131, 16
        %v3293 = vrot.slane %v3291, 7
        %v3294 = vor.u32 %v3290, %v3293
        %v3295 = vsel %vm1659, %v3286, %v3294
        %v3296 = vrot.slane %v3294, 4
        %v3298 = vshrl.u32 %v3132, 16
        %v3300 = vrot.slane %v3298, 6
        %v3301 = vshll.u32 %v3132, 16
        %v3303 = vrot.slane %v3301, 7
        %v3304 = vor.u32 %v3300, %v3303
        %v3305 = vsel %vm1659, %v3296, %v3304
        %v3307 = vshrl.u32 %v3133, 16
        %v3309 = vrot.slane %v3307, 6
        %v3310 = vshll.u32 %v3133, 16
        %v3312 = vrot.slane %v3310, 7
        %v3313 = vor.u32 %v3309, %v3312
        %v3314 = vrot.slane %v3313, 4
        %v3316 = vshrl.u32 %v3134, 16
        %v3318 = vrot.slane %v3316, 6
        %v3319 = vshll.u32 %v3134, 16
        %v3321 = vrot.slane %v3319, 7
        %v3322 = vor.u32 %v3318, %v3321
        %v3323 = vsel %vm1659, %v3314, %v3322
        %v3324 = vrot.slane %v3322, 4
        %v3326 = vshrl.u32 %v3135, 16
        %v3328 = vrot.slane %v3326, 6
        %v3329 = vshll.u32 %v3135, 16
        %v3331 = vrot.slane %v3329, 7
        %v3332 = vor.u32 %v3328, %v3331
        %v3333 = vsel %vm1659, %v3324, %v3332
        %v3335 = vshrl.u32 %v3136, 16
        %v3337 = vrot.slane %v3335, 6
        %v3338 = vshll.u32 %v3136, 16
        %v3340 = vrot.slane %v3338, 7
        %v3341 = vor.u32 %v3337, %v3340
        %v3342 = vrot.slane %v3341, 4
        %v3344 = vshrl.u32 %v3137, 16
        %v3346 = vrot.slane %v3344, 6
        %v3347 = vshll.u32 %v3137, 16
        %v3349 = vrot.slane %v3347, 7
        %v3350 = vor.u32 %v3346, %v3349
        %v3351 = vsel %vm1659, %v3342, %v3350
        %v3352 = vrot.slane %v3350, 4
        %v3354 = vshrl.u32 %v3138, 16
        %v3356 = vrot.slane %v3354, 6
        %v3357 = vshll.u32 %v3138, 16
        %v3359 = vrot.slane %v3357, 7
        %v3360 = vor.u32 %v3356, %v3359
        %v3361 = vsel %vm1659, %v3352, %v3360
        %v3363 = vshrl.u32 %v3139, 16
        %v3365 = vrot.slane %v3363, 6
        %v3366 = vshll.u32 %v3139, 16
        %v3368 = vrot.slane %v3366, 7
        %v3369 = vor.u32 %v3365, %v3368
        %v3370 = vrot.slane %v3369, 4
        %v3372 = vshrl.u32 %v3140, 16
        %v3374 = vrot.slane %v3372, 6
        %v3375 = vshll.u32 %v3140, 16
        %v3377 = vrot.slane %v3375, 7
        %v3378 = vor.u32 %v3374, %v3377
        %v3379 = vsel %vm1659, %v3370, %v3378
        %v3380 = vrot.slane %v3378, 4
        %v3382 = vshrl.u32 %v3141, 16
        %v3384 = vrot.slane %v3382, 6
        %v3385 = vshll.u32 %v3141, 16
        %v3387 = vrot.slane %v3385, 7
        %v3388 = vor.u32 %v3384, %v3387
        %v3389 = vsel %vm1659, %v3380, %v3388
        %v3391 = vshrl.u32 %v3142, 16
        %v3393 = vrot.slane %v3391, 6
        %v3394 = vshll.u32 %v3142, 16
        %v3396 = vrot.slane %v3394, 7
        %v3397 = vor.u32 %v3393, %v3396
        %v3398 = vrot.slane %v3397, 4
        %v3400 = vshrl.u32 %v3143, 16
        %v3402 = vrot.slane %v3400, 6
        %v3403 = vshll.u32 %v3143, 16
        %v3405 = vrot.slane %v3403, 7
        %v3406 = vor.u32 %v3402, %v3405
        %v3407 = vsel %vm1659, %v3398, %v3406
        %v3408 = vrot.slane %v3406, 4
        %v3410 = vshrl.u32 %v3144, 16
        %v3412 = vrot.slane %v3410, 6
        %v3413 = vshll.u32 %v3144, 16
        %v3415 = vrot.slane %v3413, 7
        %v3416 = vor.u32 %v3412, %v3415
        %v3417 = vsel %vm1659, %v3408, %v3416
        %v3419 = vshrl.u32 %v3145, 16
        %v3421 = vrot.slane %v3419, 6
        %v3422 = vshll.u32 %v3145, 16
        %v3424 = vrot.slane %v3422, 7
        %v3425 = vor.u32 %v3421, %v3424
        %v3426 = vrot.slane %v3425, 4
        %v3428 = vshrl.u32 %v3146, 16
        %v3430 = vrot.slane %v3428, 6
        %v3431 = vshll.u32 %v3146, 16
        %v3433 = vrot.slane %v3431, 7
        %v3434 = vor.u32 %v3430, %v3433
        %v3435 = vsel %vm1659, %v3426, %v3434
        %v3436 = vrot.slane %v3434, 4
        %v3438 = vshrl.u32 %v3147, 16
        %v3440 = vrot.slane %v3438, 6
        %v3441 = vshll.u32 %v3147, 16
        %v3443 = vrot.slane %v3441, 7
        %v3444 = vor.u32 %v3440, %v3443
        %v3445 = vsel %vm1659, %v3436, %v3444
        %v3447 = vshrl.u32 %v3148, 16
        %v3449 = vrot.slane %v3447, 6
        %v3450 = vshll.u32 %v3148, 16
        %v3452 = vrot.slane %v3450, 7
        %v3453 = vor.u32 %v3449, %v3452
        %v3454 = vrot.slane %v3453, 4
        %v3456 = vshrl.u32 %v3149, 16
        %v3458 = vrot.slane %v3456, 6
        %v3459 = vshll.u32 %v3149, 16
        %v3461 = vrot.slane %v3459, 7
        %v3462 = vor.u32 %v3458, %v3461
        %v3463 = vsel %vm1659, %v3454, %v3462
        %v3464 = vrot.slane %v3462, 4
        %v3466 = vshrl.u32 %v3150, 16
        %v3468 = vrot.slane %v3466, 6
        %v3469 = vshll.u32 %v3150, 16
        %v3471 = vrot.slane %v3469, 7
        %v3472 = vor.u32 %v3468, %v3471
        %v3473 = vsel %vm1659, %v3464, %v3472
        %v3475 = vshrl.u32 %v3151, 16
        %v3477 = vrot.slane %v3475, 6
        %v3478 = vshll.u32 %v3151, 16
        %v3480 = vrot.slane %v3478, 7
        %v3481 = vor.u32 %v3477, %v3480
        %v3482 = vrot.slane %v3481, 4
        %v3484 = vshrl.u32 %v3152, 16
        %v3486 = vrot.slane %v3484, 6
        %v3487 = vshll.u32 %v3152, 16
        %v3489 = vrot.slane %v3487, 7
        %v3490 = vor.u32 %v3486, %v3489
        %v3491 = vsel %vm1659, %v3482, %v3490
        %v3492 = vrot.slane %v3490, 4
        %v3494 = vshrl.u32 %v3153, 16
        %v3496 = vrot.slane %v3494, 6
        %v3497 = vshll.u32 %v3153, 16
        %v3499 = vrot.slane %v3497, 7
        %v3500 = vor.u32 %v3496, %v3499
        %v3501 = vsel %vm1659, %v3492, %v3500
        %v3503 = vshrl.u32 %v3154, 16
        %v3505 = vrot.slane %v3503, 6
        %v3506 = vshll.u32 %v3154, 16
        %v3508 = vrot.slane %v3506, 7
        %v3509 = vor.u32 %v3505, %v3508
        %v3510 = vrot.slane %v3509, 4
        %v3512 = vshrl.u32 %v3155, 16
        %v3514 = vrot.slane %v3512, 6
        %v3515 = vshll.u32 %v3155, 16
        %v3517 = vrot.slane %v3515, 7
        %v3518 = vor.u32 %v3514, %v3517
        %v3519 = vsel %vm1659, %v3510, %v3518
        %v3520 = vrot.slane %v3518, 4
        %v3522 = vshrl.u32 %v3156, 16
        %v3524 = vrot.slane %v3522, 6
        %v3525 = vshll.u32 %v3156, 16
        %v3527 = vrot.slane %v3525, 7
        %v3528 = vor.u32 %v3524, %v3527
        %v3529 = vsel %vm1659, %v3520, %v3528
        %v3531 = vshrl.u32 %v3157, 16
        %v3533 = vrot.slane %v3531, 6
        %v3534 = vshll.u32 %v3157, 16
        %v3536 = vrot.slane %v3534, 7
        %v3537 = vor.u32 %v3533, %v3536
        %v3538 = vrot.slane %v3537, 4
        %v3540 = vshrl.u32 %v3158, 16
        %v3542 = vrot.slane %v3540, 6
        %v3543 = vshll.u32 %v3158, 16
        %v3545 = vrot.slane %v3543, 7
        %v3546 = vor.u32 %v3542, %v3545
        %v3547 = vsel %vm1659, %v3538, %v3546
        %v3548 = vrot.slane %v3546, 4
        %v3550 = vshrl.u32 %v3159, 16
        %v3552 = vrot.slane %v3550, 6
        %v3553 = vshll.u32 %v3159, 16
        %v3555 = vrot.slane %v3553, 7
        %v3556 = vor.u32 %v3552, %v3555
        %v3557 = vsel %vm1659, %v3548, %v3556
        %v3559 = vshrl.u32 %v3160, 16
        %v3561 = vrot.slane %v3559, 6
        %v3562 = vshll.u32 %v3160, 16
        %v3564 = vrot.slane %v3562, 7
        %v3565 = vor.u32 %v3561, %v3564
        %v3566 = vrot.slane %v3565, 4
        %v3568 = vshrl.u32 %v3161, 16
        %v3570 = vrot.slane %v3568, 6
        %v3571 = vshll.u32 %v3161, 16
        %v3573 = vrot.slane %v3571, 7
        %v3574 = vor.u32 %v3570, %v3573
        %v3575 = vsel %vm1659, %v3566, %v3574
        %v3576 = vrot.slane %v3574, 4
        %v3578 = vshrl.u32 %v3162, 16
        %v3580 = vrot.slane %v3578, 6
        %v3581 = vshll.u32 %v3162, 16
        %v3583 = vrot.slane %v3581, 7
        %v3584 = vor.u32 %v3580, %v3583
        %v3585 = vsel %vm1659, %v3576, %v3584
        %v3587 = vshrl.u32 %v3163, 16
        %v3589 = vrot.slane %v3587, 6
        %v3590 = vshll.u32 %v3163, 16
        %v3592 = vrot.slane %v3590, 7
        %v3593 = vor.u32 %v3589, %v3592
        %v3594 = vrot.slane %v3593, 4
        %v3596 = vshrl.u32 %v3164, 16
        %v3598 = vrot.slane %v3596, 6
        %v3599 = vshll.u32 %v3164, 16
        %v3601 = vrot.slane %v3599, 7
        %v3602 = vor.u32 %v3598, %v3601
        %v3603 = vsel %vm1659, %v3594, %v3602
        %v3604 = vrot.slane %v3602, 4
        %v3606 = vshrl.u32 %v3165, 16
        %v3608 = vrot.slane %v3606, 6
        %v3609 = vshll.u32 %v3165, 16
        %v3611 = vrot.slane %v3609, 7
        %v3612 = vor.u32 %v3608, %v3611
        %v3613 = vsel %vm1659, %v3604, %v3612
        %v3614 = vunpack.c.l.b16 %v3183
        %v3615 = vunpack.c.l.b16 %v3193
        %v3616 = vunpack.c.l.b16 %v3211
        %v3617 = vunpack.c.l.b16 %v3221
        %v3618 = vunpack.c.l.b16 %v3239
        %v3619 = vunpack.c.l.b16 %v3249
        %v3620 = vunpack.c.l.b16 %v3267
        %v3621 = vunpack.c.l.b16 %v3277
        %v3622 = vunpack.c.l.b16 %v3295
        %v3623 = vunpack.c.l.b16 %v3305
        %v3624 = vunpack.c.l.b16 %v3323
        %v3625 = vunpack.c.l.b16 %v3333
        %v3626 = vunpack.c.l.b16 %v3351
        %v3627 = vunpack.c.l.b16 %v3361
        %v3628 = vunpack.c.l.b16 %v3379
        %v3629 = vunpack.c.l.b16 %v3389
        %v3630 = vunpack.c.l.b16 %v3407
        %v3631 = vunpack.c.l.b16 %v3417
        %v3632 = vunpack.c.l.b16 %v3435
        %v3633 = vunpack.c.l.b16 %v3445
        %v3634 = vunpack.c.l.b16 %v3463
        %v3635 = vunpack.c.l.b16 %v3473
        %v3636 = vunpack.c.l.b16 %v3491
        %v3637 = vunpack.c.l.b16 %v3501
        %v3638 = vunpack.c.l.b16 %v3519
        %v3639 = vunpack.c.l.b16 %v3529
        %v3640 = vunpack.c.l.b16 %v3547
        %v3641 = vunpack.c.l.b16 %v3557
        %v3642 = vunpack.c.l.b16 %v3575
        %v3643 = vunpack.c.l.b16 %v3585
        %v3644 = vunpack.c.l.b16 %v3603
        %v3645 = vunpack.c.l.b16 %v3613
        %v3646 = vpack.c.b16 %v3615, %v3614
        %v3647 = vpack.c.b16 %v3617, %v3616
        %v3648 = vpack.c.b16 %v3619, %v3618
        %v3649 = vpack.c.b16 %v3621, %v3620
        %v3650 = vpack.c.b16 %v3623, %v3622
        %v3651 = vpack.c.b16 %v3625, %v3624
        %v3652 = vpack.c.b16 %v3627, %v3626
        %v3653 = vpack.c.b16 %v3629, %v3628
        %v3654 = vpack.c.b16 %v3631, %v3630
        %v3655 = vpack.c.b16 %v3633, %v3632
        %v3656 = vpack.c.b16 %v3635, %v3634
        %v3657 = vpack.c.b16 %v3637, %v3636
        %v3658 = vpack.c.b16 %v3639, %v3638
        %v3659 = vpack.c.b16 %v3641, %v3640
        %v3660 = vpack.c.b16 %v3643, %v3642
        %v3661 = vpack.c.b16 %v3645, %v3644
        %3662 = vrot.lane.b32.xlu0 %v3646, 32
        %v3663 = vpop.permute.xlu0 %3662
        %3664 = vrot.lane.b32.xlu0 %v3647, 32
        %v3665 = vpop.permute.xlu0 %3664
        %3666 = vrot.lane.b32.xlu0 %v3648, 32
        %v3667 = vpop.permute.xlu0 %3666
        %3668 = vrot.lane.b32.xlu0 %v3649, 32
        %v3669 = vpop.permute.xlu0 %3668
        %3670 = vrot.lane.b32.xlu0 %v3650, 32
        %v3671 = vpop.permute.xlu0 %3670
        %3672 = vrot.lane.b32.xlu0 %v3651, 32
        %v3673 = vpop.permute.xlu0 %3672
        %3674 = vrot.lane.b32.xlu0 %v3652, 32
        %v3675 = vpop.permute.xlu0 %3674
        %3676 = vrot.lane.b32.xlu0 %v3653, 32
        %v3677 = vpop.permute.xlu0 %3676
        %3678 = vrot.lane.b32.xlu0 %v3654, 32
        %v3679 = vpop.permute.xlu0 %3678
        %3680 = vrot.lane.b32.xlu0 %v3655, 32
        %v3681 = vpop.permute.xlu0 %3680
        %3682 = vrot.lane.b32.xlu0 %v3656, 32
        %v3683 = vpop.permute.xlu0 %3682
        %3684 = vrot.lane.b32.xlu0 %v3657, 32
        %v3685 = vpop.permute.xlu0 %3684
        %3686 = vrot.lane.b32.xlu0 %v3658, 32
        %v3687 = vpop.permute.xlu0 %3686
        %3688 = vrot.lane.b32.xlu0 %v3659, 32
        %v3689 = vpop.permute.xlu0 %3688
        %3690 = vrot.lane.b32.xlu0 %v3660, 32
        %v3691 = vpop.permute.xlu0 %3690
        %3692 = vrot.lane.b32.xlu0 %v3661, 32
        %v3693 = vpop.permute.xlu0 %3692
        %3710 = vst.msk [vmem:[#allocation3 + $0x8] sm:$0xff] %vm1592, %v3663
        %3711 = vst.msk [vmem:[#allocation3 + $0x40] sm:$0xff] %vm1592, %v3665
        %3712 = vst.msk [vmem:[#allocation3 + $0x78] sm:$0xff] %vm1592, %v3667
        %3713 = vst.msk [vmem:[#allocation3 + $0xb0] sm:$0xff] %vm1592, %v3669
        %3714 = vst.msk [vmem:[#allocation3 + $0xe8] sm:$0xff] %vm1592, %v3671
        %3715 = vst.msk [vmem:[#allocation3 + $0x120] sm:$0xff] %vm1592, %v3673
        %3716 = vst.msk [vmem:[#allocation3 + $0x158] sm:$0xff] %vm1592, %v3675
        %3717 = vst.msk [vmem:[#allocation3 + $0x190] sm:$0xff] %vm1592, %v3677
        %3718 = vst.msk [vmem:[#allocation3 + $0x1c8] sm:$0xff] %vm1592, %v3679
        %3719 = vst.msk [vmem:[#allocation3 + $0x200] sm:$0xff] %vm1592, %v3681
        %3720 = vst.msk [vmem:[#allocation3 + $0x238] sm:$0xff] %vm1592, %v3683
        %3721 = vst.msk [vmem:[#allocation3 + $0x270] sm:$0xff] %vm1592, %v3685
        %3722 = vst.msk [vmem:[#allocation3 + $0x2a8] sm:$0xff] %vm1592, %v3687
        %3723 = vst.msk [vmem:[#allocation3 + $0x2e0] sm:$0xff] %vm1592, %v3689
        %3724 = vst.msk [vmem:[#allocation3 + $0x318] sm:$0xff] %vm1592, %v3691
        %3725 = vst.msk [vmem:[#allocation3 + $0x350] sm:$0xff] %vm1592, %v3693
        %s3726 = scalar_lea.vmem [#allocation2], 60
        %v3727 = vld [vmem:[%s3726] sm:$0xe]
        %v3728 = vld [vmem:[%s3726 + $0x4] sm:$0xf]
        %v3729 = vld [vmem:[%s3726 + $0x8] sm:$0x3]
        %v3730 = vld [vmem:[%s3726 + $0xc] sm:$0xe]
        %v3731 = vld [vmem:[%s3726 + $0x10] sm:$0xf]
        %v3732 = vld [vmem:[%s3726 + $0x14] sm:$0x3]
        %v3733 = vld [vmem:[%s3726 + $0x18] sm:$0xe]
        %v3734 = vld [vmem:[%s3726 + $0x1c] sm:$0xf]
        %v3735 = vld [vmem:[%s3726 + $0x20] sm:$0x3]
        %v3736 = vld [vmem:[%s3726 + $0x24] sm:$0xe]
        %v3737 = vld [vmem:[%s3726 + $0x28] sm:$0xf]
        %v3738 = vld [vmem:[%s3726 + $0x2c] sm:$0x3]
        %v3739 = vld [vmem:[%s3726 + $0x30] sm:$0xe]
        %v3740 = vld [vmem:[%s3726 + $0x34] sm:$0xf]
        %v3741 = vld [vmem:[%s3726 + $0x38] sm:$0x3]
        %v3742 = vld [vmem:[%s3726 + $0x3c] sm:$0xe]
        %v3743 = vld [vmem:[%s3726 + $0x40] sm:$0xf]
        %v3744 = vld [vmem:[%s3726 + $0x44] sm:$0x3]
        %v3745 = vld [vmem:[%s3726 + $0x48] sm:$0xe]
        %v3746 = vld [vmem:[%s3726 + $0x4c] sm:$0xf]
        %v3747 = vld [vmem:[%s3726 + $0x50] sm:$0x3]
        %v3748 = vld [vmem:[%s3726 + $0x54] sm:$0xe]
        %v3749 = vld [vmem:[%s3726 + $0x58] sm:$0xf]
        %v3750 = vld [vmem:[%s3726 + $0x5c] sm:$0x3]
        %v3751 = vld [vmem:[%s3726 + $0x60] sm:$0xe]
        %v3752 = vld [vmem:[%s3726 + $0x64] sm:$0xf]
        %v3753 = vld [vmem:[%s3726 + $0x68] sm:$0x3]
        %v3754 = vld [vmem:[%s3726 + $0x6c] sm:$0xe]
        %v3755 = vld [vmem:[%s3726 + $0x70] sm:$0xf]
        %v3756 = vld [vmem:[%s3726 + $0x74] sm:$0x3]
        %v3757 = vld [vmem:[%s3726 + $0x78] sm:$0xe]
        %v3758 = vld [vmem:[%s3726 + $0x7c] sm:$0xf]
        %v3759 = vld [vmem:[%s3726 + $0x80] sm:$0x3]
        %v3760 = vld [vmem:[%s3726 + $0x84] sm:$0xe]
        %v3761 = vld [vmem:[%s3726 + $0x88] sm:$0xf]
        %v3762 = vld [vmem:[%s3726 + $0x8c] sm:$0x3]
        %v3763 = vld [vmem:[%s3726 + $0x90] sm:$0xe]
        %v3764 = vld [vmem:[%s3726 + $0x94] sm:$0xf]
        %v3765 = vld [vmem:[%s3726 + $0x98] sm:$0x3]
        %v3766 = vld [vmem:[%s3726 + $0x9c] sm:$0xe]
        %v3767 = vld [vmem:[%s3726 + $0xa0] sm:$0xf]
        %v3768 = vld [vmem:[%s3726 + $0xa4] sm:$0x3]
        %v3769 = vld [vmem:[%s3726 + $0xa8] sm:$0xe]
        %v3770 = vld [vmem:[%s3726 + $0xac] sm:$0xf]
        %v3771 = vld [vmem:[%s3726 + $0xb0] sm:$0x3]
        %v3772 = vld [vmem:[%s3726 + $0xb4] sm:$0xe]
        %v3773 = vld [vmem:[%s3726 + $0xb8] sm:$0xf]
        %v3774 = vld [vmem:[%s3726 + $0xbc] sm:$0x3]
        %v3776 = vshrl.u32 %v3727, 16
        %v3778 = vrot.slane %v3776, 5
        %v3779 = vshll.u32 %v3727, 16
        %v3781 = vrot.slane %v3779, 6
        %v3782 = vor.u32 %v3778, %v3781
        %v3783 = vrot.slane %v3782, 4
        %v3785 = vshrl.u32 %v3728, 16
        %v3787 = vrot.slane %v3785, 5
        %v3788 = vshll.u32 %v3728, 16
        %v3790 = vrot.slane %v3788, 6
        %v3791 = vor.u32 %v3787, %v3790
        %v3792 = vsel %vm758, %v3783, %v3791
        %v3793 = vrot.slane %v3791, 4
        %v3795 = vshrl.u32 %v3729, 16
        %v3797 = vrot.slane %v3795, 5
        %v3798 = vshll.u32 %v3729, 16
        %v3800 = vrot.slane %v3798, 6
        %v3801 = vor.u32 %v3797, %v3800
        %v3802 = vsel %vm758, %v3793, %v3801
        %v3804 = vshrl.u32 %v3730, 16
        %v3806 = vrot.slane %v3804, 5
        %v3807 = vshll.u32 %v3730, 16
        %v3809 = vrot.slane %v3807, 6
        %v3810 = vor.u32 %v3806, %v3809
        %v3811 = vrot.slane %v3810, 4
        %v3813 = vshrl.u32 %v3731, 16
        %v3815 = vrot.slane %v3813, 5
        %v3816 = vshll.u32 %v3731, 16
        %v3818 = vrot.slane %v3816, 6
        %v3819 = vor.u32 %v3815, %v3818
        %v3820 = vsel %vm758, %v3811, %v3819
        %v3821 = vrot.slane %v3819, 4
        %v3823 = vshrl.u32 %v3732, 16
        %v3825 = vrot.slane %v3823, 5
        %v3826 = vshll.u32 %v3732, 16
        %v3828 = vrot.slane %v3826, 6
        %v3829 = vor.u32 %v3825, %v3828
        %v3830 = vsel %vm758, %v3821, %v3829
        %v3832 = vshrl.u32 %v3733, 16
        %v3834 = vrot.slane %v3832, 5
        %v3835 = vshll.u32 %v3733, 16
        %v3837 = vrot.slane %v3835, 6
        %v3838 = vor.u32 %v3834, %v3837
        %v3839 = vrot.slane %v3838, 4
        %v3841 = vshrl.u32 %v3734, 16
        %v3843 = vrot.slane %v3841, 5
        %v3844 = vshll.u32 %v3734, 16
        %v3846 = vrot.slane %v3844, 6
        %v3847 = vor.u32 %v3843, %v3846
        %v3848 = vsel %vm758, %v3839, %v3847
        %v3849 = vrot.slane %v3847, 4
        %v3851 = vshrl.u32 %v3735, 16
        %v3853 = vrot.slane %v3851, 5
        %v3854 = vshll.u32 %v3735, 16
        %v3856 = vrot.slane %v3854, 6
        %v3857 = vor.u32 %v3853, %v3856
        %v3858 = vsel %vm758, %v3849, %v3857
        %v3860 = vshrl.u32 %v3736, 16
        %v3862 = vrot.slane %v3860, 5
        %v3863 = vshll.u32 %v3736, 16
        %v3865 = vrot.slane %v3863, 6
        %v3866 = vor.u32 %v3862, %v3865
        %v3867 = vrot.slane %v3866, 4
        %v3869 = vshrl.u32 %v3737, 16
        %v3871 = vrot.slane %v3869, 5
        %v3872 = vshll.u32 %v3737, 16
        %v3874 = vrot.slane %v3872, 6
        %v3875 = vor.u32 %v3871, %v3874
        %v3876 = vsel %vm758, %v3867, %v3875
        %v3877 = vrot.slane %v3875, 4
        %v3879 = vshrl.u32 %v3738, 16
        %v3881 = vrot.slane %v3879, 5
        %v3882 = vshll.u32 %v3738, 16
        %v3884 = vrot.slane %v3882, 6
        %v3885 = vor.u32 %v3881, %v3884
        %v3886 = vsel %vm758, %v3877, %v3885
        %v3888 = vshrl.u32 %v3739, 16
        %v3890 = vrot.slane %v3888, 5
        %v3891 = vshll.u32 %v3739, 16
        %v3893 = vrot.slane %v3891, 6
        %v3894 = vor.u32 %v3890, %v3893
        %v3895 = vrot.slane %v3894, 4
        %v3897 = vshrl.u32 %v3740, 16
        %v3899 = vrot.slane %v3897, 5
        %v3900 = vshll.u32 %v3740, 16
        %v3902 = vrot.slane %v3900, 6
        %v3903 = vor.u32 %v3899, %v3902
        %v3904 = vsel %vm758, %v3895, %v3903
        %v3905 = vrot.slane %v3903, 4
        %v3907 = vshrl.u32 %v3741, 16
        %v3909 = vrot.slane %v3907, 5
        %v3910 = vshll.u32 %v3741, 16
        %v3912 = vrot.slane %v3910, 6
        %v3913 = vor.u32 %v3909, %v3912
        %v3914 = vsel %vm758, %v3905, %v3913
        %v3916 = vshrl.u32 %v3742, 16
        %v3918 = vrot.slane %v3916, 5
        %v3919 = vshll.u32 %v3742, 16
        %v3921 = vrot.slane %v3919, 6
        %v3922 = vor.u32 %v3918, %v3921
        %v3923 = vrot.slane %v3922, 4
        %v3925 = vshrl.u32 %v3743, 16
        %v3927 = vrot.slane %v3925, 5
        %v3928 = vshll.u32 %v3743, 16
        %v3930 = vrot.slane %v3928, 6
        %v3931 = vor.u32 %v3927, %v3930
        %v3932 = vsel %vm758, %v3923, %v3931
        %v3933 = vrot.slane %v3931, 4
        %v3935 = vshrl.u32 %v3744, 16
        %v3937 = vrot.slane %v3935, 5
        %v3938 = vshll.u32 %v3744, 16
        %v3940 = vrot.slane %v3938, 6
        %v3941 = vor.u32 %v3937, %v3940
        %v3942 = vsel %vm758, %v3933, %v3941
        %v3944 = vshrl.u32 %v3745, 16
        %v3946 = vrot.slane %v3944, 5
        %v3947 = vshll.u32 %v3745, 16
        %v3949 = vrot.slane %v3947, 6
        %v3950 = vor.u32 %v3946, %v3949
        %v3951 = vrot.slane %v3950, 4
        %v3953 = vshrl.u32 %v3746, 16
        %v3955 = vrot.slane %v3953, 5
        %v3956 = vshll.u32 %v3746, 16
        %v3958 = vrot.slane %v3956, 6
        %v3959 = vor.u32 %v3955, %v3958
        %v3960 = vsel %vm758, %v3951, %v3959
        %v3961 = vrot.slane %v3959, 4
        %v3963 = vshrl.u32 %v3747, 16
        %v3965 = vrot.slane %v3963, 5
        %v3966 = vshll.u32 %v3747, 16
        %v3968 = vrot.slane %v3966, 6
        %v3969 = vor.u32 %v3965, %v3968
        %v3970 = vsel %vm758, %v3961, %v3969
        %v3972 = vshrl.u32 %v3748, 16
        %v3974 = vrot.slane %v3972, 5
        %v3975 = vshll.u32 %v3748, 16
        %v3977 = vrot.slane %v3975, 6
        %v3978 = vor.u32 %v3974, %v3977
        %v3979 = vrot.slane %v3978, 4
        %v3981 = vshrl.u32 %v3749, 16
        %v3983 = vrot.slane %v3981, 5
        %v3984 = vshll.u32 %v3749, 16
        %v3986 = vrot.slane %v3984, 6
        %v3987 = vor.u32 %v3983, %v3986
        %v3988 = vsel %vm758, %v3979, %v3987
        %v3989 = vrot.slane %v3987, 4
        %v3991 = vshrl.u32 %v3750, 16
        %v3993 = vrot.slane %v3991, 5
        %v3994 = vshll.u32 %v3750, 16
        %v3996 = vrot.slane %v3994, 6
        %v3997 = vor.u32 %v3993, %v3996
        %v3998 = vsel %vm758, %v3989, %v3997
        %v4000 = vshrl.u32 %v3751, 16
        %v4002 = vrot.slane %v4000, 5
        %v4003 = vshll.u32 %v3751, 16
        %v4005 = vrot.slane %v4003, 6
        %v4006 = vor.u32 %v4002, %v4005
        %v4007 = vrot.slane %v4006, 4
        %v4009 = vshrl.u32 %v3752, 16
        %v4011 = vrot.slane %v4009, 5
        %v4012 = vshll.u32 %v3752, 16
        %v4014 = vrot.slane %v4012, 6
        %v4015 = vor.u32 %v4011, %v4014
        %v4016 = vsel %vm758, %v4007, %v4015
        %v4017 = vrot.slane %v4015, 4
        %v4019 = vshrl.u32 %v3753, 16
        %v4021 = vrot.slane %v4019, 5
        %v4022 = vshll.u32 %v3753, 16
        %v4024 = vrot.slane %v4022, 6
        %v4025 = vor.u32 %v4021, %v4024
        %v4026 = vsel %vm758, %v4017, %v4025
        %v4028 = vshrl.u32 %v3754, 16
        %v4030 = vrot.slane %v4028, 5
        %v4031 = vshll.u32 %v3754, 16
        %v4033 = vrot.slane %v4031, 6
        %v4034 = vor.u32 %v4030, %v4033
        %v4035 = vrot.slane %v4034, 4
        %v4037 = vshrl.u32 %v3755, 16
        %v4039 = vrot.slane %v4037, 5
        %v4040 = vshll.u32 %v3755, 16
        %v4042 = vrot.slane %v4040, 6
        %v4043 = vor.u32 %v4039, %v4042
        %v4044 = vsel %vm758, %v4035, %v4043
        %v4045 = vrot.slane %v4043, 4
        %v4047 = vshrl.u32 %v3756, 16
        %v4049 = vrot.slane %v4047, 5
        %v4050 = vshll.u32 %v3756, 16
        %v4052 = vrot.slane %v4050, 6
        %v4053 = vor.u32 %v4049, %v4052
        %v4054 = vsel %vm758, %v4045, %v4053
        %v4056 = vshrl.u32 %v3757, 16
        %v4058 = vrot.slane %v4056, 5
        %v4059 = vshll.u32 %v3757, 16
        %v4061 = vrot.slane %v4059, 6
        %v4062 = vor.u32 %v4058, %v4061
        %v4063 = vrot.slane %v4062, 4
        %v4065 = vshrl.u32 %v3758, 16
        %v4067 = vrot.slane %v4065, 5
        %v4068 = vshll.u32 %v3758, 16
        %v4070 = vrot.slane %v4068, 6
        %v4071 = vor.u32 %v4067, %v4070
        %v4072 = vsel %vm758, %v4063, %v4071
        %v4073 = vrot.slane %v4071, 4
        %v4075 = vshrl.u32 %v3759, 16
        %v4077 = vrot.slane %v4075, 5
        %v4078 = vshll.u32 %v3759, 16
        %v4080 = vrot.slane %v4078, 6
        %v4081 = vor.u32 %v4077, %v4080
        %v4082 = vsel %vm758, %v4073, %v4081
        %v4084 = vshrl.u32 %v3760, 16
        %v4086 = vrot.slane %v4084, 5
        %v4087 = vshll.u32 %v3760, 16
        %v4089 = vrot.slane %v4087, 6
        %v4090 = vor.u32 %v4086, %v4089
        %v4091 = vrot.slane %v4090, 4
        %v4093 = vshrl.u32 %v3761, 16
        %v4095 = vrot.slane %v4093, 5
        %v4096 = vshll.u32 %v3761, 16
        %v4098 = vrot.slane %v4096, 6
        %v4099 = vor.u32 %v4095, %v4098
        %v4100 = vsel %vm758, %v4091, %v4099
        %v4101 = vrot.slane %v4099, 4
        %v4103 = vshrl.u32 %v3762, 16
        %v4105 = vrot.slane %v4103, 5
        %v4106 = vshll.u32 %v3762, 16
        %v4108 = vrot.slane %v4106, 6
        %v4109 = vor.u32 %v4105, %v4108
        %v4110 = vsel %vm758, %v4101, %v4109
        %v4112 = vshrl.u32 %v3763, 16
        %v4114 = vrot.slane %v4112, 5
        %v4115 = vshll.u32 %v3763, 16
        %v4117 = vrot.slane %v4115, 6
        %v4118 = vor.u32 %v4114, %v4117
        %v4119 = vrot.slane %v4118, 4
        %v4121 = vshrl.u32 %v3764, 16
        %v4123 = vrot.slane %v4121, 5
        %v4124 = vshll.u32 %v3764, 16
        %v4126 = vrot.slane %v4124, 6
        %v4127 = vor.u32 %v4123, %v4126
        %v4128 = vsel %vm758, %v4119, %v4127
        %v4129 = vrot.slane %v4127, 4
        %v4131 = vshrl.u32 %v3765, 16
        %v4133 = vrot.slane %v4131, 5
        %v4134 = vshll.u32 %v3765, 16
        %v4136 = vrot.slane %v4134, 6
        %v4137 = vor.u32 %v4133, %v4136
        %v4138 = vsel %vm758, %v4129, %v4137
        %v4140 = vshrl.u32 %v3766, 16
        %v4142 = vrot.slane %v4140, 5
        %v4143 = vshll.u32 %v3766, 16
        %v4145 = vrot.slane %v4143, 6
        %v4146 = vor.u32 %v4142, %v4145
        %v4147 = vrot.slane %v4146, 4
        %v4149 = vshrl.u32 %v3767, 16
        %v4151 = vrot.slane %v4149, 5
        %v4152 = vshll.u32 %v3767, 16
        %v4154 = vrot.slane %v4152, 6
        %v4155 = vor.u32 %v4151, %v4154
        %v4156 = vsel %vm758, %v4147, %v4155
        %v4157 = vrot.slane %v4155, 4
        %v4159 = vshrl.u32 %v3768, 16
        %v4161 = vrot.slane %v4159, 5
        %v4162 = vshll.u32 %v3768, 16
        %v4164 = vrot.slane %v4162, 6
        %v4165 = vor.u32 %v4161, %v4164
        %v4166 = vsel %vm758, %v4157, %v4165
        %v4168 = vshrl.u32 %v3769, 16
        %v4170 = vrot.slane %v4168, 5
        %v4171 = vshll.u32 %v3769, 16
        %v4173 = vrot.slane %v4171, 6
        %v4174 = vor.u32 %v4170, %v4173
        %v4175 = vrot.slane %v4174, 4
        %v4177 = vshrl.u32 %v3770, 16
        %v4179 = vrot.slane %v4177, 5
        %v4180 = vshll.u32 %v3770, 16
        %v4182 = vrot.slane %v4180, 6
        %v4183 = vor.u32 %v4179, %v4182
        %v4184 = vsel %vm758, %v4175, %v4183
        %v4185 = vrot.slane %v4183, 4
        %v4187 = vshrl.u32 %v3771, 16
        %v4189 = vrot.slane %v4187, 5
        %v4190 = vshll.u32 %v3771, 16
        %v4192 = vrot.slane %v4190, 6
        %v4193 = vor.u32 %v4189, %v4192
        %v4194 = vsel %vm758, %v4185, %v4193
        %v4196 = vshrl.u32 %v3772, 16
        %v4198 = vrot.slane %v4196, 5
        %v4199 = vshll.u32 %v3772, 16
        %v4201 = vrot.slane %v4199, 6
        %v4202 = vor.u32 %v4198, %v4201
        %v4203 = vrot.slane %v4202, 4
        %v4205 = vshrl.u32 %v3773, 16
        %v4207 = vrot.slane %v4205, 5
        %v4208 = vshll.u32 %v3773, 16
        %v4210 = vrot.slane %v4208, 6
        %v4211 = vor.u32 %v4207, %v4210
        %v4212 = vsel %vm758, %v4203, %v4211
        %v4213 = vrot.slane %v4211, 4
        %v4215 = vshrl.u32 %v3774, 16
        %v4217 = vrot.slane %v4215, 5
        %v4218 = vshll.u32 %v3774, 16
        %v4220 = vrot.slane %v4218, 6
        %v4221 = vor.u32 %v4217, %v4220
        %v4222 = vsel %vm758, %v4213, %v4221
        %v4223 = vunpack.c.l.b16 %v3792
        %v4224 = vunpack.c.l.b16 %v3802
        %v4225 = vunpack.c.l.b16 %v3820
        %v4226 = vunpack.c.l.b16 %v3830
        %v4227 = vunpack.c.l.b16 %v3848
        %v4228 = vunpack.c.l.b16 %v3858
        %v4229 = vunpack.c.l.b16 %v3876
        %v4230 = vunpack.c.l.b16 %v3886
        %v4231 = vunpack.c.l.b16 %v3904
        %v4232 = vunpack.c.l.b16 %v3914
        %v4233 = vunpack.c.l.b16 %v3932
        %v4234 = vunpack.c.l.b16 %v3942
        %v4235 = vunpack.c.l.b16 %v3960
        %v4236 = vunpack.c.l.b16 %v3970
        %v4237 = vunpack.c.l.b16 %v3988
        %v4238 = vunpack.c.l.b16 %v3998
        %v4239 = vunpack.c.l.b16 %v4016
        %v4240 = vunpack.c.l.b16 %v4026
        %v4241 = vunpack.c.l.b16 %v4044
        %v4242 = vunpack.c.l.b16 %v4054
        %v4243 = vunpack.c.l.b16 %v4072
        %v4244 = vunpack.c.l.b16 %v4082
        %v4245 = vunpack.c.l.b16 %v4100
        %v4246 = vunpack.c.l.b16 %v4110
        %v4247 = vunpack.c.l.b16 %v4128
        %v4248 = vunpack.c.l.b16 %v4138
        %v4249 = vunpack.c.l.b16 %v4156
        %v4250 = vunpack.c.l.b16 %v4166
        %v4251 = vunpack.c.l.b16 %v4184
        %v4252 = vunpack.c.l.b16 %v4194
        %v4253 = vunpack.c.l.b16 %v4212
        %v4254 = vunpack.c.l.b16 %v4222
        %v4255 = vpack.c.b16 %v4224, %v4223
        %v4256 = vpack.c.b16 %v4226, %v4225
        %v4257 = vpack.c.b16 %v4228, %v4227
        %v4258 = vpack.c.b16 %v4230, %v4229
        %v4259 = vpack.c.b16 %v4232, %v4231
        %v4260 = vpack.c.b16 %v4234, %v4233
        %v4261 = vpack.c.b16 %v4236, %v4235
        %v4262 = vpack.c.b16 %v4238, %v4237
        %v4263 = vpack.c.b16 %v4240, %v4239
        %v4264 = vpack.c.b16 %v4242, %v4241
        %v4265 = vpack.c.b16 %v4244, %v4243
        %v4266 = vpack.c.b16 %v4246, %v4245
        %v4267 = vpack.c.b16 %v4248, %v4247
        %v4268 = vpack.c.b16 %v4250, %v4249
        %v4269 = vpack.c.b16 %v4252, %v4251
        %v4270 = vpack.c.b16 %v4254, %v4253
        %4271 = vrot.lane.b32.xlu0 %v4255, 64
        %v4272 = vpop.permute.xlu0 %4271
        %4273 = vrot.lane.b32.xlu0 %v4256, 64
        %v4274 = vpop.permute.xlu0 %4273
        %4275 = vrot.lane.b32.xlu0 %v4257, 64
        %v4276 = vpop.permute.xlu0 %4275
        %4277 = vrot.lane.b32.xlu0 %v4258, 64
        %v4278 = vpop.permute.xlu0 %4277
        %4279 = vrot.lane.b32.xlu0 %v4259, 64
        %v4280 = vpop.permute.xlu0 %4279
        %4281 = vrot.lane.b32.xlu0 %v4260, 64
        %v4282 = vpop.permute.xlu0 %4281
        %4283 = vrot.lane.b32.xlu0 %v4261, 64
        %v4284 = vpop.permute.xlu0 %4283
        %4285 = vrot.lane.b32.xlu0 %v4262, 64
        %v4286 = vpop.permute.xlu0 %4285
        %4287 = vrot.lane.b32.xlu0 %v4263, 64
        %v4288 = vpop.permute.xlu0 %4287
        %4289 = vrot.lane.b32.xlu0 %v4264, 64
        %v4290 = vpop.permute.xlu0 %4289
        %4291 = vrot.lane.b32.xlu0 %v4265, 64
        %v4292 = vpop.permute.xlu0 %4291
        %4293 = vrot.lane.b32.xlu0 %v4266, 64
        %v4294 = vpop.permute.xlu0 %4293
        %4295 = vrot.lane.b32.xlu0 %v4267, 64
        %v4296 = vpop.permute.xlu0 %4295
        %4297 = vrot.lane.b32.xlu0 %v4268, 64
        %v4298 = vpop.permute.xlu0 %4297
        %4299 = vrot.lane.b32.xlu0 %v4269, 64
        %v4300 = vpop.permute.xlu0 %4299
        %4301 = vrot.lane.b32.xlu0 %v4270, 64
        %v4302 = vpop.permute.xlu0 %4301
        %4319 = vst.msk [vmem:[#allocation3 + $0x8] sm:$0xff] %vm2204, %v4272
        %4320 = vst.msk [vmem:[#allocation3 + $0x40] sm:$0xff] %vm2204, %v4274
        %4321 = vst.msk [vmem:[#allocation3 + $0x78] sm:$0xff] %vm2204, %v4276
        %4322 = vst.msk [vmem:[#allocation3 + $0xb0] sm:$0xff] %vm2204, %v4278
        %4323 = vst.msk [vmem:[#allocation3 + $0xe8] sm:$0xff] %vm2204, %v4280
        %4324 = vst.msk [vmem:[#allocation3 + $0x120] sm:$0xff] %vm2204, %v4282
        %4325 = vst.msk [vmem:[#allocation3 + $0x158] sm:$0xff] %vm2204, %v4284
        %4326 = vst.msk [vmem:[#allocation3 + $0x190] sm:$0xff] %vm2204, %v4286
        %4327 = vst.msk [vmem:[#allocation3 + $0x1c8] sm:$0xff] %vm2204, %v4288
        %4328 = vst.msk [vmem:[#allocation3 + $0x200] sm:$0xff] %vm2204, %v4290
        %4329 = vst.msk [vmem:[#allocation3 + $0x238] sm:$0xff] %vm2204, %v4292
        %4330 = vst.msk [vmem:[#allocation3 + $0x270] sm:$0xff] %vm2204, %v4294
        %4331 = vst.msk [vmem:[#allocation3 + $0x2a8] sm:$0xff] %vm2204, %v4296
        %4332 = vst.msk [vmem:[#allocation3 + $0x2e0] sm:$0xff] %vm2204, %v4298
        %4333 = vst.msk [vmem:[#allocation3 + $0x318] sm:$0xff] %vm2204, %v4300
        %4334 = vst.msk [vmem:[#allocation3 + $0x350] sm:$0xff] %vm2204, %v4302
        %v4335 = vld [vmem:[%s3726] sm:$0xc]
        %v4336 = vld [vmem:[%s3726 + $0x4] sm:$0xf]
        %v4337 = vld [vmem:[%s3726 + $0x8] sm:$0x3]
        %v4338 = vld [vmem:[%s3726 + $0xc] sm:$0xc]
        %v4339 = vld [vmem:[%s3726 + $0x10] sm:$0xf]
        %v4340 = vld [vmem:[%s3726 + $0x14] sm:$0x3]
        %v4341 = vld [vmem:[%s3726 + $0x18] sm:$0xc]
        %v4342 = vld [vmem:[%s3726 + $0x1c] sm:$0xf]
        %v4343 = vld [vmem:[%s3726 + $0x20] sm:$0x3]
        %v4344 = vld [vmem:[%s3726 + $0x24] sm:$0xc]
        %v4345 = vld [vmem:[%s3726 + $0x28] sm:$0xf]
        %v4346 = vld [vmem:[%s3726 + $0x2c] sm:$0x3]
        %v4347 = vld [vmem:[%s3726 + $0x30] sm:$0xc]
        %v4348 = vld [vmem:[%s3726 + $0x34] sm:$0xf]
        %v4349 = vld [vmem:[%s3726 + $0x38] sm:$0x3]
        %v4350 = vld [vmem:[%s3726 + $0x3c] sm:$0xc]
        %v4351 = vld [vmem:[%s3726 + $0x40] sm:$0xf]
        %v4352 = vld [vmem:[%s3726 + $0x44] sm:$0x3]
        %v4353 = vld [vmem:[%s3726 + $0x48] sm:$0xc]
        %v4354 = vld [vmem:[%s3726 + $0x4c] sm:$0xf]
        %v4355 = vld [vmem:[%s3726 + $0x50] sm:$0x3]
        %v4356 = vld [vmem:[%s3726 + $0x54] sm:$0xc]
        %v4357 = vld [vmem:[%s3726 + $0x58] sm:$0xf]
        %v4358 = vld [vmem:[%s3726 + $0x5c] sm:$0x3]
        %v4359 = vld [vmem:[%s3726 + $0x60] sm:$0xc]
        %v4360 = vld [vmem:[%s3726 + $0x64] sm:$0xf]
        %v4361 = vld [vmem:[%s3726 + $0x68] sm:$0x3]
        %v4362 = vld [vmem:[%s3726 + $0x6c] sm:$0xc]
        %v4363 = vld [vmem:[%s3726 + $0x70] sm:$0xf]
        %v4364 = vld [vmem:[%s3726 + $0x74] sm:$0x3]
        %v4365 = vld [vmem:[%s3726 + $0x78] sm:$0xc]
        %v4366 = vld [vmem:[%s3726 + $0x7c] sm:$0xf]
        %v4367 = vld [vmem:[%s3726 + $0x80] sm:$0x3]
        %v4368 = vld [vmem:[%s3726 + $0x84] sm:$0xc]
        %v4369 = vld [vmem:[%s3726 + $0x88] sm:$0xf]
        %v4370 = vld [vmem:[%s3726 + $0x8c] sm:$0x3]
        %v4371 = vld [vmem:[%s3726 + $0x90] sm:$0xc]
        %v4372 = vld [vmem:[%s3726 + $0x94] sm:$0xf]
        %v4373 = vld [vmem:[%s3726 + $0x98] sm:$0x3]
        %v4374 = vld [vmem:[%s3726 + $0x9c] sm:$0xc]
        %v4375 = vld [vmem:[%s3726 + $0xa0] sm:$0xf]
        %v4376 = vld [vmem:[%s3726 + $0xa4] sm:$0x3]
        %v4377 = vld [vmem:[%s3726 + $0xa8] sm:$0xc]
        %v4378 = vld [vmem:[%s3726 + $0xac] sm:$0xf]
        %v4379 = vld [vmem:[%s3726 + $0xb0] sm:$0x3]
        %v4380 = vld [vmem:[%s3726 + $0xb4] sm:$0xc]
        %v4381 = vld [vmem:[%s3726 + $0xb8] sm:$0xf]
        %v4382 = vld [vmem:[%s3726 + $0xbc] sm:$0x3]
        %v4431 = vrot.slane %v4335, 6
        %v4432 = vrot.slane %v4431, 4
        %v4433 = vrot.slane %v4336, 6
        %v4434 = vsel %vm530, %v4432, %v4433
        %v4435 = vrot.slane %v4433, 4
        %v4436 = vrot.slane %v4337, 6
        %v4437 = vsel %vm530, %v4435, %v4436
        %v4438 = vrot.slane %v4338, 6
        %v4439 = vrot.slane %v4438, 4
        %v4440 = vrot.slane %v4339, 6
        %v4441 = vsel %vm530, %v4439, %v4440
        %v4442 = vrot.slane %v4440, 4
        %v4443 = vrot.slane %v4340, 6
        %v4444 = vsel %vm530, %v4442, %v4443
        %v4445 = vrot.slane %v4341, 6
        %v4446 = vrot.slane %v4445, 4
        %v4447 = vrot.slane %v4342, 6
        %v4448 = vsel %vm530, %v4446, %v4447
        %v4449 = vrot.slane %v4447, 4
        %v4450 = vrot.slane %v4343, 6
        %v4451 = vsel %vm530, %v4449, %v4450
        %v4452 = vrot.slane %v4344, 6
        %v4453 = vrot.slane %v4452, 4
        %v4454 = vrot.slane %v4345, 6
        %v4455 = vsel %vm530, %v4453, %v4454
        %v4456 = vrot.slane %v4454, 4
        %v4457 = vrot.slane %v4346, 6
        %v4458 = vsel %vm530, %v4456, %v4457
        %v4459 = vrot.slane %v4347, 6
        %v4460 = vrot.slane %v4459, 4
        %v4461 = vrot.slane %v4348, 6
        %v4462 = vsel %vm530, %v4460, %v4461
        %v4463 = vrot.slane %v4461, 4
        %v4464 = vrot.slane %v4349, 6
        %v4465 = vsel %vm530, %v4463, %v4464
        %v4466 = vrot.slane %v4350, 6
        %v4467 = vrot.slane %v4466, 4
        %v4468 = vrot.slane %v4351, 6
        %v4469 = vsel %vm530, %v4467, %v4468
        %v4470 = vrot.slane %v4468, 4
        %v4471 = vrot.slane %v4352, 6
        %v4472 = vsel %vm530, %v4470, %v4471
        %v4473 = vrot.slane %v4353, 6
        %v4474 = vrot.slane %v4473, 4
        %v4475 = vrot.slane %v4354, 6
        %v4476 = vsel %vm530, %v4474, %v4475
        %v4477 = vrot.slane %v4475, 4
        %v4478 = vrot.slane %v4355, 6
        %v4479 = vsel %vm530, %v4477, %v4478
        %v4480 = vrot.slane %v4356, 6
        %v4481 = vrot.slane %v4480, 4
        %v4482 = vrot.slane %v4357, 6
        %v4483 = vsel %vm530, %v4481, %v4482
        %v4484 = vrot.slane %v4482, 4
        %v4485 = vrot.slane %v4358, 6
        %v4486 = vsel %vm530, %v4484, %v4485
        %v4487 = vrot.slane %v4359, 6
        %v4488 = vrot.slane %v4487, 4
        %v4489 = vrot.slane %v4360, 6
        %v4490 = vsel %vm530, %v4488, %v4489
        %v4491 = vrot.slane %v4489, 4
        %v4492 = vrot.slane %v4361, 6
        %v4493 = vsel %vm530, %v4491, %v4492
        %v4494 = vrot.slane %v4362, 6
        %v4495 = vrot.slane %v4494, 4
        %v4496 = vrot.slane %v4363, 6
        %v4497 = vsel %vm530, %v4495, %v4496
        %v4498 = vrot.slane %v4496, 4
        %v4499 = vrot.slane %v4364, 6
        %v4500 = vsel %vm530, %v4498, %v4499
        %v4501 = vrot.slane %v4365, 6
        %v4502 = vrot.slane %v4501, 4
        %v4503 = vrot.slane %v4366, 6
        %v4504 = vsel %vm530, %v4502, %v4503
        %v4505 = vrot.slane %v4503, 4
        %v4506 = vrot.slane %v4367, 6
        %v4507 = vsel %vm530, %v4505, %v4506
        %v4508 = vrot.slane %v4368, 6
        %v4509 = vrot.slane %v4508, 4
        %v4510 = vrot.slane %v4369, 6
        %v4511 = vsel %vm530, %v4509, %v4510
        %v4512 = vrot.slane %v4510, 4
        %v4513 = vrot.slane %v4370, 6
        %v4514 = vsel %vm530, %v4512, %v4513
        %v4515 = vrot.slane %v4371, 6
        %v4516 = vrot.slane %v4515, 4
        %v4517 = vrot.slane %v4372, 6
        %v4518 = vsel %vm530, %v4516, %v4517
        %v4519 = vrot.slane %v4517, 4
        %v4520 = vrot.slane %v4373, 6
        %v4521 = vsel %vm530, %v4519, %v4520
        %v4522 = vrot.slane %v4374, 6
        %v4523 = vrot.slane %v4522, 4
        %v4524 = vrot.slane %v4375, 6
        %v4525 = vsel %vm530, %v4523, %v4524
        %v4526 = vrot.slane %v4524, 4
        %v4527 = vrot.slane %v4376, 6
        %v4528 = vsel %vm530, %v4526, %v4527
        %v4529 = vrot.slane %v4377, 6
        %v4530 = vrot.slane %v4529, 4
        %v4531 = vrot.slane %v4378, 6
        %v4532 = vsel %vm530, %v4530, %v4531
        %v4533 = vrot.slane %v4531, 4
        %v4534 = vrot.slane %v4379, 6
        %v4535 = vsel %vm530, %v4533, %v4534
        %v4536 = vrot.slane %v4380, 6
        %v4537 = vrot.slane %v4536, 4
        %v4538 = vrot.slane %v4381, 6
        %v4539 = vsel %vm530, %v4537, %v4538
        %v4540 = vrot.slane %v4538, 4
        %v4541 = vrot.slane %v4382, 6
        %v4542 = vsel %vm530, %v4540, %v4541
        %v4543 = vunpack.c.l.b16 %v4434
        %v4544 = vunpack.c.l.b16 %v4437
        %v4545 = vunpack.c.l.b16 %v4441
        %v4546 = vunpack.c.l.b16 %v4444
        %v4547 = vunpack.c.l.b16 %v4448
        %v4548 = vunpack.c.l.b16 %v4451
        %v4549 = vunpack.c.l.b16 %v4455
        %v4550 = vunpack.c.l.b16 %v4458
        %v4551 = vunpack.c.l.b16 %v4462
        %v4552 = vunpack.c.l.b16 %v4465
        %v4553 = vunpack.c.l.b16 %v4469
        %v4554 = vunpack.c.l.b16 %v4472
        %v4555 = vunpack.c.l.b16 %v4476
        %v4556 = vunpack.c.l.b16 %v4479
        %v4557 = vunpack.c.l.b16 %v4483
        %v4558 = vunpack.c.l.b16 %v4486
        %v4559 = vunpack.c.l.b16 %v4490
        %v4560 = vunpack.c.l.b16 %v4493
        %v4561 = vunpack.c.l.b16 %v4497
        %v4562 = vunpack.c.l.b16 %v4500
        %v4563 = vunpack.c.l.b16 %v4504
        %v4564 = vunpack.c.l.b16 %v4507
        %v4565 = vunpack.c.l.b16 %v4511
        %v4566 = vunpack.c.l.b16 %v4514
        %v4567 = vunpack.c.l.b16 %v4518
        %v4568 = vunpack.c.l.b16 %v4521
        %v4569 = vunpack.c.l.b16 %v4525
        %v4570 = vunpack.c.l.b16 %v4528
        %v4571 = vunpack.c.l.b16 %v4532
        %v4572 = vunpack.c.l.b16 %v4535
        %v4573 = vunpack.c.l.b16 %v4539
        %v4574 = vunpack.c.l.b16 %v4542
        %v4575 = vpack.c.b16 %v4544, %v4543
        %v4576 = vpack.c.b16 %v4546, %v4545
        %v4577 = vpack.c.b16 %v4548, %v4547
        %v4578 = vpack.c.b16 %v4550, %v4549
        %v4579 = vpack.c.b16 %v4552, %v4551
        %v4580 = vpack.c.b16 %v4554, %v4553
        %v4581 = vpack.c.b16 %v4556, %v4555
        %v4582 = vpack.c.b16 %v4558, %v4557
        %v4583 = vpack.c.b16 %v4560, %v4559
        %v4584 = vpack.c.b16 %v4562, %v4561
        %v4585 = vpack.c.b16 %v4564, %v4563
        %v4586 = vpack.c.b16 %v4566, %v4565
        %v4587 = vpack.c.b16 %v4568, %v4567
        %v4588 = vpack.c.b16 %v4570, %v4569
        %v4589 = vpack.c.b16 %v4572, %v4571
        %v4590 = vpack.c.b16 %v4574, %v4573
        %4591 = vrot.lane.b32.xlu0 %v4575, 96
        %v4592 = vpop.permute.xlu0 %4591
        %4593 = vrot.lane.b32.xlu0 %v4576, 96
        %v4594 = vpop.permute.xlu0 %4593
        %4595 = vrot.lane.b32.xlu0 %v4577, 96
        %v4596 = vpop.permute.xlu0 %4595
        %4597 = vrot.lane.b32.xlu0 %v4578, 96
        %v4598 = vpop.permute.xlu0 %4597
        %4599 = vrot.lane.b32.xlu0 %v4579, 96
        %v4600 = vpop.permute.xlu0 %4599
        %4601 = vrot.lane.b32.xlu0 %v4580, 96
        %v4602 = vpop.permute.xlu0 %4601
        %4603 = vrot.lane.b32.xlu0 %v4581, 96
        %v4604 = vpop.permute.xlu0 %4603
        %4605 = vrot.lane.b32.xlu0 %v4582, 96
        %v4606 = vpop.permute.xlu0 %4605
        %4607 = vrot.lane.b32.xlu0 %v4583, 96
        %v4608 = vpop.permute.xlu0 %4607
        %4609 = vrot.lane.b32.xlu0 %v4584, 96
        %v4610 = vpop.permute.xlu0 %4609
        %4611 = vrot.lane.b32.xlu0 %v4585, 96
        %v4612 = vpop.permute.xlu0 %4611
        %4613 = vrot.lane.b32.xlu0 %v4586, 96
        %v4614 = vpop.permute.xlu0 %4613
        %4615 = vrot.lane.b32.xlu0 %v4587, 96
        %v4616 = vpop.permute.xlu0 %4615
        %4617 = vrot.lane.b32.xlu0 %v4588, 96
        %v4618 = vpop.permute.xlu0 %4617
        %4619 = vrot.lane.b32.xlu0 %v4589, 96
        %v4620 = vpop.permute.xlu0 %4619
        %4621 = vrot.lane.b32.xlu0 %v4590, 96
        %v4622 = vpop.permute.xlu0 %4621
        %4639 = vst.msk [vmem:[#allocation3 + $0x8] sm:$0xff] %vm2813, %v4592
        %4640 = vst.msk [vmem:[#allocation3 + $0x40] sm:$0xff] %vm2813, %v4594
        %4641 = vst.msk [vmem:[#allocation3 + $0x78] sm:$0xff] %vm2813, %v4596
        %4642 = vst.msk [vmem:[#allocation3 + $0xb0] sm:$0xff] %vm2813, %v4598
        %4643 = vst.msk [vmem:[#allocation3 + $0xe8] sm:$0xff] %vm2813, %v4600
        %4644 = vst.msk [vmem:[#allocation3 + $0x120] sm:$0xff] %vm2813, %v4602
        %4645 = vst.msk [vmem:[#allocation3 + $0x158] sm:$0xff] %vm2813, %v4604
        %4646 = vst.msk [vmem:[#allocation3 + $0x190] sm:$0xff] %vm2813, %v4606
        %4647 = vst.msk [vmem:[#allocation3 + $0x1c8] sm:$0xff] %vm2813, %v4608
        %4648 = vst.msk [vmem:[#allocation3 + $0x200] sm:$0xff] %vm2813, %v4610
        %4649 = vst.msk [vmem:[#allocation3 + $0x238] sm:$0xff] %vm2813, %v4612
        %4650 = vst.msk [vmem:[#allocation3 + $0x270] sm:$0xff] %vm2813, %v4614
        %4651 = vst.msk [vmem:[#allocation3 + $0x2a8] sm:$0xff] %vm2813, %v4616
        %4652 = vst.msk [vmem:[#allocation3 + $0x2e0] sm:$0xff] %vm2813, %v4618
        %4653 = vst.msk [vmem:[#allocation3 + $0x318] sm:$0xff] %vm2813, %v4620
        %4654 = vst.msk [vmem:[#allocation3 + $0x350] sm:$0xff] %vm2813, %v4622
        %v4655 = vld [vmem:[%s3726] sm:$0xc]
        %v4656 = vld [vmem:[%s3726 + $0x4] sm:$0xf]
        %v4657 = vld [vmem:[%s3726 + $0x8] sm:$0x7]
        %v4658 = vld [vmem:[%s3726 + $0xc] sm:$0xc]
        %v4659 = vld [vmem:[%s3726 + $0x10] sm:$0xf]
        %v4660 = vld [vmem:[%s3726 + $0x14] sm:$0x7]
        %v4661 = vld [vmem:[%s3726 + $0x18] sm:$0xc]
        %v4662 = vld [vmem:[%s3726 + $0x1c] sm:$0xf]
        %v4663 = vld [vmem:[%s3726 + $0x20] sm:$0x7]
        %v4664 = vld [vmem:[%s3726 + $0x24] sm:$0xc]
        %v4665 = vld [vmem:[%s3726 + $0x28] sm:$0xf]
        %v4666 = vld [vmem:[%s3726 + $0x2c] sm:$0x7]
        %v4667 = vld [vmem:[%s3726 + $0x30] sm:$0xc]
        %v4668 = vld [vmem:[%s3726 + $0x34] sm:$0xf]
        %v4669 = vld [vmem:[%s3726 + $0x38] sm:$0x7]
        %v4670 = vld [vmem:[%s3726 + $0x3c] sm:$0xc]
        %v4671 = vld [vmem:[%s3726 + $0x40] sm:$0xf]
        %v4672 = vld [vmem:[%s3726 + $0x44] sm:$0x7]
        %v4673 = vld [vmem:[%s3726 + $0x48] sm:$0xc]
        %v4674 = vld [vmem:[%s3726 + $0x4c] sm:$0xf]
        %v4675 = vld [vmem:[%s3726 + $0x50] sm:$0x7]
        %v4676 = vld [vmem:[%s3726 + $0x54] sm:$0xc]
        %v4677 = vld [vmem:[%s3726 + $0x58] sm:$0xf]
        %v4678 = vld [vmem:[%s3726 + $0x5c] sm:$0x7]
        %v4679 = vld [vmem:[%s3726 + $0x60] sm:$0xc]
        %v4680 = vld [vmem:[%s3726 + $0x64] sm:$0xf]
        %v4681 = vld [vmem:[%s3726 + $0x68] sm:$0x7]
        %v4682 = vld [vmem:[%s3726 + $0x6c] sm:$0xc]
        %v4683 = vld [vmem:[%s3726 + $0x70] sm:$0xf]
        %v4684 = vld [vmem:[%s3726 + $0x74] sm:$0x7]
        %v4685 = vld [vmem:[%s3726 + $0x78] sm:$0xc]
        %v4686 = vld [vmem:[%s3726 + $0x7c] sm:$0xf]
        %v4687 = vld [vmem:[%s3726 + $0x80] sm:$0x7]
        %v4688 = vld [vmem:[%s3726 + $0x84] sm:$0xc]
        %v4689 = vld [vmem:[%s3726 + $0x88] sm:$0xf]
        %v4690 = vld [vmem:[%s3726 + $0x8c] sm:$0x7]
        %v4691 = vld [vmem:[%s3726 + $0x90] sm:$0xc]
        %v4692 = vld [vmem:[%s3726 + $0x94] sm:$0xf]
        %v4693 = vld [vmem:[%s3726 + $0x98] sm:$0x7]
        %v4694 = vld [vmem:[%s3726 + $0x9c] sm:$0xc]
        %v4695 = vld [vmem:[%s3726 + $0xa0] sm:$0xf]
        %v4696 = vld [vmem:[%s3726 + $0xa4] sm:$0x7]
        %v4697 = vld [vmem:[%s3726 + $0xa8] sm:$0xc]
        %v4698 = vld [vmem:[%s3726 + $0xac] sm:$0xf]
        %v4699 = vld [vmem:[%s3726 + $0xb0] sm:$0x7]
        %v4700 = vld [vmem:[%s3726 + $0xb4] sm:$0xc]
        %v4701 = vld [vmem:[%s3726 + $0xb8] sm:$0xf]
        %v4702 = vld [vmem:[%s3726 + $0xbc] sm:$0x7]
        %v4704 = vshrl.u32 %v4655, 16
        %v4706 = vrot.slane %v4704, 6
        %v4707 = vshll.u32 %v4655, 16
        %v4709 = vrot.slane %v4707, 7
        %v4710 = vor.u32 %v4706, %v4709
        %v4711 = vrot.slane %v4710, 4
        %v4713 = vshrl.u32 %v4656, 16
        %v4715 = vrot.slane %v4713, 6
        %v4716 = vshll.u32 %v4656, 16
        %v4718 = vrot.slane %v4716, 7
        %v4719 = vor.u32 %v4715, %v4718
        %v4720 = vsel %vm1659, %v4711, %v4719
        %v4721 = vrot.slane %v4719, 4
        %v4723 = vshrl.u32 %v4657, 16
        %v4725 = vrot.slane %v4723, 6
        %v4726 = vshll.u32 %v4657, 16
        %v4728 = vrot.slane %v4726, 7
        %v4729 = vor.u32 %v4725, %v4728
        %v4730 = vsel %vm1659, %v4721, %v4729
        %v4732 = vshrl.u32 %v4658, 16
        %v4734 = vrot.slane %v4732, 6
        %v4735 = vshll.u32 %v4658, 16
        %v4737 = vrot.slane %v4735, 7
        %v4738 = vor.u32 %v4734, %v4737
        %v4739 = vrot.slane %v4738, 4
        %v4741 = vshrl.u32 %v4659, 16
        %v4743 = vrot.slane %v4741, 6
        %v4744 = vshll.u32 %v4659, 16
        %v4746 = vrot.slane %v4744, 7
        %v4747 = vor.u32 %v4743, %v4746
        %v4748 = vsel %vm1659, %v4739, %v4747
        %v4749 = vrot.slane %v4747, 4
        %v4751 = vshrl.u32 %v4660, 16
        %v4753 = vrot.slane %v4751, 6
        %v4754 = vshll.u32 %v4660, 16
        %v4756 = vrot.slane %v4754, 7
        %v4757 = vor.u32 %v4753, %v4756
        %v4758 = vsel %vm1659, %v4749, %v4757
        %v4760 = vshrl.u32 %v4661, 16
        %v4762 = vrot.slane %v4760, 6
        %v4763 = vshll.u32 %v4661, 16
        %v4765 = vrot.slane %v4763, 7
        %v4766 = vor.u32 %v4762, %v4765
        %v4767 = vrot.slane %v4766, 4
        %v4769 = vshrl.u32 %v4662, 16
        %v4771 = vrot.slane %v4769, 6
        %v4772 = vshll.u32 %v4662, 16
        %v4774 = vrot.slane %v4772, 7
        %v4775 = vor.u32 %v4771, %v4774
        %v4776 = vsel %vm1659, %v4767, %v4775
        %v4777 = vrot.slane %v4775, 4
        %v4779 = vshrl.u32 %v4663, 16
        %v4781 = vrot.slane %v4779, 6
        %v4782 = vshll.u32 %v4663, 16
        %v4784 = vrot.slane %v4782, 7
        %v4785 = vor.u32 %v4781, %v4784
        %v4786 = vsel %vm1659, %v4777, %v4785
        %v4788 = vshrl.u32 %v4664, 16
        %v4790 = vrot.slane %v4788, 6
        %v4791 = vshll.u32 %v4664, 16
        %v4793 = vrot.slane %v4791, 7
        %v4794 = vor.u32 %v4790, %v4793
        %v4795 = vrot.slane %v4794, 4
        %v4797 = vshrl.u32 %v4665, 16
        %v4799 = vrot.slane %v4797, 6
        %v4800 = vshll.u32 %v4665, 16
        %v4802 = vrot.slane %v4800, 7
        %v4803 = vor.u32 %v4799, %v4802
        %v4804 = vsel %vm1659, %v4795, %v4803
        %v4805 = vrot.slane %v4803, 4
        %v4807 = vshrl.u32 %v4666, 16
        %v4809 = vrot.slane %v4807, 6
        %v4810 = vshll.u32 %v4666, 16
        %v4812 = vrot.slane %v4810, 7
        %v4813 = vor.u32 %v4809, %v4812
        %v4814 = vsel %vm1659, %v4805, %v4813
        %v4816 = vshrl.u32 %v4667, 16
        %v4818 = vrot.slane %v4816, 6
        %v4819 = vshll.u32 %v4667, 16
        %v4821 = vrot.slane %v4819, 7
        %v4822 = vor.u32 %v4818, %v4821
        %v4823 = vrot.slane %v4822, 4
        %v4825 = vshrl.u32 %v4668, 16
        %v4827 = vrot.slane %v4825, 6
        %v4828 = vshll.u32 %v4668, 16
        %v4830 = vrot.slane %v4828, 7
        %v4831 = vor.u32 %v4827, %v4830
        %v4832 = vsel %vm1659, %v4823, %v4831
        %v4833 = vrot.slane %v4831, 4
        %v4835 = vshrl.u32 %v4669, 16
        %v4837 = vrot.slane %v4835, 6
        %v4838 = vshll.u32 %v4669, 16
        %v4840 = vrot.slane %v4838, 7
        %v4841 = vor.u32 %v4837, %v4840
        %v4842 = vsel %vm1659, %v4833, %v4841
        %v4844 = vshrl.u32 %v4670, 16
        %v4846 = vrot.slane %v4844, 6
        %v4847 = vshll.u32 %v4670, 16
        %v4849 = vrot.slane %v4847, 7
        %v4850 = vor.u32 %v4846, %v4849
        %v4851 = vrot.slane %v4850, 4
        %v4853 = vshrl.u32 %v4671, 16
        %v4855 = vrot.slane %v4853, 6
        %v4856 = vshll.u32 %v4671, 16
        %v4858 = vrot.slane %v4856, 7
        %v4859 = vor.u32 %v4855, %v4858
        %v4860 = vsel %vm1659, %v4851, %v4859
        %v4861 = vrot.slane %v4859, 4
        %v4863 = vshrl.u32 %v4672, 16
        %v4865 = vrot.slane %v4863, 6
        %v4866 = vshll.u32 %v4672, 16
        %v4868 = vrot.slane %v4866, 7
        %v4869 = vor.u32 %v4865, %v4868
        %v4870 = vsel %vm1659, %v4861, %v4869
        %v4872 = vshrl.u32 %v4673, 16
        %v4874 = vrot.slane %v4872, 6
        %v4875 = vshll.u32 %v4673, 16
        %v4877 = vrot.slane %v4875, 7
        %v4878 = vor.u32 %v4874, %v4877
        %v4879 = vrot.slane %v4878, 4
        %v4881 = vshrl.u32 %v4674, 16
        %v4883 = vrot.slane %v4881, 6
        %v4884 = vshll.u32 %v4674, 16
        %v4886 = vrot.slane %v4884, 7
        %v4887 = vor.u32 %v4883, %v4886
        %v4888 = vsel %vm1659, %v4879, %v4887
        %v4889 = vrot.slane %v4887, 4
        %v4891 = vshrl.u32 %v4675, 16
        %v4893 = vrot.slane %v4891, 6
        %v4894 = vshll.u32 %v4675, 16
        %v4896 = vrot.slane %v4894, 7
        %v4897 = vor.u32 %v4893, %v4896
        %v4898 = vsel %vm1659, %v4889, %v4897
        %v4900 = vshrl.u32 %v4676, 16
        %v4902 = vrot.slane %v4900, 6
        %v4903 = vshll.u32 %v4676, 16
        %v4905 = vrot.slane %v4903, 7
        %v4906 = vor.u32 %v4902, %v4905
        %v4907 = vrot.slane %v4906, 4
        %v4909 = vshrl.u32 %v4677, 16
        %v4911 = vrot.slane %v4909, 6
        %v4912 = vshll.u32 %v4677, 16
        %v4914 = vrot.slane %v4912, 7
        %v4915 = vor.u32 %v4911, %v4914
        %v4916 = vsel %vm1659, %v4907, %v4915
        %v4917 = vrot.slane %v4915, 4
        %v4919 = vshrl.u32 %v4678, 16
        %v4921 = vrot.slane %v4919, 6
        %v4922 = vshll.u32 %v4678, 16
        %v4924 = vrot.slane %v4922, 7
        %v4925 = vor.u32 %v4921, %v4924
        %v4926 = vsel %vm1659, %v4917, %v4925
        %v4928 = vshrl.u32 %v4679, 16
        %v4930 = vrot.slane %v4928, 6
        %v4931 = vshll.u32 %v4679, 16
        %v4933 = vrot.slane %v4931, 7
        %v4934 = vor.u32 %v4930, %v4933
        %v4935 = vrot.slane %v4934, 4
        %v4937 = vshrl.u32 %v4680, 16
        %v4939 = vrot.slane %v4937, 6
        %v4940 = vshll.u32 %v4680, 16
        %v4942 = vrot.slane %v4940, 7
        %v4943 = vor.u32 %v4939, %v4942
        %v4944 = vsel %vm1659, %v4935, %v4943
        %v4945 = vrot.slane %v4943, 4
        %v4947 = vshrl.u32 %v4681, 16
        %v4949 = vrot.slane %v4947, 6
        %v4950 = vshll.u32 %v4681, 16
        %v4952 = vrot.slane %v4950, 7
        %v4953 = vor.u32 %v4949, %v4952
        %v4954 = vsel %vm1659, %v4945, %v4953
        %v4956 = vshrl.u32 %v4682, 16
        %v4958 = vrot.slane %v4956, 6
        %v4959 = vshll.u32 %v4682, 16
        %v4961 = vrot.slane %v4959, 7
        %v4962 = vor.u32 %v4958, %v4961
        %v4963 = vrot.slane %v4962, 4
        %v4965 = vshrl.u32 %v4683, 16
        %v4967 = vrot.slane %v4965, 6
        %v4968 = vshll.u32 %v4683, 16
        %v4970 = vrot.slane %v4968, 7
        %v4971 = vor.u32 %v4967, %v4970
        %v4972 = vsel %vm1659, %v4963, %v4971
        %v4973 = vrot.slane %v4971, 4
        %v4975 = vshrl.u32 %v4684, 16
        %v4977 = vrot.slane %v4975, 6
        %v4978 = vshll.u32 %v4684, 16
        %v4980 = vrot.slane %v4978, 7
        %v4981 = vor.u32 %v4977, %v4980
        %v4982 = vsel %vm1659, %v4973, %v4981
        %v4984 = vshrl.u32 %v4685, 16
        %v4986 = vrot.slane %v4984, 6
        %v4987 = vshll.u32 %v4685, 16
        %v4989 = vrot.slane %v4987, 7
        %v4990 = vor.u32 %v4986, %v4989
        %v4991 = vrot.slane %v4990, 4
        %v4993 = vshrl.u32 %v4686, 16
        %v4995 = vrot.slane %v4993, 6
        %v4996 = vshll.u32 %v4686, 16
        %v4998 = vrot.slane %v4996, 7
        %v4999 = vor.u32 %v4995, %v4998
        %v5000 = vsel %vm1659, %v4991, %v4999
        %v5001 = vrot.slane %v4999, 4
        %v5003 = vshrl.u32 %v4687, 16
        %v5005 = vrot.slane %v5003, 6
        %v5006 = vshll.u32 %v4687, 16
        %v5008 = vrot.slane %v5006, 7
        %v5009 = vor.u32 %v5005, %v5008
        %v5010 = vsel %vm1659, %v5001, %v5009
        %v5012 = vshrl.u32 %v4688, 16
        %v5014 = vrot.slane %v5012, 6
        %v5015 = vshll.u32 %v4688, 16
        %v5017 = vrot.slane %v5015, 7
        %v5018 = vor.u32 %v5014, %v5017
        %v5019 = vrot.slane %v5018, 4
        %v5021 = vshrl.u32 %v4689, 16
        %v5023 = vrot.slane %v5021, 6
        %v5024 = vshll.u32 %v4689, 16
        %v5026 = vrot.slane %v5024, 7
        %v5027 = vor.u32 %v5023, %v5026
        %v5028 = vsel %vm1659, %v5019, %v5027
        %v5029 = vrot.slane %v5027, 4
        %v5031 = vshrl.u32 %v4690, 16
        %v5033 = vrot.slane %v5031, 6
        %v5034 = vshll.u32 %v4690, 16
        %v5036 = vrot.slane %v5034, 7
        %v5037 = vor.u32 %v5033, %v5036
        %v5038 = vsel %vm1659, %v5029, %v5037
        %v5040 = vshrl.u32 %v4691, 16
        %v5042 = vrot.slane %v5040, 6
        %v5043 = vshll.u32 %v4691, 16
        %v5045 = vrot.slane %v5043, 7
        %v5046 = vor.u32 %v5042, %v5045
        %v5047 = vrot.slane %v5046, 4
        %v5049 = vshrl.u32 %v4692, 16
        %v5051 = vrot.slane %v5049, 6
        %v5052 = vshll.u32 %v4692, 16
        %v5054 = vrot.slane %v5052, 7
        %v5055 = vor.u32 %v5051, %v5054
        %v5056 = vsel %vm1659, %v5047, %v5055
        %v5057 = vrot.slane %v5055, 4
        %v5059 = vshrl.u32 %v4693, 16
        %v5061 = vrot.slane %v5059, 6
        %v5062 = vshll.u32 %v4693, 16
        %v5064 = vrot.slane %v5062, 7
        %v5065 = vor.u32 %v5061, %v5064
        %v5066 = vsel %vm1659, %v5057, %v5065
        %v5068 = vshrl.u32 %v4694, 16
        %v5070 = vrot.slane %v5068, 6
        %v5071 = vshll.u32 %v4694, 16
        %v5073 = vrot.slane %v5071, 7
        %v5074 = vor.u32 %v5070, %v5073
        %v5075 = vrot.slane %v5074, 4
        %v5077 = vshrl.u32 %v4695, 16
        %v5079 = vrot.slane %v5077, 6
        %v5080 = vshll.u32 %v4695, 16
        %v5082 = vrot.slane %v5080, 7
        %v5083 = vor.u32 %v5079, %v5082
        %v5084 = vsel %vm1659, %v5075, %v5083
        %v5085 = vrot.slane %v5083, 4
        %v5087 = vshrl.u32 %v4696, 16
        %v5089 = vrot.slane %v5087, 6
        %v5090 = vshll.u32 %v4696, 16
        %v5092 = vrot.slane %v5090, 7
        %v5093 = vor.u32 %v5089, %v5092
        %v5094 = vsel %vm1659, %v5085, %v5093
        %v5096 = vshrl.u32 %v4697, 16
        %v5098 = vrot.slane %v5096, 6
        %v5099 = vshll.u32 %v4697, 16
        %v5101 = vrot.slane %v5099, 7
        %v5102 = vor.u32 %v5098, %v5101
        %v5103 = vrot.slane %v5102, 4
        %v5105 = vshrl.u32 %v4698, 16
        %v5107 = vrot.slane %v5105, 6
        %v5108 = vshll.u32 %v4698, 16
        %v5110 = vrot.slane %v5108, 7
        %v5111 = vor.u32 %v5107, %v5110
        %v5112 = vsel %vm1659, %v5103, %v5111
        %v5113 = vrot.slane %v5111, 4
        %v5115 = vshrl.u32 %v4699, 16
        %v5117 = vrot.slane %v5115, 6
        %v5118 = vshll.u32 %v4699, 16
        %v5120 = vrot.slane %v5118, 7
        %v5121 = vor.u32 %v5117, %v5120
        %v5122 = vsel %vm1659, %v5113, %v5121
        %v5124 = vshrl.u32 %v4700, 16
        %v5126 = vrot.slane %v5124, 6
        %v5127 = vshll.u32 %v4700, 16
        %v5129 = vrot.slane %v5127, 7
        %v5130 = vor.u32 %v5126, %v5129
        %v5131 = vrot.slane %v5130, 4
        %v5133 = vshrl.u32 %v4701, 16
        %v5135 = vrot.slane %v5133, 6
        %v5136 = vshll.u32 %v4701, 16
        %v5138 = vrot.slane %v5136, 7
        %v5139 = vor.u32 %v5135, %v5138
        %v5140 = vsel %vm1659, %v5131, %v5139
        %v5141 = vrot.slane %v5139, 4
        %v5143 = vshrl.u32 %v4702, 16
        %v5145 = vrot.slane %v5143, 6
        %v5146 = vshll.u32 %v4702, 16
        %v5148 = vrot.slane %v5146, 7
        %v5149 = vor.u32 %v5145, %v5148
        %v5150 = vsel %vm1659, %v5141, %v5149
        %v5151 = vunpack.c.l.b16 %v4720
        %v5152 = vunpack.c.l.b16 %v4730
        %v5153 = vunpack.c.l.b16 %v4748
        %v5154 = vunpack.c.l.b16 %v4758
        %v5155 = vunpack.c.l.b16 %v4776
        %v5156 = vunpack.c.l.b16 %v4786
        %v5157 = vunpack.c.l.b16 %v4804
        %v5158 = vunpack.c.l.b16 %v4814
        %v5159 = vunpack.c.l.b16 %v4832
        %v5160 = vunpack.c.l.b16 %v4842
        %v5161 = vunpack.c.l.b16 %v4860
        %v5162 = vunpack.c.l.b16 %v4870
        %v5163 = vunpack.c.l.b16 %v4888
        %v5164 = vunpack.c.l.b16 %v4898
        %v5165 = vunpack.c.l.b16 %v4916
        %v5166 = vunpack.c.l.b16 %v4926
        %v5167 = vunpack.c.l.b16 %v4944
        %v5168 = vunpack.c.l.b16 %v4954
        %v5169 = vunpack.c.l.b16 %v4972
        %v5170 = vunpack.c.l.b16 %v4982
        %v5171 = vunpack.c.l.b16 %v5000
        %v5172 = vunpack.c.l.b16 %v5010
        %v5173 = vunpack.c.l.b16 %v5028
        %v5174 = vunpack.c.l.b16 %v5038
        %v5175 = vunpack.c.l.b16 %v5056
        %v5176 = vunpack.c.l.b16 %v5066
        %v5177 = vunpack.c.l.b16 %v5084
        %v5178 = vunpack.c.l.b16 %v5094
        %v5179 = vunpack.c.l.b16 %v5112
        %v5180 = vunpack.c.l.b16 %v5122
        %v5181 = vunpack.c.l.b16 %v5140
        %v5182 = vunpack.c.l.b16 %v5150
        %v5183 = vpack.c.b16 %v5152, %v5151
        %v5184 = vpack.c.b16 %v5154, %v5153
        %v5185 = vpack.c.b16 %v5156, %v5155
        %v5186 = vpack.c.b16 %v5158, %v5157
        %v5187 = vpack.c.b16 %v5160, %v5159
        %v5188 = vpack.c.b16 %v5162, %v5161
        %v5189 = vpack.c.b16 %v5164, %v5163
        %v5190 = vpack.c.b16 %v5166, %v5165
        %v5191 = vpack.c.b16 %v5168, %v5167
        %v5192 = vpack.c.b16 %v5170, %v5169
        %v5193 = vpack.c.b16 %v5172, %v5171
        %v5194 = vpack.c.b16 %v5174, %v5173
        %v5195 = vpack.c.b16 %v5176, %v5175
        %v5196 = vpack.c.b16 %v5178, %v5177
        %v5197 = vpack.c.b16 %v5180, %v5179
        %v5198 = vpack.c.b16 %v5182, %v5181
        %5215 = vst.msk [vmem:[#allocation3 + $0x10] sm:$0xff] %vm1271, %v5183
        %5216 = vst.msk [vmem:[#allocation3 + $0x48] sm:$0xff] %vm1271, %v5184
        %5217 = vst.msk [vmem:[#allocation3 + $0x80] sm:$0xff] %vm1271, %v5185
        %5218 = vst.msk [vmem:[#allocation3 + $0xb8] sm:$0xff] %vm1271, %v5186
        %5219 = vst.msk [vmem:[#allocation3 + $0xf0] sm:$0xff] %vm1271, %v5187
        %5220 = vst.msk [vmem:[#allocation3 + $0x128] sm:$0xff] %vm1271, %v5188
        %5221 = vst.msk [vmem:[#allocation3 + $0x160] sm:$0xff] %vm1271, %v5189
        %5222 = vst.msk [vmem:[#allocation3 + $0x198] sm:$0xff] %vm1271, %v5190
        %5223 = vst.msk [vmem:[#allocation3 + $0x1d0] sm:$0xff] %vm1271, %v5191
        %5224 = vst.msk [vmem:[#allocation3 + $0x208] sm:$0xff] %vm1271, %v5192
        %5225 = vst.msk [vmem:[#allocation3 + $0x240] sm:$0xff] %vm1271, %v5193
        %5226 = vst.msk [vmem:[#allocation3 + $0x278] sm:$0xff] %vm1271, %v5194
        %5227 = vst.msk [vmem:[#allocation3 + $0x2b0] sm:$0xff] %vm1271, %v5195
        %5228 = vst.msk [vmem:[#allocation3 + $0x2e8] sm:$0xff] %vm1271, %v5196
        %5229 = vst.msk [vmem:[#allocation3 + $0x320] sm:$0xff] %vm1271, %v5197
        %5230 = vst.msk [vmem:[#allocation3 + $0x358] sm:$0xff] %vm1271, %v5198
        %s5231 = scalar_lea.vmem %s226, 256
        %v5232 = vld [vmem:[%s5231] sm:$0xff]
        %v5233 = vld [vmem:[%s5231 + $0x8] sm:$0xff]
        %v5234 = vld [vmem:[%s5231 + $0x10] sm:$0xff]
        %v5235 = vld [vmem:[%s5231 + $0x18] sm:$0xff]
        %v5236 = vld [vmem:[%s5231 + $0x20] sm:$0xff]
        %v5237 = vld [vmem:[%s5231 + $0x28] sm:$0xff]
        %v5238 = vld [vmem:[%s5231 + $0x30] sm:$0xff]
        %v5239 = vld [vmem:[%s5231 + $0x38] sm:$0xff]
        %v5240 = vld [vmem:[%s5231 + $0x40] sm:$0xff]
        %v5241 = vld [vmem:[%s5231 + $0x48] sm:$0xff]
        %v5242 = vld [vmem:[%s5231 + $0x50] sm:$0xff]
        %v5243 = vld [vmem:[%s5231 + $0x58] sm:$0xff]
        %v5244 = vld [vmem:[%s5231 + $0x60] sm:$0xff]
        %v5245 = vld [vmem:[%s5231 + $0x68] sm:$0xff]
        %v5246 = vld [vmem:[%s5231 + $0x70] sm:$0xff]
        %v5247 = vld [vmem:[%s5231 + $0x78] sm:$0xff]
        %v5248 = vld [vmem:[%s5231 + $0x80] sm:$0xff]
        %v5249 = vld [vmem:[%s5231 + $0x88] sm:$0xff]
        %v5250 = vld [vmem:[%s5231 + $0x90] sm:$0xff]
        %v5251 = vld [vmem:[%s5231 + $0x98] sm:$0xff]
        %v5252 = vld [vmem:[%s5231 + $0xa0] sm:$0xff]
        %v5253 = vld [vmem:[%s5231 + $0xa8] sm:$0xff]
        %v5254 = vld [vmem:[%s5231 + $0xb0] sm:$0xff]
        %v5255 = vld [vmem:[%s5231 + $0xb8] sm:$0xff]
        %v5256 = vld [vmem:[%s5231 + $0xc0] sm:$0xff]
        %v5257 = vld [vmem:[%s5231 + $0xc8] sm:$0xff]
        %v5258 = vld [vmem:[%s5231 + $0xd0] sm:$0xff]
        %v5259 = vld [vmem:[%s5231 + $0xd8] sm:$0xff]
        %v5260 = vld [vmem:[%s5231 + $0xe0] sm:$0xff]
        %v5261 = vld [vmem:[%s5231 + $0xe8] sm:$0xff]
        %v5262 = vld [vmem:[%s5231 + $0xf0] sm:$0xff]
        %v5263 = vld [vmem:[%s5231 + $0xf8] sm:$0xff]
        %s5264 = scalar_lea.vmem %s1, 1
        %v5265 = vld [vmem:[%s5264] sm:$0x1]
        %v5267 = vlaneseq
        %v5268 = vshrl.u32 %v5267, 7
        %v5269 = vsub.s32 0, %v5268
        %v5270 = vrot.slane %v5265, %v5269
        %v5272 = vmul.f32 %v5232, %v5270
        %v5273 = vmul.f32 %v5233, %v5270
        %v5274 = vmul.f32 %v5234, %v5270
        %v5275 = vmul.f32 %v5235, %v5270
        %v5276 = vmul.f32 %v5236, %v5270
        %v5277 = vmul.f32 %v5237, %v5270
        %v5278 = vmul.f32 %v5238, %v5270
        %v5279 = vmul.f32 %v5239, %v5270
        %v5280 = vmul.f32 %v5240, %v5270
        %v5281 = vmul.f32 %v5241, %v5270
        %v5282 = vmul.f32 %v5242, %v5270
        %v5283 = vmul.f32 %v5243, %v5270
        %v5284 = vmul.f32 %v5244, %v5270
        %v5285 = vmul.f32 %v5245, %v5270
        %v5286 = vmul.f32 %v5246, %v5270
        %v5287 = vmul.f32 %v5247, %v5270
        %v5288 = vmul.f32 %v5248, %v5270
        %v5289 = vmul.f32 %v5249, %v5270
        %v5290 = vmul.f32 %v5250, %v5270
        %v5291 = vmul.f32 %v5251, %v5270
        %v5292 = vmul.f32 %v5252, %v5270
        %v5293 = vmul.f32 %v5253, %v5270
        %v5294 = vmul.f32 %v5254, %v5270
        %v5295 = vmul.f32 %v5255, %v5270
        %v5296 = vmul.f32 %v5256, %v5270
        %v5297 = vmul.f32 %v5257, %v5270
        %v5298 = vmul.f32 %v5258, %v5270
        %v5299 = vmul.f32 %v5259, %v5270
        %v5300 = vmul.f32 %v5260, %v5270
        %v5301 = vmul.f32 %v5261, %v5270
        %v5302 = vmul.f32 %v5262, %v5270
        %v5303 = vmul.f32 %v5263, %v5270
        %s5304 = scalar_lea.vmem %s2, 1
        %v5305 = vld [vmem:[%s5304] sm:$0x1]
        %v5307 = vlaneseq
        %v5308 = vshrl.u32 %v5307, 7
        %v5309 = vsub.s32 0, %v5308
        %v5310 = vrot.slane %v5305, %v5309
        %v5312 = vadd.f32 %v5272, %v5310
        %v5313 = vadd.f32 %v5273, %v5310
        %v5314 = vadd.f32 %v5274, %v5310
        %v5315 = vadd.f32 %v5275, %v5310
        %v5316 = vadd.f32 %v5276, %v5310
        %v5317 = vadd.f32 %v5277, %v5310
        %v5318 = vadd.f32 %v5278, %v5310
        %v5319 = vadd.f32 %v5279, %v5310
        %v5320 = vadd.f32 %v5280, %v5310
        %v5321 = vadd.f32 %v5281, %v5310
        %v5322 = vadd.f32 %v5282, %v5310
        %v5323 = vadd.f32 %v5283, %v5310
        %v5324 = vadd.f32 %v5284, %v5310
        %v5325 = vadd.f32 %v5285, %v5310
        %v5326 = vadd.f32 %v5286, %v5310
        %v5327 = vadd.f32 %v5287, %v5310
        %v5328 = vadd.f32 %v5288, %v5310
        %v5329 = vadd.f32 %v5289, %v5310
        %v5330 = vadd.f32 %v5290, %v5310
        %v5331 = vadd.f32 %v5291, %v5310
        %v5332 = vadd.f32 %v5292, %v5310
        %v5333 = vadd.f32 %v5293, %v5310
        %v5334 = vadd.f32 %v5294, %v5310
        %v5335 = vadd.f32 %v5295, %v5310
        %v5336 = vadd.f32 %v5296, %v5310
        %v5337 = vadd.f32 %v5297, %v5310
        %v5338 = vadd.f32 %v5298, %v5310
        %v5339 = vadd.f32 %v5299, %v5310
        %v5340 = vadd.f32 %v5300, %v5310
        %v5341 = vadd.f32 %v5301, %v5310
        %v5342 = vadd.f32 %v5302, %v5310
        %v5343 = vadd.f32 %v5303, %v5310
        %v5344 = vmax.f32 %v5312, 0.0
        %v5345 = vmax.f32 %v5313, 0.0
        %v5346 = vmax.f32 %v5314, 0.0
        %v5347 = vmax.f32 %v5315, 0.0
        %v5348 = vmax.f32 %v5316, 0.0
        %v5349 = vmax.f32 %v5317, 0.0
        %v5350 = vmax.f32 %v5318, 0.0
        %v5351 = vmax.f32 %v5319, 0.0
        %v5352 = vmax.f32 %v5320, 0.0
        %v5353 = vmax.f32 %v5321, 0.0
        %v5354 = vmax.f32 %v5322, 0.0
        %v5355 = vmax.f32 %v5323, 0.0
        %v5356 = vmax.f32 %v5324, 0.0
        %v5357 = vmax.f32 %v5325, 0.0
        %v5358 = vmax.f32 %v5326, 0.0
        %v5359 = vmax.f32 %v5327, 0.0
        %v5360 = vmax.f32 %v5328, 0.0
        %v5361 = vmax.f32 %v5329, 0.0
        %v5362 = vmax.f32 %v5330, 0.0
        %v5363 = vmax.f32 %v5331, 0.0
        %v5364 = vmax.f32 %v5332, 0.0
        %v5365 = vmax.f32 %v5333, 0.0
        %v5366 = vmax.f32 %v5334, 0.0
        %v5367 = vmax.f32 %v5335, 0.0
        %v5368 = vmax.f32 %v5336, 0.0
        %v5369 = vmax.f32 %v5337, 0.0
        %v5370 = vmax.f32 %v5338, 0.0
        %v5371 = vmax.f32 %v5339, 0.0
        %v5372 = vmax.f32 %v5340, 0.0
        %v5373 = vmax.f32 %v5341, 0.0
        %v5374 = vmax.f32 %v5342, 0.0
        %v5375 = vmax.f32 %v5343, 0.0
        %v5376 = vpack.c.bf16 %v5345, %v5344
        %v5377 = vpack.c.bf16 %v5347, %v5346
        %v5378 = vpack.c.bf16 %v5349, %v5348
        %v5379 = vpack.c.bf16 %v5351, %v5350
        %v5380 = vpack.c.bf16 %v5353, %v5352
        %v5381 = vpack.c.bf16 %v5355, %v5354
        %v5382 = vpack.c.bf16 %v5357, %v5356
        %v5383 = vpack.c.bf16 %v5359, %v5358
        %v5384 = vpack.c.bf16 %v5361, %v5360
        %v5385 = vpack.c.bf16 %v5363, %v5362
        %v5386 = vpack.c.bf16 %v5365, %v5364
        %v5387 = vpack.c.bf16 %v5367, %v5366
        %v5388 = vpack.c.bf16 %v5369, %v5368
        %v5389 = vpack.c.bf16 %v5371, %v5370
        %v5390 = vpack.c.bf16 %v5373, %v5372
        %v5391 = vpack.c.bf16 %v5375, %v5374
        %v5408 = vunpack.c.l.b16 %v5376
        %v5409 = vunpack.c.h.b16 %v5376
        %v5410 = vunpack.c.l.b16 %v5377
        %v5411 = vunpack.c.h.b16 %v5377
        %v5412 = vunpack.c.l.b16 %v5378
        %v5413 = vunpack.c.h.b16 %v5378
        %v5414 = vunpack.c.l.b16 %v5379
        %v5415 = vunpack.c.h.b16 %v5379
        %v5416 = vunpack.c.l.b16 %v5380
        %v5417 = vunpack.c.h.b16 %v5380
        %v5418 = vunpack.c.l.b16 %v5381
        %v5419 = vunpack.c.h.b16 %v5381
        %v5420 = vunpack.c.l.b16 %v5382
        %v5421 = vunpack.c.h.b16 %v5382
        %v5422 = vunpack.c.l.b16 %v5383
        %v5423 = vunpack.c.h.b16 %v5383
        %v5424 = vunpack.c.l.b16 %v5384
        %v5425 = vunpack.c.h.b16 %v5384
        %v5426 = vunpack.c.l.b16 %v5385
        %v5427 = vunpack.c.h.b16 %v5385
        %v5428 = vunpack.c.l.b16 %v5386
        %v5429 = vunpack.c.h.b16 %v5386
        %v5430 = vunpack.c.l.b16 %v5387
        %v5431 = vunpack.c.h.b16 %v5387
        %v5432 = vunpack.c.l.b16 %v5388
        %v5433 = vunpack.c.h.b16 %v5388
        %v5434 = vunpack.c.l.b16 %v5389
        %v5435 = vunpack.c.h.b16 %v5389
        %v5436 = vunpack.c.l.b16 %v5390
        %v5437 = vunpack.c.h.b16 %v5390
        %v5438 = vunpack.c.l.b16 %v5391
        %v5439 = vunpack.c.h.b16 %v5391
        %v5440 = vpack.c.b16 %v5408, %v5408
        %v5441 = vpack.c.b16 %v5409, %v5409
        %v5442 = vpack.c.b16 %v5410, %v5410
        %v5443 = vpack.c.b16 %v5411, %v5411
        %v5444 = vpack.c.b16 %v5412, %v5412
        %v5445 = vpack.c.b16 %v5413, %v5413
        %v5446 = vpack.c.b16 %v5414, %v5414
        %v5447 = vpack.c.b16 %v5415, %v5415
        %v5448 = vpack.c.b16 %v5416, %v5416
        %v5449 = vpack.c.b16 %v5417, %v5417
        %v5450 = vpack.c.b16 %v5418, %v5418
        %v5451 = vpack.c.b16 %v5419, %v5419
        %v5452 = vpack.c.b16 %v5420, %v5420
        %v5453 = vpack.c.b16 %v5421, %v5421
        %v5454 = vpack.c.b16 %v5422, %v5422
        %v5455 = vpack.c.b16 %v5423, %v5423
        %v5456 = vpack.c.b16 %v5424, %v5424
        %v5457 = vpack.c.b16 %v5425, %v5425
        %v5458 = vpack.c.b16 %v5426, %v5426
        %v5459 = vpack.c.b16 %v5427, %v5427
        %v5460 = vpack.c.b16 %v5428, %v5428
        %v5461 = vpack.c.b16 %v5429, %v5429
        %v5462 = vpack.c.b16 %v5430, %v5430
        %v5463 = vpack.c.b16 %v5431, %v5431
        %v5464 = vpack.c.b16 %v5432, %v5432
        %v5465 = vpack.c.b16 %v5433, %v5433
        %v5466 = vpack.c.b16 %v5434, %v5434
        %v5467 = vpack.c.b16 %v5435, %v5435
        %v5468 = vpack.c.b16 %v5436, %v5436
        %v5469 = vpack.c.b16 %v5437, %v5437
        %v5470 = vpack.c.b16 %v5438, %v5438
        %v5471 = vpack.c.b16 %v5439, %v5439
        %v5472 = vrot.slane %v5440, 6
        %v5473 = vrot.slane %v5472, 4
        %v5474 = vrot.slane %v5441, 6
        %v5475 = vsel %vm530, %v5473, %v5474
        %v5476 = vrot.slane %v5474, 4
        %v5477 = vrot.slane %v5442, 6
        %v5478 = vrot.slane %v5477, 4
        %v5479 = vrot.slane %v5443, 6
        %v5480 = vsel %vm530, %v5478, %v5479
        %v5481 = vrot.slane %v5479, 4
        %v5482 = vrot.slane %v5444, 6
        %v5483 = vrot.slane %v5482, 4
        %v5484 = vrot.slane %v5445, 6
        %v5485 = vsel %vm530, %v5483, %v5484
        %v5486 = vrot.slane %v5484, 4
        %v5487 = vrot.slane %v5446, 6
        %v5488 = vrot.slane %v5487, 4
        %v5489 = vrot.slane %v5447, 6
        %v5490 = vsel %vm530, %v5488, %v5489
        %v5491 = vrot.slane %v5489, 4
        %v5492 = vrot.slane %v5448, 6
        %v5493 = vrot.slane %v5492, 4
        %v5494 = vrot.slane %v5449, 6
        %v5495 = vsel %vm530, %v5493, %v5494
        %v5496 = vrot.slane %v5494, 4
        %v5497 = vrot.slane %v5450, 6
        %v5498 = vrot.slane %v5497, 4
        %v5499 = vrot.slane %v5451, 6
        %v5500 = vsel %vm530, %v5498, %v5499
        %v5501 = vrot.slane %v5499, 4
        %v5502 = vrot.slane %v5452, 6
        %v5503 = vrot.slane %v5502, 4
        %v5504 = vrot.slane %v5453, 6
        %v5505 = vsel %vm530, %v5503, %v5504
        %v5506 = vrot.slane %v5504, 4
        %v5507 = vrot.slane %v5454, 6
        %v5508 = vrot.slane %v5507, 4
        %v5509 = vrot.slane %v5455, 6
        %v5510 = vsel %vm530, %v5508, %v5509
        %v5511 = vrot.slane %v5509, 4
        %v5512 = vrot.slane %v5456, 6
        %v5513 = vrot.slane %v5512, 4
        %v5514 = vrot.slane %v5457, 6
        %v5515 = vsel %vm530, %v5513, %v5514
        %v5516 = vrot.slane %v5514, 4
        %v5517 = vrot.slane %v5458, 6
        %v5518 = vrot.slane %v5517, 4
        %v5519 = vrot.slane %v5459, 6
        %v5520 = vsel %vm530, %v5518, %v5519
        %v5521 = vrot.slane %v5519, 4
        %v5522 = vrot.slane %v5460, 6
        %v5523 = vrot.slane %v5522, 4
        %v5524 = vrot.slane %v5461, 6
        %v5525 = vsel %vm530, %v5523, %v5524
        %v5526 = vrot.slane %v5524, 4
        %v5527 = vrot.slane %v5462, 6
        %v5528 = vrot.slane %v5527, 4
        %v5529 = vrot.slane %v5463, 6
        %v5530 = vsel %vm530, %v5528, %v5529
        %v5531 = vrot.slane %v5529, 4
        %v5532 = vrot.slane %v5464, 6
        %v5533 = vrot.slane %v5532, 4
        %v5534 = vrot.slane %v5465, 6
        %v5535 = vsel %vm530, %v5533, %v5534
        %v5536 = vrot.slane %v5534, 4
        %v5537 = vrot.slane %v5466, 6
        %v5538 = vrot.slane %v5537, 4
        %v5539 = vrot.slane %v5467, 6
        %v5540 = vsel %vm530, %v5538, %v5539
        %v5541 = vrot.slane %v5539, 4
        %v5542 = vrot.slane %v5468, 6
        %v5543 = vrot.slane %v5542, 4
        %v5544 = vrot.slane %v5469, 6
        %v5545 = vsel %vm530, %v5543, %v5544
        %v5546 = vrot.slane %v5544, 4
        %v5547 = vrot.slane %v5470, 6
        %v5548 = vrot.slane %v5547, 4
        %v5549 = vrot.slane %v5471, 6
        %v5550 = vsel %vm530, %v5548, %v5549
        %v5551 = vrot.slane %v5549, 4
        %5600 = vst.msk [vmem:[%s255] sm:$0xc] %vm273, %v5472
        %5601 = vst.msk [vmem:[%s255 + $0x4] sm:$0xf] %vm229, %v5475
        %5602 = vst.msk [vmem:[%s255 + $0x8] sm:$0x3] %vm256, %v5476
        %5603 = vst.msk [vmem:[%s255 + $0xc] sm:$0xc] %vm273, %v5477
        %5604 = vst.msk [vmem:[%s255 + $0x10] sm:$0xf] %vm229, %v5480
        %5605 = vst.msk [vmem:[%s255 + $0x14] sm:$0x3] %vm256, %v5481
        %5606 = vst.msk [vmem:[%s255 + $0x18] sm:$0xc] %vm273, %v5482
        %5607 = vst.msk [vmem:[%s255 + $0x1c] sm:$0xf] %vm229, %v5485
        %5608 = vst.msk [vmem:[%s255 + $0x20] sm:$0x3] %vm256, %v5486
        %5609 = vst.msk [vmem:[%s255 + $0x24] sm:$0xc] %vm273, %v5487
        %5610 = vst.msk [vmem:[%s255 + $0x28] sm:$0xf] %vm229, %v5490
        %5611 = vst.msk [vmem:[%s255 + $0x2c] sm:$0x3] %vm256, %v5491
        %5612 = vst.msk [vmem:[%s255 + $0x30] sm:$0xc] %vm273, %v5492
        %5613 = vst.msk [vmem:[%s255 + $0x34] sm:$0xf] %vm229, %v5495
        %5614 = vst.msk [vmem:[%s255 + $0x38] sm:$0x3] %vm256, %v5496
        %5615 = vst.msk [vmem:[%s255 + $0x3c] sm:$0xc] %vm273, %v5497
        %5616 = vst.msk [vmem:[%s255 + $0x40] sm:$0xf] %vm229, %v5500
        %5617 = vst.msk [vmem:[%s255 + $0x44] sm:$0x3] %vm256, %v5501
        %5618 = vst.msk [vmem:[%s255 + $0x48] sm:$0xc] %vm273, %v5502
        %5619 = vst.msk [vmem:[%s255 + $0x4c] sm:$0xf] %vm229, %v5505
        %5620 = vst.msk [vmem:[%s255 + $0x50] sm:$0x3] %vm256, %v5506
        %5621 = vst.msk [vmem:[%s255 + $0x54] sm:$0xc] %vm273, %v5507
        %5622 = vst.msk [vmem:[%s255 + $0x58] sm:$0xf] %vm229, %v5510
        %5623 = vst.msk [vmem:[%s255 + $0x5c] sm:$0x3] %vm256, %v5511
        %5624 = vst.msk [vmem:[%s255 + $0x60] sm:$0xc] %vm273, %v5512
        %5625 = vst.msk [vmem:[%s255 + $0x64] sm:$0xf] %vm229, %v5515
        %5626 = vst.msk [vmem:[%s255 + $0x68] sm:$0x3] %vm256, %v5516
        %5627 = vst.msk [vmem:[%s255 + $0x6c] sm:$0xc] %vm273, %v5517
        %5628 = vst.msk [vmem:[%s255 + $0x70] sm:$0xf] %vm229, %v5520
        %5629 = vst.msk [vmem:[%s255 + $0x74] sm:$0x3] %vm256, %v5521
        %5630 = vst.msk [vmem:[%s255 + $0x78] sm:$0xc] %vm273, %v5522
        %5631 = vst.msk [vmem:[%s255 + $0x7c] sm:$0xf] %vm229, %v5525
        %5632 = vst.msk [vmem:[%s255 + $0x80] sm:$0x3] %vm256, %v5526
        %5633 = vst.msk [vmem:[%s255 + $0x84] sm:$0xc] %vm273, %v5527
        %5634 = vst.msk [vmem:[%s255 + $0x88] sm:$0xf] %vm229, %v5530
        %5635 = vst.msk [vmem:[%s255 + $0x8c] sm:$0x3] %vm256, %v5531
        %5636 = vst.msk [vmem:[%s255 + $0x90] sm:$0xc] %vm273, %v5532
        %5637 = vst.msk [vmem:[%s255 + $0x94] sm:$0xf] %vm229, %v5535
        %5638 = vst.msk [vmem:[%s255 + $0x98] sm:$0x3] %vm256, %v5536
        %5639 = vst.msk [vmem:[%s255 + $0x9c] sm:$0xc] %vm273, %v5537
        %5640 = vst.msk [vmem:[%s255 + $0xa0] sm:$0xf] %vm229, %v5540
        %5641 = vst.msk [vmem:[%s255 + $0xa4] sm:$0x3] %vm256, %v5541
        %5642 = vst.msk [vmem:[%s255 + $0xa8] sm:$0xc] %vm273, %v5542
        %5643 = vst.msk [vmem:[%s255 + $0xac] sm:$0xf] %vm229, %v5545
        %5644 = vst.msk [vmem:[%s255 + $0xb0] sm:$0x3] %vm256, %v5546
        %5645 = vst.msk [vmem:[%s255 + $0xb4] sm:$0xc] %vm273, %v5547
        %5646 = vst.msk [vmem:[%s255 + $0xb8] sm:$0xf] %vm229, %v5550
        %5647 = vst.msk [vmem:[%s255 + $0xbc] sm:$0x3] %vm256, %v5551
        %s5648 = scalar_lea.vmem [#allocation2], 24
        %v5649 = vld [vmem:[%s5648] sm:$0xe]
        %v5650 = vld [vmem:[%s5648 + $0x4] sm:$0xf]
        %v5651 = vld [vmem:[%s5648 + $0x8] sm:$0x1]
        %v5652 = vld [vmem:[%s5648 + $0xc] sm:$0xe]
        %v5653 = vld [vmem:[%s5648 + $0x10] sm:$0xf]
        %v5654 = vld [vmem:[%s5648 + $0x14] sm:$0x1]
        %v5655 = vld [vmem:[%s5648 + $0x18] sm:$0xe]
        %v5656 = vld [vmem:[%s5648 + $0x1c] sm:$0xf]
        %v5657 = vld [vmem:[%s5648 + $0x20] sm:$0x1]
        %v5658 = vld [vmem:[%s5648 + $0x24] sm:$0xe]
        %v5659 = vld [vmem:[%s5648 + $0x28] sm:$0xf]
        %v5660 = vld [vmem:[%s5648 + $0x2c] sm:$0x1]
        %v5661 = vld [vmem:[%s5648 + $0x30] sm:$0xe]
        %v5662 = vld [vmem:[%s5648 + $0x34] sm:$0xf]
        %v5663 = vld [vmem:[%s5648 + $0x38] sm:$0x1]
        %v5664 = vld [vmem:[%s5648 + $0x3c] sm:$0xe]
        %v5665 = vld [vmem:[%s5648 + $0x40] sm:$0xf]
        %v5666 = vld [vmem:[%s5648 + $0x44] sm:$0x1]
        %v5667 = vld [vmem:[%s5648 + $0x48] sm:$0xe]
        %v5668 = vld [vmem:[%s5648 + $0x4c] sm:$0xf]
        %v5669 = vld [vmem:[%s5648 + $0x50] sm:$0x1]
        %v5670 = vld [vmem:[%s5648 + $0x54] sm:$0xe]
        %v5671 = vld [vmem:[%s5648 + $0x58] sm:$0xf]
        %v5672 = vld [vmem:[%s5648 + $0x5c] sm:$0x1]
        %v5673 = vld [vmem:[%s5648 + $0x60] sm:$0xe]
        %v5674 = vld [vmem:[%s5648 + $0x64] sm:$0xf]
        %v5675 = vld [vmem:[%s5648 + $0x68] sm:$0x1]
        %v5676 = vld [vmem:[%s5648 + $0x6c] sm:$0xe]
        %v5677 = vld [vmem:[%s5648 + $0x70] sm:$0xf]
        %v5678 = vld [vmem:[%s5648 + $0x74] sm:$0x1]
        %v5679 = vld [vmem:[%s5648 + $0x78] sm:$0xe]
        %v5680 = vld [vmem:[%s5648 + $0x7c] sm:$0xf]
        %v5681 = vld [vmem:[%s5648 + $0x80] sm:$0x1]
        %v5682 = vld [vmem:[%s5648 + $0x84] sm:$0xe]
        %v5683 = vld [vmem:[%s5648 + $0x88] sm:$0xf]
        %v5684 = vld [vmem:[%s5648 + $0x8c] sm:$0x1]
        %v5685 = vld [vmem:[%s5648 + $0x90] sm:$0xe]
        %v5686 = vld [vmem:[%s5648 + $0x94] sm:$0xf]
        %v5687 = vld [vmem:[%s5648 + $0x98] sm:$0x1]
        %v5688 = vld [vmem:[%s5648 + $0x9c] sm:$0xe]
        %v5689 = vld [vmem:[%s5648 + $0xa0] sm:$0xf]
        %v5690 = vld [vmem:[%s5648 + $0xa4] sm:$0x1]
        %v5691 = vld [vmem:[%s5648 + $0xa8] sm:$0xe]
        %v5692 = vld [vmem:[%s5648 + $0xac] sm:$0xf]
        %v5693 = vld [vmem:[%s5648 + $0xb0] sm:$0x1]
        %v5694 = vld [vmem:[%s5648 + $0xb4] sm:$0xe]
        %v5695 = vld [vmem:[%s5648 + $0xb8] sm:$0xf]
        %v5696 = vld [vmem:[%s5648 + $0xbc] sm:$0x1]
        %vm5745 = vcmask 1042432
        %vm5746 = vcmask 1046532
        %vm5747 = vmor %vm5745, %vm5746
        %v5748 = vrot.slane %v5649, 5
        %v5749 = vrot.slane %v5748, 4
        %v5750 = vrot.slane %v5650, 5
        %v5751 = vsel %vm5747, %v5749, %v5750
        %v5752 = vrot.slane %v5750, 4
        %v5753 = vrot.slane %v5651, 5
        %v5754 = vsel %vm5747, %v5752, %v5753
        %v5755 = vrot.slane %v5652, 5
        %v5756 = vrot.slane %v5755, 4
        %v5757 = vrot.slane %v5653, 5
        %v5758 = vsel %vm5747, %v5756, %v5757
        %v5759 = vrot.slane %v5757, 4
        %v5760 = vrot.slane %v5654, 5
        %v5761 = vsel %vm5747, %v5759, %v5760
        %v5762 = vrot.slane %v5655, 5
        %v5763 = vrot.slane %v5762, 4
        %v5764 = vrot.slane %v5656, 5
        %v5765 = vsel %vm5747, %v5763, %v5764
        %v5766 = vrot.slane %v5764, 4
        %v5767 = vrot.slane %v5657, 5
        %v5768 = vsel %vm5747, %v5766, %v5767
        %v5769 = vrot.slane %v5658, 5
        %v5770 = vrot.slane %v5769, 4
        %v5771 = vrot.slane %v5659, 5
        %v5772 = vsel %vm5747, %v5770, %v5771
        %v5773 = vrot.slane %v5771, 4
        %v5774 = vrot.slane %v5660, 5
        %v5775 = vsel %vm5747, %v5773, %v5774
        %v5776 = vrot.slane %v5661, 5
        %v5777 = vrot.slane %v5776, 4
        %v5778 = vrot.slane %v5662, 5
        %v5779 = vsel %vm5747, %v5777, %v5778
        %v5780 = vrot.slane %v5778, 4
        %v5781 = vrot.slane %v5663, 5
        %v5782 = vsel %vm5747, %v5780, %v5781
        %v5783 = vrot.slane %v5664, 5
        %v5784 = vrot.slane %v5783, 4
        %v5785 = vrot.slane %v5665, 5
        %v5786 = vsel %vm5747, %v5784, %v5785
        %v5787 = vrot.slane %v5785, 4
        %v5788 = vrot.slane %v5666, 5
        %v5789 = vsel %vm5747, %v5787, %v5788
        %v5790 = vrot.slane %v5667, 5
        %v5791 = vrot.slane %v5790, 4
        %v5792 = vrot.slane %v5668, 5
        %v5793 = vsel %vm5747, %v5791, %v5792
        %v5794 = vrot.slane %v5792, 4
        %v5795 = vrot.slane %v5669, 5
        %v5796 = vsel %vm5747, %v5794, %v5795
        %v5797 = vrot.slane %v5670, 5
        %v5798 = vrot.slane %v5797, 4
        %v5799 = vrot.slane %v5671, 5
        %v5800 = vsel %vm5747, %v5798, %v5799
        %v5801 = vrot.slane %v5799, 4
        %v5802 = vrot.slane %v5672, 5
        %v5803 = vsel %vm5747, %v5801, %v5802
        %v5804 = vrot.slane %v5673, 5
        %v5805 = vrot.slane %v5804, 4
        %v5806 = vrot.slane %v5674, 5
        %v5807 = vsel %vm5747, %v5805, %v5806
        %v5808 = vrot.slane %v5806, 4
        %v5809 = vrot.slane %v5675, 5
        %v5810 = vsel %vm5747, %v5808, %v5809
        %v5811 = vrot.slane %v5676, 5
        %v5812 = vrot.slane %v5811, 4
        %v5813 = vrot.slane %v5677, 5
        %v5814 = vsel %vm5747, %v5812, %v5813
        %v5815 = vrot.slane %v5813, 4
        %v5816 = vrot.slane %v5678, 5
        %v5817 = vsel %vm5747, %v5815, %v5816
        %v5818 = vrot.slane %v5679, 5
        %v5819 = vrot.slane %v5818, 4
        %v5820 = vrot.slane %v5680, 5
        %v5821 = vsel %vm5747, %v5819, %v5820
        %v5822 = vrot.slane %v5820, 4
        %v5823 = vrot.slane %v5681, 5
        %v5824 = vsel %vm5747, %v5822, %v5823
        %v5825 = vrot.slane %v5682, 5
        %v5826 = vrot.slane %v5825, 4
        %v5827 = vrot.slane %v5683, 5
        %v5828 = vsel %vm5747, %v5826, %v5827
        %v5829 = vrot.slane %v5827, 4
        %v5830 = vrot.slane %v5684, 5
        %v5831 = vsel %vm5747, %v5829, %v5830
        %v5832 = vrot.slane %v5685, 5
        %v5833 = vrot.slane %v5832, 4
        %v5834 = vrot.slane %v5686, 5
        %v5835 = vsel %vm5747, %v5833, %v5834
        %v5836 = vrot.slane %v5834, 4
        %v5837 = vrot.slane %v5687, 5
        %v5838 = vsel %vm5747, %v5836, %v5837
        %v5839 = vrot.slane %v5688, 5
        %v5840 = vrot.slane %v5839, 4
        %v5841 = vrot.slane %v5689, 5
        %v5842 = vsel %vm5747, %v5840, %v5841
        %v5843 = vrot.slane %v5841, 4
        %v5844 = vrot.slane %v5690, 5
        %v5845 = vsel %vm5747, %v5843, %v5844
        %v5846 = vrot.slane %v5691, 5
        %v5847 = vrot.slane %v5846, 4
        %v5848 = vrot.slane %v5692, 5
        %v5849 = vsel %vm5747, %v5847, %v5848
        %v5850 = vrot.slane %v5848, 4
        %v5851 = vrot.slane %v5693, 5
        %v5852 = vsel %vm5747, %v5850, %v5851
        %v5853 = vrot.slane %v5694, 5
        %v5854 = vrot.slane %v5853, 4
        %v5855 = vrot.slane %v5695, 5
        %v5856 = vsel %vm5747, %v5854, %v5855
        %v5857 = vrot.slane %v5855, 4
        %v5858 = vrot.slane %v5696, 5
        %v5859 = vsel %vm5747, %v5857, %v5858
        %v5860 = vunpack.c.l.b16 %v5751
        %v5861 = vunpack.c.l.b16 %v5754
        %v5862 = vunpack.c.l.b16 %v5758
        %v5863 = vunpack.c.l.b16 %v5761
        %v5864 = vunpack.c.l.b16 %v5765
        %v5865 = vunpack.c.l.b16 %v5768
        %v5866 = vunpack.c.l.b16 %v5772
        %v5867 = vunpack.c.l.b16 %v5775
        %v5868 = vunpack.c.l.b16 %v5779
        %v5869 = vunpack.c.l.b16 %v5782
        %v5870 = vunpack.c.l.b16 %v5786
        %v5871 = vunpack.c.l.b16 %v5789
        %v5872 = vunpack.c.l.b16 %v5793
        %v5873 = vunpack.c.l.b16 %v5796
        %v5874 = vunpack.c.l.b16 %v5800
        %v5875 = vunpack.c.l.b16 %v5803
        %v5876 = vunpack.c.l.b16 %v5807
        %v5877 = vunpack.c.l.b16 %v5810
        %v5878 = vunpack.c.l.b16 %v5814
        %v5879 = vunpack.c.l.b16 %v5817
        %v5880 = vunpack.c.l.b16 %v5821
        %v5881 = vunpack.c.l.b16 %v5824
        %v5882 = vunpack.c.l.b16 %v5828
        %v5883 = vunpack.c.l.b16 %v5831
        %v5884 = vunpack.c.l.b16 %v5835
        %v5885 = vunpack.c.l.b16 %v5838
        %v5886 = vunpack.c.l.b16 %v5842
        %v5887 = vunpack.c.l.b16 %v5845
        %v5888 = vunpack.c.l.b16 %v5849
        %v5889 = vunpack.c.l.b16 %v5852
        %v5890 = vunpack.c.l.b16 %v5856
        %v5891 = vunpack.c.l.b16 %v5859
        %v5892 = vpack.c.b16 %v5861, %v5860
        %v5893 = vpack.c.b16 %v5863, %v5862
        %v5894 = vpack.c.b16 %v5865, %v5864
        %v5895 = vpack.c.b16 %v5867, %v5866
        %v5896 = vpack.c.b16 %v5869, %v5868
        %v5897 = vpack.c.b16 %v5871, %v5870
        %v5898 = vpack.c.b16 %v5873, %v5872
        %v5899 = vpack.c.b16 %v5875, %v5874
        %v5900 = vpack.c.b16 %v5877, %v5876
        %v5901 = vpack.c.b16 %v5879, %v5878
        %v5902 = vpack.c.b16 %v5881, %v5880
        %v5903 = vpack.c.b16 %v5883, %v5882
        %v5904 = vpack.c.b16 %v5885, %v5884
        %v5905 = vpack.c.b16 %v5887, %v5886
        %v5906 = vpack.c.b16 %v5889, %v5888
        %v5907 = vpack.c.b16 %v5891, %v5890
        %5908 = vrot.lane.b32.xlu0 %v5892, 32
        %v5909 = vpop.permute.xlu0 %5908
        %5910 = vrot.lane.b32.xlu0 %v5893, 32
        %v5911 = vpop.permute.xlu0 %5910
        %5912 = vrot.lane.b32.xlu0 %v5894, 32
        %v5913 = vpop.permute.xlu0 %5912
        %5914 = vrot.lane.b32.xlu0 %v5895, 32
        %v5915 = vpop.permute.xlu0 %5914
        %5916 = vrot.lane.b32.xlu0 %v5896, 32
        %v5917 = vpop.permute.xlu0 %5916
        %5918 = vrot.lane.b32.xlu0 %v5897, 32
        %v5919 = vpop.permute.xlu0 %5918
        %5920 = vrot.lane.b32.xlu0 %v5898, 32
        %v5921 = vpop.permute.xlu0 %5920
        %5922 = vrot.lane.b32.xlu0 %v5899, 32
        %v5923 = vpop.permute.xlu0 %5922
        %5924 = vrot.lane.b32.xlu0 %v5900, 32
        %v5925 = vpop.permute.xlu0 %5924
        %5926 = vrot.lane.b32.xlu0 %v5901, 32
        %v5927 = vpop.permute.xlu0 %5926
        %5928 = vrot.lane.b32.xlu0 %v5902, 32
        %v5929 = vpop.permute.xlu0 %5928
        %5930 = vrot.lane.b32.xlu0 %v5903, 32
        %v5931 = vpop.permute.xlu0 %5930
        %5932 = vrot.lane.b32.xlu0 %v5904, 32
        %v5933 = vpop.permute.xlu0 %5932
        %5934 = vrot.lane.b32.xlu0 %v5905, 32
        %v5935 = vpop.permute.xlu0 %5934
        %5936 = vrot.lane.b32.xlu0 %v5906, 32
        %v5937 = vpop.permute.xlu0 %5936
        %5938 = vrot.lane.b32.xlu0 %v5907, 32
        %v5939 = vpop.permute.xlu0 %5938
        %5956 = vst.msk [vmem:[#allocation3 + $0x10] sm:$0xff] %vm1592, %v5909
        %5957 = vst.msk [vmem:[#allocation3 + $0x48] sm:$0xff] %vm1592, %v5911
        %5958 = vst.msk [vmem:[#allocation3 + $0x80] sm:$0xff] %vm1592, %v5913
        %5959 = vst.msk [vmem:[#allocation3 + $0xb8] sm:$0xff] %vm1592, %v5915
        %5960 = vst.msk [vmem:[#allocation3 + $0xf0] sm:$0xff] %vm1592, %v5917
        %5961 = vst.msk [vmem:[#allocation3 + $0x128] sm:$0xff] %vm1592, %v5919
        %5962 = vst.msk [vmem:[#allocation3 + $0x160] sm:$0xff] %vm1592, %v5921
        %5963 = vst.msk [vmem:[#allocation3 + $0x198] sm:$0xff] %vm1592, %v5923
        %5964 = vst.msk [vmem:[#allocation3 + $0x1d0] sm:$0xff] %vm1592, %v5925
        %5965 = vst.msk [vmem:[#allocation3 + $0x208] sm:$0xff] %vm1592, %v5927
        %5966 = vst.msk [vmem:[#allocation3 + $0x240] sm:$0xff] %vm1592, %v5929
        %5967 = vst.msk [vmem:[#allocation3 + $0x278] sm:$0xff] %vm1592, %v5931
        %5968 = vst.msk [vmem:[#allocation3 + $0x2b0] sm:$0xff] %vm1592, %v5933
        %5969 = vst.msk [vmem:[#allocation3 + $0x2e8] sm:$0xff] %vm1592, %v5935
        %5970 = vst.msk [vmem:[#allocation3 + $0x320] sm:$0xff] %vm1592, %v5937
        %5971 = vst.msk [vmem:[#allocation3 + $0x358] sm:$0xff] %vm1592, %v5939
        %v5972 = vld [vmem:[%s5648] sm:$0xc]
        %v5973 = vld [vmem:[%s5648 + $0x4] sm:$0xf]
        %v5974 = vld [vmem:[%s5648 + $0x8] sm:$0x3]
        %v5975 = vld [vmem:[%s5648 + $0xc] sm:$0xc]
        %v5976 = vld [vmem:[%s5648 + $0x10] sm:$0xf]
        %v5977 = vld [vmem:[%s5648 + $0x14] sm:$0x3]
        %v5978 = vld [vmem:[%s5648 + $0x18] sm:$0xc]
        %v5979 = vld [vmem:[%s5648 + $0x1c] sm:$0xf]
        %v5980 = vld [vmem:[%s5648 + $0x20] sm:$0x3]
        %v5981 = vld [vmem:[%s5648 + $0x24] sm:$0xc]
        %v5982 = vld [vmem:[%s5648 + $0x28] sm:$0xf]
        %v5983 = vld [vmem:[%s5648 + $0x2c] sm:$0x3]
        %v5984 = vld [vmem:[%s5648 + $0x30] sm:$0xc]
        %v5985 = vld [vmem:[%s5648 + $0x34] sm:$0xf]
        %v5986 = vld [vmem:[%s5648 + $0x38] sm:$0x3]
        %v5987 = vld [vmem:[%s5648 + $0x3c] sm:$0xc]
        %v5988 = vld [vmem:[%s5648 + $0x40] sm:$0xf]
        %v5989 = vld [vmem:[%s5648 + $0x44] sm:$0x3]
        %v5990 = vld [vmem:[%s5648 + $0x48] sm:$0xc]
        %v5991 = vld [vmem:[%s5648 + $0x4c] sm:$0xf]
        %v5992 = vld [vmem:[%s5648 + $0x50] sm:$0x3]
        %v5993 = vld [vmem:[%s5648 + $0x54] sm:$0xc]
        %v5994 = vld [vmem:[%s5648 + $0x58] sm:$0xf]
        %v5995 = vld [vmem:[%s5648 + $0x5c] sm:$0x3]
        %v5996 = vld [vmem:[%s5648 + $0x60] sm:$0xc]
        %v5997 = vld [vmem:[%s5648 + $0x64] sm:$0xf]
        %v5998 = vld [vmem:[%s5648 + $0x68] sm:$0x3]
        %v5999 = vld [vmem:[%s5648 + $0x6c] sm:$0xc]
        %v6000 = vld [vmem:[%s5648 + $0x70] sm:$0xf]
        %v6001 = vld [vmem:[%s5648 + $0x74] sm:$0x3]
        %v6002 = vld [vmem:[%s5648 + $0x78] sm:$0xc]
        %v6003 = vld [vmem:[%s5648 + $0x7c] sm:$0xf]
        %v6004 = vld [vmem:[%s5648 + $0x80] sm:$0x3]
        %v6005 = vld [vmem:[%s5648 + $0x84] sm:$0xc]
        %v6006 = vld [vmem:[%s5648 + $0x88] sm:$0xf]
        %v6007 = vld [vmem:[%s5648 + $0x8c] sm:$0x3]
        %v6008 = vld [vmem:[%s5648 + $0x90] sm:$0xc]
        %v6009 = vld [vmem:[%s5648 + $0x94] sm:$0xf]
        %v6010 = vld [vmem:[%s5648 + $0x98] sm:$0x3]
        %v6011 = vld [vmem:[%s5648 + $0x9c] sm:$0xc]
        %v6012 = vld [vmem:[%s5648 + $0xa0] sm:$0xf]
        %v6013 = vld [vmem:[%s5648 + $0xa4] sm:$0x3]
        %v6014 = vld [vmem:[%s5648 + $0xa8] sm:$0xc]
        %v6015 = vld [vmem:[%s5648 + $0xac] sm:$0xf]
        %v6016 = vld [vmem:[%s5648 + $0xb0] sm:$0x3]
        %v6017 = vld [vmem:[%s5648 + $0xb4] sm:$0xc]
        %v6018 = vld [vmem:[%s5648 + $0xb8] sm:$0xf]
        %v6019 = vld [vmem:[%s5648 + $0xbc] sm:$0x3]
        %v6068 = vrot.slane %v5972, 6
        %v6069 = vrot.slane %v6068, 4
        %v6070 = vrot.slane %v5973, 6
        %v6071 = vsel %vm530, %v6069, %v6070
        %v6072 = vrot.slane %v6070, 4
        %v6073 = vrot.slane %v5974, 6
        %v6074 = vsel %vm530, %v6072, %v6073
        %v6075 = vrot.slane %v5975, 6
        %v6076 = vrot.slane %v6075, 4
        %v6077 = vrot.slane %v5976, 6
        %v6078 = vsel %vm530, %v6076, %v6077
        %v6079 = vrot.slane %v6077, 4
        %v6080 = vrot.slane %v5977, 6
        %v6081 = vsel %vm530, %v6079, %v6080
        %v6082 = vrot.slane %v5978, 6
        %v6083 = vrot.slane %v6082, 4
        %v6084 = vrot.slane %v5979, 6
        %v6085 = vsel %vm530, %v6083, %v6084
        %v6086 = vrot.slane %v6084, 4
        %v6087 = vrot.slane %v5980, 6
        %v6088 = vsel %vm530, %v6086, %v6087
        %v6089 = vrot.slane %v5981, 6
        %v6090 = vrot.slane %v6089, 4
        %v6091 = vrot.slane %v5982, 6
        %v6092 = vsel %vm530, %v6090, %v6091
        %v6093 = vrot.slane %v6091, 4
        %v6094 = vrot.slane %v5983, 6
        %v6095 = vsel %vm530, %v6093, %v6094
        %v6096 = vrot.slane %v5984, 6
        %v6097 = vrot.slane %v6096, 4
        %v6098 = vrot.slane %v5985, 6
        %v6099 = vsel %vm530, %v6097, %v6098
        %v6100 = vrot.slane %v6098, 4
        %v6101 = vrot.slane %v5986, 6
        %v6102 = vsel %vm530, %v6100, %v6101
        %v6103 = vrot.slane %v5987, 6
        %v6104 = vrot.slane %v6103, 4
        %v6105 = vrot.slane %v5988, 6
        %v6106 = vsel %vm530, %v6104, %v6105
        %v6107 = vrot.slane %v6105, 4
        %v6108 = vrot.slane %v5989, 6
        %v6109 = vsel %vm530, %v6107, %v6108
        %v6110 = vrot.slane %v5990, 6
        %v6111 = vrot.slane %v6110, 4
        %v6112 = vrot.slane %v5991, 6
        %v6113 = vsel %vm530, %v6111, %v6112
        %v6114 = vrot.slane %v6112, 4
        %v6115 = vrot.slane %v5992, 6
        %v6116 = vsel %vm530, %v6114, %v6115
        %v6117 = vrot.slane %v5993, 6
        %v6118 = vrot.slane %v6117, 4
        %v6119 = vrot.slane %v5994, 6
        %v6120 = vsel %vm530, %v6118, %v6119
        %v6121 = vrot.slane %v6119, 4
        %v6122 = vrot.slane %v5995, 6
        %v6123 = vsel %vm530, %v6121, %v6122
        %v6124 = vrot.slane %v5996, 6
        %v6125 = vrot.slane %v6124, 4
        %v6126 = vrot.slane %v5997, 6
        %v6127 = vsel %vm530, %v6125, %v6126
        %v6128 = vrot.slane %v6126, 4
        %v6129 = vrot.slane %v5998, 6
        %v6130 = vsel %vm530, %v6128, %v6129
        %v6131 = vrot.slane %v5999, 6
        %v6132 = vrot.slane %v6131, 4
        %v6133 = vrot.slane %v6000, 6
        %v6134 = vsel %vm530, %v6132, %v6133
        %v6135 = vrot.slane %v6133, 4
        %v6136 = vrot.slane %v6001, 6
        %v6137 = vsel %vm530, %v6135, %v6136
        %v6138 = vrot.slane %v6002, 6
        %v6139 = vrot.slane %v6138, 4
        %v6140 = vrot.slane %v6003, 6
        %v6141 = vsel %vm530, %v6139, %v6140
        %v6142 = vrot.slane %v6140, 4
        %v6143 = vrot.slane %v6004, 6
        %v6144 = vsel %vm530, %v6142, %v6143
        %v6145 = vrot.slane %v6005, 6
        %v6146 = vrot.slane %v6145, 4
        %v6147 = vrot.slane %v6006, 6
        %v6148 = vsel %vm530, %v6146, %v6147
        %v6149 = vrot.slane %v6147, 4
        %v6150 = vrot.slane %v6007, 6
        %v6151 = vsel %vm530, %v6149, %v6150
        %v6152 = vrot.slane %v6008, 6
        %v6153 = vrot.slane %v6152, 4
        %v6154 = vrot.slane %v6009, 6
        %v6155 = vsel %vm530, %v6153, %v6154
        %v6156 = vrot.slane %v6154, 4
        %v6157 = vrot.slane %v6010, 6
        %v6158 = vsel %vm530, %v6156, %v6157
        %v6159 = vrot.slane %v6011, 6
        %v6160 = vrot.slane %v6159, 4
        %v6161 = vrot.slane %v6012, 6
        %v6162 = vsel %vm530, %v6160, %v6161
        %v6163 = vrot.slane %v6161, 4
        %v6164 = vrot.slane %v6013, 6
        %v6165 = vsel %vm530, %v6163, %v6164
        %v6166 = vrot.slane %v6014, 6
        %v6167 = vrot.slane %v6166, 4
        %v6168 = vrot.slane %v6015, 6
        %v6169 = vsel %vm530, %v6167, %v6168
        %v6170 = vrot.slane %v6168, 4
        %v6171 = vrot.slane %v6016, 6
        %v6172 = vsel %vm530, %v6170, %v6171
        %v6173 = vrot.slane %v6017, 6
        %v6174 = vrot.slane %v6173, 4
        %v6175 = vrot.slane %v6018, 6
        %v6176 = vsel %vm530, %v6174, %v6175
        %v6177 = vrot.slane %v6175, 4
        %v6178 = vrot.slane %v6019, 6
        %v6179 = vsel %vm530, %v6177, %v6178
        %v6180 = vunpack.c.l.b16 %v6071
        %v6181 = vunpack.c.l.b16 %v6074
        %v6182 = vunpack.c.l.b16 %v6078
        %v6183 = vunpack.c.l.b16 %v6081
        %v6184 = vunpack.c.l.b16 %v6085
        %v6185 = vunpack.c.l.b16 %v6088
        %v6186 = vunpack.c.l.b16 %v6092
        %v6187 = vunpack.c.l.b16 %v6095
        %v6188 = vunpack.c.l.b16 %v6099
        %v6189 = vunpack.c.l.b16 %v6102
        %v6190 = vunpack.c.l.b16 %v6106
        %v6191 = vunpack.c.l.b16 %v6109
        %v6192 = vunpack.c.l.b16 %v6113
        %v6193 = vunpack.c.l.b16 %v6116
        %v6194 = vunpack.c.l.b16 %v6120
        %v6195 = vunpack.c.l.b16 %v6123
        %v6196 = vunpack.c.l.b16 %v6127
        %v6197 = vunpack.c.l.b16 %v6130
        %v6198 = vunpack.c.l.b16 %v6134
        %v6199 = vunpack.c.l.b16 %v6137
        %v6200 = vunpack.c.l.b16 %v6141
        %v6201 = vunpack.c.l.b16 %v6144
        %v6202 = vunpack.c.l.b16 %v6148
        %v6203 = vunpack.c.l.b16 %v6151
        %v6204 = vunpack.c.l.b16 %v6155
        %v6205 = vunpack.c.l.b16 %v6158
        %v6206 = vunpack.c.l.b16 %v6162
        %v6207 = vunpack.c.l.b16 %v6165
        %v6208 = vunpack.c.l.b16 %v6169
        %v6209 = vunpack.c.l.b16 %v6172
        %v6210 = vunpack.c.l.b16 %v6176
        %v6211 = vunpack.c.l.b16 %v6179
        %v6212 = vpack.c.b16 %v6181, %v6180
        %v6213 = vpack.c.b16 %v6183, %v6182
        %v6214 = vpack.c.b16 %v6185, %v6184
        %v6215 = vpack.c.b16 %v6187, %v6186
        %v6216 = vpack.c.b16 %v6189, %v6188
        %v6217 = vpack.c.b16 %v6191, %v6190
        %v6218 = vpack.c.b16 %v6193, %v6192
        %v6219 = vpack.c.b16 %v6195, %v6194
        %v6220 = vpack.c.b16 %v6197, %v6196
        %v6221 = vpack.c.b16 %v6199, %v6198
        %v6222 = vpack.c.b16 %v6201, %v6200
        %v6223 = vpack.c.b16 %v6203, %v6202
        %v6224 = vpack.c.b16 %v6205, %v6204
        %v6225 = vpack.c.b16 %v6207, %v6206
        %v6226 = vpack.c.b16 %v6209, %v6208
        %v6227 = vpack.c.b16 %v6211, %v6210
        %6228 = vrot.lane.b32.xlu0 %v6212, 64
        %v6229 = vpop.permute.xlu0 %6228
        %6230 = vrot.lane.b32.xlu0 %v6213, 64
        %v6231 = vpop.permute.xlu0 %6230
        %6232 = vrot.lane.b32.xlu0 %v6214, 64
        %v6233 = vpop.permute.xlu0 %6232
        %6234 = vrot.lane.b32.xlu0 %v6215, 64
        %v6235 = vpop.permute.xlu0 %6234
        %6236 = vrot.lane.b32.xlu0 %v6216, 64
        %v6237 = vpop.permute.xlu0 %6236
        %6238 = vrot.lane.b32.xlu0 %v6217, 64
        %v6239 = vpop.permute.xlu0 %6238
        %6240 = vrot.lane.b32.xlu0 %v6218, 64
        %v6241 = vpop.permute.xlu0 %6240
        %6242 = vrot.lane.b32.xlu0 %v6219, 64
        %v6243 = vpop.permute.xlu0 %6242
        %6244 = vrot.lane.b32.xlu0 %v6220, 64
        %v6245 = vpop.permute.xlu0 %6244
        %6246 = vrot.lane.b32.xlu0 %v6221, 64
        %v6247 = vpop.permute.xlu0 %6246
        %6248 = vrot.lane.b32.xlu0 %v6222, 64
        %v6249 = vpop.permute.xlu0 %6248
        %6250 = vrot.lane.b32.xlu0 %v6223, 64
        %v6251 = vpop.permute.xlu0 %6250
        %6252 = vrot.lane.b32.xlu0 %v6224, 64
        %v6253 = vpop.permute.xlu0 %6252
        %6254 = vrot.lane.b32.xlu0 %v6225, 64
        %v6255 = vpop.permute.xlu0 %6254
        %6256 = vrot.lane.b32.xlu0 %v6226, 64
        %v6257 = vpop.permute.xlu0 %6256
        %6258 = vrot.lane.b32.xlu0 %v6227, 64
        %v6259 = vpop.permute.xlu0 %6258
        %6276 = vst.msk [vmem:[#allocation3 + $0x10] sm:$0xff] %vm2204, %v6229
        %6277 = vst.msk [vmem:[#allocation3 + $0x48] sm:$0xff] %vm2204, %v6231
        %6278 = vst.msk [vmem:[#allocation3 + $0x80] sm:$0xff] %vm2204, %v6233
        %6279 = vst.msk [vmem:[#allocation3 + $0xb8] sm:$0xff] %vm2204, %v6235
        %6280 = vst.msk [vmem:[#allocation3 + $0xf0] sm:$0xff] %vm2204, %v6237
        %6281 = vst.msk [vmem:[#allocation3 + $0x128] sm:$0xff] %vm2204, %v6239
        %6282 = vst.msk [vmem:[#allocation3 + $0x160] sm:$0xff] %vm2204, %v6241
        %6283 = vst.msk [vmem:[#allocation3 + $0x198] sm:$0xff] %vm2204, %v6243
        %6284 = vst.msk [vmem:[#allocation3 + $0x1d0] sm:$0xff] %vm2204, %v6245
        %6285 = vst.msk [vmem:[#allocation3 + $0x208] sm:$0xff] %vm2204, %v6247
        %6286 = vst.msk [vmem:[#allocation3 + $0x240] sm:$0xff] %vm2204, %v6249
        %6287 = vst.msk [vmem:[#allocation3 + $0x278] sm:$0xff] %vm2204, %v6251
        %6288 = vst.msk [vmem:[#allocation3 + $0x2b0] sm:$0xff] %vm2204, %v6253
        %6289 = vst.msk [vmem:[#allocation3 + $0x2e8] sm:$0xff] %vm2204, %v6255
        %6290 = vst.msk [vmem:[#allocation3 + $0x320] sm:$0xff] %vm2204, %v6257
        %6291 = vst.msk [vmem:[#allocation3 + $0x358] sm:$0xff] %vm2204, %v6259
        %v6292 = vld [vmem:[%s5648] sm:$0x8]
        %v6293 = vld [vmem:[%s5648 + $0x4] sm:$0xf]
        %v6294 = vld [vmem:[%s5648 + $0x8] sm:$0x7]
        %v6295 = vld [vmem:[%s5648 + $0xc] sm:$0x8]
        %v6296 = vld [vmem:[%s5648 + $0x10] sm:$0xf]
        %v6297 = vld [vmem:[%s5648 + $0x14] sm:$0x7]
        %v6298 = vld [vmem:[%s5648 + $0x18] sm:$0x8]
        %v6299 = vld [vmem:[%s5648 + $0x1c] sm:$0xf]
        %v6300 = vld [vmem:[%s5648 + $0x20] sm:$0x7]
        %v6301 = vld [vmem:[%s5648 + $0x24] sm:$0x8]
        %v6302 = vld [vmem:[%s5648 + $0x28] sm:$0xf]
        %v6303 = vld [vmem:[%s5648 + $0x2c] sm:$0x7]
        %v6304 = vld [vmem:[%s5648 + $0x30] sm:$0x8]
        %v6305 = vld [vmem:[%s5648 + $0x34] sm:$0xf]
        %v6306 = vld [vmem:[%s5648 + $0x38] sm:$0x7]
        %v6307 = vld [vmem:[%s5648 + $0x3c] sm:$0x8]
        %v6308 = vld [vmem:[%s5648 + $0x40] sm:$0xf]
        %v6309 = vld [vmem:[%s5648 + $0x44] sm:$0x7]
        %v6310 = vld [vmem:[%s5648 + $0x48] sm:$0x8]
        %v6311 = vld [vmem:[%s5648 + $0x4c] sm:$0xf]
        %v6312 = vld [vmem:[%s5648 + $0x50] sm:$0x7]
        %v6313 = vld [vmem:[%s5648 + $0x54] sm:$0x8]
        %v6314 = vld [vmem:[%s5648 + $0x58] sm:$0xf]
        %v6315 = vld [vmem:[%s5648 + $0x5c] sm:$0x7]
        %v6316 = vld [vmem:[%s5648 + $0x60] sm:$0x8]
        %v6317 = vld [vmem:[%s5648 + $0x64] sm:$0xf]
        %v6318 = vld [vmem:[%s5648 + $0x68] sm:$0x7]
        %v6319 = vld [vmem:[%s5648 + $0x6c] sm:$0x8]
        %v6320 = vld [vmem:[%s5648 + $0x70] sm:$0xf]
        %v6321 = vld [vmem:[%s5648 + $0x74] sm:$0x7]
        %v6322 = vld [vmem:[%s5648 + $0x78] sm:$0x8]
        %v6323 = vld [vmem:[%s5648 + $0x7c] sm:$0xf]
        %v6324 = vld [vmem:[%s5648 + $0x80] sm:$0x7]
        %v6325 = vld [vmem:[%s5648 + $0x84] sm:$0x8]
        %v6326 = vld [vmem:[%s5648 + $0x88] sm:$0xf]
        %v6327 = vld [vmem:[%s5648 + $0x8c] sm:$0x7]
        %v6328 = vld [vmem:[%s5648 + $0x90] sm:$0x8]
        %v6329 = vld [vmem:[%s5648 + $0x94] sm:$0xf]
        %v6330 = vld [vmem:[%s5648 + $0x98] sm:$0x7]
        %v6331 = vld [vmem:[%s5648 + $0x9c] sm:$0x8]
        %v6332 = vld [vmem:[%s5648 + $0xa0] sm:$0xf]
        %v6333 = vld [vmem:[%s5648 + $0xa4] sm:$0x7]
        %v6334 = vld [vmem:[%s5648 + $0xa8] sm:$0x8]
        %v6335 = vld [vmem:[%s5648 + $0xac] sm:$0xf]
        %v6336 = vld [vmem:[%s5648 + $0xb0] sm:$0x7]
        %v6337 = vld [vmem:[%s5648 + $0xb4] sm:$0x8]
        %v6338 = vld [vmem:[%s5648 + $0xb8] sm:$0xf]
        %v6339 = vld [vmem:[%s5648 + $0xbc] sm:$0x7]
        %vm6388 = vcmask 1040384
        %vm6389 = vcmask 1044484
        %vm6390 = vmor %vm6388, %vm6389
        %v6391 = vrot.slane %v6292, 7
        %v6392 = vrot.slane %v6391, 4
        %v6393 = vrot.slane %v6293, 7
        %v6394 = vsel %vm6390, %v6392, %v6393
        %v6395 = vrot.slane %v6393, 4
        %v6396 = vrot.slane %v6294, 7
        %v6397 = vsel %vm6390, %v6395, %v6396
        %v6398 = vrot.slane %v6295, 7
        %v6399 = vrot.slane %v6398, 4
        %v6400 = vrot.slane %v6296, 7
        %v6401 = vsel %vm6390, %v6399, %v6400
        %v6402 = vrot.slane %v6400, 4
        %v6403 = vrot.slane %v6297, 7
        %v6404 = vsel %vm6390, %v6402, %v6403
        %v6405 = vrot.slane %v6298, 7
        %v6406 = vrot.slane %v6405, 4
        %v6407 = vrot.slane %v6299, 7
        %v6408 = vsel %vm6390, %v6406, %v6407
        %v6409 = vrot.slane %v6407, 4
        %v6410 = vrot.slane %v6300, 7
        %v6411 = vsel %vm6390, %v6409, %v6410
        %v6412 = vrot.slane %v6301, 7
        %v6413 = vrot.slane %v6412, 4
        %v6414 = vrot.slane %v6302, 7
        %v6415 = vsel %vm6390, %v6413, %v6414
        %v6416 = vrot.slane %v6414, 4
        %v6417 = vrot.slane %v6303, 7
        %v6418 = vsel %vm6390, %v6416, %v6417
        %v6419 = vrot.slane %v6304, 7
        %v6420 = vrot.slane %v6419, 4
        %v6421 = vrot.slane %v6305, 7
        %v6422 = vsel %vm6390, %v6420, %v6421
        %v6423 = vrot.slane %v6421, 4
        %v6424 = vrot.slane %v6306, 7
        %v6425 = vsel %vm6390, %v6423, %v6424
        %v6426 = vrot.slane %v6307, 7
        %v6427 = vrot.slane %v6426, 4
        %v6428 = vrot.slane %v6308, 7
        %v6429 = vsel %vm6390, %v6427, %v6428
        %v6430 = vrot.slane %v6428, 4
        %v6431 = vrot.slane %v6309, 7
        %v6432 = vsel %vm6390, %v6430, %v6431
        %v6433 = vrot.slane %v6310, 7
        %v6434 = vrot.slane %v6433, 4
        %v6435 = vrot.slane %v6311, 7
        %v6436 = vsel %vm6390, %v6434, %v6435
        %v6437 = vrot.slane %v6435, 4
        %v6438 = vrot.slane %v6312, 7
        %v6439 = vsel %vm6390, %v6437, %v6438
        %v6440 = vrot.slane %v6313, 7
        %v6441 = vrot.slane %v6440, 4
        %v6442 = vrot.slane %v6314, 7
        %v6443 = vsel %vm6390, %v6441, %v6442
        %v6444 = vrot.slane %v6442, 4
        %v6445 = vrot.slane %v6315, 7
        %v6446 = vsel %vm6390, %v6444, %v6445
        %v6447 = vrot.slane %v6316, 7
        %v6448 = vrot.slane %v6447, 4
        %v6449 = vrot.slane %v6317, 7
        %v6450 = vsel %vm6390, %v6448, %v6449
        %v6451 = vrot.slane %v6449, 4
        %v6452 = vrot.slane %v6318, 7
        %v6453 = vsel %vm6390, %v6451, %v6452
        %v6454 = vrot.slane %v6319, 7
        %v6455 = vrot.slane %v6454, 4
        %v6456 = vrot.slane %v6320, 7
        %v6457 = vsel %vm6390, %v6455, %v6456
        %v6458 = vrot.slane %v6456, 4
        %v6459 = vrot.slane %v6321, 7
        %v6460 = vsel %vm6390, %v6458, %v6459
        %v6461 = vrot.slane %v6322, 7
        %v6462 = vrot.slane %v6461, 4
        %v6463 = vrot.slane %v6323, 7
        %v6464 = vsel %vm6390, %v6462, %v6463
        %v6465 = vrot.slane %v6463, 4
        %v6466 = vrot.slane %v6324, 7
        %v6467 = vsel %vm6390, %v6465, %v6466
        %v6468 = vrot.slane %v6325, 7
        %v6469 = vrot.slane %v6468, 4
        %v6470 = vrot.slane %v6326, 7
        %v6471 = vsel %vm6390, %v6469, %v6470
        %v6472 = vrot.slane %v6470, 4
        %v6473 = vrot.slane %v6327, 7
        %v6474 = vsel %vm6390, %v6472, %v6473
        %v6475 = vrot.slane %v6328, 7
        %v6476 = vrot.slane %v6475, 4
        %v6477 = vrot.slane %v6329, 7
        %v6478 = vsel %vm6390, %v6476, %v6477
        %v6479 = vrot.slane %v6477, 4
        %v6480 = vrot.slane %v6330, 7
        %v6481 = vsel %vm6390, %v6479, %v6480
        %v6482 = vrot.slane %v6331, 7
        %v6483 = vrot.slane %v6482, 4
        %v6484 = vrot.slane %v6332, 7
        %v6485 = vsel %vm6390, %v6483, %v6484
        %v6486 = vrot.slane %v6484, 4
        %v6487 = vrot.slane %v6333, 7
        %v6488 = vsel %vm6390, %v6486, %v6487
        %v6489 = vrot.slane %v6334, 7
        %v6490 = vrot.slane %v6489, 4
        %v6491 = vrot.slane %v6335, 7
        %v6492 = vsel %vm6390, %v6490, %v6491
        %v6493 = vrot.slane %v6491, 4
        %v6494 = vrot.slane %v6336, 7
        %v6495 = vsel %vm6390, %v6493, %v6494
        %v6496 = vrot.slane %v6337, 7
        %v6497 = vrot.slane %v6496, 4
        %v6498 = vrot.slane %v6338, 7
        %v6499 = vsel %vm6390, %v6497, %v6498
        %v6500 = vrot.slane %v6498, 4
        %v6501 = vrot.slane %v6339, 7
        %v6502 = vsel %vm6390, %v6500, %v6501
        %v6503 = vunpack.c.l.b16 %v6394
        %v6504 = vunpack.c.l.b16 %v6397
        %v6505 = vunpack.c.l.b16 %v6401
        %v6506 = vunpack.c.l.b16 %v6404
        %v6507 = vunpack.c.l.b16 %v6408
        %v6508 = vunpack.c.l.b16 %v6411
        %v6509 = vunpack.c.l.b16 %v6415
        %v6510 = vunpack.c.l.b16 %v6418
        %v6511 = vunpack.c.l.b16 %v6422
        %v6512 = vunpack.c.l.b16 %v6425
        %v6513 = vunpack.c.l.b16 %v6429
        %v6514 = vunpack.c.l.b16 %v6432
        %v6515 = vunpack.c.l.b16 %v6436
        %v6516 = vunpack.c.l.b16 %v6439
        %v6517 = vunpack.c.l.b16 %v6443
        %v6518 = vunpack.c.l.b16 %v6446
        %v6519 = vunpack.c.l.b16 %v6450
        %v6520 = vunpack.c.l.b16 %v6453
        %v6521 = vunpack.c.l.b16 %v6457
        %v6522 = vunpack.c.l.b16 %v6460
        %v6523 = vunpack.c.l.b16 %v6464
        %v6524 = vunpack.c.l.b16 %v6467
        %v6525 = vunpack.c.l.b16 %v6471
        %v6526 = vunpack.c.l.b16 %v6474
        %v6527 = vunpack.c.l.b16 %v6478
        %v6528 = vunpack.c.l.b16 %v6481
        %v6529 = vunpack.c.l.b16 %v6485
        %v6530 = vunpack.c.l.b16 %v6488
        %v6531 = vunpack.c.l.b16 %v6492
        %v6532 = vunpack.c.l.b16 %v6495
        %v6533 = vunpack.c.l.b16 %v6499
        %v6534 = vunpack.c.l.b16 %v6502
        %v6535 = vpack.c.b16 %v6504, %v6503
        %v6536 = vpack.c.b16 %v6506, %v6505
        %v6537 = vpack.c.b16 %v6508, %v6507
        %v6538 = vpack.c.b16 %v6510, %v6509
        %v6539 = vpack.c.b16 %v6512, %v6511
        %v6540 = vpack.c.b16 %v6514, %v6513
        %v6541 = vpack.c.b16 %v6516, %v6515
        %v6542 = vpack.c.b16 %v6518, %v6517
        %v6543 = vpack.c.b16 %v6520, %v6519
        %v6544 = vpack.c.b16 %v6522, %v6521
        %v6545 = vpack.c.b16 %v6524, %v6523
        %v6546 = vpack.c.b16 %v6526, %v6525
        %v6547 = vpack.c.b16 %v6528, %v6527
        %v6548 = vpack.c.b16 %v6530, %v6529
        %v6549 = vpack.c.b16 %v6532, %v6531
        %v6550 = vpack.c.b16 %v6534, %v6533
        %6551 = vrot.lane.b32.xlu0 %v6535, 96
        %v6552 = vpop.permute.xlu0 %6551
        %6553 = vrot.lane.b32.xlu0 %v6536, 96
        %v6554 = vpop.permute.xlu0 %6553
        %6555 = vrot.lane.b32.xlu0 %v6537, 96
        %v6556 = vpop.permute.xlu0 %6555
        %6557 = vrot.lane.b32.xlu0 %v6538, 96
        %v6558 = vpop.permute.xlu0 %6557
        %6559 = vrot.lane.b32.xlu0 %v6539, 96
        %v6560 = vpop.permute.xlu0 %6559
        %6561 = vrot.lane.b32.xlu0 %v6540, 96
        %v6562 = vpop.permute.xlu0 %6561
        %6563 = vrot.lane.b32.xlu0 %v6541, 96
        %v6564 = vpop.permute.xlu0 %6563
        %6565 = vrot.lane.b32.xlu0 %v6542, 96
        %v6566 = vpop.permute.xlu0 %6565
        %6567 = vrot.lane.b32.xlu0 %v6543, 96
        %v6568 = vpop.permute.xlu0 %6567
        %6569 = vrot.lane.b32.xlu0 %v6544, 96
        %v6570 = vpop.permute.xlu0 %6569
        %6571 = vrot.lane.b32.xlu0 %v6545, 96
        %v6572 = vpop.permute.xlu0 %6571
        %6573 = vrot.lane.b32.xlu0 %v6546, 96
        %v6574 = vpop.permute.xlu0 %6573
        %6575 = vrot.lane.b32.xlu0 %v6547, 96
        %v6576 = vpop.permute.xlu0 %6575
        %6577 = vrot.lane.b32.xlu0 %v6548, 96
        %v6578 = vpop.permute.xlu0 %6577
        %6579 = vrot.lane.b32.xlu0 %v6549, 96
        %v6580 = vpop.permute.xlu0 %6579
        %6581 = vrot.lane.b32.xlu0 %v6550, 96
        %v6582 = vpop.permute.xlu0 %6581
        %6599 = vst.msk [vmem:[#allocation3 + $0x10] sm:$0xff] %vm2813, %v6552
        %6600 = vst.msk [vmem:[#allocation3 + $0x48] sm:$0xff] %vm2813, %v6554
        %6601 = vst.msk [vmem:[#allocation3 + $0x80] sm:$0xff] %vm2813, %v6556
        %6602 = vst.msk [vmem:[#allocation3 + $0xb8] sm:$0xff] %vm2813, %v6558
        %6603 = vst.msk [vmem:[#allocation3 + $0xf0] sm:$0xff] %vm2813, %v6560
        %6604 = vst.msk [vmem:[#allocation3 + $0x128] sm:$0xff] %vm2813, %v6562
        %6605 = vst.msk [vmem:[#allocation3 + $0x160] sm:$0xff] %vm2813, %v6564
        %6606 = vst.msk [vmem:[#allocation3 + $0x198] sm:$0xff] %vm2813, %v6566
        %6607 = vst.msk [vmem:[#allocation3 + $0x1d0] sm:$0xff] %vm2813, %v6568
        %6608 = vst.msk [vmem:[#allocation3 + $0x208] sm:$0xff] %vm2813, %v6570
        %6609 = vst.msk [vmem:[#allocation3 + $0x240] sm:$0xff] %vm2813, %v6572
        %6610 = vst.msk [vmem:[#allocation3 + $0x278] sm:$0xff] %vm2813, %v6574
        %6611 = vst.msk [vmem:[#allocation3 + $0x2b0] sm:$0xff] %vm2813, %v6576
        %6612 = vst.msk [vmem:[#allocation3 + $0x2e8] sm:$0xff] %vm2813, %v6578
        %6613 = vst.msk [vmem:[#allocation3 + $0x320] sm:$0xff] %vm2813, %v6580
        %6614 = vst.msk [vmem:[#allocation3 + $0x358] sm:$0xff] %vm2813, %v6582
        %v6615 = vld [vmem:[%s255] sm:$0xe]
        %v6616 = vld [vmem:[%s255 + $0x4] sm:$0xf]
        %v6617 = vld [vmem:[%s255 + $0x8] sm:$0x1]
        %v6618 = vld [vmem:[%s255 + $0xc] sm:$0xe]
        %v6619 = vld [vmem:[%s255 + $0x10] sm:$0xf]
        %v6620 = vld [vmem:[%s255 + $0x14] sm:$0x1]
        %v6621 = vld [vmem:[%s255 + $0x18] sm:$0xe]
        %v6622 = vld [vmem:[%s255 + $0x1c] sm:$0xf]
        %v6623 = vld [vmem:[%s255 + $0x20] sm:$0x1]
        %v6624 = vld [vmem:[%s255 + $0x24] sm:$0xe]
        %v6625 = vld [vmem:[%s255 + $0x28] sm:$0xf]
        %v6626 = vld [vmem:[%s255 + $0x2c] sm:$0x1]
        %v6627 = vld [vmem:[%s255 + $0x30] sm:$0xe]
        %v6628 = vld [vmem:[%s255 + $0x34] sm:$0xf]
        %v6629 = vld [vmem:[%s255 + $0x38] sm:$0x1]
        %v6630 = vld [vmem:[%s255 + $0x3c] sm:$0xe]
        %v6631 = vld [vmem:[%s255 + $0x40] sm:$0xf]
        %v6632 = vld [vmem:[%s255 + $0x44] sm:$0x1]
        %v6633 = vld [vmem:[%s255 + $0x48] sm:$0xe]
        %v6634 = vld [vmem:[%s255 + $0x4c] sm:$0xf]
        %v6635 = vld [vmem:[%s255 + $0x50] sm:$0x1]
        %v6636 = vld [vmem:[%s255 + $0x54] sm:$0xe]
        %v6637 = vld [vmem:[%s255 + $0x58] sm:$0xf]
        %v6638 = vld [vmem:[%s255 + $0x5c] sm:$0x1]
        %v6639 = vld [vmem:[%s255 + $0x60] sm:$0xe]
        %v6640 = vld [vmem:[%s255 + $0x64] sm:$0xf]
        %v6641 = vld [vmem:[%s255 + $0x68] sm:$0x1]
        %v6642 = vld [vmem:[%s255 + $0x6c] sm:$0xe]
        %v6643 = vld [vmem:[%s255 + $0x70] sm:$0xf]
        %v6644 = vld [vmem:[%s255 + $0x74] sm:$0x1]
        %v6645 = vld [vmem:[%s255 + $0x78] sm:$0xe]
        %v6646 = vld [vmem:[%s255 + $0x7c] sm:$0xf]
        %v6647 = vld [vmem:[%s255 + $0x80] sm:$0x1]
        %v6648 = vld [vmem:[%s255 + $0x84] sm:$0xe]
        %v6649 = vld [vmem:[%s255 + $0x88] sm:$0xf]
        %v6650 = vld [vmem:[%s255 + $0x8c] sm:$0x1]
        %v6651 = vld [vmem:[%s255 + $0x90] sm:$0xe]
        %v6652 = vld [vmem:[%s255 + $0x94] sm:$0xf]
        %v6653 = vld [vmem:[%s255 + $0x98] sm:$0x1]
        %v6654 = vld [vmem:[%s255 + $0x9c] sm:$0xe]
        %v6655 = vld [vmem:[%s255 + $0xa0] sm:$0xf]
        %v6656 = vld [vmem:[%s255 + $0xa4] sm:$0x1]
        %v6657 = vld [vmem:[%s255 + $0xa8] sm:$0xe]
        %v6658 = vld [vmem:[%s255 + $0xac] sm:$0xf]
        %v6659 = vld [vmem:[%s255 + $0xb0] sm:$0x1]
        %v6660 = vld [vmem:[%s255 + $0xb4] sm:$0xe]
        %v6661 = vld [vmem:[%s255 + $0xb8] sm:$0xf]
        %v6662 = vld [vmem:[%s255 + $0xbc] sm:$0x1]
        %v6711 = vrot.slane %v6615, 5
        %v6712 = vrot.slane %v6711, 4
        %v6713 = vrot.slane %v6616, 5
        %v6714 = vsel %vm5747, %v6712, %v6713
        %v6715 = vrot.slane %v6713, 4
        %v6716 = vrot.slane %v6617, 5
        %v6717 = vsel %vm5747, %v6715, %v6716
        %v6718 = vrot.slane %v6618, 5
        %v6719 = vrot.slane %v6718, 4
        %v6720 = vrot.slane %v6619, 5
        %v6721 = vsel %vm5747, %v6719, %v6720
        %v6722 = vrot.slane %v6720, 4
        %v6723 = vrot.slane %v6620, 5
        %v6724 = vsel %vm5747, %v6722, %v6723
        %v6725 = vrot.slane %v6621, 5
        %v6726 = vrot.slane %v6725, 4
        %v6727 = vrot.slane %v6622, 5
        %v6728 = vsel %vm5747, %v6726, %v6727
        %v6729 = vrot.slane %v6727, 4
        %v6730 = vrot.slane %v6623, 5
        %v6731 = vsel %vm5747, %v6729, %v6730
        %v6732 = vrot.slane %v6624, 5
        %v6733 = vrot.slane %v6732, 4
        %v6734 = vrot.slane %v6625, 5
        %v6735 = vsel %vm5747, %v6733, %v6734
        %v6736 = vrot.slane %v6734, 4
        %v6737 = vrot.slane %v6626, 5
        %v6738 = vsel %vm5747, %v6736, %v6737
        %v6739 = vrot.slane %v6627, 5
        %v6740 = vrot.slane %v6739, 4
        %v6741 = vrot.slane %v6628, 5
        %v6742 = vsel %vm5747, %v6740, %v6741
        %v6743 = vrot.slane %v6741, 4
        %v6744 = vrot.slane %v6629, 5
        %v6745 = vsel %vm5747, %v6743, %v6744
        %v6746 = vrot.slane %v6630, 5
        %v6747 = vrot.slane %v6746, 4
        %v6748 = vrot.slane %v6631, 5
        %v6749 = vsel %vm5747, %v6747, %v6748
        %v6750 = vrot.slane %v6748, 4
        %v6751 = vrot.slane %v6632, 5
        %v6752 = vsel %vm5747, %v6750, %v6751
        %v6753 = vrot.slane %v6633, 5
        %v6754 = vrot.slane %v6753, 4
        %v6755 = vrot.slane %v6634, 5
        %v6756 = vsel %vm5747, %v6754, %v6755
        %v6757 = vrot.slane %v6755, 4
        %v6758 = vrot.slane %v6635, 5
        %v6759 = vsel %vm5747, %v6757, %v6758
        %v6760 = vrot.slane %v6636, 5
        %v6761 = vrot.slane %v6760, 4
        %v6762 = vrot.slane %v6637, 5
        %v6763 = vsel %vm5747, %v6761, %v6762
        %v6764 = vrot.slane %v6762, 4
        %v6765 = vrot.slane %v6638, 5
        %v6766 = vsel %vm5747, %v6764, %v6765
        %v6767 = vrot.slane %v6639, 5
        %v6768 = vrot.slane %v6767, 4
        %v6769 = vrot.slane %v6640, 5
        %v6770 = vsel %vm5747, %v6768, %v6769
        %v6771 = vrot.slane %v6769, 4
        %v6772 = vrot.slane %v6641, 5
        %v6773 = vsel %vm5747, %v6771, %v6772
        %v6774 = vrot.slane %v6642, 5
        %v6775 = vrot.slane %v6774, 4
        %v6776 = vrot.slane %v6643, 5
        %v6777 = vsel %vm5747, %v6775, %v6776
        %v6778 = vrot.slane %v6776, 4
        %v6779 = vrot.slane %v6644, 5
        %v6780 = vsel %vm5747, %v6778, %v6779
        %v6781 = vrot.slane %v6645, 5
        %v6782 = vrot.slane %v6781, 4
        %v6783 = vrot.slane %v6646, 5
        %v6784 = vsel %vm5747, %v6782, %v6783
        %v6785 = vrot.slane %v6783, 4
        %v6786 = vrot.slane %v6647, 5
        %v6787 = vsel %vm5747, %v6785, %v6786
        %v6788 = vrot.slane %v6648, 5
        %v6789 = vrot.slane %v6788, 4
        %v6790 = vrot.slane %v6649, 5
        %v6791 = vsel %vm5747, %v6789, %v6790
        %v6792 = vrot.slane %v6790, 4
        %v6793 = vrot.slane %v6650, 5
        %v6794 = vsel %vm5747, %v6792, %v6793
        %v6795 = vrot.slane %v6651, 5
        %v6796 = vrot.slane %v6795, 4
        %v6797 = vrot.slane %v6652, 5
        %v6798 = vsel %vm5747, %v6796, %v6797
        %v6799 = vrot.slane %v6797, 4
        %v6800 = vrot.slane %v6653, 5
        %v6801 = vsel %vm5747, %v6799, %v6800
        %v6802 = vrot.slane %v6654, 5
        %v6803 = vrot.slane %v6802, 4
        %v6804 = vrot.slane %v6655, 5
        %v6805 = vsel %vm5747, %v6803, %v6804
        %v6806 = vrot.slane %v6804, 4
        %v6807 = vrot.slane %v6656, 5
        %v6808 = vsel %vm5747, %v6806, %v6807
        %v6809 = vrot.slane %v6657, 5
        %v6810 = vrot.slane %v6809, 4
        %v6811 = vrot.slane %v6658, 5
        %v6812 = vsel %vm5747, %v6810, %v6811
        %v6813 = vrot.slane %v6811, 4
        %v6814 = vrot.slane %v6659, 5
        %v6815 = vsel %vm5747, %v6813, %v6814
        %v6816 = vrot.slane %v6660, 5
        %v6817 = vrot.slane %v6816, 4
        %v6818 = vrot.slane %v6661, 5
        %v6819 = vsel %vm5747, %v6817, %v6818
        %v6820 = vrot.slane %v6818, 4
        %v6821 = vrot.slane %v6662, 5
        %v6822 = vsel %vm5747, %v6820, %v6821
        %v6823 = vunpack.c.l.b16 %v6714
        %v6824 = vunpack.c.l.b16 %v6717
        %v6825 = vunpack.c.l.b16 %v6721
        %v6826 = vunpack.c.l.b16 %v6724
        %v6827 = vunpack.c.l.b16 %v6728
        %v6828 = vunpack.c.l.b16 %v6731
        %v6829 = vunpack.c.l.b16 %v6735
        %v6830 = vunpack.c.l.b16 %v6738
        %v6831 = vunpack.c.l.b16 %v6742
        %v6832 = vunpack.c.l.b16 %v6745
        %v6833 = vunpack.c.l.b16 %v6749
        %v6834 = vunpack.c.l.b16 %v6752
        %v6835 = vunpack.c.l.b16 %v6756
        %v6836 = vunpack.c.l.b16 %v6759
        %v6837 = vunpack.c.l.b16 %v6763
        %v6838 = vunpack.c.l.b16 %v6766
        %v6839 = vunpack.c.l.b16 %v6770
        %v6840 = vunpack.c.l.b16 %v6773
        %v6841 = vunpack.c.l.b16 %v6777
        %v6842 = vunpack.c.l.b16 %v6780
        %v6843 = vunpack.c.l.b16 %v6784
        %v6844 = vunpack.c.l.b16 %v6787
        %v6845 = vunpack.c.l.b16 %v6791
        %v6846 = vunpack.c.l.b16 %v6794
        %v6847 = vunpack.c.l.b16 %v6798
        %v6848 = vunpack.c.l.b16 %v6801
        %v6849 = vunpack.c.l.b16 %v6805
        %v6850 = vunpack.c.l.b16 %v6808
        %v6851 = vunpack.c.l.b16 %v6812
        %v6852 = vunpack.c.l.b16 %v6815
        %v6853 = vunpack.c.l.b16 %v6819
        %v6854 = vunpack.c.l.b16 %v6822
        %v6855 = vpack.c.b16 %v6824, %v6823
        %v6856 = vpack.c.b16 %v6826, %v6825
        %v6857 = vpack.c.b16 %v6828, %v6827
        %v6858 = vpack.c.b16 %v6830, %v6829
        %v6859 = vpack.c.b16 %v6832, %v6831
        %v6860 = vpack.c.b16 %v6834, %v6833
        %v6861 = vpack.c.b16 %v6836, %v6835
        %v6862 = vpack.c.b16 %v6838, %v6837
        %v6863 = vpack.c.b16 %v6840, %v6839
        %v6864 = vpack.c.b16 %v6842, %v6841
        %v6865 = vpack.c.b16 %v6844, %v6843
        %v6866 = vpack.c.b16 %v6846, %v6845
        %v6867 = vpack.c.b16 %v6848, %v6847
        %v6868 = vpack.c.b16 %v6850, %v6849
        %v6869 = vpack.c.b16 %v6852, %v6851
        %v6870 = vpack.c.b16 %v6854, %v6853
        %6887 = vst.msk [vmem:[#allocation3 + $0x18] sm:$0xff] %vm1271, %v6855
        %6888 = vst.msk [vmem:[#allocation3 + $0x50] sm:$0xff] %vm1271, %v6856
        %6889 = vst.msk [vmem:[#allocation3 + $0x88] sm:$0xff] %vm1271, %v6857
        %6890 = vst.msk [vmem:[#allocation3 + $0xc0] sm:$0xff] %vm1271, %v6858
        %6891 = vst.msk [vmem:[#allocation3 + $0xf8] sm:$0xff] %vm1271, %v6859
        %6892 = vst.msk [vmem:[#allocation3 + $0x130] sm:$0xff] %vm1271, %v6860
        %6893 = vst.msk [vmem:[#allocation3 + $0x168] sm:$0xff] %vm1271, %v6861
        %6894 = vst.msk [vmem:[#allocation3 + $0x1a0] sm:$0xff] %vm1271, %v6862
        %6895 = vst.msk [vmem:[#allocation3 + $0x1d8] sm:$0xff] %vm1271, %v6863
        %6896 = vst.msk [vmem:[#allocation3 + $0x210] sm:$0xff] %vm1271, %v6864
        %6897 = vst.msk [vmem:[#allocation3 + $0x248] sm:$0xff] %vm1271, %v6865
        %6898 = vst.msk [vmem:[#allocation3 + $0x280] sm:$0xff] %vm1271, %v6866
        %6899 = vst.msk [vmem:[#allocation3 + $0x2b8] sm:$0xff] %vm1271, %v6867
        %6900 = vst.msk [vmem:[#allocation3 + $0x2f0] sm:$0xff] %vm1271, %v6868
        %6901 = vst.msk [vmem:[#allocation3 + $0x328] sm:$0xff] %vm1271, %v6869
        %6902 = vst.msk [vmem:[#allocation3 + $0x360] sm:$0xff] %vm1271, %v6870
        %v6903 = vld [vmem:[%s255] sm:$0xc]
        %v6904 = vld [vmem:[%s255 + $0x4] sm:$0xf]
        %v6905 = vld [vmem:[%s255 + $0x8] sm:$0x3]
        %v6906 = vld [vmem:[%s255 + $0xc] sm:$0xc]
        %v6907 = vld [vmem:[%s255 + $0x10] sm:$0xf]
        %v6908 = vld [vmem:[%s255 + $0x14] sm:$0x3]
        %v6909 = vld [vmem:[%s255 + $0x18] sm:$0xc]
        %v6910 = vld [vmem:[%s255 + $0x1c] sm:$0xf]
        %v6911 = vld [vmem:[%s255 + $0x20] sm:$0x3]
        %v6912 = vld [vmem:[%s255 + $0x24] sm:$0xc]
        %v6913 = vld [vmem:[%s255 + $0x28] sm:$0xf]
        %v6914 = vld [vmem:[%s255 + $0x2c] sm:$0x3]
        %v6915 = vld [vmem:[%s255 + $0x30] sm:$0xc]
        %v6916 = vld [vmem:[%s255 + $0x34] sm:$0xf]
        %v6917 = vld [vmem:[%s255 + $0x38] sm:$0x3]
        %v6918 = vld [vmem:[%s255 + $0x3c] sm:$0xc]
        %v6919 = vld [vmem:[%s255 + $0x40] sm:$0xf]
        %v6920 = vld [vmem:[%s255 + $0x44] sm:$0x3]
        %v6921 = vld [vmem:[%s255 + $0x48] sm:$0xc]
        %v6922 = vld [vmem:[%s255 + $0x4c] sm:$0xf]
        %v6923 = vld [vmem:[%s255 + $0x50] sm:$0x3]
        %v6924 = vld [vmem:[%s255 + $0x54] sm:$0xc]
        %v6925 = vld [vmem:[%s255 + $0x58] sm:$0xf]
        %v6926 = vld [vmem:[%s255 + $0x5c] sm:$0x3]
        %v6927 = vld [vmem:[%s255 + $0x60] sm:$0xc]
        %v6928 = vld [vmem:[%s255 + $0x64] sm:$0xf]
        %v6929 = vld [vmem:[%s255 + $0x68] sm:$0x3]
        %v6930 = vld [vmem:[%s255 + $0x6c] sm:$0xc]
        %v6931 = vld [vmem:[%s255 + $0x70] sm:$0xf]
        %v6932 = vld [vmem:[%s255 + $0x74] sm:$0x3]
        %v6933 = vld [vmem:[%s255 + $0x78] sm:$0xc]
        %v6934 = vld [vmem:[%s255 + $0x7c] sm:$0xf]
        %v6935 = vld [vmem:[%s255 + $0x80] sm:$0x3]
        %v6936 = vld [vmem:[%s255 + $0x84] sm:$0xc]
        %v6937 = vld [vmem:[%s255 + $0x88] sm:$0xf]
        %v6938 = vld [vmem:[%s255 + $0x8c] sm:$0x3]
        %v6939 = vld [vmem:[%s255 + $0x90] sm:$0xc]
        %v6940 = vld [vmem:[%s255 + $0x94] sm:$0xf]
        %v6941 = vld [vmem:[%s255 + $0x98] sm:$0x3]
        %v6942 = vld [vmem:[%s255 + $0x9c] sm:$0xc]
        %v6943 = vld [vmem:[%s255 + $0xa0] sm:$0xf]
        %v6944 = vld [vmem:[%s255 + $0xa4] sm:$0x3]
        %v6945 = vld [vmem:[%s255 + $0xa8] sm:$0xc]
        %v6946 = vld [vmem:[%s255 + $0xac] sm:$0xf]
        %v6947 = vld [vmem:[%s255 + $0xb0] sm:$0x3]
        %v6948 = vld [vmem:[%s255 + $0xb4] sm:$0xc]
        %v6949 = vld [vmem:[%s255 + $0xb8] sm:$0xf]
        %v6950 = vld [vmem:[%s255 + $0xbc] sm:$0x3]
        %v6999 = vrot.slane %v6903, 6
        %v7000 = vrot.slane %v6999, 4
        %v7001 = vrot.slane %v6904, 6
        %v7002 = vsel %vm530, %v7000, %v7001
        %v7003 = vrot.slane %v7001, 4
        %v7004 = vrot.slane %v6905, 6
        %v7005 = vsel %vm530, %v7003, %v7004
        %v7006 = vrot.slane %v6906, 6
        %v7007 = vrot.slane %v7006, 4
        %v7008 = vrot.slane %v6907, 6
        %v7009 = vsel %vm530, %v7007, %v7008
        %v7010 = vrot.slane %v7008, 4
        %v7011 = vrot.slane %v6908, 6
        %v7012 = vsel %vm530, %v7010, %v7011
        %v7013 = vrot.slane %v6909, 6
        %v7014 = vrot.slane %v7013, 4
        %v7015 = vrot.slane %v6910, 6
        %v7016 = vsel %vm530, %v7014, %v7015
        %v7017 = vrot.slane %v7015, 4
        %v7018 = vrot.slane %v6911, 6
        %v7019 = vsel %vm530, %v7017, %v7018
        %v7020 = vrot.slane %v6912, 6
        %v7021 = vrot.slane %v7020, 4
        %v7022 = vrot.slane %v6913, 6
        %v7023 = vsel %vm530, %v7021, %v7022
        %v7024 = vrot.slane %v7022, 4
        %v7025 = vrot.slane %v6914, 6
        %v7026 = vsel %vm530, %v7024, %v7025
        %v7027 = vrot.slane %v6915, 6
        %v7028 = vrot.slane %v7027, 4
        %v7029 = vrot.slane %v6916, 6
        %v7030 = vsel %vm530, %v7028, %v7029
        %v7031 = vrot.slane %v7029, 4
        %v7032 = vrot.slane %v6917, 6
        %v7033 = vsel %vm530, %v7031, %v7032
        %v7034 = vrot.slane %v6918, 6
        %v7035 = vrot.slane %v7034, 4
        %v7036 = vrot.slane %v6919, 6
        %v7037 = vsel %vm530, %v7035, %v7036
        %v7038 = vrot.slane %v7036, 4
        %v7039 = vrot.slane %v6920, 6
        %v7040 = vsel %vm530, %v7038, %v7039
        %v7041 = vrot.slane %v6921, 6
        %v7042 = vrot.slane %v7041, 4
        %v7043 = vrot.slane %v6922, 6
        %v7044 = vsel %vm530, %v7042, %v7043
        %v7045 = vrot.slane %v7043, 4
        %v7046 = vrot.slane %v6923, 6
        %v7047 = vsel %vm530, %v7045, %v7046
        %v7048 = vrot.slane %v6924, 6
        %v7049 = vrot.slane %v7048, 4
        %v7050 = vrot.slane %v6925, 6
        %v7051 = vsel %vm530, %v7049, %v7050
        %v7052 = vrot.slane %v7050, 4
        %v7053 = vrot.slane %v6926, 6
        %v7054 = vsel %vm530, %v7052, %v7053
        %v7055 = vrot.slane %v6927, 6
        %v7056 = vrot.slane %v7055, 4
        %v7057 = vrot.slane %v6928, 6
        %v7058 = vsel %vm530, %v7056, %v7057
        %v7059 = vrot.slane %v7057, 4
        %v7060 = vrot.slane %v6929, 6
        %v7061 = vsel %vm530, %v7059, %v7060
        %v7062 = vrot.slane %v6930, 6
        %v7063 = vrot.slane %v7062, 4
        %v7064 = vrot.slane %v6931, 6
        %v7065 = vsel %vm530, %v7063, %v7064
        %v7066 = vrot.slane %v7064, 4
        %v7067 = vrot.slane %v6932, 6
        %v7068 = vsel %vm530, %v7066, %v7067
        %v7069 = vrot.slane %v6933, 6
        %v7070 = vrot.slane %v7069, 4
        %v7071 = vrot.slane %v6934, 6
        %v7072 = vsel %vm530, %v7070, %v7071
        %v7073 = vrot.slane %v7071, 4
        %v7074 = vrot.slane %v6935, 6
        %v7075 = vsel %vm530, %v7073, %v7074
        %v7076 = vrot.slane %v6936, 6
        %v7077 = vrot.slane %v7076, 4
        %v7078 = vrot.slane %v6937, 6
        %v7079 = vsel %vm530, %v7077, %v7078
        %v7080 = vrot.slane %v7078, 4
        %v7081 = vrot.slane %v6938, 6
        %v7082 = vsel %vm530, %v7080, %v7081
        %v7083 = vrot.slane %v6939, 6
        %v7084 = vrot.slane %v7083, 4
        %v7085 = vrot.slane %v6940, 6
        %v7086 = vsel %vm530, %v7084, %v7085
        %v7087 = vrot.slane %v7085, 4
        %v7088 = vrot.slane %v6941, 6
        %v7089 = vsel %vm530, %v7087, %v7088
        %v7090 = vrot.slane %v6942, 6
        %v7091 = vrot.slane %v7090, 4
        %v7092 = vrot.slane %v6943, 6
        %v7093 = vsel %vm530, %v7091, %v7092
        %v7094 = vrot.slane %v7092, 4
        %v7095 = vrot.slane %v6944, 6
        %v7096 = vsel %vm530, %v7094, %v7095
        %v7097 = vrot.slane %v6945, 6
        %v7098 = vrot.slane %v7097, 4
        %v7099 = vrot.slane %v6946, 6
        %v7100 = vsel %vm530, %v7098, %v7099
        %v7101 = vrot.slane %v7099, 4
        %v7102 = vrot.slane %v6947, 6
        %v7103 = vsel %vm530, %v7101, %v7102
        %v7104 = vrot.slane %v6948, 6
        %v7105 = vrot.slane %v7104, 4
        %v7106 = vrot.slane %v6949, 6
        %v7107 = vsel %vm530, %v7105, %v7106
        %v7108 = vrot.slane %v7106, 4
        %v7109 = vrot.slane %v6950, 6
        %v7110 = vsel %vm530, %v7108, %v7109
        %v7111 = vunpack.c.l.b16 %v7002
        %v7112 = vunpack.c.l.b16 %v7005
        %v7113 = vunpack.c.l.b16 %v7009
        %v7114 = vunpack.c.l.b16 %v7012
        %v7115 = vunpack.c.l.b16 %v7016
        %v7116 = vunpack.c.l.b16 %v7019
        %v7117 = vunpack.c.l.b16 %v7023
        %v7118 = vunpack.c.l.b16 %v7026
        %v7119 = vunpack.c.l.b16 %v7030
        %v7120 = vunpack.c.l.b16 %v7033
        %v7121 = vunpack.c.l.b16 %v7037
        %v7122 = vunpack.c.l.b16 %v7040
        %v7123 = vunpack.c.l.b16 %v7044
        %v7124 = vunpack.c.l.b16 %v7047
        %v7125 = vunpack.c.l.b16 %v7051
        %v7126 = vunpack.c.l.b16 %v7054
        %v7127 = vunpack.c.l.b16 %v7058
        %v7128 = vunpack.c.l.b16 %v7061
        %v7129 = vunpack.c.l.b16 %v7065
        %v7130 = vunpack.c.l.b16 %v7068
        %v7131 = vunpack.c.l.b16 %v7072
        %v7132 = vunpack.c.l.b16 %v7075
        %v7133 = vunpack.c.l.b16 %v7079
        %v7134 = vunpack.c.l.b16 %v7082
        %v7135 = vunpack.c.l.b16 %v7086
        %v7136 = vunpack.c.l.b16 %v7089
        %v7137 = vunpack.c.l.b16 %v7093
        %v7138 = vunpack.c.l.b16 %v7096
        %v7139 = vunpack.c.l.b16 %v7100
        %v7140 = vunpack.c.l.b16 %v7103
        %v7141 = vunpack.c.l.b16 %v7107
        %v7142 = vunpack.c.l.b16 %v7110
        %v7143 = vpack.c.b16 %v7112, %v7111
        %v7144 = vpack.c.b16 %v7114, %v7113
        %v7145 = vpack.c.b16 %v7116, %v7115
        %v7146 = vpack.c.b16 %v7118, %v7117
        %v7147 = vpack.c.b16 %v7120, %v7119
        %v7148 = vpack.c.b16 %v7122, %v7121
        %v7149 = vpack.c.b16 %v7124, %v7123
        %v7150 = vpack.c.b16 %v7126, %v7125
        %v7151 = vpack.c.b16 %v7128, %v7127
        %v7152 = vpack.c.b16 %v7130, %v7129
        %v7153 = vpack.c.b16 %v7132, %v7131
        %v7154 = vpack.c.b16 %v7134, %v7133
        %v7155 = vpack.c.b16 %v7136, %v7135
        %v7156 = vpack.c.b16 %v7138, %v7137
        %v7157 = vpack.c.b16 %v7140, %v7139
        %v7158 = vpack.c.b16 %v7142, %v7141
        %7159 = vrot.lane.b32.xlu0 %v7143, 32
        %v7160 = vpop.permute.xlu0 %7159
        %7161 = vrot.lane.b32.xlu0 %v7144, 32
        %v7162 = vpop.permute.xlu0 %7161
        %7163 = vrot.lane.b32.xlu0 %v7145, 32
        %v7164 = vpop.permute.xlu0 %7163
        %7165 = vrot.lane.b32.xlu0 %v7146, 32
        %v7166 = vpop.permute.xlu0 %7165
        %7167 = vrot.lane.b32.xlu0 %v7147, 32
        %v7168 = vpop.permute.xlu0 %7167
        %7169 = vrot.lane.b32.xlu0 %v7148, 32
        %v7170 = vpop.permute.xlu0 %7169
        %7171 = vrot.lane.b32.xlu0 %v7149, 32
        %v7172 = vpop.permute.xlu0 %7171
        %7173 = vrot.lane.b32.xlu0 %v7150, 32
        %v7174 = vpop.permute.xlu0 %7173
        %7175 = vrot.lane.b32.xlu0 %v7151, 32
        %v7176 = vpop.permute.xlu0 %7175
        %7177 = vrot.lane.b32.xlu0 %v7152, 32
        %v7178 = vpop.permute.xlu0 %7177
        %7179 = vrot.lane.b32.xlu0 %v7153, 32
        %v7180 = vpop.permute.xlu0 %7179
        %7181 = vrot.lane.b32.xlu0 %v7154, 32
        %v7182 = vpop.permute.xlu0 %7181
        %7183 = vrot.lane.b32.xlu0 %v7155, 32
        %v7184 = vpop.permute.xlu0 %7183
        %7185 = vrot.lane.b32.xlu0 %v7156, 32
        %v7186 = vpop.permute.xlu0 %7185
        %7187 = vrot.lane.b32.xlu0 %v7157, 32
        %v7188 = vpop.permute.xlu0 %7187
        %7189 = vrot.lane.b32.xlu0 %v7158, 32
        %v7190 = vpop.permute.xlu0 %7189
        %7207 = vst.msk [vmem:[#allocation3 + $0x18] sm:$0xff] %vm1592, %v7160
        %7208 = vst.msk [vmem:[#allocation3 + $0x50] sm:$0xff] %vm1592, %v7162
        %7209 = vst.msk [vmem:[#allocation3 + $0x88] sm:$0xff] %vm1592, %v7164
        %7210 = vst.msk [vmem:[#allocation3 + $0xc0] sm:$0xff] %vm1592, %v7166
        %7211 = vst.msk [vmem:[#allocation3 + $0xf8] sm:$0xff] %vm1592, %v7168
        %7212 = vst.msk [vmem:[#allocation3 + $0x130] sm:$0xff] %vm1592, %v7170
        %7213 = vst.msk [vmem:[#allocation3 + $0x168] sm:$0xff] %vm1592, %v7172
        %7214 = vst.msk [vmem:[#allocation3 + $0x1a0] sm:$0xff] %vm1592, %v7174
        %7215 = vst.msk [vmem:[#allocation3 + $0x1d8] sm:$0xff] %vm1592, %v7176
        %7216 = vst.msk [vmem:[#allocation3 + $0x210] sm:$0xff] %vm1592, %v7178
        %7217 = vst.msk [vmem:[#allocation3 + $0x248] sm:$0xff] %vm1592, %v7180
        %7218 = vst.msk [vmem:[#allocation3 + $0x280] sm:$0xff] %vm1592, %v7182
        %7219 = vst.msk [vmem:[#allocation3 + $0x2b8] sm:$0xff] %vm1592, %v7184
        %7220 = vst.msk [vmem:[#allocation3 + $0x2f0] sm:$0xff] %vm1592, %v7186
        %7221 = vst.msk [vmem:[#allocation3 + $0x328] sm:$0xff] %vm1592, %v7188
        %7222 = vst.msk [vmem:[#allocation3 + $0x360] sm:$0xff] %vm1592, %v7190
        %v7223 = vld [vmem:[%s255] sm:$0x8]
        %v7224 = vld [vmem:[%s255 + $0x4] sm:$0xf]
        %v7225 = vld [vmem:[%s255 + $0x8] sm:$0x7]
        %v7226 = vld [vmem:[%s255 + $0xc] sm:$0x8]
        %v7227 = vld [vmem:[%s255 + $0x10] sm:$0xf]
        %v7228 = vld [vmem:[%s255 + $0x14] sm:$0x7]
        %v7229 = vld [vmem:[%s255 + $0x18] sm:$0x8]
        %v7230 = vld [vmem:[%s255 + $0x1c] sm:$0xf]
        %v7231 = vld [vmem:[%s255 + $0x20] sm:$0x7]
        %v7232 = vld [vmem:[%s255 + $0x24] sm:$0x8]
        %v7233 = vld [vmem:[%s255 + $0x28] sm:$0xf]
        %v7234 = vld [vmem:[%s255 + $0x2c] sm:$0x7]
        %v7235 = vld [vmem:[%s255 + $0x30] sm:$0x8]
        %v7236 = vld [vmem:[%s255 + $0x34] sm:$0xf]
        %v7237 = vld [vmem:[%s255 + $0x38] sm:$0x7]
        %v7238 = vld [vmem:[%s255 + $0x3c] sm:$0x8]
        %v7239 = vld [vmem:[%s255 + $0x40] sm:$0xf]
        %v7240 = vld [vmem:[%s255 + $0x44] sm:$0x7]
        %v7241 = vld [vmem:[%s255 + $0x48] sm:$0x8]
        %v7242 = vld [vmem:[%s255 + $0x4c] sm:$0xf]
        %v7243 = vld [vmem:[%s255 + $0x50] sm:$0x7]
        %v7244 = vld [vmem:[%s255 + $0x54] sm:$0x8]
        %v7245 = vld [vmem:[%s255 + $0x58] sm:$0xf]
        %v7246 = vld [vmem:[%s255 + $0x5c] sm:$0x7]
        %v7247 = vld [vmem:[%s255 + $0x60] sm:$0x8]
        %v7248 = vld [vmem:[%s255 + $0x64] sm:$0xf]
        %v7249 = vld [vmem:[%s255 + $0x68] sm:$0x7]
        %v7250 = vld [vmem:[%s255 + $0x6c] sm:$0x8]
        %v7251 = vld [vmem:[%s255 + $0x70] sm:$0xf]
        %v7252 = vld [vmem:[%s255 + $0x74] sm:$0x7]
        %v7253 = vld [vmem:[%s255 + $0x78] sm:$0x8]
        %v7254 = vld [vmem:[%s255 + $0x7c] sm:$0xf]
        %v7255 = vld [vmem:[%s255 + $0x80] sm:$0x7]
        %v7256 = vld [vmem:[%s255 + $0x84] sm:$0x8]
        %v7257 = vld [vmem:[%s255 + $0x88] sm:$0xf]
        %v7258 = vld [vmem:[%s255 + $0x8c] sm:$0x7]
        %v7259 = vld [vmem:[%s255 + $0x90] sm:$0x8]
        %v7260 = vld [vmem:[%s255 + $0x94] sm:$0xf]
        %v7261 = vld [vmem:[%s255 + $0x98] sm:$0x7]
        %v7262 = vld [vmem:[%s255 + $0x9c] sm:$0x8]
        %v7263 = vld [vmem:[%s255 + $0xa0] sm:$0xf]
        %v7264 = vld [vmem:[%s255 + $0xa4] sm:$0x7]
        %v7265 = vld [vmem:[%s255 + $0xa8] sm:$0x8]
        %v7266 = vld [vmem:[%s255 + $0xac] sm:$0xf]
        %v7267 = vld [vmem:[%s255 + $0xb0] sm:$0x7]
        %v7268 = vld [vmem:[%s255 + $0xb4] sm:$0x8]
        %v7269 = vld [vmem:[%s255 + $0xb8] sm:$0xf]
        %v7270 = vld [vmem:[%s255 + $0xbc] sm:$0x7]
        %v7319 = vrot.slane %v7223, 7
        %v7320 = vrot.slane %v7319, 4
        %v7321 = vrot.slane %v7224, 7
        %v7322 = vsel %vm6390, %v7320, %v7321
        %v7323 = vrot.slane %v7321, 4
        %v7324 = vrot.slane %v7225, 7
        %v7325 = vsel %vm6390, %v7323, %v7324
        %v7326 = vrot.slane %v7226, 7
        %v7327 = vrot.slane %v7326, 4
        %v7328 = vrot.slane %v7227, 7
        %v7329 = vsel %vm6390, %v7327, %v7328
        %v7330 = vrot.slane %v7328, 4
        %v7331 = vrot.slane %v7228, 7
        %v7332 = vsel %vm6390, %v7330, %v7331
        %v7333 = vrot.slane %v7229, 7
        %v7334 = vrot.slane %v7333, 4
        %v7335 = vrot.slane %v7230, 7
        %v7336 = vsel %vm6390, %v7334, %v7335
        %v7337 = vrot.slane %v7335, 4
        %v7338 = vrot.slane %v7231, 7
        %v7339 = vsel %vm6390, %v7337, %v7338
        %v7340 = vrot.slane %v7232, 7
        %v7341 = vrot.slane %v7340, 4
        %v7342 = vrot.slane %v7233, 7
        %v7343 = vsel %vm6390, %v7341, %v7342
        %v7344 = vrot.slane %v7342, 4
        %v7345 = vrot.slane %v7234, 7
        %v7346 = vsel %vm6390, %v7344, %v7345
        %v7347 = vrot.slane %v7235, 7
        %v7348 = vrot.slane %v7347, 4
        %v7349 = vrot.slane %v7236, 7
        %v7350 = vsel %vm6390, %v7348, %v7349
        %v7351 = vrot.slane %v7349, 4
        %v7352 = vrot.slane %v7237, 7
        %v7353 = vsel %vm6390, %v7351, %v7352
        %v7354 = vrot.slane %v7238, 7
        %v7355 = vrot.slane %v7354, 4
        %v7356 = vrot.slane %v7239, 7
        %v7357 = vsel %vm6390, %v7355, %v7356
        %v7358 = vrot.slane %v7356, 4
        %v7359 = vrot.slane %v7240, 7
        %v7360 = vsel %vm6390, %v7358, %v7359
        %v7361 = vrot.slane %v7241, 7
        %v7362 = vrot.slane %v7361, 4
        %v7363 = vrot.slane %v7242, 7
        %v7364 = vsel %vm6390, %v7362, %v7363
        %v7365 = vrot.slane %v7363, 4
        %v7366 = vrot.slane %v7243, 7
        %v7367 = vsel %vm6390, %v7365, %v7366
        %v7368 = vrot.slane %v7244, 7
        %v7369 = vrot.slane %v7368, 4
        %v7370 = vrot.slane %v7245, 7
        %v7371 = vsel %vm6390, %v7369, %v7370
        %v7372 = vrot.slane %v7370, 4
        %v7373 = vrot.slane %v7246, 7
        %v7374 = vsel %vm6390, %v7372, %v7373
        %v7375 = vrot.slane %v7247, 7
        %v7376 = vrot.slane %v7375, 4
        %v7377 = vrot.slane %v7248, 7
        %v7378 = vsel %vm6390, %v7376, %v7377
        %v7379 = vrot.slane %v7377, 4
        %v7380 = vrot.slane %v7249, 7
        %v7381 = vsel %vm6390, %v7379, %v7380
        %v7382 = vrot.slane %v7250, 7
        %v7383 = vrot.slane %v7382, 4
        %v7384 = vrot.slane %v7251, 7
        %v7385 = vsel %vm6390, %v7383, %v7384
        %v7386 = vrot.slane %v7384, 4
        %v7387 = vrot.slane %v7252, 7
        %v7388 = vsel %vm6390, %v7386, %v7387
        %v7389 = vrot.slane %v7253, 7
        %v7390 = vrot.slane %v7389, 4
        %v7391 = vrot.slane %v7254, 7
        %v7392 = vsel %vm6390, %v7390, %v7391
        %v7393 = vrot.slane %v7391, 4
        %v7394 = vrot.slane %v7255, 7
        %v7395 = vsel %vm6390, %v7393, %v7394
        %v7396 = vrot.slane %v7256, 7
        %v7397 = vrot.slane %v7396, 4
        %v7398 = vrot.slane %v7257, 7
        %v7399 = vsel %vm6390, %v7397, %v7398
        %v7400 = vrot.slane %v7398, 4
        %v7401 = vrot.slane %v7258, 7
        %v7402 = vsel %vm6390, %v7400, %v7401
        %v7403 = vrot.slane %v7259, 7
        %v7404 = vrot.slane %v7403, 4
        %v7405 = vrot.slane %v7260, 7
        %v7406 = vsel %vm6390, %v7404, %v7405
        %v7407 = vrot.slane %v7405, 4
        %v7408 = vrot.slane %v7261, 7
        %v7409 = vsel %vm6390, %v7407, %v7408
        %v7410 = vrot.slane %v7262, 7
        %v7411 = vrot.slane %v7410, 4
        %v7412 = vrot.slane %v7263, 7
        %v7413 = vsel %vm6390, %v7411, %v7412
        %v7414 = vrot.slane %v7412, 4
        %v7415 = vrot.slane %v7264, 7
        %v7416 = vsel %vm6390, %v7414, %v7415
        %v7417 = vrot.slane %v7265, 7
        %v7418 = vrot.slane %v7417, 4
        %v7419 = vrot.slane %v7266, 7
        %v7420 = vsel %vm6390, %v7418, %v7419
        %v7421 = vrot.slane %v7419, 4
        %v7422 = vrot.slane %v7267, 7
        %v7423 = vsel %vm6390, %v7421, %v7422
        %v7424 = vrot.slane %v7268, 7
        %v7425 = vrot.slane %v7424, 4
        %v7426 = vrot.slane %v7269, 7
        %v7427 = vsel %vm6390, %v7425, %v7426
        %v7428 = vrot.slane %v7426, 4
        %v7429 = vrot.slane %v7270, 7
        %v7430 = vsel %vm6390, %v7428, %v7429
        %v7431 = vunpack.c.l.b16 %v7322
        %v7432 = vunpack.c.l.b16 %v7325
        %v7433 = vunpack.c.l.b16 %v7329
        %v7434 = vunpack.c.l.b16 %v7332
        %v7435 = vunpack.c.l.b16 %v7336
        %v7436 = vunpack.c.l.b16 %v7339
        %v7437 = vunpack.c.l.b16 %v7343
        %v7438 = vunpack.c.l.b16 %v7346
        %v7439 = vunpack.c.l.b16 %v7350
        %v7440 = vunpack.c.l.b16 %v7353
        %v7441 = vunpack.c.l.b16 %v7357
        %v7442 = vunpack.c.l.b16 %v7360
        %v7443 = vunpack.c.l.b16 %v7364
        %v7444 = vunpack.c.l.b16 %v7367
        %v7445 = vunpack.c.l.b16 %v7371
        %v7446 = vunpack.c.l.b16 %v7374
        %v7447 = vunpack.c.l.b16 %v7378
        %v7448 = vunpack.c.l.b16 %v7381
        %v7449 = vunpack.c.l.b16 %v7385
        %v7450 = vunpack.c.l.b16 %v7388
        %v7451 = vunpack.c.l.b16 %v7392
        %v7452 = vunpack.c.l.b16 %v7395
        %v7453 = vunpack.c.l.b16 %v7399
        %v7454 = vunpack.c.l.b16 %v7402
        %v7455 = vunpack.c.l.b16 %v7406
        %v7456 = vunpack.c.l.b16 %v7409
        %v7457 = vunpack.c.l.b16 %v7413
        %v7458 = vunpack.c.l.b16 %v7416
        %v7459 = vunpack.c.l.b16 %v7420
        %v7460 = vunpack.c.l.b16 %v7423
        %v7461 = vunpack.c.l.b16 %v7427
        %v7462 = vunpack.c.l.b16 %v7430
        %v7463 = vpack.c.b16 %v7432, %v7431
        %v7464 = vpack.c.b16 %v7434, %v7433
        %v7465 = vpack.c.b16 %v7436, %v7435
        %v7466 = vpack.c.b16 %v7438, %v7437
        %v7467 = vpack.c.b16 %v7440, %v7439
        %v7468 = vpack.c.b16 %v7442, %v7441
        %v7469 = vpack.c.b16 %v7444, %v7443
        %v7470 = vpack.c.b16 %v7446, %v7445
        %v7471 = vpack.c.b16 %v7448, %v7447
        %v7472 = vpack.c.b16 %v7450, %v7449
        %v7473 = vpack.c.b16 %v7452, %v7451
        %v7474 = vpack.c.b16 %v7454, %v7453
        %v7475 = vpack.c.b16 %v7456, %v7455
        %v7476 = vpack.c.b16 %v7458, %v7457
        %v7477 = vpack.c.b16 %v7460, %v7459
        %v7478 = vpack.c.b16 %v7462, %v7461
        %7479 = vrot.lane.b32.xlu0 %v7463, 64
        %v7480 = vpop.permute.xlu0 %7479
        %7481 = vrot.lane.b32.xlu0 %v7464, 64
        %v7482 = vpop.permute.xlu0 %7481
        %7483 = vrot.lane.b32.xlu0 %v7465, 64
        %v7484 = vpop.permute.xlu0 %7483
        %7485 = vrot.lane.b32.xlu0 %v7466, 64
        %v7486 = vpop.permute.xlu0 %7485
        %7487 = vrot.lane.b32.xlu0 %v7467, 64
        %v7488 = vpop.permute.xlu0 %7487
        %7489 = vrot.lane.b32.xlu0 %v7468, 64
        %v7490 = vpop.permute.xlu0 %7489
        %7491 = vrot.lane.b32.xlu0 %v7469, 64
        %v7492 = vpop.permute.xlu0 %7491
        %7493 = vrot.lane.b32.xlu0 %v7470, 64
        %v7494 = vpop.permute.xlu0 %7493
        %7495 = vrot.lane.b32.xlu0 %v7471, 64
        %v7496 = vpop.permute.xlu0 %7495
        %7497 = vrot.lane.b32.xlu0 %v7472, 64
        %v7498 = vpop.permute.xlu0 %7497
        %7499 = vrot.lane.b32.xlu0 %v7473, 64
        %v7500 = vpop.permute.xlu0 %7499
        %7501 = vrot.lane.b32.xlu0 %v7474, 64
        %v7502 = vpop.permute.xlu0 %7501
        %7503 = vrot.lane.b32.xlu0 %v7475, 64
        %v7504 = vpop.permute.xlu0 %7503
        %7505 = vrot.lane.b32.xlu0 %v7476, 64
        %v7506 = vpop.permute.xlu0 %7505
        %7507 = vrot.lane.b32.xlu0 %v7477, 64
        %v7508 = vpop.permute.xlu0 %7507
        %7509 = vrot.lane.b32.xlu0 %v7478, 64
        %v7510 = vpop.permute.xlu0 %7509
        %7527 = vst.msk [vmem:[#allocation3 + $0x18] sm:$0xff] %vm2204, %v7480
        %7528 = vst.msk [vmem:[#allocation3 + $0x50] sm:$0xff] %vm2204, %v7482
        %7529 = vst.msk [vmem:[#allocation3 + $0x88] sm:$0xff] %vm2204, %v7484
        %7530 = vst.msk [vmem:[#allocation3 + $0xc0] sm:$0xff] %vm2204, %v7486
        %7531 = vst.msk [vmem:[#allocation3 + $0xf8] sm:$0xff] %vm2204, %v7488
        %7532 = vst.msk [vmem:[#allocation3 + $0x130] sm:$0xff] %vm2204, %v7490
        %7533 = vst.msk [vmem:[#allocation3 + $0x168] sm:$0xff] %vm2204, %v7492
        %7534 = vst.msk [vmem:[#allocation3 + $0x1a0] sm:$0xff] %vm2204, %v7494
        %7535 = vst.msk [vmem:[#allocation3 + $0x1d8] sm:$0xff] %vm2204, %v7496
        %7536 = vst.msk [vmem:[#allocation3 + $0x210] sm:$0xff] %vm2204, %v7498
        %7537 = vst.msk [vmem:[#allocation3 + $0x248] sm:$0xff] %vm2204, %v7500
        %7538 = vst.msk [vmem:[#allocation3 + $0x280] sm:$0xff] %vm2204, %v7502
        %7539 = vst.msk [vmem:[#allocation3 + $0x2b8] sm:$0xff] %vm2204, %v7504
        %7540 = vst.msk [vmem:[#allocation3 + $0x2f0] sm:$0xff] %vm2204, %v7506
        %7541 = vst.msk [vmem:[#allocation3 + $0x328] sm:$0xff] %vm2204, %v7508
        %7542 = vst.msk [vmem:[#allocation3 + $0x360] sm:$0xff] %vm2204, %v7510
        %s7543 = scalar_lea.vmem [#allocation2], 72
        %v7544 = vld [vmem:[%s7543] sm:$0xe]
        %v7545 = vld [vmem:[%s7543 + $0x4] sm:$0xf]
        %v7546 = vld [vmem:[%s7543 + $0x8] sm:$0x1]
        %v7547 = vld [vmem:[%s7543 + $0xc] sm:$0xe]
        %v7548 = vld [vmem:[%s7543 + $0x10] sm:$0xf]
        %v7549 = vld [vmem:[%s7543 + $0x14] sm:$0x1]
        %v7550 = vld [vmem:[%s7543 + $0x18] sm:$0xe]
        %v7551 = vld [vmem:[%s7543 + $0x1c] sm:$0xf]
        %v7552 = vld [vmem:[%s7543 + $0x20] sm:$0x1]
        %v7553 = vld [vmem:[%s7543 + $0x24] sm:$0xe]
        %v7554 = vld [vmem:[%s7543 + $0x28] sm:$0xf]
        %v7555 = vld [vmem:[%s7543 + $0x2c] sm:$0x1]
        %v7556 = vld [vmem:[%s7543 + $0x30] sm:$0xe]
        %v7557 = vld [vmem:[%s7543 + $0x34] sm:$0xf]
        %v7558 = vld [vmem:[%s7543 + $0x38] sm:$0x1]
        %v7559 = vld [vmem:[%s7543 + $0x3c] sm:$0xe]
        %v7560 = vld [vmem:[%s7543 + $0x40] sm:$0xf]
        %v7561 = vld [vmem:[%s7543 + $0x44] sm:$0x1]
        %v7562 = vld [vmem:[%s7543 + $0x48] sm:$0xe]
        %v7563 = vld [vmem:[%s7543 + $0x4c] sm:$0xf]
        %v7564 = vld [vmem:[%s7543 + $0x50] sm:$0x1]
        %v7565 = vld [vmem:[%s7543 + $0x54] sm:$0xe]
        %v7566 = vld [vmem:[%s7543 + $0x58] sm:$0xf]
        %v7567 = vld [vmem:[%s7543 + $0x5c] sm:$0x1]
        %v7568 = vld [vmem:[%s7543 + $0x60] sm:$0xe]
        %v7569 = vld [vmem:[%s7543 + $0x64] sm:$0xf]
        %v7570 = vld [vmem:[%s7543 + $0x68] sm:$0x1]
        %v7571 = vld [vmem:[%s7543 + $0x6c] sm:$0xe]
        %v7572 = vld [vmem:[%s7543 + $0x70] sm:$0xf]
        %v7573 = vld [vmem:[%s7543 + $0x74] sm:$0x1]
        %v7574 = vld [vmem:[%s7543 + $0x78] sm:$0xe]
        %v7575 = vld [vmem:[%s7543 + $0x7c] sm:$0xf]
        %v7576 = vld [vmem:[%s7543 + $0x80] sm:$0x1]
        %v7577 = vld [vmem:[%s7543 + $0x84] sm:$0xe]
        %v7578 = vld [vmem:[%s7543 + $0x88] sm:$0xf]
        %v7579 = vld [vmem:[%s7543 + $0x8c] sm:$0x1]
        %v7580 = vld [vmem:[%s7543 + $0x90] sm:$0xe]
        %v7581 = vld [vmem:[%s7543 + $0x94] sm:$0xf]
        %v7582 = vld [vmem:[%s7543 + $0x98] sm:$0x1]
        %v7583 = vld [vmem:[%s7543 + $0x9c] sm:$0xe]
        %v7584 = vld [vmem:[%s7543 + $0xa0] sm:$0xf]
        %v7585 = vld [vmem:[%s7543 + $0xa4] sm:$0x1]
        %v7586 = vld [vmem:[%s7543 + $0xa8] sm:$0xe]
        %v7587 = vld [vmem:[%s7543 + $0xac] sm:$0xf]
        %v7588 = vld [vmem:[%s7543 + $0xb0] sm:$0x1]
        %v7589 = vld [vmem:[%s7543 + $0xb4] sm:$0xe]
        %v7590 = vld [vmem:[%s7543 + $0xb8] sm:$0xf]
        %v7591 = vld [vmem:[%s7543 + $0xbc] sm:$0x1]
        %v7640 = vrot.slane %v7544, 5
        %v7641 = vrot.slane %v7640, 4
        %v7642 = vrot.slane %v7545, 5
        %v7643 = vsel %vm5747, %v7641, %v7642
        %v7644 = vrot.slane %v7642, 4
        %v7645 = vrot.slane %v7546, 5
        %v7646 = vsel %vm5747, %v7644, %v7645
        %v7647 = vrot.slane %v7547, 5
        %v7648 = vrot.slane %v7647, 4
        %v7649 = vrot.slane %v7548, 5
        %v7650 = vsel %vm5747, %v7648, %v7649
        %v7651 = vrot.slane %v7649, 4
        %v7652 = vrot.slane %v7549, 5
        %v7653 = vsel %vm5747, %v7651, %v7652
        %v7654 = vrot.slane %v7550, 5
        %v7655 = vrot.slane %v7654, 4
        %v7656 = vrot.slane %v7551, 5
        %v7657 = vsel %vm5747, %v7655, %v7656
        %v7658 = vrot.slane %v7656, 4
        %v7659 = vrot.slane %v7552, 5
        %v7660 = vsel %vm5747, %v7658, %v7659
        %v7661 = vrot.slane %v7553, 5
        %v7662 = vrot.slane %v7661, 4
        %v7663 = vrot.slane %v7554, 5
        %v7664 = vsel %vm5747, %v7662, %v7663
        %v7665 = vrot.slane %v7663, 4
        %v7666 = vrot.slane %v7555, 5
        %v7667 = vsel %vm5747, %v7665, %v7666
        %v7668 = vrot.slane %v7556, 5
        %v7669 = vrot.slane %v7668, 4
        %v7670 = vrot.slane %v7557, 5
        %v7671 = vsel %vm5747, %v7669, %v7670
        %v7672 = vrot.slane %v7670, 4
        %v7673 = vrot.slane %v7558, 5
        %v7674 = vsel %vm5747, %v7672, %v7673
        %v7675 = vrot.slane %v7559, 5
        %v7676 = vrot.slane %v7675, 4
        %v7677 = vrot.slane %v7560, 5
        %v7678 = vsel %vm5747, %v7676, %v7677
        %v7679 = vrot.slane %v7677, 4
        %v7680 = vrot.slane %v7561, 5
        %v7681 = vsel %vm5747, %v7679, %v7680
        %v7682 = vrot.slane %v7562, 5
        %v7683 = vrot.slane %v7682, 4
        %v7684 = vrot.slane %v7563, 5
        %v7685 = vsel %vm5747, %v7683, %v7684
        %v7686 = vrot.slane %v7684, 4
        %v7687 = vrot.slane %v7564, 5
        %v7688 = vsel %vm5747, %v7686, %v7687
        %v7689 = vrot.slane %v7565, 5
        %v7690 = vrot.slane %v7689, 4
        %v7691 = vrot.slane %v7566, 5
        %v7692 = vsel %vm5747, %v7690, %v7691
        %v7693 = vrot.slane %v7691, 4
        %v7694 = vrot.slane %v7567, 5
        %v7695 = vsel %vm5747, %v7693, %v7694
        %v7696 = vrot.slane %v7568, 5
        %v7697 = vrot.slane %v7696, 4
        %v7698 = vrot.slane %v7569, 5
        %v7699 = vsel %vm5747, %v7697, %v7698
        %v7700 = vrot.slane %v7698, 4
        %v7701 = vrot.slane %v7570, 5
        %v7702 = vsel %vm5747, %v7700, %v7701
        %v7703 = vrot.slane %v7571, 5
        %v7704 = vrot.slane %v7703, 4
        %v7705 = vrot.slane %v7572, 5
        %v7706 = vsel %vm5747, %v7704, %v7705
        %v7707 = vrot.slane %v7705, 4
        %v7708 = vrot.slane %v7573, 5
        %v7709 = vsel %vm5747, %v7707, %v7708
        %v7710 = vrot.slane %v7574, 5
        %v7711 = vrot.slane %v7710, 4
        %v7712 = vrot.slane %v7575, 5
        %v7713 = vsel %vm5747, %v7711, %v7712
        %v7714 = vrot.slane %v7712, 4
        %v7715 = vrot.slane %v7576, 5
        %v7716 = vsel %vm5747, %v7714, %v7715
        %v7717 = vrot.slane %v7577, 5
        %v7718 = vrot.slane %v7717, 4
        %v7719 = vrot.slane %v7578, 5
        %v7720 = vsel %vm5747, %v7718, %v7719
        %v7721 = vrot.slane %v7719, 4
        %v7722 = vrot.slane %v7579, 5
        %v7723 = vsel %vm5747, %v7721, %v7722
        %v7724 = vrot.slane %v7580, 5
        %v7725 = vrot.slane %v7724, 4
        %v7726 = vrot.slane %v7581, 5
        %v7727 = vsel %vm5747, %v7725, %v7726
        %v7728 = vrot.slane %v7726, 4
        %v7729 = vrot.slane %v7582, 5
        %v7730 = vsel %vm5747, %v7728, %v7729
        %v7731 = vrot.slane %v7583, 5
        %v7732 = vrot.slane %v7731, 4
        %v7733 = vrot.slane %v7584, 5
        %v7734 = vsel %vm5747, %v7732, %v7733
        %v7735 = vrot.slane %v7733, 4
        %v7736 = vrot.slane %v7585, 5
        %v7737 = vsel %vm5747, %v7735, %v7736
        %v7738 = vrot.slane %v7586, 5
        %v7739 = vrot.slane %v7738, 4
        %v7740 = vrot.slane %v7587, 5
        %v7741 = vsel %vm5747, %v7739, %v7740
        %v7742 = vrot.slane %v7740, 4
        %v7743 = vrot.slane %v7588, 5
        %v7744 = vsel %vm5747, %v7742, %v7743
        %v7745 = vrot.slane %v7589, 5
        %v7746 = vrot.slane %v7745, 4
        %v7747 = vrot.slane %v7590, 5
        %v7748 = vsel %vm5747, %v7746, %v7747
        %v7749 = vrot.slane %v7747, 4
        %v7750 = vrot.slane %v7591, 5
        %v7751 = vsel %vm5747, %v7749, %v7750
        %v7752 = vunpack.c.l.b16 %v7643
        %v7753 = vunpack.c.l.b16 %v7646
        %v7754 = vunpack.c.l.b16 %v7650
        %v7755 = vunpack.c.l.b16 %v7653
        %v7756 = vunpack.c.l.b16 %v7657
        %v7757 = vunpack.c.l.b16 %v7660
        %v7758 = vunpack.c.l.b16 %v7664
        %v7759 = vunpack.c.l.b16 %v7667
        %v7760 = vunpack.c.l.b16 %v7671
        %v7761 = vunpack.c.l.b16 %v7674
        %v7762 = vunpack.c.l.b16 %v7678
        %v7763 = vunpack.c.l.b16 %v7681
        %v7764 = vunpack.c.l.b16 %v7685
        %v7765 = vunpack.c.l.b16 %v7688
        %v7766 = vunpack.c.l.b16 %v7692
        %v7767 = vunpack.c.l.b16 %v7695
        %v7768 = vunpack.c.l.b16 %v7699
        %v7769 = vunpack.c.l.b16 %v7702
        %v7770 = vunpack.c.l.b16 %v7706
        %v7771 = vunpack.c.l.b16 %v7709
        %v7772 = vunpack.c.l.b16 %v7713
        %v7773 = vunpack.c.l.b16 %v7716
        %v7774 = vunpack.c.l.b16 %v7720
        %v7775 = vunpack.c.l.b16 %v7723
        %v7776 = vunpack.c.l.b16 %v7727
        %v7777 = vunpack.c.l.b16 %v7730
        %v7778 = vunpack.c.l.b16 %v7734
        %v7779 = vunpack.c.l.b16 %v7737
        %v7780 = vunpack.c.l.b16 %v7741
        %v7781 = vunpack.c.l.b16 %v7744
        %v7782 = vunpack.c.l.b16 %v7748
        %v7783 = vunpack.c.l.b16 %v7751
        %v7784 = vpack.c.b16 %v7753, %v7752
        %v7785 = vpack.c.b16 %v7755, %v7754
        %v7786 = vpack.c.b16 %v7757, %v7756
        %v7787 = vpack.c.b16 %v7759, %v7758
        %v7788 = vpack.c.b16 %v7761, %v7760
        %v7789 = vpack.c.b16 %v7763, %v7762
        %v7790 = vpack.c.b16 %v7765, %v7764
        %v7791 = vpack.c.b16 %v7767, %v7766
        %v7792 = vpack.c.b16 %v7769, %v7768
        %v7793 = vpack.c.b16 %v7771, %v7770
        %v7794 = vpack.c.b16 %v7773, %v7772
        %v7795 = vpack.c.b16 %v7775, %v7774
        %v7796 = vpack.c.b16 %v7777, %v7776
        %v7797 = vpack.c.b16 %v7779, %v7778
        %v7798 = vpack.c.b16 %v7781, %v7780
        %v7799 = vpack.c.b16 %v7783, %v7782
        %7800 = vrot.lane.b32.xlu0 %v7784, 96
        %v7801 = vpop.permute.xlu0 %7800
        %7802 = vrot.lane.b32.xlu0 %v7785, 96
        %v7803 = vpop.permute.xlu0 %7802
        %7804 = vrot.lane.b32.xlu0 %v7786, 96
        %v7805 = vpop.permute.xlu0 %7804
        %7806 = vrot.lane.b32.xlu0 %v7787, 96
        %v7807 = vpop.permute.xlu0 %7806
        %7808 = vrot.lane.b32.xlu0 %v7788, 96
        %v7809 = vpop.permute.xlu0 %7808
        %7810 = vrot.lane.b32.xlu0 %v7789, 96
        %v7811 = vpop.permute.xlu0 %7810
        %7812 = vrot.lane.b32.xlu0 %v7790, 96
        %v7813 = vpop.permute.xlu0 %7812
        %7814 = vrot.lane.b32.xlu0 %v7791, 96
        %v7815 = vpop.permute.xlu0 %7814
        %7816 = vrot.lane.b32.xlu0 %v7792, 96
        %v7817 = vpop.permute.xlu0 %7816
        %7818 = vrot.lane.b32.xlu0 %v7793, 96
        %v7819 = vpop.permute.xlu0 %7818
        %7820 = vrot.lane.b32.xlu0 %v7794, 96
        %v7821 = vpop.permute.xlu0 %7820
        %7822 = vrot.lane.b32.xlu0 %v7795, 96
        %v7823 = vpop.permute.xlu0 %7822
        %7824 = vrot.lane.b32.xlu0 %v7796, 96
        %v7825 = vpop.permute.xlu0 %7824
        %7826 = vrot.lane.b32.xlu0 %v7797, 96
        %v7827 = vpop.permute.xlu0 %7826
        %7828 = vrot.lane.b32.xlu0 %v7798, 96
        %v7829 = vpop.permute.xlu0 %7828
        %7830 = vrot.lane.b32.xlu0 %v7799, 96
        %v7831 = vpop.permute.xlu0 %7830
        %7848 = vst.msk [vmem:[#allocation3 + $0x18] sm:$0xff] %vm2813, %v7801
        %7849 = vst.msk [vmem:[#allocation3 + $0x50] sm:$0xff] %vm2813, %v7803
        %7850 = vst.msk [vmem:[#allocation3 + $0x88] sm:$0xff] %vm2813, %v7805
        %7851 = vst.msk [vmem:[#allocation3 + $0xc0] sm:$0xff] %vm2813, %v7807
        %7852 = vst.msk [vmem:[#allocation3 + $0xf8] sm:$0xff] %vm2813, %v7809
        %7853 = vst.msk [vmem:[#allocation3 + $0x130] sm:$0xff] %vm2813, %v7811
        %7854 = vst.msk [vmem:[#allocation3 + $0x168] sm:$0xff] %vm2813, %v7813
        %7855 = vst.msk [vmem:[#allocation3 + $0x1a0] sm:$0xff] %vm2813, %v7815
        %7856 = vst.msk [vmem:[#allocation3 + $0x1d8] sm:$0xff] %vm2813, %v7817
        %7857 = vst.msk [vmem:[#allocation3 + $0x210] sm:$0xff] %vm2813, %v7819
        %7858 = vst.msk [vmem:[#allocation3 + $0x248] sm:$0xff] %vm2813, %v7821
        %7859 = vst.msk [vmem:[#allocation3 + $0x280] sm:$0xff] %vm2813, %v7823
        %7860 = vst.msk [vmem:[#allocation3 + $0x2b8] sm:$0xff] %vm2813, %v7825
        %7861 = vst.msk [vmem:[#allocation3 + $0x2f0] sm:$0xff] %vm2813, %v7827
        %7862 = vst.msk [vmem:[#allocation3 + $0x328] sm:$0xff] %vm2813, %v7829
        %7863 = vst.msk [vmem:[#allocation3 + $0x360] sm:$0xff] %vm2813, %v7831
        %v7864 = vld [vmem:[%s7543] sm:$0xc]
        %v7865 = vld [vmem:[%s7543 + $0x4] sm:$0xf]
        %v7866 = vld [vmem:[%s7543 + $0x8] sm:$0x3]
        %v7867 = vld [vmem:[%s7543 + $0xc] sm:$0xc]
        %v7868 = vld [vmem:[%s7543 + $0x10] sm:$0xf]
        %v7869 = vld [vmem:[%s7543 + $0x14] sm:$0x3]
        %v7870 = vld [vmem:[%s7543 + $0x18] sm:$0xc]
        %v7871 = vld [vmem:[%s7543 + $0x1c] sm:$0xf]
        %v7872 = vld [vmem:[%s7543 + $0x20] sm:$0x3]
        %v7873 = vld [vmem:[%s7543 + $0x24] sm:$0xc]
        %v7874 = vld [vmem:[%s7543 + $0x28] sm:$0xf]
        %v7875 = vld [vmem:[%s7543 + $0x2c] sm:$0x3]
        %v7876 = vld [vmem:[%s7543 + $0x30] sm:$0xc]
        %v7877 = vld [vmem:[%s7543 + $0x34] sm:$0xf]
        %v7878 = vld [vmem:[%s7543 + $0x38] sm:$0x3]
        %v7879 = vld [vmem:[%s7543 + $0x3c] sm:$0xc]
        %v7880 = vld [vmem:[%s7543 + $0x40] sm:$0xf]
        %v7881 = vld [vmem:[%s7543 + $0x44] sm:$0x3]
        %v7882 = vld [vmem:[%s7543 + $0x48] sm:$0xc]
        %v7883 = vld [vmem:[%s7543 + $0x4c] sm:$0xf]
        %v7884 = vld [vmem:[%s7543 + $0x50] sm:$0x3]
        %v7885 = vld [vmem:[%s7543 + $0x54] sm:$0xc]
        %v7886 = vld [vmem:[%s7543 + $0x58] sm:$0xf]
        %v7887 = vld [vmem:[%s7543 + $0x5c] sm:$0x3]
        %v7888 = vld [vmem:[%s7543 + $0x60] sm:$0xc]
        %v7889 = vld [vmem:[%s7543 + $0x64] sm:$0xf]
        %v7890 = vld [vmem:[%s7543 + $0x68] sm:$0x3]
        %v7891 = vld [vmem:[%s7543 + $0x6c] sm:$0xc]
        %v7892 = vld [vmem:[%s7543 + $0x70] sm:$0xf]
        %v7893 = vld [vmem:[%s7543 + $0x74] sm:$0x3]
        %v7894 = vld [vmem:[%s7543 + $0x78] sm:$0xc]
        %v7895 = vld [vmem:[%s7543 + $0x7c] sm:$0xf]
        %v7896 = vld [vmem:[%s7543 + $0x80] sm:$0x3]
        %v7897 = vld [vmem:[%s7543 + $0x84] sm:$0xc]
        %v7898 = vld [vmem:[%s7543 + $0x88] sm:$0xf]
        %v7899 = vld [vmem:[%s7543 + $0x8c] sm:$0x3]
        %v7900 = vld [vmem:[%s7543 + $0x90] sm:$0xc]
        %v7901 = vld [vmem:[%s7543 + $0x94] sm:$0xf]
        %v7902 = vld [vmem:[%s7543 + $0x98] sm:$0x3]
        %v7903 = vld [vmem:[%s7543 + $0x9c] sm:$0xc]
        %v7904 = vld [vmem:[%s7543 + $0xa0] sm:$0xf]
        %v7905 = vld [vmem:[%s7543 + $0xa4] sm:$0x3]
        %v7906 = vld [vmem:[%s7543 + $0xa8] sm:$0xc]
        %v7907 = vld [vmem:[%s7543 + $0xac] sm:$0xf]
        %v7908 = vld [vmem:[%s7543 + $0xb0] sm:$0x3]
        %v7909 = vld [vmem:[%s7543 + $0xb4] sm:$0xc]
        %v7910 = vld [vmem:[%s7543 + $0xb8] sm:$0xf]
        %v7911 = vld [vmem:[%s7543 + $0xbc] sm:$0x3]
        %v7960 = vrot.slane %v7864, 6
        %v7961 = vrot.slane %v7960, 4
        %v7962 = vrot.slane %v7865, 6
        %v7963 = vsel %vm530, %v7961, %v7962
        %v7964 = vrot.slane %v7962, 4
        %v7965 = vrot.slane %v7866, 6
        %v7966 = vsel %vm530, %v7964, %v7965
        %v7967 = vrot.slane %v7867, 6
        %v7968 = vrot.slane %v7967, 4
        %v7969 = vrot.slane %v7868, 6
        %v7970 = vsel %vm530, %v7968, %v7969
        %v7971 = vrot.slane %v7969, 4
        %v7972 = vrot.slane %v7869, 6
        %v7973 = vsel %vm530, %v7971, %v7972
        %v7974 = vrot.slane %v7870, 6
        %v7975 = vrot.slane %v7974, 4
        %v7976 = vrot.slane %v7871, 6
        %v7977 = vsel %vm530, %v7975, %v7976
        %v7978 = vrot.slane %v7976, 4
        %v7979 = vrot.slane %v7872, 6
        %v7980 = vsel %vm530, %v7978, %v7979
        %v7981 = vrot.slane %v7873, 6
        %v7982 = vrot.slane %v7981, 4
        %v7983 = vrot.slane %v7874, 6
        %v7984 = vsel %vm530, %v7982, %v7983
        %v7985 = vrot.slane %v7983, 4
        %v7986 = vrot.slane %v7875, 6
        %v7987 = vsel %vm530, %v7985, %v7986
        %v7988 = vrot.slane %v7876, 6
        %v7989 = vrot.slane %v7988, 4
        %v7990 = vrot.slane %v7877, 6
        %v7991 = vsel %vm530, %v7989, %v7990
        %v7992 = vrot.slane %v7990, 4
        %v7993 = vrot.slane %v7878, 6
        %v7994 = vsel %vm530, %v7992, %v7993
        %v7995 = vrot.slane %v7879, 6
        %v7996 = vrot.slane %v7995, 4
        %v7997 = vrot.slane %v7880, 6
        %v7998 = vsel %vm530, %v7996, %v7997
        %v7999 = vrot.slane %v7997, 4
        %v8000 = vrot.slane %v7881, 6
        %v8001 = vsel %vm530, %v7999, %v8000
        %v8002 = vrot.slane %v7882, 6
        %v8003 = vrot.slane %v8002, 4
        %v8004 = vrot.slane %v7883, 6
        %v8005 = vsel %vm530, %v8003, %v8004
        %v8006 = vrot.slane %v8004, 4
        %v8007 = vrot.slane %v7884, 6
        %v8008 = vsel %vm530, %v8006, %v8007
        %v8009 = vrot.slane %v7885, 6
        %v8010 = vrot.slane %v8009, 4
        %v8011 = vrot.slane %v7886, 6
        %v8012 = vsel %vm530, %v8010, %v8011
        %v8013 = vrot.slane %v8011, 4
        %v8014 = vrot.slane %v7887, 6
        %v8015 = vsel %vm530, %v8013, %v8014
        %v8016 = vrot.slane %v7888, 6
        %v8017 = vrot.slane %v8016, 4
        %v8018 = vrot.slane %v7889, 6
        %v8019 = vsel %vm530, %v8017, %v8018
        %v8020 = vrot.slane %v8018, 4
        %v8021 = vrot.slane %v7890, 6
        %v8022 = vsel %vm530, %v8020, %v8021
        %v8023 = vrot.slane %v7891, 6
        %v8024 = vrot.slane %v8023, 4
        %v8025 = vrot.slane %v7892, 6
        %v8026 = vsel %vm530, %v8024, %v8025
        %v8027 = vrot.slane %v8025, 4
        %v8028 = vrot.slane %v7893, 6
        %v8029 = vsel %vm530, %v8027, %v8028
        %v8030 = vrot.slane %v7894, 6
        %v8031 = vrot.slane %v8030, 4
        %v8032 = vrot.slane %v7895, 6
        %v8033 = vsel %vm530, %v8031, %v8032
        %v8034 = vrot.slane %v8032, 4
        %v8035 = vrot.slane %v7896, 6
        %v8036 = vsel %vm530, %v8034, %v8035
        %v8037 = vrot.slane %v7897, 6
        %v8038 = vrot.slane %v8037, 4
        %v8039 = vrot.slane %v7898, 6
        %v8040 = vsel %vm530, %v8038, %v8039
        %v8041 = vrot.slane %v8039, 4
        %v8042 = vrot.slane %v7899, 6
        %v8043 = vsel %vm530, %v8041, %v8042
        %v8044 = vrot.slane %v7900, 6
        %v8045 = vrot.slane %v8044, 4
        %v8046 = vrot.slane %v7901, 6
        %v8047 = vsel %vm530, %v8045, %v8046
        %v8048 = vrot.slane %v8046, 4
        %v8049 = vrot.slane %v7902, 6
        %v8050 = vsel %vm530, %v8048, %v8049
        %v8051 = vrot.slane %v7903, 6
        %v8052 = vrot.slane %v8051, 4
        %v8053 = vrot.slane %v7904, 6
        %v8054 = vsel %vm530, %v8052, %v8053
        %v8055 = vrot.slane %v8053, 4
        %v8056 = vrot.slane %v7905, 6
        %v8057 = vsel %vm530, %v8055, %v8056
        %v8058 = vrot.slane %v7906, 6
        %v8059 = vrot.slane %v8058, 4
        %v8060 = vrot.slane %v7907, 6
        %v8061 = vsel %vm530, %v8059, %v8060
        %v8062 = vrot.slane %v8060, 4
        %v8063 = vrot.slane %v7908, 6
        %v8064 = vsel %vm530, %v8062, %v8063
        %v8065 = vrot.slane %v7909, 6
        %v8066 = vrot.slane %v8065, 4
        %v8067 = vrot.slane %v7910, 6
        %v8068 = vsel %vm530, %v8066, %v8067
        %v8069 = vrot.slane %v8067, 4
        %v8070 = vrot.slane %v7911, 6
        %v8071 = vsel %vm530, %v8069, %v8070
        %v8072 = vunpack.c.l.b16 %v7963
        %v8073 = vunpack.c.l.b16 %v7966
        %v8074 = vunpack.c.l.b16 %v7970
        %v8075 = vunpack.c.l.b16 %v7973
        %v8076 = vunpack.c.l.b16 %v7977
        %v8077 = vunpack.c.l.b16 %v7980
        %v8078 = vunpack.c.l.b16 %v7984
        %v8079 = vunpack.c.l.b16 %v7987
        %v8080 = vunpack.c.l.b16 %v7991
        %v8081 = vunpack.c.l.b16 %v7994
        %v8082 = vunpack.c.l.b16 %v7998
        %v8083 = vunpack.c.l.b16 %v8001
        %v8084 = vunpack.c.l.b16 %v8005
        %v8085 = vunpack.c.l.b16 %v8008
        %v8086 = vunpack.c.l.b16 %v8012
        %v8087 = vunpack.c.l.b16 %v8015
        %v8088 = vunpack.c.l.b16 %v8019
        %v8089 = vunpack.c.l.b16 %v8022
        %v8090 = vunpack.c.l.b16 %v8026
        %v8091 = vunpack.c.l.b16 %v8029
        %v8092 = vunpack.c.l.b16 %v8033
        %v8093 = vunpack.c.l.b16 %v8036
        %v8094 = vunpack.c.l.b16 %v8040
        %v8095 = vunpack.c.l.b16 %v8043
        %v8096 = vunpack.c.l.b16 %v8047
        %v8097 = vunpack.c.l.b16 %v8050
        %v8098 = vunpack.c.l.b16 %v8054
        %v8099 = vunpack.c.l.b16 %v8057
        %v8100 = vunpack.c.l.b16 %v8061
        %v8101 = vunpack.c.l.b16 %v8064
        %v8102 = vunpack.c.l.b16 %v8068
        %v8103 = vunpack.c.l.b16 %v8071
        %v8104 = vpack.c.b16 %v8073, %v8072
        %v8105 = vpack.c.b16 %v8075, %v8074
        %v8106 = vpack.c.b16 %v8077, %v8076
        %v8107 = vpack.c.b16 %v8079, %v8078
        %v8108 = vpack.c.b16 %v8081, %v8080
        %v8109 = vpack.c.b16 %v8083, %v8082
        %v8110 = vpack.c.b16 %v8085, %v8084
        %v8111 = vpack.c.b16 %v8087, %v8086
        %v8112 = vpack.c.b16 %v8089, %v8088
        %v8113 = vpack.c.b16 %v8091, %v8090
        %v8114 = vpack.c.b16 %v8093, %v8092
        %v8115 = vpack.c.b16 %v8095, %v8094
        %v8116 = vpack.c.b16 %v8097, %v8096
        %v8117 = vpack.c.b16 %v8099, %v8098
        %v8118 = vpack.c.b16 %v8101, %v8100
        %v8119 = vpack.c.b16 %v8103, %v8102
        %8136 = vst.msk [vmem:[#allocation3 + $0x20] sm:$0xff] %vm1271, %v8104
        %8137 = vst.msk [vmem:[#allocation3 + $0x58] sm:$0xff] %vm1271, %v8105
        %8138 = vst.msk [vmem:[#allocation3 + $0x90] sm:$0xff] %vm1271, %v8106
        %8139 = vst.msk [vmem:[#allocation3 + $0xc8] sm:$0xff] %vm1271, %v8107
        %8140 = vst.msk [vmem:[#allocation3 + $0x100] sm:$0xff] %vm1271, %v8108
        %8141 = vst.msk [vmem:[#allocation3 + $0x138] sm:$0xff] %vm1271, %v8109
        %8142 = vst.msk [vmem:[#allocation3 + $0x170] sm:$0xff] %vm1271, %v8110
        %8143 = vst.msk [vmem:[#allocation3 + $0x1a8] sm:$0xff] %vm1271, %v8111
        %8144 = vst.msk [vmem:[#allocation3 + $0x1e0] sm:$0xff] %vm1271, %v8112
        %8145 = vst.msk [vmem:[#allocation3 + $0x218] sm:$0xff] %vm1271, %v8113
        %8146 = vst.msk [vmem:[#allocation3 + $0x250] sm:$0xff] %vm1271, %v8114
        %8147 = vst.msk [vmem:[#allocation3 + $0x288] sm:$0xff] %vm1271, %v8115
        %8148 = vst.msk [vmem:[#allocation3 + $0x2c0] sm:$0xff] %vm1271, %v8116
        %8149 = vst.msk [vmem:[#allocation3 + $0x2f8] sm:$0xff] %vm1271, %v8117
        %8150 = vst.msk [vmem:[#allocation3 + $0x330] sm:$0xff] %vm1271, %v8118
        %8151 = vst.msk [vmem:[#allocation3 + $0x368] sm:$0xff] %vm1271, %v8119
        %v8152 = vld [vmem:[%s7543] sm:$0x8]
        %v8153 = vld [vmem:[%s7543 + $0x4] sm:$0xf]
        %v8154 = vld [vmem:[%s7543 + $0x8] sm:$0x7]
        %v8155 = vld [vmem:[%s7543 + $0xc] sm:$0x8]
        %v8156 = vld [vmem:[%s7543 + $0x10] sm:$0xf]
        %v8157 = vld [vmem:[%s7543 + $0x14] sm:$0x7]
        %v8158 = vld [vmem:[%s7543 + $0x18] sm:$0x8]
        %v8159 = vld [vmem:[%s7543 + $0x1c] sm:$0xf]
        %v8160 = vld [vmem:[%s7543 + $0x20] sm:$0x7]
        %v8161 = vld [vmem:[%s7543 + $0x24] sm:$0x8]
        %v8162 = vld [vmem:[%s7543 + $0x28] sm:$0xf]
        %v8163 = vld [vmem:[%s7543 + $0x2c] sm:$0x7]
        %v8164 = vld [vmem:[%s7543 + $0x30] sm:$0x8]
        %v8165 = vld [vmem:[%s7543 + $0x34] sm:$0xf]
        %v8166 = vld [vmem:[%s7543 + $0x38] sm:$0x7]
        %v8167 = vld [vmem:[%s7543 + $0x3c] sm:$0x8]
        %v8168 = vld [vmem:[%s7543 + $0x40] sm:$0xf]
        %v8169 = vld [vmem:[%s7543 + $0x44] sm:$0x7]
        %v8170 = vld [vmem:[%s7543 + $0x48] sm:$0x8]
        %v8171 = vld [vmem:[%s7543 + $0x4c] sm:$0xf]
        %v8172 = vld [vmem:[%s7543 + $0x50] sm:$0x7]
        %v8173 = vld [vmem:[%s7543 + $0x54] sm:$0x8]
        %v8174 = vld [vmem:[%s7543 + $0x58] sm:$0xf]
        %v8175 = vld [vmem:[%s7543 + $0x5c] sm:$0x7]
        %v8176 = vld [vmem:[%s7543 + $0x60] sm:$0x8]
        %v8177 = vld [vmem:[%s7543 + $0x64] sm:$0xf]
        %v8178 = vld [vmem:[%s7543 + $0x68] sm:$0x7]
        %v8179 = vld [vmem:[%s7543 + $0x6c] sm:$0x8]
        %v8180 = vld [vmem:[%s7543 + $0x70] sm:$0xf]
        %v8181 = vld [vmem:[%s7543 + $0x74] sm:$0x7]
        %v8182 = vld [vmem:[%s7543 + $0x78] sm:$0x8]
        %v8183 = vld [vmem:[%s7543 + $0x7c] sm:$0xf]
        %v8184 = vld [vmem:[%s7543 + $0x80] sm:$0x7]
        %v8185 = vld [vmem:[%s7543 + $0x84] sm:$0x8]
        %v8186 = vld [vmem:[%s7543 + $0x88] sm:$0xf]
        %v8187 = vld [vmem:[%s7543 + $0x8c] sm:$0x7]
        %v8188 = vld [vmem:[%s7543 + $0x90] sm:$0x8]
        %v8189 = vld [vmem:[%s7543 + $0x94] sm:$0xf]
        %v8190 = vld [vmem:[%s7543 + $0x98] sm:$0x7]
        %v8191 = vld [vmem:[%s7543 + $0x9c] sm:$0x8]
        %v8192 = vld [vmem:[%s7543 + $0xa0] sm:$0xf]
        %v8193 = vld [vmem:[%s7543 + $0xa4] sm:$0x7]
        %v8194 = vld [vmem:[%s7543 + $0xa8] sm:$0x8]
        %v8195 = vld [vmem:[%s7543 + $0xac] sm:$0xf]
        %v8196 = vld [vmem:[%s7543 + $0xb0] sm:$0x7]
        %v8197 = vld [vmem:[%s7543 + $0xb4] sm:$0x8]
        %v8198 = vld [vmem:[%s7543 + $0xb8] sm:$0xf]
        %v8199 = vld [vmem:[%s7543 + $0xbc] sm:$0x7]
        %v8248 = vrot.slane %v8152, 7
        %v8249 = vrot.slane %v8248, 4
        %v8250 = vrot.slane %v8153, 7
        %v8251 = vsel %vm6390, %v8249, %v8250
        %v8252 = vrot.slane %v8250, 4
        %v8253 = vrot.slane %v8154, 7
        %v8254 = vsel %vm6390, %v8252, %v8253
        %v8255 = vrot.slane %v8155, 7
        %v8256 = vrot.slane %v8255, 4
        %v8257 = vrot.slane %v8156, 7
        %v8258 = vsel %vm6390, %v8256, %v8257
        %v8259 = vrot.slane %v8257, 4
        %v8260 = vrot.slane %v8157, 7
        %v8261 = vsel %vm6390, %v8259, %v8260
        %v8262 = vrot.slane %v8158, 7
        %v8263 = vrot.slane %v8262, 4
        %v8264 = vrot.slane %v8159, 7
        %v8265 = vsel %vm6390, %v8263, %v8264
        %v8266 = vrot.slane %v8264, 4
        %v8267 = vrot.slane %v8160, 7
        %v8268 = vsel %vm6390, %v8266, %v8267
        %v8269 = vrot.slane %v8161, 7
        %v8270 = vrot.slane %v8269, 4
        %v8271 = vrot.slane %v8162, 7
        %v8272 = vsel %vm6390, %v8270, %v8271
        %v8273 = vrot.slane %v8271, 4
        %v8274 = vrot.slane %v8163, 7
        %v8275 = vsel %vm6390, %v8273, %v8274
        %v8276 = vrot.slane %v8164, 7
        %v8277 = vrot.slane %v8276, 4
        %v8278 = vrot.slane %v8165, 7
        %v8279 = vsel %vm6390, %v8277, %v8278
        %v8280 = vrot.slane %v8278, 4
        %v8281 = vrot.slane %v8166, 7
        %v8282 = vsel %vm6390, %v8280, %v8281
        %v8283 = vrot.slane %v8167, 7
        %v8284 = vrot.slane %v8283, 4
        %v8285 = vrot.slane %v8168, 7
        %v8286 = vsel %vm6390, %v8284, %v8285
        %v8287 = vrot.slane %v8285, 4
        %v8288 = vrot.slane %v8169, 7
        %v8289 = vsel %vm6390, %v8287, %v8288
        %v8290 = vrot.slane %v8170, 7
        %v8291 = vrot.slane %v8290, 4
        %v8292 = vrot.slane %v8171, 7
        %v8293 = vsel %vm6390, %v8291, %v8292
        %v8294 = vrot.slane %v8292, 4
        %v8295 = vrot.slane %v8172, 7
        %v8296 = vsel %vm6390, %v8294, %v8295
        %v8297 = vrot.slane %v8173, 7
        %v8298 = vrot.slane %v8297, 4
        %v8299 = vrot.slane %v8174, 7
        %v8300 = vsel %vm6390, %v8298, %v8299
        %v8301 = vrot.slane %v8299, 4
        %v8302 = vrot.slane %v8175, 7
        %v8303 = vsel %vm6390, %v8301, %v8302
        %v8304 = vrot.slane %v8176, 7
        %v8305 = vrot.slane %v8304, 4
        %v8306 = vrot.slane %v8177, 7
        %v8307 = vsel %vm6390, %v8305, %v8306
        %v8308 = vrot.slane %v8306, 4
        %v8309 = vrot.slane %v8178, 7
        %v8310 = vsel %vm6390, %v8308, %v8309
        %v8311 = vrot.slane %v8179, 7
        %v8312 = vrot.slane %v8311, 4
        %v8313 = vrot.slane %v8180, 7
        %v8314 = vsel %vm6390, %v8312, %v8313
        %v8315 = vrot.slane %v8313, 4
        %v8316 = vrot.slane %v8181, 7
        %v8317 = vsel %vm6390, %v8315, %v8316
        %v8318 = vrot.slane %v8182, 7
        %v8319 = vrot.slane %v8318, 4
        %v8320 = vrot.slane %v8183, 7
        %v8321 = vsel %vm6390, %v8319, %v8320
        %v8322 = vrot.slane %v8320, 4
        %v8323 = vrot.slane %v8184, 7
        %v8324 = vsel %vm6390, %v8322, %v8323
        %v8325 = vrot.slane %v8185, 7
        %v8326 = vrot.slane %v8325, 4
        %v8327 = vrot.slane %v8186, 7
        %v8328 = vsel %vm6390, %v8326, %v8327
        %v8329 = vrot.slane %v8327, 4
        %v8330 = vrot.slane %v8187, 7
        %v8331 = vsel %vm6390, %v8329, %v8330
        %v8332 = vrot.slane %v8188, 7
        %v8333 = vrot.slane %v8332, 4
        %v8334 = vrot.slane %v8189, 7
        %v8335 = vsel %vm6390, %v8333, %v8334
        %v8336 = vrot.slane %v8334, 4
        %v8337 = vrot.slane %v8190, 7
        %v8338 = vsel %vm6390, %v8336, %v8337
        %v8339 = vrot.slane %v8191, 7
        %v8340 = vrot.slane %v8339, 4
        %v8341 = vrot.slane %v8192, 7
        %v8342 = vsel %vm6390, %v8340, %v8341
        %v8343 = vrot.slane %v8341, 4
        %v8344 = vrot.slane %v8193, 7
        %v8345 = vsel %vm6390, %v8343, %v8344
        %v8346 = vrot.slane %v8194, 7
        %v8347 = vrot.slane %v8346, 4
        %v8348 = vrot.slane %v8195, 7
        %v8349 = vsel %vm6390, %v8347, %v8348
        %v8350 = vrot.slane %v8348, 4
        %v8351 = vrot.slane %v8196, 7
        %v8352 = vsel %vm6390, %v8350, %v8351
        %v8353 = vrot.slane %v8197, 7
        %v8354 = vrot.slane %v8353, 4
        %v8355 = vrot.slane %v8198, 7
        %v8356 = vsel %vm6390, %v8354, %v8355
        %v8357 = vrot.slane %v8355, 4
        %v8358 = vrot.slane %v8199, 7
        %v8359 = vsel %vm6390, %v8357, %v8358
        %v8360 = vunpack.c.l.b16 %v8251
        %v8361 = vunpack.c.l.b16 %v8254
        %v8362 = vunpack.c.l.b16 %v8258
        %v8363 = vunpack.c.l.b16 %v8261
        %v8364 = vunpack.c.l.b16 %v8265
        %v8365 = vunpack.c.l.b16 %v8268
        %v8366 = vunpack.c.l.b16 %v8272
        %v8367 = vunpack.c.l.b16 %v8275
        %v8368 = vunpack.c.l.b16 %v8279
        %v8369 = vunpack.c.l.b16 %v8282
        %v8370 = vunpack.c.l.b16 %v8286
        %v8371 = vunpack.c.l.b16 %v8289
        %v8372 = vunpack.c.l.b16 %v8293
        %v8373 = vunpack.c.l.b16 %v8296
        %v8374 = vunpack.c.l.b16 %v8300
        %v8375 = vunpack.c.l.b16 %v8303
        %v8376 = vunpack.c.l.b16 %v8307
        %v8377 = vunpack.c.l.b16 %v8310
        %v8378 = vunpack.c.l.b16 %v8314
        %v8379 = vunpack.c.l.b16 %v8317
        %v8380 = vunpack.c.l.b16 %v8321
        %v8381 = vunpack.c.l.b16 %v8324
        %v8382 = vunpack.c.l.b16 %v8328
        %v8383 = vunpack.c.l.b16 %v8331
        %v8384 = vunpack.c.l.b16 %v8335
        %v8385 = vunpack.c.l.b16 %v8338
        %v8386 = vunpack.c.l.b16 %v8342
        %v8387 = vunpack.c.l.b16 %v8345
        %v8388 = vunpack.c.l.b16 %v8349
        %v8389 = vunpack.c.l.b16 %v8352
        %v8390 = vunpack.c.l.b16 %v8356
        %v8391 = vunpack.c.l.b16 %v8359
        %v8392 = vpack.c.b16 %v8361, %v8360
        %v8393 = vpack.c.b16 %v8363, %v8362
        %v8394 = vpack.c.b16 %v8365, %v8364
        %v8395 = vpack.c.b16 %v8367, %v8366
        %v8396 = vpack.c.b16 %v8369, %v8368
        %v8397 = vpack.c.b16 %v8371, %v8370
        %v8398 = vpack.c.b16 %v8373, %v8372
        %v8399 = vpack.c.b16 %v8375, %v8374
        %v8400 = vpack.c.b16 %v8377, %v8376
        %v8401 = vpack.c.b16 %v8379, %v8378
        %v8402 = vpack.c.b16 %v8381, %v8380
        %v8403 = vpack.c.b16 %v8383, %v8382
        %v8404 = vpack.c.b16 %v8385, %v8384
        %v8405 = vpack.c.b16 %v8387, %v8386
        %v8406 = vpack.c.b16 %v8389, %v8388
        %v8407 = vpack.c.b16 %v8391, %v8390
        %8408 = vrot.lane.b32.xlu0 %v8392, 32
        %v8409 = vpop.permute.xlu0 %8408
        %8410 = vrot.lane.b32.xlu0 %v8393, 32
        %v8411 = vpop.permute.xlu0 %8410
        %8412 = vrot.lane.b32.xlu0 %v8394, 32
        %v8413 = vpop.permute.xlu0 %8412
        %8414 = vrot.lane.b32.xlu0 %v8395, 32
        %v8415 = vpop.permute.xlu0 %8414
        %8416 = vrot.lane.b32.xlu0 %v8396, 32
        %v8417 = vpop.permute.xlu0 %8416
        %8418 = vrot.lane.b32.xlu0 %v8397, 32
        %v8419 = vpop.permute.xlu0 %8418
        %8420 = vrot.lane.b32.xlu0 %v8398, 32
        %v8421 = vpop.permute.xlu0 %8420
        %8422 = vrot.lane.b32.xlu0 %v8399, 32
        %v8423 = vpop.permute.xlu0 %8422
        %8424 = vrot.lane.b32.xlu0 %v8400, 32
        %v8425 = vpop.permute.xlu0 %8424
        %8426 = vrot.lane.b32.xlu0 %v8401, 32
        %v8427 = vpop.permute.xlu0 %8426
        %8428 = vrot.lane.b32.xlu0 %v8402, 32
        %v8429 = vpop.permute.xlu0 %8428
        %8430 = vrot.lane.b32.xlu0 %v8403, 32
        %v8431 = vpop.permute.xlu0 %8430
        %8432 = vrot.lane.b32.xlu0 %v8404, 32
        %v8433 = vpop.permute.xlu0 %8432
        %8434 = vrot.lane.b32.xlu0 %v8405, 32
        %v8435 = vpop.permute.xlu0 %8434
        %8436 = vrot.lane.b32.xlu0 %v8406, 32
        %v8437 = vpop.permute.xlu0 %8436
        %8438 = vrot.lane.b32.xlu0 %v8407, 32
        %v8439 = vpop.permute.xlu0 %8438
        %8456 = vst.msk [vmem:[#allocation3 + $0x20] sm:$0xff] %vm1592, %v8409
        %8457 = vst.msk [vmem:[#allocation3 + $0x58] sm:$0xff] %vm1592, %v8411
        %8458 = vst.msk [vmem:[#allocation3 + $0x90] sm:$0xff] %vm1592, %v8413
        %8459 = vst.msk [vmem:[#allocation3 + $0xc8] sm:$0xff] %vm1592, %v8415
        %8460 = vst.msk [vmem:[#allocation3 + $0x100] sm:$0xff] %vm1592, %v8417
        %8461 = vst.msk [vmem:[#allocation3 + $0x138] sm:$0xff] %vm1592, %v8419
        %8462 = vst.msk [vmem:[#allocation3 + $0x170] sm:$0xff] %vm1592, %v8421
        %8463 = vst.msk [vmem:[#allocation3 + $0x1a8] sm:$0xff] %vm1592, %v8423
        %8464 = vst.msk [vmem:[#allocation3 + $0x1e0] sm:$0xff] %vm1592, %v8425
        %8465 = vst.msk [vmem:[#allocation3 + $0x218] sm:$0xff] %vm1592, %v8427
        %8466 = vst.msk [vmem:[#allocation3 + $0x250] sm:$0xff] %vm1592, %v8429
        %8467 = vst.msk [vmem:[#allocation3 + $0x288] sm:$0xff] %vm1592, %v8431
        %8468 = vst.msk [vmem:[#allocation3 + $0x2c0] sm:$0xff] %vm1592, %v8433
        %8469 = vst.msk [vmem:[#allocation3 + $0x2f8] sm:$0xff] %vm1592, %v8435
        %8470 = vst.msk [vmem:[#allocation3 + $0x330] sm:$0xff] %vm1592, %v8437
        %8471 = vst.msk [vmem:[#allocation3 + $0x368] sm:$0xff] %vm1592, %v8439
        %s8472 = scalar_lea.vmem %s226, 512
        %v8473 = vld [vmem:[%s8472] sm:$0xff]
        %v8474 = vld [vmem:[%s8472 + $0x8] sm:$0xff]
        %v8475 = vld [vmem:[%s8472 + $0x10] sm:$0xff]
        %v8476 = vld [vmem:[%s8472 + $0x18] sm:$0xff]
        %v8477 = vld [vmem:[%s8472 + $0x20] sm:$0xff]
        %v8478 = vld [vmem:[%s8472 + $0x28] sm:$0xff]
        %v8479 = vld [vmem:[%s8472 + $0x30] sm:$0xff]
        %v8480 = vld [vmem:[%s8472 + $0x38] sm:$0xff]
        %v8481 = vld [vmem:[%s8472 + $0x40] sm:$0xff]
        %v8482 = vld [vmem:[%s8472 + $0x48] sm:$0xff]
        %v8483 = vld [vmem:[%s8472 + $0x50] sm:$0xff]
        %v8484 = vld [vmem:[%s8472 + $0x58] sm:$0xff]
        %v8485 = vld [vmem:[%s8472 + $0x60] sm:$0xff]
        %v8486 = vld [vmem:[%s8472 + $0x68] sm:$0xff]
        %v8487 = vld [vmem:[%s8472 + $0x70] sm:$0xff]
        %v8488 = vld [vmem:[%s8472 + $0x78] sm:$0xff]
        %v8489 = vld [vmem:[%s8472 + $0x80] sm:$0xff]
        %v8490 = vld [vmem:[%s8472 + $0x88] sm:$0xff]
        %v8491 = vld [vmem:[%s8472 + $0x90] sm:$0xff]
        %v8492 = vld [vmem:[%s8472 + $0x98] sm:$0xff]
        %v8493 = vld [vmem:[%s8472 + $0xa0] sm:$0xff]
        %v8494 = vld [vmem:[%s8472 + $0xa8] sm:$0xff]
        %v8495 = vld [vmem:[%s8472 + $0xb0] sm:$0xff]
        %v8496 = vld [vmem:[%s8472 + $0xb8] sm:$0xff]
        %v8497 = vld [vmem:[%s8472 + $0xc0] sm:$0xff]
        %v8498 = vld [vmem:[%s8472 + $0xc8] sm:$0xff]
        %v8499 = vld [vmem:[%s8472 + $0xd0] sm:$0xff]
        %v8500 = vld [vmem:[%s8472 + $0xd8] sm:$0xff]
        %v8501 = vld [vmem:[%s8472 + $0xe0] sm:$0xff]
        %v8502 = vld [vmem:[%s8472 + $0xe8] sm:$0xff]
        %v8503 = vld [vmem:[%s8472 + $0xf0] sm:$0xff]
        %v8504 = vld [vmem:[%s8472 + $0xf8] sm:$0xff]
        %s8505 = scalar_lea.vmem %s1, 2
        %v8506 = vld [vmem:[%s8505] sm:$0x1]
        %v8508 = vlaneseq
        %v8509 = vshrl.u32 %v8508, 7
        %v8510 = vsub.s32 0, %v8509
        %v8511 = vrot.slane %v8506, %v8510
        %v8513 = vmul.f32 %v8473, %v8511
        %v8514 = vmul.f32 %v8474, %v8511
        %v8515 = vmul.f32 %v8475, %v8511
        %v8516 = vmul.f32 %v8476, %v8511
        %v8517 = vmul.f32 %v8477, %v8511
        %v8518 = vmul.f32 %v8478, %v8511
        %v8519 = vmul.f32 %v8479, %v8511
        %v8520 = vmul.f32 %v8480, %v8511
        %v8521 = vmul.f32 %v8481, %v8511
        %v8522 = vmul.f32 %v8482, %v8511
        %v8523 = vmul.f32 %v8483, %v8511
        %v8524 = vmul.f32 %v8484, %v8511
        %v8525 = vmul.f32 %v8485, %v8511
        %v8526 = vmul.f32 %v8486, %v8511
        %v8527 = vmul.f32 %v8487, %v8511
        %v8528 = vmul.f32 %v8488, %v8511
        %v8529 = vmul.f32 %v8489, %v8511
        %v8530 = vmul.f32 %v8490, %v8511
        %v8531 = vmul.f32 %v8491, %v8511
        %v8532 = vmul.f32 %v8492, %v8511
        %v8533 = vmul.f32 %v8493, %v8511
        %v8534 = vmul.f32 %v8494, %v8511
        %v8535 = vmul.f32 %v8495, %v8511
        %v8536 = vmul.f32 %v8496, %v8511
        %v8537 = vmul.f32 %v8497, %v8511
        %v8538 = vmul.f32 %v8498, %v8511
        %v8539 = vmul.f32 %v8499, %v8511
        %v8540 = vmul.f32 %v8500, %v8511
        %v8541 = vmul.f32 %v8501, %v8511
        %v8542 = vmul.f32 %v8502, %v8511
        %v8543 = vmul.f32 %v8503, %v8511
        %v8544 = vmul.f32 %v8504, %v8511
        %s8545 = scalar_lea.vmem %s2, 2
        %v8546 = vld [vmem:[%s8545] sm:$0x1]
        %v8548 = vlaneseq
        %v8549 = vshrl.u32 %v8548, 7
        %v8550 = vsub.s32 0, %v8549
        %v8551 = vrot.slane %v8546, %v8550
        %v8553 = vadd.f32 %v8513, %v8551
        %v8554 = vadd.f32 %v8514, %v8551
        %v8555 = vadd.f32 %v8515, %v8551
        %v8556 = vadd.f32 %v8516, %v8551
        %v8557 = vadd.f32 %v8517, %v8551
        %v8558 = vadd.f32 %v8518, %v8551
        %v8559 = vadd.f32 %v8519, %v8551
        %v8560 = vadd.f32 %v8520, %v8551
        %v8561 = vadd.f32 %v8521, %v8551
        %v8562 = vadd.f32 %v8522, %v8551
        %v8563 = vadd.f32 %v8523, %v8551
        %v8564 = vadd.f32 %v8524, %v8551
        %v8565 = vadd.f32 %v8525, %v8551
        %v8566 = vadd.f32 %v8526, %v8551
        %v8567 = vadd.f32 %v8527, %v8551
        %v8568 = vadd.f32 %v8528, %v8551
        %v8569 = vadd.f32 %v8529, %v8551
        %v8570 = vadd.f32 %v8530, %v8551
        %v8571 = vadd.f32 %v8531, %v8551
        %v8572 = vadd.f32 %v8532, %v8551
        %v8573 = vadd.f32 %v8533, %v8551
        %v8574 = vadd.f32 %v8534, %v8551
        %v8575 = vadd.f32 %v8535, %v8551
        %v8576 = vadd.f32 %v8536, %v8551
        %v8577 = vadd.f32 %v8537, %v8551
        %v8578 = vadd.f32 %v8538, %v8551
        %v8579 = vadd.f32 %v8539, %v8551
        %v8580 = vadd.f32 %v8540, %v8551
        %v8581 = vadd.f32 %v8541, %v8551
        %v8582 = vadd.f32 %v8542, %v8551
        %v8583 = vadd.f32 %v8543, %v8551
        %v8584 = vadd.f32 %v8544, %v8551
        %v8585 = vmax.f32 %v8553, 0.0
        %v8586 = vmax.f32 %v8554, 0.0
        %v8587 = vmax.f32 %v8555, 0.0
        %v8588 = vmax.f32 %v8556, 0.0
        %v8589 = vmax.f32 %v8557, 0.0
        %v8590 = vmax.f32 %v8558, 0.0
        %v8591 = vmax.f32 %v8559, 0.0
        %v8592 = vmax.f32 %v8560, 0.0
        %v8593 = vmax.f32 %v8561, 0.0
        %v8594 = vmax.f32 %v8562, 0.0
        %v8595 = vmax.f32 %v8563, 0.0
        %v8596 = vmax.f32 %v8564, 0.0
        %v8597 = vmax.f32 %v8565, 0.0
        %v8598 = vmax.f32 %v8566, 0.0
        %v8599 = vmax.f32 %v8567, 0.0
        %v8600 = vmax.f32 %v8568, 0.0
        %v8601 = vmax.f32 %v8569, 0.0
        %v8602 = vmax.f32 %v8570, 0.0
        %v8603 = vmax.f32 %v8571, 0.0
        %v8604 = vmax.f32 %v8572, 0.0
        %v8605 = vmax.f32 %v8573, 0.0
        %v8606 = vmax.f32 %v8574, 0.0
        %v8607 = vmax.f32 %v8575, 0.0
        %v8608 = vmax.f32 %v8576, 0.0
        %v8609 = vmax.f32 %v8577, 0.0
        %v8610 = vmax.f32 %v8578, 0.0
        %v8611 = vmax.f32 %v8579, 0.0
        %v8612 = vmax.f32 %v8580, 0.0
        %v8613 = vmax.f32 %v8581, 0.0
        %v8614 = vmax.f32 %v8582, 0.0
        %v8615 = vmax.f32 %v8583, 0.0
        %v8616 = vmax.f32 %v8584, 0.0
        %v8617 = vpack.c.bf16 %v8586, %v8585
        %v8618 = vpack.c.bf16 %v8588, %v8587
        %v8619 = vpack.c.bf16 %v8590, %v8589
        %v8620 = vpack.c.bf16 %v8592, %v8591
        %v8621 = vpack.c.bf16 %v8594, %v8593
        %v8622 = vpack.c.bf16 %v8596, %v8595
        %v8623 = vpack.c.bf16 %v8598, %v8597
        %v8624 = vpack.c.bf16 %v8600, %v8599
        %v8625 = vpack.c.bf16 %v8602, %v8601
        %v8626 = vpack.c.bf16 %v8604, %v8603
        %v8627 = vpack.c.bf16 %v8606, %v8605
        %v8628 = vpack.c.bf16 %v8608, %v8607
        %v8629 = vpack.c.bf16 %v8610, %v8609
        %v8630 = vpack.c.bf16 %v8612, %v8611
        %v8631 = vpack.c.bf16 %v8614, %v8613
        %v8632 = vpack.c.bf16 %v8616, %v8615
        %v8649 = vunpack.c.l.b16 %v8617
        %v8650 = vunpack.c.h.b16 %v8617
        %v8651 = vunpack.c.l.b16 %v8618
        %v8652 = vunpack.c.h.b16 %v8618
        %v8653 = vunpack.c.l.b16 %v8619
        %v8654 = vunpack.c.h.b16 %v8619
        %v8655 = vunpack.c.l.b16 %v8620
        %v8656 = vunpack.c.h.b16 %v8620
        %v8657 = vunpack.c.l.b16 %v8621
        %v8658 = vunpack.c.h.b16 %v8621
        %v8659 = vunpack.c.l.b16 %v8622
        %v8660 = vunpack.c.h.b16 %v8622
        %v8661 = vunpack.c.l.b16 %v8623
        %v8662 = vunpack.c.h.b16 %v8623
        %v8663 = vunpack.c.l.b16 %v8624
        %v8664 = vunpack.c.h.b16 %v8624
        %v8665 = vunpack.c.l.b16 %v8625
        %v8666 = vunpack.c.h.b16 %v8625
        %v8667 = vunpack.c.l.b16 %v8626
        %v8668 = vunpack.c.h.b16 %v8626
        %v8669 = vunpack.c.l.b16 %v8627
        %v8670 = vunpack.c.h.b16 %v8627
        %v8671 = vunpack.c.l.b16 %v8628
        %v8672 = vunpack.c.h.b16 %v8628
        %v8673 = vunpack.c.l.b16 %v8629
        %v8674 = vunpack.c.h.b16 %v8629
        %v8675 = vunpack.c.l.b16 %v8630
        %v8676 = vunpack.c.h.b16 %v8630
        %v8677 = vunpack.c.l.b16 %v8631
        %v8678 = vunpack.c.h.b16 %v8631
        %v8679 = vunpack.c.l.b16 %v8632
        %v8680 = vunpack.c.h.b16 %v8632
        %v8681 = vpack.c.b16 %v8649, %v8649
        %v8682 = vpack.c.b16 %v8650, %v8650
        %v8683 = vpack.c.b16 %v8651, %v8651
        %v8684 = vpack.c.b16 %v8652, %v8652
        %v8685 = vpack.c.b16 %v8653, %v8653
        %v8686 = vpack.c.b16 %v8654, %v8654
        %v8687 = vpack.c.b16 %v8655, %v8655
        %v8688 = vpack.c.b16 %v8656, %v8656
        %v8689 = vpack.c.b16 %v8657, %v8657
        %v8690 = vpack.c.b16 %v8658, %v8658
        %v8691 = vpack.c.b16 %v8659, %v8659
        %v8692 = vpack.c.b16 %v8660, %v8660
        %v8693 = vpack.c.b16 %v8661, %v8661
        %v8694 = vpack.c.b16 %v8662, %v8662
        %v8695 = vpack.c.b16 %v8663, %v8663
        %v8696 = vpack.c.b16 %v8664, %v8664
        %v8697 = vpack.c.b16 %v8665, %v8665
        %v8698 = vpack.c.b16 %v8666, %v8666
        %v8699 = vpack.c.b16 %v8667, %v8667
        %v8700 = vpack.c.b16 %v8668, %v8668
        %v8701 = vpack.c.b16 %v8669, %v8669
        %v8702 = vpack.c.b16 %v8670, %v8670
        %v8703 = vpack.c.b16 %v8671, %v8671
        %v8704 = vpack.c.b16 %v8672, %v8672
        %v8705 = vpack.c.b16 %v8673, %v8673
        %v8706 = vpack.c.b16 %v8674, %v8674
        %v8707 = vpack.c.b16 %v8675, %v8675
        %v8708 = vpack.c.b16 %v8676, %v8676
        %v8709 = vpack.c.b16 %v8677, %v8677
        %v8710 = vpack.c.b16 %v8678, %v8678
        %v8711 = vpack.c.b16 %v8679, %v8679
        %v8712 = vpack.c.b16 %v8680, %v8680
        %v8713 = vrot.slane %v8681, 6
        %v8714 = vrot.slane %v8713, 4
        %v8715 = vrot.slane %v8682, 6
        %v8716 = vsel %vm530, %v8714, %v8715
        %v8717 = vrot.slane %v8715, 4
        %v8718 = vrot.slane %v8683, 6
        %v8719 = vrot.slane %v8718, 4
        %v8720 = vrot.slane %v8684, 6
        %v8721 = vsel %vm530, %v8719, %v8720
        %v8722 = vrot.slane %v8720, 4
        %v8723 = vrot.slane %v8685, 6
        %v8724 = vrot.slane %v8723, 4
        %v8725 = vrot.slane %v8686, 6
        %v8726 = vsel %vm530, %v8724, %v8725
        %v8727 = vrot.slane %v8725, 4
        %v8728 = vrot.slane %v8687, 6
        %v8729 = vrot.slane %v8728, 4
        %v8730 = vrot.slane %v8688, 6
        %v8731 = vsel %vm530, %v8729, %v8730
        %v8732 = vrot.slane %v8730, 4
        %v8733 = vrot.slane %v8689, 6
        %v8734 = vrot.slane %v8733, 4
        %v8735 = vrot.slane %v8690, 6
        %v8736 = vsel %vm530, %v8734, %v8735
        %v8737 = vrot.slane %v8735, 4
        %v8738 = vrot.slane %v8691, 6
        %v8739 = vrot.slane %v8738, 4
        %v8740 = vrot.slane %v8692, 6
        %v8741 = vsel %vm530, %v8739, %v8740
        %v8742 = vrot.slane %v8740, 4
        %v8743 = vrot.slane %v8693, 6
        %v8744 = vrot.slane %v8743, 4
        %v8745 = vrot.slane %v8694, 6
        %v8746 = vsel %vm530, %v8744, %v8745
        %v8747 = vrot.slane %v8745, 4
        %v8748 = vrot.slane %v8695, 6
        %v8749 = vrot.slane %v8748, 4
        %v8750 = vrot.slane %v8696, 6
        %v8751 = vsel %vm530, %v8749, %v8750
        %v8752 = vrot.slane %v8750, 4
        %v8753 = vrot.slane %v8697, 6
        %v8754 = vrot.slane %v8753, 4
        %v8755 = vrot.slane %v8698, 6
        %v8756 = vsel %vm530, %v8754, %v8755
        %v8757 = vrot.slane %v8755, 4
        %v8758 = vrot.slane %v8699, 6
        %v8759 = vrot.slane %v8758, 4
        %v8760 = vrot.slane %v8700, 6
        %v8761 = vsel %vm530, %v8759, %v8760
        %v8762 = vrot.slane %v8760, 4
        %v8763 = vrot.slane %v8701, 6
        %v8764 = vrot.slane %v8763, 4
        %v8765 = vrot.slane %v8702, 6
        %v8766 = vsel %vm530, %v8764, %v8765
        %v8767 = vrot.slane %v8765, 4
        %v8768 = vrot.slane %v8703, 6
        %v8769 = vrot.slane %v8768, 4
        %v8770 = vrot.slane %v8704, 6
        %v8771 = vsel %vm530, %v8769, %v8770
        %v8772 = vrot.slane %v8770, 4
        %v8773 = vrot.slane %v8705, 6
        %v8774 = vrot.slane %v8773, 4
        %v8775 = vrot.slane %v8706, 6
        %v8776 = vsel %vm530, %v8774, %v8775
        %v8777 = vrot.slane %v8775, 4
        %v8778 = vrot.slane %v8707, 6
        %v8779 = vrot.slane %v8778, 4
        %v8780 = vrot.slane %v8708, 6
        %v8781 = vsel %vm530, %v8779, %v8780
        %v8782 = vrot.slane %v8780, 4
        %v8783 = vrot.slane %v8709, 6
        %v8784 = vrot.slane %v8783, 4
        %v8785 = vrot.slane %v8710, 6
        %v8786 = vsel %vm530, %v8784, %v8785
        %v8787 = vrot.slane %v8785, 4
        %v8788 = vrot.slane %v8711, 6
        %v8789 = vrot.slane %v8788, 4
        %v8790 = vrot.slane %v8712, 6
        %v8791 = vsel %vm530, %v8789, %v8790
        %v8792 = vrot.slane %v8790, 4
        %8841 = vst.msk [vmem:[%s255] sm:$0xc] %vm273, %v8713
        %8842 = vst.msk [vmem:[%s255 + $0x4] sm:$0xf] %vm229, %v8716
        %8843 = vst.msk [vmem:[%s255 + $0x8] sm:$0x3] %vm256, %v8717
        %8844 = vst.msk [vmem:[%s255 + $0xc] sm:$0xc] %vm273, %v8718
        %8845 = vst.msk [vmem:[%s255 + $0x10] sm:$0xf] %vm229, %v8721
        %8846 = vst.msk [vmem:[%s255 + $0x14] sm:$0x3] %vm256, %v8722
        %8847 = vst.msk [vmem:[%s255 + $0x18] sm:$0xc] %vm273, %v8723
        %8848 = vst.msk [vmem:[%s255 + $0x1c] sm:$0xf] %vm229, %v8726
        %8849 = vst.msk [vmem:[%s255 + $0x20] sm:$0x3] %vm256, %v8727
        %8850 = vst.msk [vmem:[%s255 + $0x24] sm:$0xc] %vm273, %v8728
        %8851 = vst.msk [vmem:[%s255 + $0x28] sm:$0xf] %vm229, %v8731
        %8852 = vst.msk [vmem:[%s255 + $0x2c] sm:$0x3] %vm256, %v8732
        %8853 = vst.msk [vmem:[%s255 + $0x30] sm:$0xc] %vm273, %v8733
        %8854 = vst.msk [vmem:[%s255 + $0x34] sm:$0xf] %vm229, %v8736
        %8855 = vst.msk [vmem:[%s255 + $0x38] sm:$0x3] %vm256, %v8737
        %8856 = vst.msk [vmem:[%s255 + $0x3c] sm:$0xc] %vm273, %v8738
        %8857 = vst.msk [vmem:[%s255 + $0x40] sm:$0xf] %vm229, %v8741
        %8858 = vst.msk [vmem:[%s255 + $0x44] sm:$0x3] %vm256, %v8742
        %8859 = vst.msk [vmem:[%s255 + $0x48] sm:$0xc] %vm273, %v8743
        %8860 = vst.msk [vmem:[%s255 + $0x4c] sm:$0xf] %vm229, %v8746
        %8861 = vst.msk [vmem:[%s255 + $0x50] sm:$0x3] %vm256, %v8747
        %8862 = vst.msk [vmem:[%s255 + $0x54] sm:$0xc] %vm273, %v8748
        %8863 = vst.msk [vmem:[%s255 + $0x58] sm:$0xf] %vm229, %v8751
        %8864 = vst.msk [vmem:[%s255 + $0x5c] sm:$0x3] %vm256, %v8752
        %8865 = vst.msk [vmem:[%s255 + $0x60] sm:$0xc] %vm273, %v8753
        %8866 = vst.msk [vmem:[%s255 + $0x64] sm:$0xf] %vm229, %v8756
        %8867 = vst.msk [vmem:[%s255 + $0x68] sm:$0x3] %vm256, %v8757
        %8868 = vst.msk [vmem:[%s255 + $0x6c] sm:$0xc] %vm273, %v8758
        %8869 = vst.msk [vmem:[%s255 + $0x70] sm:$0xf] %vm229, %v8761
        %8870 = vst.msk [vmem:[%s255 + $0x74] sm:$0x3] %vm256, %v8762
        %8871 = vst.msk [vmem:[%s255 + $0x78] sm:$0xc] %vm273, %v8763
        %8872 = vst.msk [vmem:[%s255 + $0x7c] sm:$0xf] %vm229, %v8766
        %8873 = vst.msk [vmem:[%s255 + $0x80] sm:$0x3] %vm256, %v8767
        %8874 = vst.msk [vmem:[%s255 + $0x84] sm:$0xc] %vm273, %v8768
        %8875 = vst.msk [vmem:[%s255 + $0x88] sm:$0xf] %vm229, %v8771
        %8876 = vst.msk [vmem:[%s255 + $0x8c] sm:$0x3] %vm256, %v8772
        %8877 = vst.msk [vmem:[%s255 + $0x90] sm:$0xc] %vm273, %v8773
        %8878 = vst.msk [vmem:[%s255 + $0x94] sm:$0xf] %vm229, %v8776
        %8879 = vst.msk [vmem:[%s255 + $0x98] sm:$0x3] %vm256, %v8777
        %8880 = vst.msk [vmem:[%s255 + $0x9c] sm:$0xc] %vm273, %v8778
        %8881 = vst.msk [vmem:[%s255 + $0xa0] sm:$0xf] %vm229, %v8781
        %8882 = vst.msk [vmem:[%s255 + $0xa4] sm:$0x3] %vm256, %v8782
        %8883 = vst.msk [vmem:[%s255 + $0xa8] sm:$0xc] %vm273, %v8783
        %8884 = vst.msk [vmem:[%s255 + $0xac] sm:$0xf] %vm229, %v8786
        %8885 = vst.msk [vmem:[%s255 + $0xb0] sm:$0x3] %vm256, %v8787
        %8886 = vst.msk [vmem:[%s255 + $0xb4] sm:$0xc] %vm273, %v8788
        %8887 = vst.msk [vmem:[%s255 + $0xb8] sm:$0xf] %vm229, %v8791
        %8888 = vst.msk [vmem:[%s255 + $0xbc] sm:$0x3] %vm256, %v8792
        %v8889 = vld [vmem:[#allocation2] sm:$0xf]
        %v8890 = vld [vmem:[#allocation2 + $0x4] sm:$0xf]
        %v8891 = vld [vmem:[#allocation2 + $0xc] sm:$0xf]
        %v8892 = vld [vmem:[#allocation2 + $0x10] sm:$0xf]
        %v8893 = vld [vmem:[#allocation2 + $0x18] sm:$0xf]
        %v8894 = vld [vmem:[#allocation2 + $0x1c] sm:$0xf]
        %v8895 = vld [vmem:[#allocation2 + $0x24] sm:$0xf]
        %v8896 = vld [vmem:[#allocation2 + $0x28] sm:$0xf]
        %v8897 = vld [vmem:[#allocation2 + $0x30] sm:$0xf]
        %v8898 = vld [vmem:[#allocation2 + $0x34] sm:$0xf]
        %v8899 = vld [vmem:[#allocation2 + $0x3c] sm:$0xf]
        %v8900 = vld [vmem:[#allocation2 + $0x40] sm:$0xf]
        %v8901 = vld [vmem:[#allocation2 + $0x48] sm:$0xf]
        %v8902 = vld [vmem:[#allocation2 + $0x4c] sm:$0xf]
        %v8903 = vld [vmem:[#allocation2 + $0x54] sm:$0xf]
        %v8904 = vld [vmem:[#allocation2 + $0x58] sm:$0xf]
        %v8905 = vld [vmem:[#allocation2 + $0x60] sm:$0xf]
        %v8906 = vld [vmem:[#allocation2 + $0x64] sm:$0xf]
        %v8907 = vld [vmem:[#allocation2 + $0x6c] sm:$0xf]
        %v8908 = vld [vmem:[#allocation2 + $0x70] sm:$0xf]
        %v8909 = vld [vmem:[#allocation2 + $0x78] sm:$0xf]
        %v8910 = vld [vmem:[#allocation2 + $0x7c] sm:$0xf]
        %v8911 = vld [vmem:[#allocation2 + $0x84] sm:$0xf]
        %v8912 = vld [vmem:[#allocation2 + $0x88] sm:$0xf]
        %v8913 = vld [vmem:[#allocation2 + $0x90] sm:$0xf]
        %v8914 = vld [vmem:[#allocation2 + $0x94] sm:$0xf]
        %v8915 = vld [vmem:[#allocation2 + $0x9c] sm:$0xf]
        %v8916 = vld [vmem:[#allocation2 + $0xa0] sm:$0xf]
        %v8917 = vld [vmem:[#allocation2 + $0xa8] sm:$0xf]
        %v8918 = vld [vmem:[#allocation2 + $0xac] sm:$0xf]
        %v8919 = vld [vmem:[#allocation2 + $0xb4] sm:$0xf]
        %v8920 = vld [vmem:[#allocation2 + $0xb8] sm:$0xf]
        %v8953 = vunpack.c.l.b16 %v8889
        %v8954 = vunpack.c.l.b16 %v8890
        %v8955 = vunpack.c.l.b16 %v8891
        %v8956 = vunpack.c.l.b16 %v8892
        %v8957 = vunpack.c.l.b16 %v8893
        %v8958 = vunpack.c.l.b16 %v8894
        %v8959 = vunpack.c.l.b16 %v8895
        %v8960 = vunpack.c.l.b16 %v8896
        %v8961 = vunpack.c.l.b16 %v8897
        %v8962 = vunpack.c.l.b16 %v8898
        %v8963 = vunpack.c.l.b16 %v8899
        %v8964 = vunpack.c.l.b16 %v8900
        %v8965 = vunpack.c.l.b16 %v8901
        %v8966 = vunpack.c.l.b16 %v8902
        %v8967 = vunpack.c.l.b16 %v8903
        %v8968 = vunpack.c.l.b16 %v8904
        %v8969 = vunpack.c.l.b16 %v8905
        %v8970 = vunpack.c.l.b16 %v8906
        %v8971 = vunpack.c.l.b16 %v8907
        %v8972 = vunpack.c.l.b16 %v8908
        %v8973 = vunpack.c.l.b16 %v8909
        %v8974 = vunpack.c.l.b16 %v8910
        %v8975 = vunpack.c.l.b16 %v8911
        %v8976 = vunpack.c.l.b16 %v8912
        %v8977 = vunpack.c.l.b16 %v8913
        %v8978 = vunpack.c.l.b16 %v8914
        %v8979 = vunpack.c.l.b16 %v8915
        %v8980 = vunpack.c.l.b16 %v8916
        %v8981 = vunpack.c.l.b16 %v8917
        %v8982 = vunpack.c.l.b16 %v8918
        %v8983 = vunpack.c.l.b16 %v8919
        %v8984 = vunpack.c.l.b16 %v8920
        %v8985 = vpack.c.b16 %v8954, %v8953
        %v8986 = vpack.c.b16 %v8956, %v8955
        %v8987 = vpack.c.b16 %v8958, %v8957
        %v8988 = vpack.c.b16 %v8960, %v8959
        %v8989 = vpack.c.b16 %v8962, %v8961
        %v8990 = vpack.c.b16 %v8964, %v8963
        %v8991 = vpack.c.b16 %v8966, %v8965
        %v8992 = vpack.c.b16 %v8968, %v8967
        %v8993 = vpack.c.b16 %v8970, %v8969
        %v8994 = vpack.c.b16 %v8972, %v8971
        %v8995 = vpack.c.b16 %v8974, %v8973
        %v8996 = vpack.c.b16 %v8976, %v8975
        %v8997 = vpack.c.b16 %v8978, %v8977
        %v8998 = vpack.c.b16 %v8980, %v8979
        %v8999 = vpack.c.b16 %v8982, %v8981
        %v9000 = vpack.c.b16 %v8984, %v8983
        %9001 = vrot.lane.b32.xlu0 %v8985, 64
        %v9002 = vpop.permute.xlu0 %9001
        %9003 = vrot.lane.b32.xlu0 %v8986, 64
        %v9004 = vpop.permute.xlu0 %9003
        %9005 = vrot.lane.b32.xlu0 %v8987, 64
        %v9006 = vpop.permute.xlu0 %9005
        %9007 = vrot.lane.b32.xlu0 %v8988, 64
        %v9008 = vpop.permute.xlu0 %9007
        %9009 = vrot.lane.b32.xlu0 %v8989, 64
        %v9010 = vpop.permute.xlu0 %9009
        %9011 = vrot.lane.b32.xlu0 %v8990, 64
        %v9012 = vpop.permute.xlu0 %9011
        %9013 = vrot.lane.b32.xlu0 %v8991, 64
        %v9014 = vpop.permute.xlu0 %9013
        %9015 = vrot.lane.b32.xlu0 %v8992, 64
        %v9016 = vpop.permute.xlu0 %9015
        %9017 = vrot.lane.b32.xlu0 %v8993, 64
        %v9018 = vpop.permute.xlu0 %9017
        %9019 = vrot.lane.b32.xlu0 %v8994, 64
        %v9020 = vpop.permute.xlu0 %9019
        %9021 = vrot.lane.b32.xlu0 %v8995, 64
        %v9022 = vpop.permute.xlu0 %9021
        %9023 = vrot.lane.b32.xlu0 %v8996, 64
        %v9024 = vpop.permute.xlu0 %9023
        %9025 = vrot.lane.b32.xlu0 %v8997, 64
        %v9026 = vpop.permute.xlu0 %9025
        %9027 = vrot.lane.b32.xlu0 %v8998, 64
        %v9028 = vpop.permute.xlu0 %9027
        %9029 = vrot.lane.b32.xlu0 %v8999, 64
        %v9030 = vpop.permute.xlu0 %9029
        %9031 = vrot.lane.b32.xlu0 %v9000, 64
        %v9032 = vpop.permute.xlu0 %9031
        %9049 = vst.msk [vmem:[#allocation3 + $0x20] sm:$0xff] %vm2204, %v9002
        %9050 = vst.msk [vmem:[#allocation3 + $0x58] sm:$0xff] %vm2204, %v9004
        %9051 = vst.msk [vmem:[#allocation3 + $0x90] sm:$0xff] %vm2204, %v9006
        %9052 = vst.msk [vmem:[#allocation3 + $0xc8] sm:$0xff] %vm2204, %v9008
        %9053 = vst.msk [vmem:[#allocation3 + $0x100] sm:$0xff] %vm2204, %v9010
        %9054 = vst.msk [vmem:[#allocation3 + $0x138] sm:$0xff] %vm2204, %v9012
        %9055 = vst.msk [vmem:[#allocation3 + $0x170] sm:$0xff] %vm2204, %v9014
        %9056 = vst.msk [vmem:[#allocation3 + $0x1a8] sm:$0xff] %vm2204, %v9016
        %9057 = vst.msk [vmem:[#allocation3 + $0x1e0] sm:$0xff] %vm2204, %v9018
        %9058 = vst.msk [vmem:[#allocation3 + $0x218] sm:$0xff] %vm2204, %v9020
        %9059 = vst.msk [vmem:[#allocation3 + $0x250] sm:$0xff] %vm2204, %v9022
        %9060 = vst.msk [vmem:[#allocation3 + $0x288] sm:$0xff] %vm2204, %v9024
        %9061 = vst.msk [vmem:[#allocation3 + $0x2c0] sm:$0xff] %vm2204, %v9026
        %9062 = vst.msk [vmem:[#allocation3 + $0x2f8] sm:$0xff] %vm2204, %v9028
        %9063 = vst.msk [vmem:[#allocation3 + $0x330] sm:$0xff] %vm2204, %v9030
        %9064 = vst.msk [vmem:[#allocation3 + $0x368] sm:$0xff] %vm2204, %v9032
        %v9065 = vld [vmem:[#allocation2] sm:$0xc]
        %v9066 = vld [vmem:[#allocation2 + $0x4] sm:$0xf]
        %v9067 = vld [vmem:[#allocation2 + $0x8] sm:$0x3]
        %v9068 = vld [vmem:[#allocation2 + $0xc] sm:$0xc]
        %v9069 = vld [vmem:[#allocation2 + $0x10] sm:$0xf]
        %v9070 = vld [vmem:[#allocation2 + $0x14] sm:$0x3]
        %v9071 = vld [vmem:[#allocation2 + $0x18] sm:$0xc]
        %v9072 = vld [vmem:[#allocation2 + $0x1c] sm:$0xf]
        %v9073 = vld [vmem:[#allocation2 + $0x20] sm:$0x3]
        %v9074 = vld [vmem:[#allocation2 + $0x24] sm:$0xc]
        %v9075 = vld [vmem:[#allocation2 + $0x28] sm:$0xf]
        %v9076 = vld [vmem:[#allocation2 + $0x2c] sm:$0x3]
        %v9077 = vld [vmem:[#allocation2 + $0x30] sm:$0xc]
        %v9078 = vld [vmem:[#allocation2 + $0x34] sm:$0xf]
        %v9079 = vld [vmem:[#allocation2 + $0x38] sm:$0x3]
        %v9080 = vld [vmem:[#allocation2 + $0x3c] sm:$0xc]
        %v9081 = vld [vmem:[#allocation2 + $0x40] sm:$0xf]
        %v9082 = vld [vmem:[#allocation2 + $0x44] sm:$0x3]
        %v9083 = vld [vmem:[#allocation2 + $0x48] sm:$0xc]
        %v9084 = vld [vmem:[#allocation2 + $0x4c] sm:$0xf]
        %v9085 = vld [vmem:[#allocation2 + $0x50] sm:$0x3]
        %v9086 = vld [vmem:[#allocation2 + $0x54] sm:$0xc]
        %v9087 = vld [vmem:[#allocation2 + $0x58] sm:$0xf]
        %v9088 = vld [vmem:[#allocation2 + $0x5c] sm:$0x3]
        %v9089 = vld [vmem:[#allocation2 + $0x60] sm:$0xc]
        %v9090 = vld [vmem:[#allocation2 + $0x64] sm:$0xf]
        %v9091 = vld [vmem:[#allocation2 + $0x68] sm:$0x3]
        %v9092 = vld [vmem:[#allocation2 + $0x6c] sm:$0xc]
        %v9093 = vld [vmem:[#allocation2 + $0x70] sm:$0xf]
        %v9094 = vld [vmem:[#allocation2 + $0x74] sm:$0x3]
        %v9095 = vld [vmem:[#allocation2 + $0x78] sm:$0xc]
        %v9096 = vld [vmem:[#allocation2 + $0x7c] sm:$0xf]
        %v9097 = vld [vmem:[#allocation2 + $0x80] sm:$0x3]
        %v9098 = vld [vmem:[#allocation2 + $0x84] sm:$0xc]
        %v9099 = vld [vmem:[#allocation2 + $0x88] sm:$0xf]
        %v9100 = vld [vmem:[#allocation2 + $0x8c] sm:$0x3]
        %v9101 = vld [vmem:[#allocation2 + $0x90] sm:$0xc]
        %v9102 = vld [vmem:[#allocation2 + $0x94] sm:$0xf]
        %v9103 = vld [vmem:[#allocation2 + $0x98] sm:$0x3]
        %v9104 = vld [vmem:[#allocation2 + $0x9c] sm:$0xc]
        %v9105 = vld [vmem:[#allocation2 + $0xa0] sm:$0xf]
        %v9106 = vld [vmem:[#allocation2 + $0xa4] sm:$0x3]
        %v9107 = vld [vmem:[#allocation2 + $0xa8] sm:$0xc]
        %v9108 = vld [vmem:[#allocation2 + $0xac] sm:$0xf]
        %v9109 = vld [vmem:[#allocation2 + $0xb0] sm:$0x3]
        %v9110 = vld [vmem:[#allocation2 + $0xb4] sm:$0xc]
        %v9111 = vld [vmem:[#allocation2 + $0xb8] sm:$0xf]
        %v9112 = vld [vmem:[#allocation2 + $0xbc] sm:$0x3]
        %v9161 = vrot.slane %v9065, 6
        %v9162 = vrot.slane %v9161, 4
        %v9163 = vrot.slane %v9066, 6
        %v9164 = vsel %vm530, %v9162, %v9163
        %v9165 = vrot.slane %v9163, 4
        %v9166 = vrot.slane %v9067, 6
        %v9167 = vsel %vm530, %v9165, %v9166
        %v9168 = vrot.slane %v9068, 6
        %v9169 = vrot.slane %v9168, 4
        %v9170 = vrot.slane %v9069, 6
        %v9171 = vsel %vm530, %v9169, %v9170
        %v9172 = vrot.slane %v9170, 4
        %v9173 = vrot.slane %v9070, 6
        %v9174 = vsel %vm530, %v9172, %v9173
        %v9175 = vrot.slane %v9071, 6
        %v9176 = vrot.slane %v9175, 4
        %v9177 = vrot.slane %v9072, 6
        %v9178 = vsel %vm530, %v9176, %v9177
        %v9179 = vrot.slane %v9177, 4
        %v9180 = vrot.slane %v9073, 6
        %v9181 = vsel %vm530, %v9179, %v9180
        %v9182 = vrot.slane %v9074, 6
        %v9183 = vrot.slane %v9182, 4
        %v9184 = vrot.slane %v9075, 6
        %v9185 = vsel %vm530, %v9183, %v9184
        %v9186 = vrot.slane %v9184, 4
        %v9187 = vrot.slane %v9076, 6
        %v9188 = vsel %vm530, %v9186, %v9187
        %v9189 = vrot.slane %v9077, 6
        %v9190 = vrot.slane %v9189, 4
        %v9191 = vrot.slane %v9078, 6
        %v9192 = vsel %vm530, %v9190, %v9191
        %v9193 = vrot.slane %v9191, 4
        %v9194 = vrot.slane %v9079, 6
        %v9195 = vsel %vm530, %v9193, %v9194
        %v9196 = vrot.slane %v9080, 6
        %v9197 = vrot.slane %v9196, 4
        %v9198 = vrot.slane %v9081, 6
        %v9199 = vsel %vm530, %v9197, %v9198
        %v9200 = vrot.slane %v9198, 4
        %v9201 = vrot.slane %v9082, 6
        %v9202 = vsel %vm530, %v9200, %v9201
        %v9203 = vrot.slane %v9083, 6
        %v9204 = vrot.slane %v9203, 4
        %v9205 = vrot.slane %v9084, 6
        %v9206 = vsel %vm530, %v9204, %v9205
        %v9207 = vrot.slane %v9205, 4
        %v9208 = vrot.slane %v9085, 6
        %v9209 = vsel %vm530, %v9207, %v9208
        %v9210 = vrot.slane %v9086, 6
        %v9211 = vrot.slane %v9210, 4
        %v9212 = vrot.slane %v9087, 6
        %v9213 = vsel %vm530, %v9211, %v9212
        %v9214 = vrot.slane %v9212, 4
        %v9215 = vrot.slane %v9088, 6
        %v9216 = vsel %vm530, %v9214, %v9215
        %v9217 = vrot.slane %v9089, 6
        %v9218 = vrot.slane %v9217, 4
        %v9219 = vrot.slane %v9090, 6
        %v9220 = vsel %vm530, %v9218, %v9219
        %v9221 = vrot.slane %v9219, 4
        %v9222 = vrot.slane %v9091, 6
        %v9223 = vsel %vm530, %v9221, %v9222
        %v9224 = vrot.slane %v9092, 6
        %v9225 = vrot.slane %v9224, 4
        %v9226 = vrot.slane %v9093, 6
        %v9227 = vsel %vm530, %v9225, %v9226
        %v9228 = vrot.slane %v9226, 4
        %v9229 = vrot.slane %v9094, 6
        %v9230 = vsel %vm530, %v9228, %v9229
        %v9231 = vrot.slane %v9095, 6
        %v9232 = vrot.slane %v9231, 4
        %v9233 = vrot.slane %v9096, 6
        %v9234 = vsel %vm530, %v9232, %v9233
        %v9235 = vrot.slane %v9233, 4
        %v9236 = vrot.slane %v9097, 6
        %v9237 = vsel %vm530, %v9235, %v9236
        %v9238 = vrot.slane %v9098, 6
        %v9239 = vrot.slane %v9238, 4
        %v9240 = vrot.slane %v9099, 6
        %v9241 = vsel %vm530, %v9239, %v9240
        %v9242 = vrot.slane %v9240, 4
        %v9243 = vrot.slane %v9100, 6
        %v9244 = vsel %vm530, %v9242, %v9243
        %v9245 = vrot.slane %v9101, 6
        %v9246 = vrot.slane %v9245, 4
        %v9247 = vrot.slane %v9102, 6
        %v9248 = vsel %vm530, %v9246, %v9247
        %v9249 = vrot.slane %v9247, 4
        %v9250 = vrot.slane %v9103, 6
        %v9251 = vsel %vm530, %v9249, %v9250
        %v9252 = vrot.slane %v9104, 6
        %v9253 = vrot.slane %v9252, 4
        %v9254 = vrot.slane %v9105, 6
        %v9255 = vsel %vm530, %v9253, %v9254
        %v9256 = vrot.slane %v9254, 4
        %v9257 = vrot.slane %v9106, 6
        %v9258 = vsel %vm530, %v9256, %v9257
        %v9259 = vrot.slane %v9107, 6
        %v9260 = vrot.slane %v9259, 4
        %v9261 = vrot.slane %v9108, 6
        %v9262 = vsel %vm530, %v9260, %v9261
        %v9263 = vrot.slane %v9261, 4
        %v9264 = vrot.slane %v9109, 6
        %v9265 = vsel %vm530, %v9263, %v9264
        %v9266 = vrot.slane %v9110, 6
        %v9267 = vrot.slane %v9266, 4
        %v9268 = vrot.slane %v9111, 6
        %v9269 = vsel %vm530, %v9267, %v9268
        %v9270 = vrot.slane %v9268, 4
        %v9271 = vrot.slane %v9112, 6
        %v9272 = vsel %vm530, %v9270, %v9271
        %v9273 = vunpack.c.l.b16 %v9164
        %v9274 = vunpack.c.l.b16 %v9167
        %v9275 = vunpack.c.l.b16 %v9171
        %v9276 = vunpack.c.l.b16 %v9174
        %v9277 = vunpack.c.l.b16 %v9178
        %v9278 = vunpack.c.l.b16 %v9181
        %v9279 = vunpack.c.l.b16 %v9185
        %v9280 = vunpack.c.l.b16 %v9188
        %v9281 = vunpack.c.l.b16 %v9192
        %v9282 = vunpack.c.l.b16 %v9195
        %v9283 = vunpack.c.l.b16 %v9199
        %v9284 = vunpack.c.l.b16 %v9202
        %v9285 = vunpack.c.l.b16 %v9206
        %v9286 = vunpack.c.l.b16 %v9209
        %v9287 = vunpack.c.l.b16 %v9213
        %v9288 = vunpack.c.l.b16 %v9216
        %v9289 = vunpack.c.l.b16 %v9220
        %v9290 = vunpack.c.l.b16 %v9223
        %v9291 = vunpack.c.l.b16 %v9227
        %v9292 = vunpack.c.l.b16 %v9230
        %v9293 = vunpack.c.l.b16 %v9234
        %v9294 = vunpack.c.l.b16 %v9237
        %v9295 = vunpack.c.l.b16 %v9241
        %v9296 = vunpack.c.l.b16 %v9244
        %v9297 = vunpack.c.l.b16 %v9248
        %v9298 = vunpack.c.l.b16 %v9251
        %v9299 = vunpack.c.l.b16 %v9255
        %v9300 = vunpack.c.l.b16 %v9258
        %v9301 = vunpack.c.l.b16 %v9262
        %v9302 = vunpack.c.l.b16 %v9265
        %v9303 = vunpack.c.l.b16 %v9269
        %v9304 = vunpack.c.l.b16 %v9272
        %v9305 = vpack.c.b16 %v9274, %v9273
        %v9306 = vpack.c.b16 %v9276, %v9275
        %v9307 = vpack.c.b16 %v9278, %v9277
        %v9308 = vpack.c.b16 %v9280, %v9279
        %v9309 = vpack.c.b16 %v9282, %v9281
        %v9310 = vpack.c.b16 %v9284, %v9283
        %v9311 = vpack.c.b16 %v9286, %v9285
        %v9312 = vpack.c.b16 %v9288, %v9287
        %v9313 = vpack.c.b16 %v9290, %v9289
        %v9314 = vpack.c.b16 %v9292, %v9291
        %v9315 = vpack.c.b16 %v9294, %v9293
        %v9316 = vpack.c.b16 %v9296, %v9295
        %v9317 = vpack.c.b16 %v9298, %v9297
        %v9318 = vpack.c.b16 %v9300, %v9299
        %v9319 = vpack.c.b16 %v9302, %v9301
        %v9320 = vpack.c.b16 %v9304, %v9303
        %9321 = vrot.lane.b32.xlu0 %v9305, 96
        %v9322 = vpop.permute.xlu0 %9321
        %9323 = vrot.lane.b32.xlu0 %v9306, 96
        %v9324 = vpop.permute.xlu0 %9323
        %9325 = vrot.lane.b32.xlu0 %v9307, 96
        %v9326 = vpop.permute.xlu0 %9325
        %9327 = vrot.lane.b32.xlu0 %v9308, 96
        %v9328 = vpop.permute.xlu0 %9327
        %9329 = vrot.lane.b32.xlu0 %v9309, 96
        %v9330 = vpop.permute.xlu0 %9329
        %9331 = vrot.lane.b32.xlu0 %v9310, 96
        %v9332 = vpop.permute.xlu0 %9331
        %9333 = vrot.lane.b32.xlu0 %v9311, 96
        %v9334 = vpop.permute.xlu0 %9333
        %9335 = vrot.lane.b32.xlu0 %v9312, 96
        %v9336 = vpop.permute.xlu0 %9335
        %9337 = vrot.lane.b32.xlu0 %v9313, 96
        %v9338 = vpop.permute.xlu0 %9337
        %9339 = vrot.lane.b32.xlu0 %v9314, 96
        %v9340 = vpop.permute.xlu0 %9339
        %9341 = vrot.lane.b32.xlu0 %v9315, 96
        %v9342 = vpop.permute.xlu0 %9341
        %9343 = vrot.lane.b32.xlu0 %v9316, 96
        %v9344 = vpop.permute.xlu0 %9343
        %9345 = vrot.lane.b32.xlu0 %v9317, 96
        %v9346 = vpop.permute.xlu0 %9345
        %9347 = vrot.lane.b32.xlu0 %v9318, 96
        %v9348 = vpop.permute.xlu0 %9347
        %9349 = vrot.lane.b32.xlu0 %v9319, 96
        %v9350 = vpop.permute.xlu0 %9349
        %9351 = vrot.lane.b32.xlu0 %v9320, 96
        %v9352 = vpop.permute.xlu0 %9351
        %9369 = vst.msk [vmem:[#allocation3 + $0x20] sm:$0xff] %vm2813, %v9322
        %9370 = vst.msk [vmem:[#allocation3 + $0x58] sm:$0xff] %vm2813, %v9324
        %9371 = vst.msk [vmem:[#allocation3 + $0x90] sm:$0xff] %vm2813, %v9326
        %9372 = vst.msk [vmem:[#allocation3 + $0xc8] sm:$0xff] %vm2813, %v9328
        %9373 = vst.msk [vmem:[#allocation3 + $0x100] sm:$0xff] %vm2813, %v9330
        %9374 = vst.msk [vmem:[#allocation3 + $0x138] sm:$0xff] %vm2813, %v9332
        %9375 = vst.msk [vmem:[#allocation3 + $0x170] sm:$0xff] %vm2813, %v9334
        %9376 = vst.msk [vmem:[#allocation3 + $0x1a8] sm:$0xff] %vm2813, %v9336
        %9377 = vst.msk [vmem:[#allocation3 + $0x1e0] sm:$0xff] %vm2813, %v9338
        %9378 = vst.msk [vmem:[#allocation3 + $0x218] sm:$0xff] %vm2813, %v9340
        %9379 = vst.msk [vmem:[#allocation3 + $0x250] sm:$0xff] %vm2813, %v9342
        %9380 = vst.msk [vmem:[#allocation3 + $0x288] sm:$0xff] %vm2813, %v9344
        %9381 = vst.msk [vmem:[#allocation3 + $0x2c0] sm:$0xff] %vm2813, %v9346
        %9382 = vst.msk [vmem:[#allocation3 + $0x2f8] sm:$0xff] %vm2813, %v9348
        %9383 = vst.msk [vmem:[#allocation3 + $0x330] sm:$0xff] %vm2813, %v9350
        %9384 = vst.msk [vmem:[#allocation3 + $0x368] sm:$0xff] %vm2813, %v9352
        %v9385 = vld [vmem:[#allocation2 + $0x4] sm:$0xf]
        %v9386 = vld [vmem:[#allocation2 + $0x8] sm:$0xf]
        %v9387 = vld [vmem:[#allocation2 + $0x10] sm:$0xf]
        %v9388 = vld [vmem:[#allocation2 + $0x14] sm:$0xf]
        %v9389 = vld [vmem:[#allocation2 + $0x1c] sm:$0xf]
        %v9390 = vld [vmem:[#allocation2 + $0x20] sm:$0xf]
        %v9391 = vld [vmem:[#allocation2 + $0x28] sm:$0xf]
        %v9392 = vld [vmem:[#allocation2 + $0x2c] sm:$0xf]
        %v9393 = vld [vmem:[#allocation2 + $0x34] sm:$0xf]
        %v9394 = vld [vmem:[#allocation2 + $0x38] sm:$0xf]
        %v9395 = vld [vmem:[#allocation2 + $0x40] sm:$0xf]
        %v9396 = vld [vmem:[#allocation2 + $0x44] sm:$0xf]
        %v9397 = vld [vmem:[#allocation2 + $0x4c] sm:$0xf]
        %v9398 = vld [vmem:[#allocation2 + $0x50] sm:$0xf]
        %v9399 = vld [vmem:[#allocation2 + $0x58] sm:$0xf]
        %v9400 = vld [vmem:[#allocation2 + $0x5c] sm:$0xf]
        %v9401 = vld [vmem:[#allocation2 + $0x64] sm:$0xf]
        %v9402 = vld [vmem:[#allocation2 + $0x68] sm:$0xf]
        %v9403 = vld [vmem:[#allocation2 + $0x70] sm:$0xf]
        %v9404 = vld [vmem:[#allocation2 + $0x74] sm:$0xf]
        %v9405 = vld [vmem:[#allocation2 + $0x7c] sm:$0xf]
        %v9406 = vld [vmem:[#allocation2 + $0x80] sm:$0xf]
        %v9407 = vld [vmem:[#allocation2 + $0x88] sm:$0xf]
        %v9408 = vld [vmem:[#allocation2 + $0x8c] sm:$0xf]
        %v9409 = vld [vmem:[#allocation2 + $0x94] sm:$0xf]
        %v9410 = vld [vmem:[#allocation2 + $0x98] sm:$0xf]
        %v9411 = vld [vmem:[#allocation2 + $0xa0] sm:$0xf]
        %v9412 = vld [vmem:[#allocation2 + $0xa4] sm:$0xf]
        %v9413 = vld [vmem:[#allocation2 + $0xac] sm:$0xf]
        %v9414 = vld [vmem:[#allocation2 + $0xb0] sm:$0xf]
        %v9415 = vld [vmem:[#allocation2 + $0xb8] sm:$0xf]
        %v9416 = vld [vmem:[#allocation2 + $0xbc] sm:$0xf]
        %v9449 = vunpack.c.l.b16 %v9385
        %v9450 = vunpack.c.l.b16 %v9386
        %v9451 = vunpack.c.l.b16 %v9387
        %v9452 = vunpack.c.l.b16 %v9388
        %v9453 = vunpack.c.l.b16 %v9389
        %v9454 = vunpack.c.l.b16 %v9390
        %v9455 = vunpack.c.l.b16 %v9391
        %v9456 = vunpack.c.l.b16 %v9392
        %v9457 = vunpack.c.l.b16 %v9393
        %v9458 = vunpack.c.l.b16 %v9394
        %v9459 = vunpack.c.l.b16 %v9395
        %v9460 = vunpack.c.l.b16 %v9396
        %v9461 = vunpack.c.l.b16 %v9397
        %v9462 = vunpack.c.l.b16 %v9398
        %v9463 = vunpack.c.l.b16 %v9399
        %v9464 = vunpack.c.l.b16 %v9400
        %v9465 = vunpack.c.l.b16 %v9401
        %v9466 = vunpack.c.l.b16 %v9402
        %v9467 = vunpack.c.l.b16 %v9403
        %v9468 = vunpack.c.l.b16 %v9404
        %v9469 = vunpack.c.l.b16 %v9405
        %v9470 = vunpack.c.l.b16 %v9406
        %v9471 = vunpack.c.l.b16 %v9407
        %v9472 = vunpack.c.l.b16 %v9408
        %v9473 = vunpack.c.l.b16 %v9409
        %v9474 = vunpack.c.l.b16 %v9410
        %v9475 = vunpack.c.l.b16 %v9411
        %v9476 = vunpack.c.l.b16 %v9412
        %v9477 = vunpack.c.l.b16 %v9413
        %v9478 = vunpack.c.l.b16 %v9414
        %v9479 = vunpack.c.l.b16 %v9415
        %v9480 = vunpack.c.l.b16 %v9416
        %v9481 = vpack.c.b16 %v9450, %v9449
        %v9482 = vpack.c.b16 %v9452, %v9451
        %v9483 = vpack.c.b16 %v9454, %v9453
        %v9484 = vpack.c.b16 %v9456, %v9455
        %v9485 = vpack.c.b16 %v9458, %v9457
        %v9486 = vpack.c.b16 %v9460, %v9459
        %v9487 = vpack.c.b16 %v9462, %v9461
        %v9488 = vpack.c.b16 %v9464, %v9463
        %v9489 = vpack.c.b16 %v9466, %v9465
        %v9490 = vpack.c.b16 %v9468, %v9467
        %v9491 = vpack.c.b16 %v9470, %v9469
        %v9492 = vpack.c.b16 %v9472, %v9471
        %v9493 = vpack.c.b16 %v9474, %v9473
        %v9494 = vpack.c.b16 %v9476, %v9475
        %v9495 = vpack.c.b16 %v9478, %v9477
        %v9496 = vpack.c.b16 %v9480, %v9479
        %9513 = vst.msk [vmem:[#allocation3 + $0x28] sm:$0xff] %vm1271, %v9481
        %9514 = vst.msk [vmem:[#allocation3 + $0x60] sm:$0xff] %vm1271, %v9482
        %9515 = vst.msk [vmem:[#allocation3 + $0x98] sm:$0xff] %vm1271, %v9483
        %9516 = vst.msk [vmem:[#allocation3 + $0xd0] sm:$0xff] %vm1271, %v9484
        %9517 = vst.msk [vmem:[#allocation3 + $0x108] sm:$0xff] %vm1271, %v9485
        %9518 = vst.msk [vmem:[#allocation3 + $0x140] sm:$0xff] %vm1271, %v9486
        %9519 = vst.msk [vmem:[#allocation3 + $0x178] sm:$0xff] %vm1271, %v9487
        %9520 = vst.msk [vmem:[#allocation3 + $0x1b0] sm:$0xff] %vm1271, %v9488
        %9521 = vst.msk [vmem:[#allocation3 + $0x1e8] sm:$0xff] %vm1271, %v9489
        %9522 = vst.msk [vmem:[#allocation3 + $0x220] sm:$0xff] %vm1271, %v9490
        %9523 = vst.msk [vmem:[#allocation3 + $0x258] sm:$0xff] %vm1271, %v9491
        %9524 = vst.msk [vmem:[#allocation3 + $0x290] sm:$0xff] %vm1271, %v9492
        %9525 = vst.msk [vmem:[#allocation3 + $0x2c8] sm:$0xff] %vm1271, %v9493
        %9526 = vst.msk [vmem:[#allocation3 + $0x300] sm:$0xff] %vm1271, %v9494
        %9527 = vst.msk [vmem:[#allocation3 + $0x338] sm:$0xff] %vm1271, %v9495
        %9528 = vst.msk [vmem:[#allocation3 + $0x370] sm:$0xff] %vm1271, %v9496
        %v9529 = vld [vmem:[%s255] sm:$0xf]
        %v9530 = vld [vmem:[%s255 + $0x4] sm:$0xf]
        %v9531 = vld [vmem:[%s255 + $0xc] sm:$0xf]
        %v9532 = vld [vmem:[%s255 + $0x10] sm:$0xf]
        %v9533 = vld [vmem:[%s255 + $0x18] sm:$0xf]
        %v9534 = vld [vmem:[%s255 + $0x1c] sm:$0xf]
        %v9535 = vld [vmem:[%s255 + $0x24] sm:$0xf]
        %v9536 = vld [vmem:[%s255 + $0x28] sm:$0xf]
        %v9537 = vld [vmem:[%s255 + $0x30] sm:$0xf]
        %v9538 = vld [vmem:[%s255 + $0x34] sm:$0xf]
        %v9539 = vld [vmem:[%s255 + $0x3c] sm:$0xf]
        %v9540 = vld [vmem:[%s255 + $0x40] sm:$0xf]
        %v9541 = vld [vmem:[%s255 + $0x48] sm:$0xf]
        %v9542 = vld [vmem:[%s255 + $0x4c] sm:$0xf]
        %v9543 = vld [vmem:[%s255 + $0x54] sm:$0xf]
        %v9544 = vld [vmem:[%s255 + $0x58] sm:$0xf]
        %v9545 = vld [vmem:[%s255 + $0x60] sm:$0xf]
        %v9546 = vld [vmem:[%s255 + $0x64] sm:$0xf]
        %v9547 = vld [vmem:[%s255 + $0x6c] sm:$0xf]
        %v9548 = vld [vmem:[%s255 + $0x70] sm:$0xf]
        %v9549 = vld [vmem:[%s255 + $0x78] sm:$0xf]
        %v9550 = vld [vmem:[%s255 + $0x7c] sm:$0xf]
        %v9551 = vld [vmem:[%s255 + $0x84] sm:$0xf]
        %v9552 = vld [vmem:[%s255 + $0x88] sm:$0xf]
        %v9553 = vld [vmem:[%s255 + $0x90] sm:$0xf]
        %v9554 = vld [vmem:[%s255 + $0x94] sm:$0xf]
        %v9555 = vld [vmem:[%s255 + $0x9c] sm:$0xf]
        %v9556 = vld [vmem:[%s255 + $0xa0] sm:$0xf]
        %v9557 = vld [vmem:[%s255 + $0xa8] sm:$0xf]
        %v9558 = vld [vmem:[%s255 + $0xac] sm:$0xf]
        %v9559 = vld [vmem:[%s255 + $0xb4] sm:$0xf]
        %v9560 = vld [vmem:[%s255 + $0xb8] sm:$0xf]
        %v9593 = vunpack.c.l.b16 %v9529
        %v9594 = vunpack.c.l.b16 %v9530
        %v9595 = vunpack.c.l.b16 %v9531
        %v9596 = vunpack.c.l.b16 %v9532
        %v9597 = vunpack.c.l.b16 %v9533
        %v9598 = vunpack.c.l.b16 %v9534
        %v9599 = vunpack.c.l.b16 %v9535
        %v9600 = vunpack.c.l.b16 %v9536
        %v9601 = vunpack.c.l.b16 %v9537
        %v9602 = vunpack.c.l.b16 %v9538
        %v9603 = vunpack.c.l.b16 %v9539
        %v9604 = vunpack.c.l.b16 %v9540
        %v9605 = vunpack.c.l.b16 %v9541
        %v9606 = vunpack.c.l.b16 %v9542
        %v9607 = vunpack.c.l.b16 %v9543
        %v9608 = vunpack.c.l.b16 %v9544
        %v9609 = vunpack.c.l.b16 %v9545
        %v9610 = vunpack.c.l.b16 %v9546
        %v9611 = vunpack.c.l.b16 %v9547
        %v9612 = vunpack.c.l.b16 %v9548
        %v9613 = vunpack.c.l.b16 %v9549
        %v9614 = vunpack.c.l.b16 %v9550
        %v9615 = vunpack.c.l.b16 %v9551
        %v9616 = vunpack.c.l.b16 %v9552
        %v9617 = vunpack.c.l.b16 %v9553
        %v9618 = vunpack.c.l.b16 %v9554
        %v9619 = vunpack.c.l.b16 %v9555
        %v9620 = vunpack.c.l.b16 %v9556
        %v9621 = vunpack.c.l.b16 %v9557
        %v9622 = vunpack.c.l.b16 %v9558
        %v9623 = vunpack.c.l.b16 %v9559
        %v9624 = vunpack.c.l.b16 %v9560
        %v9625 = vpack.c.b16 %v9594, %v9593
        %v9626 = vpack.c.b16 %v9596, %v9595
        %v9627 = vpack.c.b16 %v9598, %v9597
        %v9628 = vpack.c.b16 %v9600, %v9599
        %v9629 = vpack.c.b16 %v9602, %v9601
        %v9630 = vpack.c.b16 %v9604, %v9603
        %v9631 = vpack.c.b16 %v9606, %v9605
        %v9632 = vpack.c.b16 %v9608, %v9607
        %v9633 = vpack.c.b16 %v9610, %v9609
        %v9634 = vpack.c.b16 %v9612, %v9611
        %v9635 = vpack.c.b16 %v9614, %v9613
        %v9636 = vpack.c.b16 %v9616, %v9615
        %v9637 = vpack.c.b16 %v9618, %v9617
        %v9638 = vpack.c.b16 %v9620, %v9619
        %v9639 = vpack.c.b16 %v9622, %v9621
        %v9640 = vpack.c.b16 %v9624, %v9623
        %9641 = vrot.lane.b32.xlu0 %v9625, 32
        %v9642 = vpop.permute.xlu0 %9641
        %9643 = vrot.lane.b32.xlu0 %v9626, 32
        %v9644 = vpop.permute.xlu0 %9643
        %9645 = vrot.lane.b32.xlu0 %v9627, 32
        %v9646 = vpop.permute.xlu0 %9645
        %9647 = vrot.lane.b32.xlu0 %v9628, 32
        %v9648 = vpop.permute.xlu0 %9647
        %9649 = vrot.lane.b32.xlu0 %v9629, 32
        %v9650 = vpop.permute.xlu0 %9649
        %9651 = vrot.lane.b32.xlu0 %v9630, 32
        %v9652 = vpop.permute.xlu0 %9651
        %9653 = vrot.lane.b32.xlu0 %v9631, 32
        %v9654 = vpop.permute.xlu0 %9653
        %9655 = vrot.lane.b32.xlu0 %v9632, 32
        %v9656 = vpop.permute.xlu0 %9655
        %9657 = vrot.lane.b32.xlu0 %v9633, 32
        %v9658 = vpop.permute.xlu0 %9657
        %9659 = vrot.lane.b32.xlu0 %v9634, 32
        %v9660 = vpop.permute.xlu0 %9659
        %9661 = vrot.lane.b32.xlu0 %v9635, 32
        %v9662 = vpop.permute.xlu0 %9661
        %9663 = vrot.lane.b32.xlu0 %v9636, 32
        %v9664 = vpop.permute.xlu0 %9663
        %9665 = vrot.lane.b32.xlu0 %v9637, 32
        %v9666 = vpop.permute.xlu0 %9665
        %9667 = vrot.lane.b32.xlu0 %v9638, 32
        %v9668 = vpop.permute.xlu0 %9667
        %9669 = vrot.lane.b32.xlu0 %v9639, 32
        %v9670 = vpop.permute.xlu0 %9669
        %9671 = vrot.lane.b32.xlu0 %v9640, 32
        %v9672 = vpop.permute.xlu0 %9671
        %9689 = vst.msk [vmem:[#allocation3 + $0x28] sm:$0xff] %vm1592, %v9642
        %9690 = vst.msk [vmem:[#allocation3 + $0x60] sm:$0xff] %vm1592, %v9644
        %9691 = vst.msk [vmem:[#allocation3 + $0x98] sm:$0xff] %vm1592, %v9646
        %9692 = vst.msk [vmem:[#allocation3 + $0xd0] sm:$0xff] %vm1592, %v9648
        %9693 = vst.msk [vmem:[#allocation3 + $0x108] sm:$0xff] %vm1592, %v9650
        %9694 = vst.msk [vmem:[#allocation3 + $0x140] sm:$0xff] %vm1592, %v9652
        %9695 = vst.msk [vmem:[#allocation3 + $0x178] sm:$0xff] %vm1592, %v9654
        %9696 = vst.msk [vmem:[#allocation3 + $0x1b0] sm:$0xff] %vm1592, %v9656
        %9697 = vst.msk [vmem:[#allocation3 + $0x1e8] sm:$0xff] %vm1592, %v9658
        %9698 = vst.msk [vmem:[#allocation3 + $0x220] sm:$0xff] %vm1592, %v9660
        %9699 = vst.msk [vmem:[#allocation3 + $0x258] sm:$0xff] %vm1592, %v9662
        %9700 = vst.msk [vmem:[#allocation3 + $0x290] sm:$0xff] %vm1592, %v9664
        %9701 = vst.msk [vmem:[#allocation3 + $0x2c8] sm:$0xff] %vm1592, %v9666
        %9702 = vst.msk [vmem:[#allocation3 + $0x300] sm:$0xff] %vm1592, %v9668
        %9703 = vst.msk [vmem:[#allocation3 + $0x338] sm:$0xff] %vm1592, %v9670
        %9704 = vst.msk [vmem:[#allocation3 + $0x370] sm:$0xff] %vm1592, %v9672
        %v9705 = vld [vmem:[%s255] sm:$0xc]
        %v9706 = vld [vmem:[%s255 + $0x4] sm:$0xf]
        %v9707 = vld [vmem:[%s255 + $0x8] sm:$0x3]
        %v9708 = vld [vmem:[%s255 + $0xc] sm:$0xc]
        %v9709 = vld [vmem:[%s255 + $0x10] sm:$0xf]
        %v9710 = vld [vmem:[%s255 + $0x14] sm:$0x3]
        %v9711 = vld [vmem:[%s255 + $0x18] sm:$0xc]
        %v9712 = vld [vmem:[%s255 + $0x1c] sm:$0xf]
        %v9713 = vld [vmem:[%s255 + $0x20] sm:$0x3]
        %v9714 = vld [vmem:[%s255 + $0x24] sm:$0xc]
        %v9715 = vld [vmem:[%s255 + $0x28] sm:$0xf]
        %v9716 = vld [vmem:[%s255 + $0x2c] sm:$0x3]
        %v9717 = vld [vmem:[%s255 + $0x30] sm:$0xc]
        %v9718 = vld [vmem:[%s255 + $0x34] sm:$0xf]
        %v9719 = vld [vmem:[%s255 + $0x38] sm:$0x3]
        %v9720 = vld [vmem:[%s255 + $0x3c] sm:$0xc]
        %v9721 = vld [vmem:[%s255 + $0x40] sm:$0xf]
        %v9722 = vld [vmem:[%s255 + $0x44] sm:$0x3]
        %v9723 = vld [vmem:[%s255 + $0x48] sm:$0xc]
        %v9724 = vld [vmem:[%s255 + $0x4c] sm:$0xf]
        %v9725 = vld [vmem:[%s255 + $0x50] sm:$0x3]
        %v9726 = vld [vmem:[%s255 + $0x54] sm:$0xc]
        %v9727 = vld [vmem:[%s255 + $0x58] sm:$0xf]
        %v9728 = vld [vmem:[%s255 + $0x5c] sm:$0x3]
        %v9729 = vld [vmem:[%s255 + $0x60] sm:$0xc]
        %v9730 = vld [vmem:[%s255 + $0x64] sm:$0xf]
        %v9731 = vld [vmem:[%s255 + $0x68] sm:$0x3]
        %v9732 = vld [vmem:[%s255 + $0x6c] sm:$0xc]
        %v9733 = vld [vmem:[%s255 + $0x70] sm:$0xf]
        %v9734 = vld [vmem:[%s255 + $0x74] sm:$0x3]
        %v9735 = vld [vmem:[%s255 + $0x78] sm:$0xc]
        %v9736 = vld [vmem:[%s255 + $0x7c] sm:$0xf]
        %v9737 = vld [vmem:[%s255 + $0x80] sm:$0x3]
        %v9738 = vld [vmem:[%s255 + $0x84] sm:$0xc]
        %v9739 = vld [vmem:[%s255 + $0x88] sm:$0xf]
        %v9740 = vld [vmem:[%s255 + $0x8c] sm:$0x3]
        %v9741 = vld [vmem:[%s255 + $0x90] sm:$0xc]
        %v9742 = vld [vmem:[%s255 + $0x94] sm:$0xf]
        %v9743 = vld [vmem:[%s255 + $0x98] sm:$0x3]
        %v9744 = vld [vmem:[%s255 + $0x9c] sm:$0xc]
        %v9745 = vld [vmem:[%s255 + $0xa0] sm:$0xf]
        %v9746 = vld [vmem:[%s255 + $0xa4] sm:$0x3]
        %v9747 = vld [vmem:[%s255 + $0xa8] sm:$0xc]
        %v9748 = vld [vmem:[%s255 + $0xac] sm:$0xf]
        %v9749 = vld [vmem:[%s255 + $0xb0] sm:$0x3]
        %v9750 = vld [vmem:[%s255 + $0xb4] sm:$0xc]
        %v9751 = vld [vmem:[%s255 + $0xb8] sm:$0xf]
        %v9752 = vld [vmem:[%s255 + $0xbc] sm:$0x3]
        %v9801 = vrot.slane %v9705, 6
        %v9802 = vrot.slane %v9801, 4
        %v9803 = vrot.slane %v9706, 6
        %v9804 = vsel %vm530, %v9802, %v9803
        %v9805 = vrot.slane %v9803, 4
        %v9806 = vrot.slane %v9707, 6
        %v9807 = vsel %vm530, %v9805, %v9806
        %v9808 = vrot.slane %v9708, 6
        %v9809 = vrot.slane %v9808, 4
        %v9810 = vrot.slane %v9709, 6
        %v9811 = vsel %vm530, %v9809, %v9810
        %v9812 = vrot.slane %v9810, 4
        %v9813 = vrot.slane %v9710, 6
        %v9814 = vsel %vm530, %v9812, %v9813
        %v9815 = vrot.slane %v9711, 6
        %v9816 = vrot.slane %v9815, 4
        %v9817 = vrot.slane %v9712, 6
        %v9818 = vsel %vm530, %v9816, %v9817
        %v9819 = vrot.slane %v9817, 4
        %v9820 = vrot.slane %v9713, 6
        %v9821 = vsel %vm530, %v9819, %v9820
        %v9822 = vrot.slane %v9714, 6
        %v9823 = vrot.slane %v9822, 4
        %v9824 = vrot.slane %v9715, 6
        %v9825 = vsel %vm530, %v9823, %v9824
        %v9826 = vrot.slane %v9824, 4
        %v9827 = vrot.slane %v9716, 6
        %v9828 = vsel %vm530, %v9826, %v9827
        %v9829 = vrot.slane %v9717, 6
        %v9830 = vrot.slane %v9829, 4
        %v9831 = vrot.slane %v9718, 6
        %v9832 = vsel %vm530, %v9830, %v9831
        %v9833 = vrot.slane %v9831, 4
        %v9834 = vrot.slane %v9719, 6
        %v9835 = vsel %vm530, %v9833, %v9834
        %v9836 = vrot.slane %v9720, 6
        %v9837 = vrot.slane %v9836, 4
        %v9838 = vrot.slane %v9721, 6
        %v9839 = vsel %vm530, %v9837, %v9838
        %v9840 = vrot.slane %v9838, 4
        %v9841 = vrot.slane %v9722, 6
        %v9842 = vsel %vm530, %v9840, %v9841
        %v9843 = vrot.slane %v9723, 6
        %v9844 = vrot.slane %v9843, 4
        %v9845 = vrot.slane %v9724, 6
        %v9846 = vsel %vm530, %v9844, %v9845
        %v9847 = vrot.slane %v9845, 4
        %v9848 = vrot.slane %v9725, 6
        %v9849 = vsel %vm530, %v9847, %v9848
        %v9850 = vrot.slane %v9726, 6
        %v9851 = vrot.slane %v9850, 4
        %v9852 = vrot.slane %v9727, 6
        %v9853 = vsel %vm530, %v9851, %v9852
        %v9854 = vrot.slane %v9852, 4
        %v9855 = vrot.slane %v9728, 6
        %v9856 = vsel %vm530, %v9854, %v9855
        %v9857 = vrot.slane %v9729, 6
        %v9858 = vrot.slane %v9857, 4
        %v9859 = vrot.slane %v9730, 6
        %v9860 = vsel %vm530, %v9858, %v9859
        %v9861 = vrot.slane %v9859, 4
        %v9862 = vrot.slane %v9731, 6
        %v9863 = vsel %vm530, %v9861, %v9862
        %v9864 = vrot.slane %v9732, 6
        %v9865 = vrot.slane %v9864, 4
        %v9866 = vrot.slane %v9733, 6
        %v9867 = vsel %vm530, %v9865, %v9866
        %v9868 = vrot.slane %v9866, 4
        %v9869 = vrot.slane %v9734, 6
        %v9870 = vsel %vm530, %v9868, %v9869
        %v9871 = vrot.slane %v9735, 6
        %v9872 = vrot.slane %v9871, 4
        %v9873 = vrot.slane %v9736, 6
        %v9874 = vsel %vm530, %v9872, %v9873
        %v9875 = vrot.slane %v9873, 4
        %v9876 = vrot.slane %v9737, 6
        %v9877 = vsel %vm530, %v9875, %v9876
        %v9878 = vrot.slane %v9738, 6
        %v9879 = vrot.slane %v9878, 4
        %v9880 = vrot.slane %v9739, 6
        %v9881 = vsel %vm530, %v9879, %v9880
        %v9882 = vrot.slane %v9880, 4
        %v9883 = vrot.slane %v9740, 6
        %v9884 = vsel %vm530, %v9882, %v9883
        %v9885 = vrot.slane %v9741, 6
        %v9886 = vrot.slane %v9885, 4
        %v9887 = vrot.slane %v9742, 6
        %v9888 = vsel %vm530, %v9886, %v9887
        %v9889 = vrot.slane %v9887, 4
        %v9890 = vrot.slane %v9743, 6
        %v9891 = vsel %vm530, %v9889, %v9890
        %v9892 = vrot.slane %v9744, 6
        %v9893 = vrot.slane %v9892, 4
        %v9894 = vrot.slane %v9745, 6
        %v9895 = vsel %vm530, %v9893, %v9894
        %v9896 = vrot.slane %v9894, 4
        %v9897 = vrot.slane %v9746, 6
        %v9898 = vsel %vm530, %v9896, %v9897
        %v9899 = vrot.slane %v9747, 6
        %v9900 = vrot.slane %v9899, 4
        %v9901 = vrot.slane %v9748, 6
        %v9902 = vsel %vm530, %v9900, %v9901
        %v9903 = vrot.slane %v9901, 4
        %v9904 = vrot.slane %v9749, 6
        %v9905 = vsel %vm530, %v9903, %v9904
        %v9906 = vrot.slane %v9750, 6
        %v9907 = vrot.slane %v9906, 4
        %v9908 = vrot.slane %v9751, 6
        %v9909 = vsel %vm530, %v9907, %v9908
        %v9910 = vrot.slane %v9908, 4
        %v9911 = vrot.slane %v9752, 6
        %v9912 = vsel %vm530, %v9910, %v9911
        %v9913 = vunpack.c.l.b16 %v9804
        %v9914 = vunpack.c.l.b16 %v9807
        %v9915 = vunpack.c.l.b16 %v9811
        %v9916 = vunpack.c.l.b16 %v9814
        %v9917 = vunpack.c.l.b16 %v9818
        %v9918 = vunpack.c.l.b16 %v9821
        %v9919 = vunpack.c.l.b16 %v9825
        %v9920 = vunpack.c.l.b16 %v9828
        %v9921 = vunpack.c.l.b16 %v9832
        %v9922 = vunpack.c.l.b16 %v9835
        %v9923 = vunpack.c.l.b16 %v9839
        %v9924 = vunpack.c.l.b16 %v9842
        %v9925 = vunpack.c.l.b16 %v9846
        %v9926 = vunpack.c.l.b16 %v9849
        %v9927 = vunpack.c.l.b16 %v9853
        %v9928 = vunpack.c.l.b16 %v9856
        %v9929 = vunpack.c.l.b16 %v9860
        %v9930 = vunpack.c.l.b16 %v9863
        %v9931 = vunpack.c.l.b16 %v9867
        %v9932 = vunpack.c.l.b16 %v9870
        %v9933 = vunpack.c.l.b16 %v9874
        %v9934 = vunpack.c.l.b16 %v9877
        %v9935 = vunpack.c.l.b16 %v9881
        %v9936 = vunpack.c.l.b16 %v9884
        %v9937 = vunpack.c.l.b16 %v9888
        %v9938 = vunpack.c.l.b16 %v9891
        %v9939 = vunpack.c.l.b16 %v9895
        %v9940 = vunpack.c.l.b16 %v9898
        %v9941 = vunpack.c.l.b16 %v9902
        %v9942 = vunpack.c.l.b16 %v9905
        %v9943 = vunpack.c.l.b16 %v9909
        %v9944 = vunpack.c.l.b16 %v9912
        %v9945 = vpack.c.b16 %v9914, %v9913
        %v9946 = vpack.c.b16 %v9916, %v9915
        %v9947 = vpack.c.b16 %v9918, %v9917
        %v9948 = vpack.c.b16 %v9920, %v9919
        %v9949 = vpack.c.b16 %v9922, %v9921
        %v9950 = vpack.c.b16 %v9924, %v9923
        %v9951 = vpack.c.b16 %v9926, %v9925
        %v9952 = vpack.c.b16 %v9928, %v9927
        %v9953 = vpack.c.b16 %v9930, %v9929
        %v9954 = vpack.c.b16 %v9932, %v9931
        %v9955 = vpack.c.b16 %v9934, %v9933
        %v9956 = vpack.c.b16 %v9936, %v9935
        %v9957 = vpack.c.b16 %v9938, %v9937
        %v9958 = vpack.c.b16 %v9940, %v9939
        %v9959 = vpack.c.b16 %v9942, %v9941
        %v9960 = vpack.c.b16 %v9944, %v9943
        %9961 = vrot.lane.b32.xlu0 %v9945, 64
        %v9962 = vpop.permute.xlu0 %9961
        %9963 = vrot.lane.b32.xlu0 %v9946, 64
        %v9964 = vpop.permute.xlu0 %9963
        %9965 = vrot.lane.b32.xlu0 %v9947, 64
        %v9966 = vpop.permute.xlu0 %9965
        %9967 = vrot.lane.b32.xlu0 %v9948, 64
        %v9968 = vpop.permute.xlu0 %9967
        %9969 = vrot.lane.b32.xlu0 %v9949, 64
        %v9970 = vpop.permute.xlu0 %9969
        %9971 = vrot.lane.b32.xlu0 %v9950, 64
        %v9972 = vpop.permute.xlu0 %9971
        %9973 = vrot.lane.b32.xlu0 %v9951, 64
        %v9974 = vpop.permute.xlu0 %9973
        %9975 = vrot.lane.b32.xlu0 %v9952, 64
        %v9976 = vpop.permute.xlu0 %9975
        %9977 = vrot.lane.b32.xlu0 %v9953, 64
        %v9978 = vpop.permute.xlu0 %9977
        %9979 = vrot.lane.b32.xlu0 %v9954, 64
        %v9980 = vpop.permute.xlu0 %9979
        %9981 = vrot.lane.b32.xlu0 %v9955, 64
        %v9982 = vpop.permute.xlu0 %9981
        %9983 = vrot.lane.b32.xlu0 %v9956, 64
        %v9984 = vpop.permute.xlu0 %9983
        %9985 = vrot.lane.b32.xlu0 %v9957, 64
        %v9986 = vpop.permute.xlu0 %9985
        %9987 = vrot.lane.b32.xlu0 %v9958, 64
        %v9988 = vpop.permute.xlu0 %9987
        %9989 = vrot.lane.b32.xlu0 %v9959, 64
        %v9990 = vpop.permute.xlu0 %9989
        %9991 = vrot.lane.b32.xlu0 %v9960, 64
        %v9992 = vpop.permute.xlu0 %9991
        %10009 = vst.msk [vmem:[#allocation3 + $0x28] sm:$0xff] %vm2204, %v9962
        %10010 = vst.msk [vmem:[#allocation3 + $0x60] sm:$0xff] %vm2204, %v9964
        %10011 = vst.msk [vmem:[#allocation3 + $0x98] sm:$0xff] %vm2204, %v9966
        %10012 = vst.msk [vmem:[#allocation3 + $0xd0] sm:$0xff] %vm2204, %v9968
        %10013 = vst.msk [vmem:[#allocation3 + $0x108] sm:$0xff] %vm2204, %v9970
        %10014 = vst.msk [vmem:[#allocation3 + $0x140] sm:$0xff] %vm2204, %v9972
        %10015 = vst.msk [vmem:[#allocation3 + $0x178] sm:$0xff] %vm2204, %v9974
        %10016 = vst.msk [vmem:[#allocation3 + $0x1b0] sm:$0xff] %vm2204, %v9976
        %10017 = vst.msk [vmem:[#allocation3 + $0x1e8] sm:$0xff] %vm2204, %v9978
        %10018 = vst.msk [vmem:[#allocation3 + $0x220] sm:$0xff] %vm2204, %v9980
        %10019 = vst.msk [vmem:[#allocation3 + $0x258] sm:$0xff] %vm2204, %v9982
        %10020 = vst.msk [vmem:[#allocation3 + $0x290] sm:$0xff] %vm2204, %v9984
        %10021 = vst.msk [vmem:[#allocation3 + $0x2c8] sm:$0xff] %vm2204, %v9986
        %10022 = vst.msk [vmem:[#allocation3 + $0x300] sm:$0xff] %vm2204, %v9988
        %10023 = vst.msk [vmem:[#allocation3 + $0x338] sm:$0xff] %vm2204, %v9990
        %10024 = vst.msk [vmem:[#allocation3 + $0x370] sm:$0xff] %vm2204, %v9992
        %v10025 = vld [vmem:[%s255 + $0x4] sm:$0xf]
        %v10026 = vld [vmem:[%s255 + $0x8] sm:$0xf]
        %v10027 = vld [vmem:[%s255 + $0x10] sm:$0xf]
        %v10028 = vld [vmem:[%s255 + $0x14] sm:$0xf]
        %v10029 = vld [vmem:[%s255 + $0x1c] sm:$0xf]
        %v10030 = vld [vmem:[%s255 + $0x20] sm:$0xf]
        %v10031 = vld [vmem:[%s255 + $0x28] sm:$0xf]
        %v10032 = vld [vmem:[%s255 + $0x2c] sm:$0xf]
        %v10033 = vld [vmem:[%s255 + $0x34] sm:$0xf]
        %v10034 = vld [vmem:[%s255 + $0x38] sm:$0xf]
        %v10035 = vld [vmem:[%s255 + $0x40] sm:$0xf]
        %v10036 = vld [vmem:[%s255 + $0x44] sm:$0xf]
        %v10037 = vld [vmem:[%s255 + $0x4c] sm:$0xf]
        %v10038 = vld [vmem:[%s255 + $0x50] sm:$0xf]
        %v10039 = vld [vmem:[%s255 + $0x58] sm:$0xf]
        %v10040 = vld [vmem:[%s255 + $0x5c] sm:$0xf]
        %v10041 = vld [vmem:[%s255 + $0x64] sm:$0xf]
        %v10042 = vld [vmem:[%s255 + $0x68] sm:$0xf]
        %v10043 = vld [vmem:[%s255 + $0x70] sm:$0xf]
        %v10044 = vld [vmem:[%s255 + $0x74] sm:$0xf]
        %v10045 = vld [vmem:[%s255 + $0x7c] sm:$0xf]
        %v10046 = vld [vmem:[%s255 + $0x80] sm:$0xf]
        %v10047 = vld [vmem:[%s255 + $0x88] sm:$0xf]
        %v10048 = vld [vmem:[%s255 + $0x8c] sm:$0xf]
        %v10049 = vld [vmem:[%s255 + $0x94] sm:$0xf]
        %v10050 = vld [vmem:[%s255 + $0x98] sm:$0xf]
        %v10051 = vld [vmem:[%s255 + $0xa0] sm:$0xf]
        %v10052 = vld [vmem:[%s255 + $0xa4] sm:$0xf]
        %v10053 = vld [vmem:[%s255 + $0xac] sm:$0xf]
        %v10054 = vld [vmem:[%s255 + $0xb0] sm:$0xf]
        %v10055 = vld [vmem:[%s255 + $0xb8] sm:$0xf]
        %v10056 = vld [vmem:[%s255 + $0xbc] sm:$0xf]
        %v10089 = vunpack.c.l.b16 %v10025
        %v10090 = vunpack.c.l.b16 %v10026
        %v10091 = vunpack.c.l.b16 %v10027
        %v10092 = vunpack.c.l.b16 %v10028
        %v10093 = vunpack.c.l.b16 %v10029
        %v10094 = vunpack.c.l.b16 %v10030
        %v10095 = vunpack.c.l.b16 %v10031
        %v10096 = vunpack.c.l.b16 %v10032
        %v10097 = vunpack.c.l.b16 %v10033
        %v10098 = vunpack.c.l.b16 %v10034
        %v10099 = vunpack.c.l.b16 %v10035
        %v10100 = vunpack.c.l.b16 %v10036
        %v10101 = vunpack.c.l.b16 %v10037
        %v10102 = vunpack.c.l.b16 %v10038
        %v10103 = vunpack.c.l.b16 %v10039
        %v10104 = vunpack.c.l.b16 %v10040
        %v10105 = vunpack.c.l.b16 %v10041
        %v10106 = vunpack.c.l.b16 %v10042
        %v10107 = vunpack.c.l.b16 %v10043
        %v10108 = vunpack.c.l.b16 %v10044
        %v10109 = vunpack.c.l.b16 %v10045
        %v10110 = vunpack.c.l.b16 %v10046
        %v10111 = vunpack.c.l.b16 %v10047
        %v10112 = vunpack.c.l.b16 %v10048
        %v10113 = vunpack.c.l.b16 %v10049
        %v10114 = vunpack.c.l.b16 %v10050
        %v10115 = vunpack.c.l.b16 %v10051
        %v10116 = vunpack.c.l.b16 %v10052
        %v10117 = vunpack.c.l.b16 %v10053
        %v10118 = vunpack.c.l.b16 %v10054
        %v10119 = vunpack.c.l.b16 %v10055
        %v10120 = vunpack.c.l.b16 %v10056
        %v10121 = vpack.c.b16 %v10090, %v10089
        %v10122 = vpack.c.b16 %v10092, %v10091
        %v10123 = vpack.c.b16 %v10094, %v10093
        %v10124 = vpack.c.b16 %v10096, %v10095
        %v10125 = vpack.c.b16 %v10098, %v10097
        %v10126 = vpack.c.b16 %v10100, %v10099
        %v10127 = vpack.c.b16 %v10102, %v10101
        %v10128 = vpack.c.b16 %v10104, %v10103
        %v10129 = vpack.c.b16 %v10106, %v10105
        %v10130 = vpack.c.b16 %v10108, %v10107
        %v10131 = vpack.c.b16 %v10110, %v10109
        %v10132 = vpack.c.b16 %v10112, %v10111
        %v10133 = vpack.c.b16 %v10114, %v10113
        %v10134 = vpack.c.b16 %v10116, %v10115
        %v10135 = vpack.c.b16 %v10118, %v10117
        %v10136 = vpack.c.b16 %v10120, %v10119
        %10137 = vrot.lane.b32.xlu0 %v10121, 96
        %v10138 = vpop.permute.xlu0 %10137
        %10139 = vrot.lane.b32.xlu0 %v10122, 96
        %v10140 = vpop.permute.xlu0 %10139
        %10141 = vrot.lane.b32.xlu0 %v10123, 96
        %v10142 = vpop.permute.xlu0 %10141
        %10143 = vrot.lane.b32.xlu0 %v10124, 96
        %v10144 = vpop.permute.xlu0 %10143
        %10145 = vrot.lane.b32.xlu0 %v10125, 96
        %v10146 = vpop.permute.xlu0 %10145
        %10147 = vrot.lane.b32.xlu0 %v10126, 96
        %v10148 = vpop.permute.xlu0 %10147
        %10149 = vrot.lane.b32.xlu0 %v10127, 96
        %v10150 = vpop.permute.xlu0 %10149
        %10151 = vrot.lane.b32.xlu0 %v10128, 96
        %v10152 = vpop.permute.xlu0 %10151
        %10153 = vrot.lane.b32.xlu0 %v10129, 96
        %v10154 = vpop.permute.xlu0 %10153
        %10155 = vrot.lane.b32.xlu0 %v10130, 96
        %v10156 = vpop.permute.xlu0 %10155
        %10157 = vrot.lane.b32.xlu0 %v10131, 96
        %v10158 = vpop.permute.xlu0 %10157
        %10159 = vrot.lane.b32.xlu0 %v10132, 96
        %v10160 = vpop.permute.xlu0 %10159
        %10161 = vrot.lane.b32.xlu0 %v10133, 96
        %v10162 = vpop.permute.xlu0 %10161
        %10163 = vrot.lane.b32.xlu0 %v10134, 96
        %v10164 = vpop.permute.xlu0 %10163
        %10165 = vrot.lane.b32.xlu0 %v10135, 96
        %v10166 = vpop.permute.xlu0 %10165
        %10167 = vrot.lane.b32.xlu0 %v10136, 96
        %v10168 = vpop.permute.xlu0 %10167
        %10185 = vst.msk [vmem:[#allocation3 + $0x28] sm:$0xff] %vm2813, %v10138
        %10186 = vst.msk [vmem:[#allocation3 + $0x60] sm:$0xff] %vm2813, %v10140
        %10187 = vst.msk [vmem:[#allocation3 + $0x98] sm:$0xff] %vm2813, %v10142
        %10188 = vst.msk [vmem:[#allocation3 + $0xd0] sm:$0xff] %vm2813, %v10144
        %10189 = vst.msk [vmem:[#allocation3 + $0x108] sm:$0xff] %vm2813, %v10146
        %10190 = vst.msk [vmem:[#allocation3 + $0x140] sm:$0xff] %vm2813, %v10148
        %10191 = vst.msk [vmem:[#allocation3 + $0x178] sm:$0xff] %vm2813, %v10150
        %10192 = vst.msk [vmem:[#allocation3 + $0x1b0] sm:$0xff] %vm2813, %v10152
        %10193 = vst.msk [vmem:[#allocation3 + $0x1e8] sm:$0xff] %vm2813, %v10154
        %10194 = vst.msk [vmem:[#allocation3 + $0x220] sm:$0xff] %vm2813, %v10156
        %10195 = vst.msk [vmem:[#allocation3 + $0x258] sm:$0xff] %vm2813, %v10158
        %10196 = vst.msk [vmem:[#allocation3 + $0x290] sm:$0xff] %vm2813, %v10160
        %10197 = vst.msk [vmem:[#allocation3 + $0x2c8] sm:$0xff] %vm2813, %v10162
        %10198 = vst.msk [vmem:[#allocation3 + $0x300] sm:$0xff] %vm2813, %v10164
        %10199 = vst.msk [vmem:[#allocation3 + $0x338] sm:$0xff] %vm2813, %v10166
        %10200 = vst.msk [vmem:[#allocation3 + $0x370] sm:$0xff] %vm2813, %v10168
        %s10201 = scalar_lea.vmem [#allocation2], 96
        %v10202 = vld [vmem:[%s10201] sm:$0xf]
        %v10203 = vld [vmem:[%s10201 + $0x4] sm:$0xf]
        %v10204 = vld [vmem:[%s10201 + $0xc] sm:$0xf]
        %v10205 = vld [vmem:[%s10201 + $0x10] sm:$0xf]
        %v10206 = vld [vmem:[%s10201 + $0x18] sm:$0xf]
        %v10207 = vld [vmem:[%s10201 + $0x1c] sm:$0xf]
        %v10208 = vld [vmem:[%s10201 + $0x24] sm:$0xf]
        %v10209 = vld [vmem:[%s10201 + $0x28] sm:$0xf]
        %v10210 = vld [vmem:[%s10201 + $0x30] sm:$0xf]
        %v10211 = vld [vmem:[%s10201 + $0x34] sm:$0xf]
        %v10212 = vld [vmem:[%s10201 + $0x3c] sm:$0xf]
        %v10213 = vld [vmem:[%s10201 + $0x40] sm:$0xf]
        %v10214 = vld [vmem:[%s10201 + $0x48] sm:$0xf]
        %v10215 = vld [vmem:[%s10201 + $0x4c] sm:$0xf]
        %v10216 = vld [vmem:[%s10201 + $0x54] sm:$0xf]
        %v10217 = vld [vmem:[%s10201 + $0x58] sm:$0xf]
        %v10218 = vld [vmem:[%s10201 + $0x60] sm:$0xf]
        %v10219 = vld [vmem:[%s10201 + $0x64] sm:$0xf]
        %v10220 = vld [vmem:[%s10201 + $0x6c] sm:$0xf]
        %v10221 = vld [vmem:[%s10201 + $0x70] sm:$0xf]
        %v10222 = vld [vmem:[%s10201 + $0x78] sm:$0xf]
        %v10223 = vld [vmem:[%s10201 + $0x7c] sm:$0xf]
        %v10224 = vld [vmem:[%s10201 + $0x84] sm:$0xf]
        %v10225 = vld [vmem:[%s10201 + $0x88] sm:$0xf]
        %v10226 = vld [vmem:[%s10201 + $0x90] sm:$0xf]
        %v10227 = vld [vmem:[%s10201 + $0x94] sm:$0xf]
        %v10228 = vld [vmem:[%s10201 + $0x9c] sm:$0xf]
        %v10229 = vld [vmem:[%s10201 + $0xa0] sm:$0xf]
        %v10230 = vld [vmem:[%s10201 + $0xa8] sm:$0xf]
        %v10231 = vld [vmem:[%s10201 + $0xac] sm:$0xf]
        %v10232 = vld [vmem:[%s10201 + $0xb4] sm:$0xf]
        %v10233 = vld [vmem:[%s10201 + $0xb8] sm:$0xf]
        %v10266 = vunpack.c.l.b16 %v10202
        %v10267 = vunpack.c.l.b16 %v10203
        %v10268 = vunpack.c.l.b16 %v10204
        %v10269 = vunpack.c.l.b16 %v10205
        %v10270 = vunpack.c.l.b16 %v10206
        %v10271 = vunpack.c.l.b16 %v10207
        %v10272 = vunpack.c.l.b16 %v10208
        %v10273 = vunpack.c.l.b16 %v10209
        %v10274 = vunpack.c.l.b16 %v10210
        %v10275 = vunpack.c.l.b16 %v10211
        %v10276 = vunpack.c.l.b16 %v10212
        %v10277 = vunpack.c.l.b16 %v10213
        %v10278 = vunpack.c.l.b16 %v10214
        %v10279 = vunpack.c.l.b16 %v10215
        %v10280 = vunpack.c.l.b16 %v10216
        %v10281 = vunpack.c.l.b16 %v10217
        %v10282 = vunpack.c.l.b16 %v10218
        %v10283 = vunpack.c.l.b16 %v10219
        %v10284 = vunpack.c.l.b16 %v10220
        %v10285 = vunpack.c.l.b16 %v10221
        %v10286 = vunpack.c.l.b16 %v10222
        %v10287 = vunpack.c.l.b16 %v10223
        %v10288 = vunpack.c.l.b16 %v10224
        %v10289 = vunpack.c.l.b16 %v10225
        %v10290 = vunpack.c.l.b16 %v10226
        %v10291 = vunpack.c.l.b16 %v10227
        %v10292 = vunpack.c.l.b16 %v10228
        %v10293 = vunpack.c.l.b16 %v10229
        %v10294 = vunpack.c.l.b16 %v10230
        %v10295 = vunpack.c.l.b16 %v10231
        %v10296 = vunpack.c.l.b16 %v10232
        %v10297 = vunpack.c.l.b16 %v10233
        %v10298 = vpack.c.b16 %v10267, %v10266
        %v10299 = vpack.c.b16 %v10269, %v10268
        %v10300 = vpack.c.b16 %v10271, %v10270
        %v10301 = vpack.c.b16 %v10273, %v10272
        %v10302 = vpack.c.b16 %v10275, %v10274
        %v10303 = vpack.c.b16 %v10277, %v10276
        %v10304 = vpack.c.b16 %v10279, %v10278
        %v10305 = vpack.c.b16 %v10281, %v10280
        %v10306 = vpack.c.b16 %v10283, %v10282
        %v10307 = vpack.c.b16 %v10285, %v10284
        %v10308 = vpack.c.b16 %v10287, %v10286
        %v10309 = vpack.c.b16 %v10289, %v10288
        %v10310 = vpack.c.b16 %v10291, %v10290
        %v10311 = vpack.c.b16 %v10293, %v10292
        %v10312 = vpack.c.b16 %v10295, %v10294
        %v10313 = vpack.c.b16 %v10297, %v10296
        %10330 = vst.msk [vmem:[#allocation3 + $0x30] sm:$0xff] %vm1271, %v10298
        %10331 = vst.msk [vmem:[#allocation3 + $0x68] sm:$0xff] %vm1271, %v10299
        %10332 = vst.msk [vmem:[#allocation3 + $0xa0] sm:$0xff] %vm1271, %v10300
        %10333 = vst.msk [vmem:[#allocation3 + $0xd8] sm:$0xff] %vm1271, %v10301
        %10334 = vst.msk [vmem:[#allocation3 + $0x110] sm:$0xff] %vm1271, %v10302
        %10335 = vst.msk [vmem:[#allocation3 + $0x148] sm:$0xff] %vm1271, %v10303
        %10336 = vst.msk [vmem:[#allocation3 + $0x180] sm:$0xff] %vm1271, %v10304
        %10337 = vst.msk [vmem:[#allocation3 + $0x1b8] sm:$0xff] %vm1271, %v10305
        %10338 = vst.msk [vmem:[#allocation3 + $0x1f0] sm:$0xff] %vm1271, %v10306
        %10339 = vst.msk [vmem:[#allocation3 + $0x228] sm:$0xff] %vm1271, %v10307
        %10340 = vst.msk [vmem:[#allocation3 + $0x260] sm:$0xff] %vm1271, %v10308
        %10341 = vst.msk [vmem:[#allocation3 + $0x298] sm:$0xff] %vm1271, %v10309
        %10342 = vst.msk [vmem:[#allocation3 + $0x2d0] sm:$0xff] %vm1271, %v10310
        %10343 = vst.msk [vmem:[#allocation3 + $0x308] sm:$0xff] %vm1271, %v10311
        %10344 = vst.msk [vmem:[#allocation3 + $0x340] sm:$0xff] %vm1271, %v10312
        %10345 = vst.msk [vmem:[#allocation3 + $0x378] sm:$0xff] %vm1271, %v10313
        %v10346 = vld [vmem:[%s10201] sm:$0xc]
        %v10347 = vld [vmem:[%s10201 + $0x4] sm:$0xf]
        %v10348 = vld [vmem:[%s10201 + $0x8] sm:$0x3]
        %v10349 = vld [vmem:[%s10201 + $0xc] sm:$0xc]
        %v10350 = vld [vmem:[%s10201 + $0x10] sm:$0xf]
        %v10351 = vld [vmem:[%s10201 + $0x14] sm:$0x3]
        %v10352 = vld [vmem:[%s10201 + $0x18] sm:$0xc]
        %v10353 = vld [vmem:[%s10201 + $0x1c] sm:$0xf]
        %v10354 = vld [vmem:[%s10201 + $0x20] sm:$0x3]
        %v10355 = vld [vmem:[%s10201 + $0x24] sm:$0xc]
        %v10356 = vld [vmem:[%s10201 + $0x28] sm:$0xf]
        %v10357 = vld [vmem:[%s10201 + $0x2c] sm:$0x3]
        %v10358 = vld [vmem:[%s10201 + $0x30] sm:$0xc]
        %v10359 = vld [vmem:[%s10201 + $0x34] sm:$0xf]
        %v10360 = vld [vmem:[%s10201 + $0x38] sm:$0x3]
        %v10361 = vld [vmem:[%s10201 + $0x3c] sm:$0xc]
        %v10362 = vld [vmem:[%s10201 + $0x40] sm:$0xf]
        %v10363 = vld [vmem:[%s10201 + $0x44] sm:$0x3]
        %v10364 = vld [vmem:[%s10201 + $0x48] sm:$0xc]
        %v10365 = vld [vmem:[%s10201 + $0x4c] sm:$0xf]
        %v10366 = vld [vmem:[%s10201 + $0x50] sm:$0x3]
        %v10367 = vld [vmem:[%s10201 + $0x54] sm:$0xc]
        %v10368 = vld [vmem:[%s10201 + $0x58] sm:$0xf]
        %v10369 = vld [vmem:[%s10201 + $0x5c] sm:$0x3]
        %v10370 = vld [vmem:[%s10201 + $0x60] sm:$0xc]
        %v10371 = vld [vmem:[%s10201 + $0x64] sm:$0xf]
        %v10372 = vld [vmem:[%s10201 + $0x68] sm:$0x3]
        %v10373 = vld [vmem:[%s10201 + $0x6c] sm:$0xc]
        %v10374 = vld [vmem:[%s10201 + $0x70] sm:$0xf]
        %v10375 = vld [vmem:[%s10201 + $0x74] sm:$0x3]
        %v10376 = vld [vmem:[%s10201 + $0x78] sm:$0xc]
        %v10377 = vld [vmem:[%s10201 + $0x7c] sm:$0xf]
        %v10378 = vld [vmem:[%s10201 + $0x80] sm:$0x3]
        %v10379 = vld [vmem:[%s10201 + $0x84] sm:$0xc]
        %v10380 = vld [vmem:[%s10201 + $0x88] sm:$0xf]
        %v10381 = vld [vmem:[%s10201 + $0x8c] sm:$0x3]
        %v10382 = vld [vmem:[%s10201 + $0x90] sm:$0xc]
        %v10383 = vld [vmem:[%s10201 + $0x94] sm:$0xf]
        %v10384 = vld [vmem:[%s10201 + $0x98] sm:$0x3]
        %v10385 = vld [vmem:[%s10201 + $0x9c] sm:$0xc]
        %v10386 = vld [vmem:[%s10201 + $0xa0] sm:$0xf]
        %v10387 = vld [vmem:[%s10201 + $0xa4] sm:$0x3]
        %v10388 = vld [vmem:[%s10201 + $0xa8] sm:$0xc]
        %v10389 = vld [vmem:[%s10201 + $0xac] sm:$0xf]
        %v10390 = vld [vmem:[%s10201 + $0xb0] sm:$0x3]
        %v10391 = vld [vmem:[%s10201 + $0xb4] sm:$0xc]
        %v10392 = vld [vmem:[%s10201 + $0xb8] sm:$0xf]
        %v10393 = vld [vmem:[%s10201 + $0xbc] sm:$0x3]
        %v10442 = vrot.slane %v10346, 6
        %v10443 = vrot.slane %v10442, 4
        %v10444 = vrot.slane %v10347, 6
        %v10445 = vsel %vm530, %v10443, %v10444
        %v10446 = vrot.slane %v10444, 4
        %v10447 = vrot.slane %v10348, 6
        %v10448 = vsel %vm530, %v10446, %v10447
        %v10449 = vrot.slane %v10349, 6
        %v10450 = vrot.slane %v10449, 4
        %v10451 = vrot.slane %v10350, 6
        %v10452 = vsel %vm530, %v10450, %v10451
        %v10453 = vrot.slane %v10451, 4
        %v10454 = vrot.slane %v10351, 6
        %v10455 = vsel %vm530, %v10453, %v10454
        %v10456 = vrot.slane %v10352, 6
        %v10457 = vrot.slane %v10456, 4
        %v10458 = vrot.slane %v10353, 6
        %v10459 = vsel %vm530, %v10457, %v10458
        %v10460 = vrot.slane %v10458, 4
        %v10461 = vrot.slane %v10354, 6
        %v10462 = vsel %vm530, %v10460, %v10461
        %v10463 = vrot.slane %v10355, 6
        %v10464 = vrot.slane %v10463, 4
        %v10465 = vrot.slane %v10356, 6
        %v10466 = vsel %vm530, %v10464, %v10465
        %v10467 = vrot.slane %v10465, 4
        %v10468 = vrot.slane %v10357, 6
        %v10469 = vsel %vm530, %v10467, %v10468
        %v10470 = vrot.slane %v10358, 6
        %v10471 = vrot.slane %v10470, 4
        %v10472 = vrot.slane %v10359, 6
        %v10473 = vsel %vm530, %v10471, %v10472
        %v10474 = vrot.slane %v10472, 4
        %v10475 = vrot.slane %v10360, 6
        %v10476 = vsel %vm530, %v10474, %v10475
        %v10477 = vrot.slane %v10361, 6
        %v10478 = vrot.slane %v10477, 4
        %v10479 = vrot.slane %v10362, 6
        %v10480 = vsel %vm530, %v10478, %v10479
        %v10481 = vrot.slane %v10479, 4
        %v10482 = vrot.slane %v10363, 6
        %v10483 = vsel %vm530, %v10481, %v10482
        %v10484 = vrot.slane %v10364, 6
        %v10485 = vrot.slane %v10484, 4
        %v10486 = vrot.slane %v10365, 6
        %v10487 = vsel %vm530, %v10485, %v10486
        %v10488 = vrot.slane %v10486, 4
        %v10489 = vrot.slane %v10366, 6
        %v10490 = vsel %vm530, %v10488, %v10489
        %v10491 = vrot.slane %v10367, 6
        %v10492 = vrot.slane %v10491, 4
        %v10493 = vrot.slane %v10368, 6
        %v10494 = vsel %vm530, %v10492, %v10493
        %v10495 = vrot.slane %v10493, 4
        %v10496 = vrot.slane %v10369, 6
        %v10497 = vsel %vm530, %v10495, %v10496
        %v10498 = vrot.slane %v10370, 6
        %v10499 = vrot.slane %v10498, 4
        %v10500 = vrot.slane %v10371, 6
        %v10501 = vsel %vm530, %v10499, %v10500
        %v10502 = vrot.slane %v10500, 4
        %v10503 = vrot.slane %v10372, 6
        %v10504 = vsel %vm530, %v10502, %v10503
        %v10505 = vrot.slane %v10373, 6
        %v10506 = vrot.slane %v10505, 4
        %v10507 = vrot.slane %v10374, 6
        %v10508 = vsel %vm530, %v10506, %v10507
        %v10509 = vrot.slane %v10507, 4
        %v10510 = vrot.slane %v10375, 6
        %v10511 = vsel %vm530, %v10509, %v10510
        %v10512 = vrot.slane %v10376, 6
        %v10513 = vrot.slane %v10512, 4
        %v10514 = vrot.slane %v10377, 6
        %v10515 = vsel %vm530, %v10513, %v10514
        %v10516 = vrot.slane %v10514, 4
        %v10517 = vrot.slane %v10378, 6
        %v10518 = vsel %vm530, %v10516, %v10517
        %v10519 = vrot.slane %v10379, 6
        %v10520 = vrot.slane %v10519, 4
        %v10521 = vrot.slane %v10380, 6
        %v10522 = vsel %vm530, %v10520, %v10521
        %v10523 = vrot.slane %v10521, 4
        %v10524 = vrot.slane %v10381, 6
        %v10525 = vsel %vm530, %v10523, %v10524
        %v10526 = vrot.slane %v10382, 6
        %v10527 = vrot.slane %v10526, 4
        %v10528 = vrot.slane %v10383, 6
        %v10529 = vsel %vm530, %v10527, %v10528
        %v10530 = vrot.slane %v10528, 4
        %v10531 = vrot.slane %v10384, 6
        %v10532 = vsel %vm530, %v10530, %v10531
        %v10533 = vrot.slane %v10385, 6
        %v10534 = vrot.slane %v10533, 4
        %v10535 = vrot.slane %v10386, 6
        %v10536 = vsel %vm530, %v10534, %v10535
        %v10537 = vrot.slane %v10535, 4
        %v10538 = vrot.slane %v10387, 6
        %v10539 = vsel %vm530, %v10537, %v10538
        %v10540 = vrot.slane %v10388, 6
        %v10541 = vrot.slane %v10540, 4
        %v10542 = vrot.slane %v10389, 6
        %v10543 = vsel %vm530, %v10541, %v10542
        %v10544 = vrot.slane %v10542, 4
        %v10545 = vrot.slane %v10390, 6
        %v10546 = vsel %vm530, %v10544, %v10545
        %v10547 = vrot.slane %v10391, 6
        %v10548 = vrot.slane %v10547, 4
        %v10549 = vrot.slane %v10392, 6
        %v10550 = vsel %vm530, %v10548, %v10549
        %v10551 = vrot.slane %v10549, 4
        %v10552 = vrot.slane %v10393, 6
        %v10553 = vsel %vm530, %v10551, %v10552
        %v10554 = vunpack.c.l.b16 %v10445
        %v10555 = vunpack.c.l.b16 %v10448
        %v10556 = vunpack.c.l.b16 %v10452
        %v10557 = vunpack.c.l.b16 %v10455
        %v10558 = vunpack.c.l.b16 %v10459
        %v10559 = vunpack.c.l.b16 %v10462
        %v10560 = vunpack.c.l.b16 %v10466
        %v10561 = vunpack.c.l.b16 %v10469
        %v10562 = vunpack.c.l.b16 %v10473
        %v10563 = vunpack.c.l.b16 %v10476
        %v10564 = vunpack.c.l.b16 %v10480
        %v10565 = vunpack.c.l.b16 %v10483
        %v10566 = vunpack.c.l.b16 %v10487
        %v10567 = vunpack.c.l.b16 %v10490
        %v10568 = vunpack.c.l.b16 %v10494
        %v10569 = vunpack.c.l.b16 %v10497
        %v10570 = vunpack.c.l.b16 %v10501
        %v10571 = vunpack.c.l.b16 %v10504
        %v10572 = vunpack.c.l.b16 %v10508
        %v10573 = vunpack.c.l.b16 %v10511
        %v10574 = vunpack.c.l.b16 %v10515
        %v10575 = vunpack.c.l.b16 %v10518
        %v10576 = vunpack.c.l.b16 %v10522
        %v10577 = vunpack.c.l.b16 %v10525
        %v10578 = vunpack.c.l.b16 %v10529
        %v10579 = vunpack.c.l.b16 %v10532
        %v10580 = vunpack.c.l.b16 %v10536
        %v10581 = vunpack.c.l.b16 %v10539
        %v10582 = vunpack.c.l.b16 %v10543
        %v10583 = vunpack.c.l.b16 %v10546
        %v10584 = vunpack.c.l.b16 %v10550
        %v10585 = vunpack.c.l.b16 %v10553
        %v10586 = vpack.c.b16 %v10555, %v10554
        %v10587 = vpack.c.b16 %v10557, %v10556
        %v10588 = vpack.c.b16 %v10559, %v10558
        %v10589 = vpack.c.b16 %v10561, %v10560
        %v10590 = vpack.c.b16 %v10563, %v10562
        %v10591 = vpack.c.b16 %v10565, %v10564
        %v10592 = vpack.c.b16 %v10567, %v10566
        %v10593 = vpack.c.b16 %v10569, %v10568
        %v10594 = vpack.c.b16 %v10571, %v10570
        %v10595 = vpack.c.b16 %v10573, %v10572
        %v10596 = vpack.c.b16 %v10575, %v10574
        %v10597 = vpack.c.b16 %v10577, %v10576
        %v10598 = vpack.c.b16 %v10579, %v10578
        %v10599 = vpack.c.b16 %v10581, %v10580
        %v10600 = vpack.c.b16 %v10583, %v10582
        %v10601 = vpack.c.b16 %v10585, %v10584
        %10602 = vrot.lane.b32.xlu0 %v10586, 32
        %v10603 = vpop.permute.xlu0 %10602
        %10604 = vrot.lane.b32.xlu0 %v10587, 32
        %v10605 = vpop.permute.xlu0 %10604
        %10606 = vrot.lane.b32.xlu0 %v10588, 32
        %v10607 = vpop.permute.xlu0 %10606
        %10608 = vrot.lane.b32.xlu0 %v10589, 32
        %v10609 = vpop.permute.xlu0 %10608
        %10610 = vrot.lane.b32.xlu0 %v10590, 32
        %v10611 = vpop.permute.xlu0 %10610
        %10612 = vrot.lane.b32.xlu0 %v10591, 32
        %v10613 = vpop.permute.xlu0 %10612
        %10614 = vrot.lane.b32.xlu0 %v10592, 32
        %v10615 = vpop.permute.xlu0 %10614
        %10616 = vrot.lane.b32.xlu0 %v10593, 32
        %v10617 = vpop.permute.xlu0 %10616
        %10618 = vrot.lane.b32.xlu0 %v10594, 32
        %v10619 = vpop.permute.xlu0 %10618
        %10620 = vrot.lane.b32.xlu0 %v10595, 32
        %v10621 = vpop.permute.xlu0 %10620
        %10622 = vrot.lane.b32.xlu0 %v10596, 32
        %v10623 = vpop.permute.xlu0 %10622
        %10624 = vrot.lane.b32.xlu0 %v10597, 32
        %v10625 = vpop.permute.xlu0 %10624
        %10626 = vrot.lane.b32.xlu0 %v10598, 32
        %v10627 = vpop.permute.xlu0 %10626
        %10628 = vrot.lane.b32.xlu0 %v10599, 32
        %v10629 = vpop.permute.xlu0 %10628
        %10630 = vrot.lane.b32.xlu0 %v10600, 32
        %v10631 = vpop.permute.xlu0 %10630
        %10632 = vrot.lane.b32.xlu0 %v10601, 32
        %v10633 = vpop.permute.xlu0 %10632
        %10650 = vst.msk [vmem:[#allocation3 + $0x30] sm:$0xff] %vm1592, %v10603
        %10651 = vst.msk [vmem:[#allocation3 + $0x68] sm:$0xff] %vm1592, %v10605
        %10652 = vst.msk [vmem:[#allocation3 + $0xa0] sm:$0xff] %vm1592, %v10607
        %10653 = vst.msk [vmem:[#allocation3 + $0xd8] sm:$0xff] %vm1592, %v10609
        %10654 = vst.msk [vmem:[#allocation3 + $0x110] sm:$0xff] %vm1592, %v10611
        %10655 = vst.msk [vmem:[#allocation3 + $0x148] sm:$0xff] %vm1592, %v10613
        %10656 = vst.msk [vmem:[#allocation3 + $0x180] sm:$0xff] %vm1592, %v10615
        %10657 = vst.msk [vmem:[#allocation3 + $0x1b8] sm:$0xff] %vm1592, %v10617
        %10658 = vst.msk [vmem:[#allocation3 + $0x1f0] sm:$0xff] %vm1592, %v10619
        %10659 = vst.msk [vmem:[#allocation3 + $0x228] sm:$0xff] %vm1592, %v10621
        %10660 = vst.msk [vmem:[#allocation3 + $0x260] sm:$0xff] %vm1592, %v10623
        %10661 = vst.msk [vmem:[#allocation3 + $0x298] sm:$0xff] %vm1592, %v10625
        %10662 = vst.msk [vmem:[#allocation3 + $0x2d0] sm:$0xff] %vm1592, %v10627
        %10663 = vst.msk [vmem:[#allocation3 + $0x308] sm:$0xff] %vm1592, %v10629
        %10664 = vst.msk [vmem:[#allocation3 + $0x340] sm:$0xff] %vm1592, %v10631
        %10665 = vst.msk [vmem:[#allocation3 + $0x378] sm:$0xff] %vm1592, %v10633
        %v10666 = vld [vmem:[%s10201 + $0x4] sm:$0xf]
        %v10667 = vld [vmem:[%s10201 + $0x8] sm:$0xf]
        %v10668 = vld [vmem:[%s10201 + $0x10] sm:$0xf]
        %v10669 = vld [vmem:[%s10201 + $0x14] sm:$0xf]
        %v10670 = vld [vmem:[%s10201 + $0x1c] sm:$0xf]
        %v10671 = vld [vmem:[%s10201 + $0x20] sm:$0xf]
        %v10672 = vld [vmem:[%s10201 + $0x28] sm:$0xf]
        %v10673 = vld [vmem:[%s10201 + $0x2c] sm:$0xf]
        %v10674 = vld [vmem:[%s10201 + $0x34] sm:$0xf]
        %v10675 = vld [vmem:[%s10201 + $0x38] sm:$0xf]
        %v10676 = vld [vmem:[%s10201 + $0x40] sm:$0xf]
        %v10677 = vld [vmem:[%s10201 + $0x44] sm:$0xf]
        %v10678 = vld [vmem:[%s10201 + $0x4c] sm:$0xf]
        %v10679 = vld [vmem:[%s10201 + $0x50] sm:$0xf]
        %v10680 = vld [vmem:[%s10201 + $0x58] sm:$0xf]
        %v10681 = vld [vmem:[%s10201 + $0x5c] sm:$0xf]
        %v10682 = vld [vmem:[%s10201 + $0x64] sm:$0xf]
        %v10683 = vld [vmem:[%s10201 + $0x68] sm:$0xf]
        %v10684 = vld [vmem:[%s10201 + $0x70] sm:$0xf]
        %v10685 = vld [vmem:[%s10201 + $0x74] sm:$0xf]
        %v10686 = vld [vmem:[%s10201 + $0x7c] sm:$0xf]
        %v10687 = vld [vmem:[%s10201 + $0x80] sm:$0xf]
        %v10688 = vld [vmem:[%s10201 + $0x88] sm:$0xf]
        %v10689 = vld [vmem:[%s10201 + $0x8c] sm:$0xf]
        %v10690 = vld [vmem:[%s10201 + $0x94] sm:$0xf]
        %v10691 = vld [vmem:[%s10201 + $0x98] sm:$0xf]
        %v10692 = vld [vmem:[%s10201 + $0xa0] sm:$0xf]
        %v10693 = vld [vmem:[%s10201 + $0xa4] sm:$0xf]
        %v10694 = vld [vmem:[%s10201 + $0xac] sm:$0xf]
        %v10695 = vld [vmem:[%s10201 + $0xb0] sm:$0xf]
        %v10696 = vld [vmem:[%s10201 + $0xb8] sm:$0xf]
        %v10697 = vld [vmem:[%s10201 + $0xbc] sm:$0xf]
        %v10730 = vunpack.c.l.b16 %v10666
        %v10731 = vunpack.c.l.b16 %v10667
        %v10732 = vunpack.c.l.b16 %v10668
        %v10733 = vunpack.c.l.b16 %v10669
        %v10734 = vunpack.c.l.b16 %v10670
        %v10735 = vunpack.c.l.b16 %v10671
        %v10736 = vunpack.c.l.b16 %v10672
        %v10737 = vunpack.c.l.b16 %v10673
        %v10738 = vunpack.c.l.b16 %v10674
        %v10739 = vunpack.c.l.b16 %v10675
        %v10740 = vunpack.c.l.b16 %v10676
        %v10741 = vunpack.c.l.b16 %v10677
        %v10742 = vunpack.c.l.b16 %v10678
        %v10743 = vunpack.c.l.b16 %v10679
        %v10744 = vunpack.c.l.b16 %v10680
        %v10745 = vunpack.c.l.b16 %v10681
        %v10746 = vunpack.c.l.b16 %v10682
        %v10747 = vunpack.c.l.b16 %v10683
        %v10748 = vunpack.c.l.b16 %v10684
        %v10749 = vunpack.c.l.b16 %v10685
        %v10750 = vunpack.c.l.b16 %v10686
        %v10751 = vunpack.c.l.b16 %v10687
        %v10752 = vunpack.c.l.b16 %v10688
        %v10753 = vunpack.c.l.b16 %v10689
        %v10754 = vunpack.c.l.b16 %v10690
        %v10755 = vunpack.c.l.b16 %v10691
        %v10756 = vunpack.c.l.b16 %v10692
        %v10757 = vunpack.c.l.b16 %v10693
        %v10758 = vunpack.c.l.b16 %v10694
        %v10759 = vunpack.c.l.b16 %v10695
        %v10760 = vunpack.c.l.b16 %v10696
        %v10761 = vunpack.c.l.b16 %v10697
        %v10762 = vpack.c.b16 %v10731, %v10730
        %v10763 = vpack.c.b16 %v10733, %v10732
        %v10764 = vpack.c.b16 %v10735, %v10734
        %v10765 = vpack.c.b16 %v10737, %v10736
        %v10766 = vpack.c.b16 %v10739, %v10738
        %v10767 = vpack.c.b16 %v10741, %v10740
        %v10768 = vpack.c.b16 %v10743, %v10742
        %v10769 = vpack.c.b16 %v10745, %v10744
        %v10770 = vpack.c.b16 %v10747, %v10746
        %v10771 = vpack.c.b16 %v10749, %v10748
        %v10772 = vpack.c.b16 %v10751, %v10750
        %v10773 = vpack.c.b16 %v10753, %v10752
        %v10774 = vpack.c.b16 %v10755, %v10754
        %v10775 = vpack.c.b16 %v10757, %v10756
        %v10776 = vpack.c.b16 %v10759, %v10758
        %v10777 = vpack.c.b16 %v10761, %v10760
        %10778 = vrot.lane.b32.xlu0 %v10762, 64
        %v10779 = vpop.permute.xlu0 %10778
        %10780 = vrot.lane.b32.xlu0 %v10763, 64
        %v10781 = vpop.permute.xlu0 %10780
        %10782 = vrot.lane.b32.xlu0 %v10764, 64
        %v10783 = vpop.permute.xlu0 %10782
        %10784 = vrot.lane.b32.xlu0 %v10765, 64
        %v10785 = vpop.permute.xlu0 %10784
        %10786 = vrot.lane.b32.xlu0 %v10766, 64
        %v10787 = vpop.permute.xlu0 %10786
        %10788 = vrot.lane.b32.xlu0 %v10767, 64
        %v10789 = vpop.permute.xlu0 %10788
        %10790 = vrot.lane.b32.xlu0 %v10768, 64
        %v10791 = vpop.permute.xlu0 %10790
        %10792 = vrot.lane.b32.xlu0 %v10769, 64
        %v10793 = vpop.permute.xlu0 %10792
        %10794 = vrot.lane.b32.xlu0 %v10770, 64
        %v10795 = vpop.permute.xlu0 %10794
        %10796 = vrot.lane.b32.xlu0 %v10771, 64
        %v10797 = vpop.permute.xlu0 %10796
        %10798 = vrot.lane.b32.xlu0 %v10772, 64
        %v10799 = vpop.permute.xlu0 %10798
        %10800 = vrot.lane.b32.xlu0 %v10773, 64
        %v10801 = vpop.permute.xlu0 %10800
        %10802 = vrot.lane.b32.xlu0 %v10774, 64
        %v10803 = vpop.permute.xlu0 %10802
        %10804 = vrot.lane.b32.xlu0 %v10775, 64
        %v10805 = vpop.permute.xlu0 %10804
        %10806 = vrot.lane.b32.xlu0 %v10776, 64
        %v10807 = vpop.permute.xlu0 %10806
        %10808 = vrot.lane.b32.xlu0 %v10777, 64
        %v10809 = vpop.permute.xlu0 %10808
        %10826 = vst.msk [vmem:[#allocation3 + $0x30] sm:$0xff] %vm2204, %v10779
        %10827 = vst.msk [vmem:[#allocation3 + $0x68] sm:$0xff] %vm2204, %v10781
        %10828 = vst.msk [vmem:[#allocation3 + $0xa0] sm:$0xff] %vm2204, %v10783
        %10829 = vst.msk [vmem:[#allocation3 + $0xd8] sm:$0xff] %vm2204, %v10785
        %10830 = vst.msk [vmem:[#allocation3 + $0x110] sm:$0xff] %vm2204, %v10787
        %10831 = vst.msk [vmem:[#allocation3 + $0x148] sm:$0xff] %vm2204, %v10789
        %10832 = vst.msk [vmem:[#allocation3 + $0x180] sm:$0xff] %vm2204, %v10791
        %10833 = vst.msk [vmem:[#allocation3 + $0x1b8] sm:$0xff] %vm2204, %v10793
        %10834 = vst.msk [vmem:[#allocation3 + $0x1f0] sm:$0xff] %vm2204, %v10795
        %10835 = vst.msk [vmem:[#allocation3 + $0x228] sm:$0xff] %vm2204, %v10797
        %10836 = vst.msk [vmem:[#allocation3 + $0x260] sm:$0xff] %vm2204, %v10799
        %10837 = vst.msk [vmem:[#allocation3 + $0x298] sm:$0xff] %vm2204, %v10801
        %10838 = vst.msk [vmem:[#allocation3 + $0x2d0] sm:$0xff] %vm2204, %v10803
        %10839 = vst.msk [vmem:[#allocation3 + $0x308] sm:$0xff] %vm2204, %v10805
        %10840 = vst.msk [vmem:[#allocation3 + $0x340] sm:$0xff] %vm2204, %v10807
        %10841 = vst.msk [vmem:[#allocation3 + $0x378] sm:$0xff] %vm2204, %v10809
        %v10842 = vld [vmem:[#allocation3] sm:$0xff]
        %v10843 = vld [vmem:[#allocation3 + $0x8] sm:$0xff]
        %v10844 = vld [vmem:[#allocation3 + $0x10] sm:$0xff]
        %v10845 = vld [vmem:[#allocation3 + $0x18] sm:$0xff]
        %v10846 = vld [vmem:[#allocation3 + $0x20] sm:$0xff]
        %v10847 = vld [vmem:[#allocation3 + $0x28] sm:$0xff]
        %v10848 = vld [vmem:[#allocation3 + $0x30] sm:$0xff]
        %v10849 = vld [vmem:[#allocation3 + $0x38] sm:$0xff]
        %v10850 = vld [vmem:[#allocation3 + $0x40] sm:$0xff]
        %v10851 = vld [vmem:[#allocation3 + $0x48] sm:$0xff]
        %v10852 = vld [vmem:[#allocation3 + $0x50] sm:$0xff]
        %v10853 = vld [vmem:[#allocation3 + $0x58] sm:$0xff]
        %v10854 = vld [vmem:[#allocation3 + $0x60] sm:$0xff]
        %v10855 = vld [vmem:[#allocation3 + $0x68] sm:$0xff]
        %v10856 = vld [vmem:[#allocation3 + $0x70] sm:$0xff]
        %v10857 = vld [vmem:[#allocation3 + $0x78] sm:$0xff]
        %v10858 = vld [vmem:[#allocation3 + $0x80] sm:$0xff]
        %v10859 = vld [vmem:[#allocation3 + $0x88] sm:$0xff]
        %v10860 = vld [vmem:[#allocation3 + $0x90] sm:$0xff]
        %v10861 = vld [vmem:[#allocation3 + $0x98] sm:$0xff]
        %v10862 = vld [vmem:[#allocation3 + $0xa0] sm:$0xff]
        %v10863 = vld [vmem:[#allocation3 + $0xa8] sm:$0xff]
        %v10864 = vld [vmem:[#allocation3 + $0xb0] sm:$0xff]
        %v10865 = vld [vmem:[#allocation3 + $0xb8] sm:$0xff]
        %v10866 = vld [vmem:[#allocation3 + $0xc0] sm:$0xff]
        %v10867 = vld [vmem:[#allocation3 + $0xc8] sm:$0xff]
        %v10868 = vld [vmem:[#allocation3 + $0xd0] sm:$0xff]
        %v10869 = vld [vmem:[#allocation3 + $0xd8] sm:$0xff]
        %v10870 = vld [vmem:[#allocation3 + $0xe0] sm:$0xff]
        %v10871 = vld [vmem:[#allocation3 + $0xe8] sm:$0xff]
        %v10872 = vld [vmem:[#allocation3 + $0xf0] sm:$0xff]
        %v10873 = vld [vmem:[#allocation3 + $0xf8] sm:$0xff]
        %v10874 = vld [vmem:[#allocation3 + $0x100] sm:$0xff]
        %v10875 = vld [vmem:[#allocation3 + $0x108] sm:$0xff]
        %v10876 = vld [vmem:[#allocation3 + $0x110] sm:$0xff]
        %v10877 = vld [vmem:[#allocation3 + $0x118] sm:$0xff]
        %v10878 = vld [vmem:[#allocation3 + $0x120] sm:$0xff]
        %v10879 = vld [vmem:[#allocation3 + $0x128] sm:$0xff]
        %v10880 = vld [vmem:[#allocation3 + $0x130] sm:$0xff]
        %v10881 = vld [vmem:[#allocation3 + $0x138] sm:$0xff]
        %v10882 = vld [vmem:[#allocation3 + $0x140] sm:$0xff]
        %v10883 = vld [vmem:[#allocation3 + $0x148] sm:$0xff]
        %v10884 = vld [vmem:[#allocation3 + $0x150] sm:$0xff]
        %v10885 = vld [vmem:[#allocation3 + $0x158] sm:$0xff]
        %v10886 = vld [vmem:[#allocation3 + $0x160] sm:$0xff]
        %v10887 = vld [vmem:[#allocation3 + $0x168] sm:$0xff]
        %v10888 = vld [vmem:[#allocation3 + $0x170] sm:$0xff]
        %v10889 = vld [vmem:[#allocation3 + $0x178] sm:$0xff]
        %v10890 = vld [vmem:[#allocation3 + $0x180] sm:$0xff]
        %v10891 = vld [vmem:[#allocation3 + $0x188] sm:$0xff]
        %v10892 = vld [vmem:[#allocation3 + $0x190] sm:$0xff]
        %v10893 = vld [vmem:[#allocation3 + $0x198] sm:$0xff]
        %v10894 = vld [vmem:[#allocation3 + $0x1a0] sm:$0xff]
        %v10895 = vld [vmem:[#allocation3 + $0x1a8] sm:$0xff]
        %v10896 = vld [vmem:[#allocation3 + $0x1b0] sm:$0xff]
        %v10897 = vld [vmem:[#allocation3 + $0x1b8] sm:$0xff]
        %v10898 = vld [vmem:[#allocation3 + $0x1c0] sm:$0xff]
        %v10899 = vld [vmem:[#allocation3 + $0x1c8] sm:$0xff]
        %v10900 = vld [vmem:[#allocation3 + $0x1d0] sm:$0xff]
        %v10901 = vld [vmem:[#allocation3 + $0x1d8] sm:$0xff]
        %v10902 = vld [vmem:[#allocation3 + $0x1e0] sm:$0xff]
        %v10903 = vld [vmem:[#allocation3 + $0x1e8] sm:$0xff]
        %v10904 = vld [vmem:[#allocation3 + $0x1f0] sm:$0xff]
        %v10905 = vld [vmem:[#allocation3 + $0x1f8] sm:$0xff]
        %v10906 = vld [vmem:[#allocation3 + $0x200] sm:$0xff]
        %v10907 = vld [vmem:[#allocation3 + $0x208] sm:$0xff]
        %v10908 = vld [vmem:[#allocation3 + $0x210] sm:$0xff]
        %v10909 = vld [vmem:[#allocation3 + $0x218] sm:$0xff]
        %v10910 = vld [vmem:[#allocation3 + $0x220] sm:$0xff]
        %v10911 = vld [vmem:[#allocation3 + $0x228] sm:$0xff]
        %v10912 = vld [vmem:[#allocation3 + $0x230] sm:$0xff]
        %v10913 = vld [vmem:[#allocation3 + $0x238] sm:$0xff]
        %v10914 = vld [vmem:[#allocation3 + $0x240] sm:$0xff]
        %v10915 = vld [vmem:[#allocation3 + $0x248] sm:$0xff]
        %v10916 = vld [vmem:[#allocation3 + $0x250] sm:$0xff]
        %v10917 = vld [vmem:[#allocation3 + $0x258] sm:$0xff]
        %v10918 = vld [vmem:[#allocation3 + $0x260] sm:$0xff]
        %v10919 = vld [vmem:[#allocation3 + $0x268] sm:$0xff]
        %v10920 = vld [vmem:[#allocation3 + $0x270] sm:$0xff]
        %v10921 = vld [vmem:[#allocation3 + $0x278] sm:$0xff]
        %v10922 = vld [vmem:[#allocation3 + $0x280] sm:$0xff]
        %v10923 = vld [vmem:[#allocation3 + $0x288] sm:$0xff]
        %v10924 = vld [vmem:[#allocation3 + $0x290] sm:$0xff]
        %v10925 = vld [vmem:[#allocation3 + $0x298] sm:$0xff]
        %v10926 = vld [vmem:[#allocation3 + $0x2a0] sm:$0xff]
        %v10927 = vld [vmem:[#allocation3 + $0x2a8] sm:$0xff]
        %v10928 = vld [vmem:[#allocation3 + $0x2b0] sm:$0xff]
        %v10929 = vld [vmem:[#allocation3 + $0x2b8] sm:$0xff]
        %v10930 = vld [vmem:[#allocation3 + $0x2c0] sm:$0xff]
        %v10931 = vld [vmem:[#allocation3 + $0x2c8] sm:$0xff]
        %v10932 = vld [vmem:[#allocation3 + $0x2d0] sm:$0xff]
        %v10933 = vld [vmem:[#allocation3 + $0x2d8] sm:$0xff]
        %v10934 = vld [vmem:[#allocation3 + $0x2e0] sm:$0xff]
        %v10935 = vld [vmem:[#allocation3 + $0x2e8] sm:$0xff]
        %v10936 = vld [vmem:[#allocation3 + $0x2f0] sm:$0xff]
        %v10937 = vld [vmem:[#allocation3 + $0x2f8] sm:$0xff]
        %v10938 = vld [vmem:[#allocation3 + $0x300] sm:$0xff]
        %v10939 = vld [vmem:[#allocation3 + $0x308] sm:$0xff]
        %v10940 = vld [vmem:[#allocation3 + $0x310] sm:$0xff]
        %v10941 = vld [vmem:[#allocation3 + $0x318] sm:$0xff]
        %v10942 = vld [vmem:[#allocation3 + $0x320] sm:$0xff]
        %v10943 = vld [vmem:[#allocation3 + $0x328] sm:$0xff]
        %v10944 = vld [vmem:[#allocation3 + $0x330] sm:$0xff]
        %v10945 = vld [vmem:[#allocation3 + $0x338] sm:$0xff]
        %v10946 = vld [vmem:[#allocation3 + $0x340] sm:$0xff]
        %v10947 = vld [vmem:[#allocation3 + $0x348] sm:$0xff]
        %v10948 = vld [vmem:[#allocation3 + $0x350] sm:$0xff]
        %v10949 = vld [vmem:[#allocation3 + $0x358] sm:$0xff]
        %v10950 = vld [vmem:[#allocation3 + $0x360] sm:$0xff]
        %v10951 = vld [vmem:[#allocation3 + $0x368] sm:$0xff]
        %v10952 = vld [vmem:[#allocation3 + $0x370] sm:$0xff]
        %v10953 = vld [vmem:[#allocation3 + $0x378] sm:$0xff]
        %v10954 = vld [vmem:[%s3] sm:$0xf]
        %v10955 = vld [vmem:[%s3 + $0x4] sm:$0xf]
        %v10956 = vld [vmem:[%s3 + $0x8] sm:$0xf]
        %v10957 = vld [vmem:[%s3 + $0xc] sm:$0xf]
        %v10958 = vld [vmem:[%s3 + $0x10] sm:$0xf]
        %v10959 = vld [vmem:[%s3 + $0x14] sm:$0xf]
        %v10960 = vld [vmem:[%s3 + $0x18] sm:$0xf]
        %v10961 = vld [vmem:[%s3 + $0x1c] sm:$0xf]
        %v10962 = vld [vmem:[%s3 + $0x20] sm:$0xf]
        %v10963 = vld [vmem:[%s3 + $0x24] sm:$0xf]
        %v10964 = vld [vmem:[%s3 + $0x28] sm:$0xf]
        %v10965 = vld [vmem:[%s3 + $0x2c] sm:$0xf]
        %v10966 = vld [vmem:[%s3 + $0x30] sm:$0xf]
        %v10967 = vld [vmem:[%s3 + $0x34] sm:$0xf]
        %v10968 = vld [vmem:[%s3 + $0x38] sm:$0xf]
        %v10969 = vld [vmem:[%s3 + $0x3c] sm:$0xf]
        %v10970 = vld [vmem:[%s3 + $0x40] sm:$0xf]
        %v10971 = vld [vmem:[%s3 + $0x44] sm:$0xf]
        %v10972 = vld [vmem:[%s3 + $0x48] sm:$0xf]
        %v10973 = vld [vmem:[%s3 + $0x4c] sm:$0xf]
        %v10974 = vld [vmem:[%s3 + $0x50] sm:$0xf]
        %v10975 = vld [vmem:[%s3 + $0x54] sm:$0xf]
        %v10976 = vld [vmem:[%s3 + $0x58] sm:$0xf]
        %v10977 = vld [vmem:[%s3 + $0x5c] sm:$0xf]
        %v10978 = vld [vmem:[%s3 + $0x60] sm:$0xf]
        %v10979 = vld [vmem:[%s3 + $0x64] sm:$0xf]
        %v10980 = vld [vmem:[%s3 + $0x68] sm:$0xf]
        %v10981 = vld [vmem:[%s3 + $0x6c] sm:$0xf]
        %v10982 = vld [vmem:[%s3 + $0x70] sm:$0xf]
        %v10983 = vld [vmem:[%s3 + $0x74] sm:$0xf]
        %v10984 = vld [vmem:[%s3 + $0x78] sm:$0xf]
        %v10985 = vld [vmem:[%s3 + $0x7c] sm:$0xf]
        %v10986 = vld [vmem:[%s3 + $0x80] sm:$0xf]
        %v10987 = vld [vmem:[%s3 + $0x84] sm:$0xf]
        %v10988 = vld [vmem:[%s3 + $0x88] sm:$0xf]
        %v10989 = vld [vmem:[%s3 + $0x8c] sm:$0xf]
        %v10990 = vld [vmem:[%s3 + $0x90] sm:$0xf]
        %v10991 = vld [vmem:[%s3 + $0x94] sm:$0xf]
        %v10992 = vld [vmem:[%s3 + $0x98] sm:$0xf]
        %v10993 = vld [vmem:[%s3 + $0x9c] sm:$0xf]
        %v10994 = vld [vmem:[%s3 + $0xa0] sm:$0xf]
        %v10995 = vld [vmem:[%s3 + $0xa4] sm:$0xf]
        %v10996 = vld [vmem:[%s3 + $0xa8] sm:$0xf]
        %v10997 = vld [vmem:[%s3 + $0xac] sm:$0xf]
        %v10998 = vld [vmem:[%s3 + $0xb0] sm:$0xf]
        %v10999 = vld [vmem:[%s3 + $0xb4] sm:$0xf]
        %v11000 = vld [vmem:[%s3 + $0xb8] sm:$0xf]
        %v11001 = vld [vmem:[%s3 + $0xbc] sm:$0xf]
        %v11002 = vld [vmem:[%s3 + $0xc0] sm:$0xf]
        %v11003 = vld [vmem:[%s3 + $0xc4] sm:$0xf]
        %v11004 = vld [vmem:[%s3 + $0xc8] sm:$0xf]
        %v11005 = vld [vmem:[%s3 + $0xcc] sm:$0xf]
        %v11006 = vld [vmem:[%s3 + $0xd0] sm:$0xf]
        %v11007 = vld [vmem:[%s3 + $0xd4] sm:$0xf]
        %v11008 = vld [vmem:[%s3 + $0xd8] sm:$0xf]
        %v11009 = vld [vmem:[%s3 + $0xdc] sm:$0xf]
        %v11010 = vld [vmem:[%s3 + $0xe0] sm:$0xf]
        %v11011 = vld [vmem:[%s3 + $0xe4] sm:$0xf]
        %v11012 = vld [vmem:[%s3 + $0xe8] sm:$0xf]
        %v11013 = vld [vmem:[%s3 + $0xec] sm:$0xf]
        %v11014 = vld [vmem:[%s3 + $0xf0] sm:$0xf]
        %v11015 = vld [vmem:[%s3 + $0xf4] sm:$0xf]
        %v11016 = vld [vmem:[%s3 + $0xf8] sm:$0xf]
        %v11017 = vld [vmem:[%s3 + $0xfc] sm:$0xf]
        %v11018 = vld [vmem:[%s3 + $0x100] sm:$0xf]
        %v11019 = vld [vmem:[%s3 + $0x104] sm:$0xf]
        %v11020 = vld [vmem:[%s3 + $0x108] sm:$0xf]
        %v11021 = vld [vmem:[%s3 + $0x10c] sm:$0xf]
        %v11022 = vld [vmem:[%s3 + $0x110] sm:$0xf]
        %v11023 = vld [vmem:[%s3 + $0x114] sm:$0xf]
        %v11024 = vld [vmem:[%s3 + $0x118] sm:$0xf]
        %v11025 = vld [vmem:[%s3 + $0x11c] sm:$0xf]
        %v11026 = vld [vmem:[%s3 + $0x120] sm:$0xf]
        %v11027 = vld [vmem:[%s3 + $0x124] sm:$0xf]
        %v11028 = vld [vmem:[%s3 + $0x128] sm:$0xf]
        %v11029 = vld [vmem:[%s3 + $0x12c] sm:$0xf]
        %v11030 = vld [vmem:[%s3 + $0x130] sm:$0xf]
        %v11031 = vld [vmem:[%s3 + $0x134] sm:$0xf]
        %v11032 = vld [vmem:[%s3 + $0x138] sm:$0xf]
        %v11033 = vld [vmem:[%s3 + $0x13c] sm:$0xf]
        %v11034 = vld [vmem:[%s3 + $0x140] sm:$0xf]
        %v11035 = vld [vmem:[%s3 + $0x144] sm:$0xf]
        %v11036 = vld [vmem:[%s3 + $0x148] sm:$0xf]
        %v11037 = vld [vmem:[%s3 + $0x14c] sm:$0xf]
        %v11038 = vld [vmem:[%s3 + $0x150] sm:$0xf]
        %v11039 = vld [vmem:[%s3 + $0x154] sm:$0xf]
        %v11040 = vld [vmem:[%s3 + $0x158] sm:$0xf]
        %v11041 = vld [vmem:[%s3 + $0x15c] sm:$0xf]
        %v11042 = vld [vmem:[%s3 + $0x160] sm:$0xf]
        %v11043 = vld [vmem:[%s3 + $0x164] sm:$0xf]
        %v11044 = vld [vmem:[%s3 + $0x168] sm:$0xf]
        %v11045 = vld [vmem:[%s3 + $0x16c] sm:$0xf]
        %v11046 = vld [vmem:[%s3 + $0x170] sm:$0xf]
        %v11047 = vld [vmem:[%s3 + $0x174] sm:$0xf]
        %v11048 = vld [vmem:[%s3 + $0x178] sm:$0xf]
        %v11049 = vld [vmem:[%s3 + $0x17c] sm:$0xf]
        %v11050 = vld [vmem:[%s3 + $0x180] sm:$0xf]
        %v11051 = vld [vmem:[%s3 + $0x184] sm:$0xf]
        %v11052 = vld [vmem:[%s3 + $0x188] sm:$0xf]
        %v11053 = vld [vmem:[%s3 + $0x18c] sm:$0xf]
        %v11054 = vld [vmem:[%s3 + $0x190] sm:$0xf]
        %v11055 = vld [vmem:[%s3 + $0x194] sm:$0xf]
        %v11056 = vld [vmem:[%s3 + $0x198] sm:$0xf]
        %v11057 = vld [vmem:[%s3 + $0x19c] sm:$0xf]
        %v11058 = vld [vmem:[%s3 + $0x1a0] sm:$0xf]
        %v11059 = vld [vmem:[%s3 + $0x1a4] sm:$0xf]
        %v11060 = vld [vmem:[%s3 + $0x1a8] sm:$0xf]
        %v11061 = vld [vmem:[%s3 + $0x1ac] sm:$0xf]
        %v11062 = vld [vmem:[%s4] sm:$0x1]
        %v11064 = vlaneseq
        %v11065 = vshrl.u32 %v11064, 7
        %v11066 = vsub.s32 0, %v11065
        %v11067 = vrot.slane %v11062, %v11066
        %v11177 = vunpack.c.l.b16 %v10954
        %v11178 = vunpack.c.l.b16 %v10955
        %v11179 = vunpack.c.l.b16 %v10956
        %v11180 = vunpack.c.l.b16 %v10957
        %v11181 = vunpack.c.l.b16 %v10958
        %v11182 = vunpack.c.l.b16 %v10959
        %v11183 = vunpack.c.l.b16 %v10960
        %v11184 = vunpack.c.l.b16 %v10961
        %v11185 = vunpack.c.l.b16 %v10962
        %v11186 = vunpack.c.l.b16 %v10963
        %v11187 = vunpack.c.l.b16 %v10964
        %v11188 = vunpack.c.l.b16 %v10965
        %v11189 = vunpack.c.l.b16 %v10966
        %v11190 = vunpack.c.l.b16 %v10967
        %v11191 = vunpack.c.l.b16 %v10968
        %v11192 = vunpack.c.l.b16 %v10969
        %v11193 = vunpack.c.l.b16 %v10970
        %v11194 = vunpack.c.l.b16 %v10971
        %v11195 = vunpack.c.l.b16 %v10972
        %v11196 = vunpack.c.l.b16 %v10973
        %v11197 = vunpack.c.l.b16 %v10974
        %v11198 = vunpack.c.l.b16 %v10975
        %v11199 = vunpack.c.l.b16 %v10976
        %v11200 = vunpack.c.l.b16 %v10977
        %v11201 = vunpack.c.l.b16 %v10978
        %v11202 = vunpack.c.l.b16 %v10979
        %v11203 = vunpack.c.l.b16 %v10980
        %v11204 = vunpack.c.l.b16 %v10981
        %v11205 = vunpack.c.l.b16 %v10982
        %v11206 = vunpack.c.l.b16 %v10983
        %v11207 = vunpack.c.l.b16 %v10984
        %v11208 = vunpack.c.l.b16 %v10985
        %v11209 = vunpack.c.l.b16 %v10986
        %v11210 = vunpack.c.l.b16 %v10987
        %v11211 = vunpack.c.l.b16 %v10988
        %v11212 = vunpack.c.l.b16 %v10989
        %v11213 = vunpack.c.l.b16 %v10990
        %v11214 = vunpack.c.l.b16 %v10991
        %v11215 = vunpack.c.l.b16 %v10992
        %v11216 = vunpack.c.l.b16 %v10993
        %v11217 = vunpack.c.l.b16 %v10994
        %v11218 = vunpack.c.l.b16 %v10995
        %v11219 = vunpack.c.l.b16 %v10996
        %v11220 = vunpack.c.l.b16 %v10997
        %v11221 = vunpack.c.l.b16 %v10998
        %v11222 = vunpack.c.l.b16 %v10999
        %v11223 = vunpack.c.l.b16 %v11000
        %v11224 = vunpack.c.l.b16 %v11001
        %v11225 = vunpack.c.l.b16 %v11002
        %v11226 = vunpack.c.l.b16 %v11003
        %v11227 = vunpack.c.l.b16 %v11004
        %v11228 = vunpack.c.l.b16 %v11005
        %v11229 = vunpack.c.l.b16 %v11006
        %v11230 = vunpack.c.l.b16 %v11007
        %v11231 = vunpack.c.l.b16 %v11008
        %v11232 = vunpack.c.l.b16 %v11009
        %v11233 = vunpack.c.l.b16 %v11010
        %v11234 = vunpack.c.l.b16 %v11011
        %v11235 = vunpack.c.l.b16 %v11012
        %v11236 = vunpack.c.l.b16 %v11013
        %v11237 = vunpack.c.l.b16 %v11014
        %v11238 = vunpack.c.l.b16 %v11015
        %v11239 = vunpack.c.l.b16 %v11016
        %v11240 = vunpack.c.l.b16 %v11017
        %v11241 = vunpack.c.l.b16 %v11018
        %v11242 = vunpack.c.l.b16 %v11019
        %v11243 = vunpack.c.l.b16 %v11020
        %v11244 = vunpack.c.l.b16 %v11021
        %v11245 = vunpack.c.l.b16 %v11022
        %v11246 = vunpack.c.l.b16 %v11023
        %v11247 = vunpack.c.l.b16 %v11024
        %v11248 = vunpack.c.l.b16 %v11025
        %v11249 = vunpack.c.l.b16 %v11026
        %v11250 = vunpack.c.l.b16 %v11027
        %v11251 = vunpack.c.l.b16 %v11028
        %v11252 = vunpack.c.l.b16 %v11029
        %v11253 = vunpack.c.l.b16 %v11030
        %v11254 = vunpack.c.l.b16 %v11031
        %v11255 = vunpack.c.l.b16 %v11032
        %v11256 = vunpack.c.l.b16 %v11033
        %v11257 = vunpack.c.l.b16 %v11034
        %v11258 = vunpack.c.l.b16 %v11035
        %v11259 = vunpack.c.l.b16 %v11036
        %v11260 = vunpack.c.l.b16 %v11037
        %v11261 = vunpack.c.l.b16 %v11038
        %v11262 = vunpack.c.l.b16 %v11039
        %v11263 = vunpack.c.l.b16 %v11040
        %v11264 = vunpack.c.l.b16 %v11041
        %v11265 = vunpack.c.l.b16 %v11042
        %v11266 = vunpack.c.l.b16 %v11043
        %v11267 = vunpack.c.l.b16 %v11044
        %v11268 = vunpack.c.l.b16 %v11045
        %v11269 = vunpack.c.l.b16 %v11046
        %v11270 = vunpack.c.l.b16 %v11047
        %v11271 = vunpack.c.l.b16 %v11048
        %v11272 = vunpack.c.l.b16 %v11049
        %v11273 = vunpack.c.l.b16 %v11050
        %v11274 = vunpack.c.l.b16 %v11051
        %v11275 = vunpack.c.l.b16 %v11052
        %v11276 = vunpack.c.l.b16 %v11053
        %v11277 = vunpack.c.l.b16 %v11054
        %v11278 = vunpack.c.l.b16 %v11055
        %v11279 = vunpack.c.l.b16 %v11056
        %v11280 = vunpack.c.l.b16 %v11057
        %v11281 = vunpack.c.l.b16 %v11058
        %v11282 = vunpack.c.l.b16 %v11059
        %v11283 = vunpack.c.l.b16 %v11060
        %v11284 = vunpack.c.l.b16 %v11061
        %v11285 = vpack.c.b16 %v11178, %v11177
        %v11286 = vpack.c.b16 %v11180, %v11179
        %v11287 = vpack.c.b16 %v11182, %v11181
        %v11288 = vpack.c.b16 %v11184, %v11183
        %v11289 = vpack.c.b16 %v11186, %v11185
        %v11290 = vpack.c.b16 %v11188, %v11187
        %v11291 = vpack.c.b16 %v11190, %v11189
        %v11292 = vpack.c.b16 %v11192, %v11191
        %v11293 = vpack.c.b16 %v11194, %v11193
        %v11294 = vpack.c.b16 %v11196, %v11195
        %v11295 = vpack.c.b16 %v11198, %v11197
        %v11296 = vpack.c.b16 %v11200, %v11199
        %v11297 = vpack.c.b16 %v11202, %v11201
        %v11298 = vpack.c.b16 %v11204, %v11203
        %v11299 = vpack.c.b16 %v11206, %v11205
        %v11300 = vpack.c.b16 %v11208, %v11207
        %v11301 = vpack.c.b16 %v11210, %v11209
        %v11302 = vpack.c.b16 %v11212, %v11211
        %v11303 = vpack.c.b16 %v11214, %v11213
        %v11304 = vpack.c.b16 %v11216, %v11215
        %v11305 = vpack.c.b16 %v11218, %v11217
        %v11306 = vpack.c.b16 %v11220, %v11219
        %v11307 = vpack.c.b16 %v11222, %v11221
        %v11308 = vpack.c.b16 %v11224, %v11223
        %v11309 = vpack.c.b16 %v11226, %v11225
        %v11310 = vpack.c.b16 %v11228, %v11227
        %v11311 = vpack.c.b16 %v11230, %v11229
        %v11312 = vpack.c.b16 %v11232, %v11231
        %v11313 = vpack.c.b16 %v11234, %v11233
        %v11314 = vpack.c.b16 %v11236, %v11235
        %v11315 = vpack.c.b16 %v11238, %v11237
        %v11316 = vpack.c.b16 %v11240, %v11239
        %v11317 = vpack.c.b16 %v11242, %v11241
        %v11318 = vpack.c.b16 %v11244, %v11243
        %v11319 = vpack.c.b16 %v11246, %v11245
        %v11320 = vpack.c.b16 %v11248, %v11247
        %v11321 = vpack.c.b16 %v11250, %v11249
        %v11322 = vpack.c.b16 %v11252, %v11251
        %v11323 = vpack.c.b16 %v11254, %v11253
        %v11324 = vpack.c.b16 %v11256, %v11255
        %v11325 = vpack.c.b16 %v11258, %v11257
        %v11326 = vpack.c.b16 %v11260, %v11259
        %v11327 = vpack.c.b16 %v11262, %v11261
        %v11328 = vpack.c.b16 %v11264, %v11263
        %v11329 = vpack.c.b16 %v11266, %v11265
        %v11330 = vpack.c.b16 %v11268, %v11267
        %v11331 = vpack.c.b16 %v11270, %v11269
        %v11332 = vpack.c.b16 %v11272, %v11271
        %v11333 = vpack.c.b16 %v11274, %v11273
        %v11334 = vpack.c.b16 %v11276, %v11275
        %v11335 = vpack.c.b16 %v11278, %v11277
        %v11336 = vpack.c.b16 %v11280, %v11279
        %v11337 = vpack.c.b16 %v11282, %v11281
        %v11338 = vpack.c.b16 %v11284, %v11283
        %vm11393 = vcmask 785408
        %v11395 = vsel %vm11393, %v10848, 0
        %v11398 = vsel %vm11393, %v10855, 0
        %v11401 = vsel %vm11393, %v10862, 0
        %v11404 = vsel %vm11393, %v10869, 0
        %v11407 = vsel %vm11393, %v10876, 0
        %v11410 = vsel %vm11393, %v10883, 0
        %v11413 = vsel %vm11393, %v10890, 0
        %v11416 = vsel %vm11393, %v10897, 0
        %v11419 = vsel %vm11393, %v10904, 0
        %v11422 = vsel %vm11393, %v10911, 0
        %v11425 = vsel %vm11393, %v10918, 0
        %v11428 = vsel %vm11393, %v10925, 0
        %v11431 = vsel %vm11393, %v10932, 0
        %v11434 = vsel %vm11393, %v10939, 0
        %v11437 = vsel %vm11393, %v10946, 0
        %v11440 = vsel %vm11393, %v10953, 0
        %11442 = vmatprep.subr.bf16.mxu0 0
        %11443 = vmatpush1.bf16.msra.mxu0 %v11285
        %11444 = vmatprep.subr.bf16.mxu0 0
        %11445 = vmatpush1.bf16.msra.mxu0 %v11286
        %11446 = vmatprep.subr.bf16.mxu0 0
        %11447 = vmatpush1.bf16.msra.mxu0 %v11287
        %11448 = vmatprep.subr.bf16.mxu0 0
        %11449 = vmatpush1.bf16.msra.mxu0 %v11288
        %11450 = vmatprep.subr.bf16.mxu0 0
        %11451 = vmatpush1.bf16.msra.mxu0 %v11289
        %11452 = vmatprep.subr.bf16.mxu0 0
        %11453 = vmatpush1.bf16.msra.mxu0 %v11290
        %11454 = vmatprep.subr.bf16.mxu0 0
        %11455 = vmatpush1.bf16.msra.mxu0 %v11291
        %11456 = vmatprep.subr.bf16.mxu0 0
        %11457 = vmatpush1.bf16.msra.mxu0 %v11292
        %11458 = vmatprep.subr.bf16.mxu0 0
        %11459 = vmatpush1.bf16.msra.mxu0 %v11293
        %11460 = vmatprep.subr.bf16.mxu0 0
        %11461 = vmatpush1.bf16.msra.mxu0 %v11294
        %11462 = vmatprep.subr.bf16.mxu0 0
        %11463 = vmatpush1.bf16.msra.mxu0 %v11295
        %11464 = vmatprep.subr.bf16.mxu0 0
        %11465 = vmatpush1.bf16.msra.mxu0 %v11296
        %11466 = vmatprep.subr.bf16.mxu0 0
        %11467 = vmatpush1.bf16.msra.mxu0 %v11297
        %11468 = vmatprep.subr.bf16.mxu0 0
        %11469 = vmatpush1.bf16.msra.mxu0 %v11298
        %11470 = vmatprep.subr.bf16.mxu0 0
        %11471 = vmatpush1.bf16.msra.mxu0 %v11299
        %11472 = vmatprep.subr.bf16.mxu0 0
        %11473 = vmatpush1.bf16.msra.mxu0 %v11300
        %11474 = vmatprep.mubr.bf16.mxu0 %v10843
        %11475 = vmatmul.mubr.bf16.gmra.mrb[0].mxu0 %v10842
        %v11476 = vpop.f32.mrb[0].mxu0
        %v11477 = vadd.f32 %v11067, %v11476
        %v11478 = vpop.f32.mrb[0].mxu0
        %v11479 = vpop.f32.mrb[0].mxu0
        %v11480 = vadd.f32 %v11067, %v11479
        %v11481 = vpop.f32.mrb[0].mxu0
        %11482 = vmatprep.mubr.bf16.mxu0 %v10850
        %11483 = vmatmul.mubr.bf16.gmra.mrb[0].mxu0 %v10849
        %v11484 = vpop.f32.mrb[0].mxu0
        %v11485 = vadd.f32 %v11067, %v11484
        %v11486 = vpop.f32.mrb[0].mxu0
        %v11487 = vpop.f32.mrb[0].mxu0
        %v11488 = vadd.f32 %v11067, %v11487
        %v11489 = vpop.f32.mrb[0].mxu0
        %11490 = vmatprep.mubr.bf16.mxu0 %v10857
        %11491 = vmatmul.mubr.bf16.gmra.mrb[0].mxu0 %v10856
        %v11492 = vpop.f32.mrb[0].mxu0
        %v11493 = vadd.f32 %v11067, %v11492
        %v11494 = vpop.f32.mrb[0].mxu0
        %v11495 = vpop.f32.mrb[0].mxu0
        %v11496 = vadd.f32 %v11067, %v11495
        %v11497 = vpop.f32.mrb[0].mxu0
        %11498 = vmatprep.mubr.bf16.mxu0 %v10864
        %11499 = vmatmul.mubr.bf16.gmra.mrb[0].mxu0 %v10863
        %v11500 = vpop.f32.mrb[0].mxu0
        %v11501 = vadd.f32 %v11067, %v11500
        %v11502 = vpop.f32.mrb[0].mxu0
        %v11503 = vpop.f32.mrb[0].mxu0
        %v11504 = vadd.f32 %v11067, %v11503
        %v11505 = vpop.f32.mrb[0].mxu0
        %11506 = vmatprep.mubr.bf16.mxu0 %v10871
        %11507 = vmatmul.mubr.bf16.gmra.mrb[0].mxu0 %v10870
        %v11508 = vpop.f32.mrb[0].mxu0
        %v11509 = vadd.f32 %v11067, %v11508
        %v11510 = vpop.f32.mrb[0].mxu0
        %v11511 = vpop.f32.mrb[0].mxu0
        %v11512 = vadd.f32 %v11067, %v11511
        %v11513 = vpop.f32.mrb[0].mxu0
        %11514 = vmatprep.mubr.bf16.mxu0 %v10878
        %11515 = vmatmul.mubr.bf16.gmra.mrb[0].mxu0 %v10877
        %v11516 = vpop.f32.mrb[0].mxu0
        %v11517 = vadd.f32 %v11067, %v11516
        %v11518 = vpop.f32.mrb[0].mxu0
        %v11519 = vpop.f32.mrb[0].mxu0
        %v11520 = vadd.f32 %v11067, %v11519
        %v11521 = vpop.f32.mrb[0].mxu0
        %11522 = vmatprep.mubr.bf16.mxu0 %v10885
        %11523 = vmatmul.mubr.bf16.gmra.mrb[0].mxu0 %v10884
        %v11524 = vpop.f32.mrb[0].mxu0
        %v11525 = vadd.f32 %v11067, %v11524
        %v11526 = vpop.f32.mrb[0].mxu0
        %v11527 = vpop.f32.mrb[0].mxu0
        %v11528 = vadd.f32 %v11067, %v11527
        %v11529 = vpop.f32.mrb[0].mxu0
        %11530 = vmatprep.mubr.bf16.mxu0 %v10892
        %11531 = vmatmul.mubr.bf16.gmra.mrb[0].mxu0 %v10891
        %v11532 = vpop.f32.mrb[0].mxu0
        %v11533 = vadd.f32 %v11067, %v11532
        %v11534 = vpop.f32.mrb[0].mxu0
        %v11535 = vpop.f32.mrb[0].mxu0
        %v11536 = vadd.f32 %v11067, %v11535
        %v11537 = vpop.f32.mrb[0].mxu0
        %11538 = vmatprep.mubr.bf16.mxu0 %v10899
        %11539 = vmatmul.mubr.bf16.gmra.mrb[0].mxu0 %v10898
        %v11540 = vpop.f32.mrb[0].mxu0
        %v11541 = vadd.f32 %v11067, %v11540
        %v11542 = vpop.f32.mrb[0].mxu0
        %v11543 = vpop.f32.mrb[0].mxu0
        %v11544 = vadd.f32 %v11067, %v11543
        %v11545 = vpop.f32.mrb[0].mxu0
        %11546 = vmatprep.mubr.bf16.mxu0 %v10906
        %11547 = vmatmul.mubr.bf16.gmra.mrb[0].mxu0 %v10905
        %v11548 = vpop.f32.mrb[0].mxu0
        %v11549 = vadd.f32 %v11067, %v11548
        %v11550 = vpop.f32.mrb[0].mxu0
        %v11551 = vpop.f32.mrb[0].mxu0
        %v11552 = vadd.f32 %v11067, %v11551
        %v11553 = vpop.f32.mrb[0].mxu0
        %11554 = vmatprep.mubr.bf16.mxu0 %v10913
        %11555 = vmatmul.mubr.bf16.gmra.mrb[0].mxu0 %v10912
        %v11556 = vpop.f32.mrb[0].mxu0
        %v11557 = vadd.f32 %v11067, %v11556
        %v11558 = vpop.f32.mrb[0].mxu0
        %v11559 = vpop.f32.mrb[0].mxu0
        %v11560 = vadd.f32 %v11067, %v11559
        %v11561 = vpop.f32.mrb[0].mxu0
        %11562 = vmatprep.mubr.bf16.mxu0 %v10920
        %11563 = vmatmul.mubr.bf16.gmra.mrb[0].mxu0 %v10919
        %v11564 = vpop.f32.mrb[0].mxu0
        %v11565 = vadd.f32 %v11067, %v11564
        %v11566 = vpop.f32.mrb[0].mxu0
        %v11567 = vpop.f32.mrb[0].mxu0
        %v11568 = vadd.f32 %v11067, %v11567
        %v11569 = vpop.f32.mrb[0].mxu0
        %11570 = vmatprep.mubr.bf16.mxu0 %v10927
        %11571 = vmatmul.mubr.bf16.gmra.mrb[0].mxu0 %v10926
        %v11572 = vpop.f32.mrb[0].mxu0
        %v11573 = vadd.f32 %v11067, %v11572
        %v11574 = vpop.f32.mrb[0].mxu0
        %v11575 = vpop.f32.mrb[0].mxu0
        %v11576 = vadd.f32 %v11067, %v11575
        %v11577 = vpop.f32.mrb[0].mxu0
        %11578 = vmatprep.mubr.bf16.mxu0 %v10934
        %11579 = vmatmul.mubr.bf16.gmra.mrb[0].mxu0 %v10933
        %v11580 = vpop.f32.mrb[0].mxu0
        %v11581 = vadd.f32 %v11067, %v11580
        %v11582 = vpop.f32.mrb[0].mxu0
        %v11583 = vpop.f32.mrb[0].mxu0
        %v11584 = vadd.f32 %v11067, %v11583
        %v11585 = vpop.f32.mrb[0].mxu0
        %11586 = vmatprep.mubr.bf16.mxu0 %v10941
        %11587 = vmatmul.mubr.bf16.gmra.mrb[0].mxu0 %v10940
        %v11588 = vpop.f32.mrb[0].mxu0
        %v11589 = vadd.f32 %v11067, %v11588
        %v11590 = vpop.f32.mrb[0].mxu0
        %v11591 = vpop.f32.mrb[0].mxu0
        %v11592 = vadd.f32 %v11067, %v11591
        %v11593 = vpop.f32.mrb[0].mxu0
        %11594 = vmatprep.mubr.bf16.mxu0 %v10948
        %11595 = vmatmul.mubr.bf16.gmra.mrb[0].mxu0 %v10947
        %v11596 = vpop.f32.mrb[0].mxu0
        %v11597 = vadd.f32 %v11067, %v11596
        %v11598 = vpop.f32.mrb[0].mxu0
        %v11599 = vpop.f32.mrb[0].mxu0
        %v11600 = vadd.f32 %v11067, %v11599
        %v11601 = vpop.f32.mrb[0].mxu0
        %11602 = vdwg.mxu0
        %11603 = vmatprep.subr.bf16.mxu0 0
        %11604 = vmatpush1.bf16.msra.mxu0 %v11301
        %11605 = vmatprep.subr.bf16.mxu0 0
        %11606 = vmatpush1.bf16.msra.mxu0 %v11302
        %11607 = vmatprep.subr.bf16.mxu0 0
        %11608 = vmatpush1.bf16.msra.mxu0 %v11303
        %11609 = vmatprep.subr.bf16.mxu0 0
        %11610 = vmatpush1.bf16.msra.mxu0 %v11304
        %11611 = vmatprep.subr.bf16.mxu0 0
        %11612 = vmatpush1.bf16.msra.mxu0 %v11305
        %11613 = vmatprep.subr.bf16.mxu0 0
        %11614 = vmatpush1.bf16.msra.mxu0 %v11306
        %11615 = vmatprep.subr.bf16.mxu0 0
        %11616 = vmatpush1.bf16.msra.mxu0 %v11307
        %11617 = vmatprep.subr.bf16.mxu0 0
        %11618 = vmatpush1.bf16.msra.mxu0 %v11308
        %11619 = vmatprep.subr.bf16.mxu0 0
        %11620 = vmatpush1.bf16.msra.mxu0 %v11309
        %11621 = vmatprep.subr.bf16.mxu0 0
        %11622 = vmatpush1.bf16.msra.mxu0 %v11310
        %11623 = vmatprep.subr.bf16.mxu0 0
        %11624 = vmatpush1.bf16.msra.mxu0 %v11311
        %11625 = vmatprep.subr.bf16.mxu0 0
        %11626 = vmatpush1.bf16.msra.mxu0 %v11312
        %11627 = vmatprep.subr.bf16.mxu0 0
        %11628 = vmatpush1.bf16.msra.mxu0 %v11313
        %11629 = vmatprep.subr.bf16.mxu0 0
        %11630 = vmatpush1.bf16.msra.mxu0 %v11314
        %11631 = vmatprep.subr.bf16.mxu0 0
        %11632 = vmatpush1.bf16.msra.mxu0 %v11315
        %11633 = vmatprep.subr.bf16.mxu0 0
        %11634 = vmatpush1.bf16.msra.mxu0 %v11316
        %11635 = vmatprep.mubr.bf16.mxu0 %v10845
        %11636 = vmatmul.mubr.bf16.gmra.mrb[0].mxu0 %v10844
        %v11637 = vpop.f32.mrb[0].mxu0
        %v11638 = vadd.f32 %v11477, %v11637
        %v11639 = vpop.f32.mrb[0].mxu0
        %v11640 = vpop.f32.mrb[0].mxu0
        %v11641 = vadd.f32 %v11480, %v11640
        %v11642 = vpop.f32.mrb[0].mxu0
        %11643 = vmatprep.mubr.bf16.mxu0 %v10852
        %11644 = vmatmul.mubr.bf16.gmra.mrb[0].mxu0 %v10851
        %v11645 = vpop.f32.mrb[0].mxu0
        %v11646 = vadd.f32 %v11485, %v11645
        %v11647 = vpop.f32.mrb[0].mxu0
        %v11648 = vpop.f32.mrb[0].mxu0
        %v11649 = vadd.f32 %v11488, %v11648
        %v11650 = vpop.f32.mrb[0].mxu0
        %11651 = vmatprep.mubr.bf16.mxu0 %v10859
        %11652 = vmatmul.mubr.bf16.gmra.mrb[0].mxu0 %v10858
        %v11653 = vpop.f32.mrb[0].mxu0
        %v11654 = vadd.f32 %v11493, %v11653
        %v11655 = vpop.f32.mrb[0].mxu0
        %v11656 = vpop.f32.mrb[0].mxu0
        %v11657 = vadd.f32 %v11496, %v11656
        %v11658 = vpop.f32.mrb[0].mxu0
        %11659 = vmatprep.mubr.bf16.mxu0 %v10866
        %11660 = vmatmul.mubr.bf16.gmra.mrb[0].mxu0 %v10865
        %v11661 = vpop.f32.mrb[0].mxu0
        %v11662 = vadd.f32 %v11501, %v11661
        %v11663 = vpop.f32.mrb[0].mxu0
        %v11664 = vpop.f32.mrb[0].mxu0
        %v11665 = vadd.f32 %v11504, %v11664
        %v11666 = vpop.f32.mrb[0].mxu0
        %11667 = vmatprep.mubr.bf16.mxu0 %v10873
        %11668 = vmatmul.mubr.bf16.gmra.mrb[0].mxu0 %v10872
        %v11669 = vpop.f32.mrb[0].mxu0
        %v11670 = vadd.f32 %v11509, %v11669
        %v11671 = vpop.f32.mrb[0].mxu0
        %v11672 = vpop.f32.mrb[0].mxu0
        %v11673 = vadd.f32 %v11512, %v11672
        %v11674 = vpop.f32.mrb[0].mxu0
        %11675 = vmatprep.mubr.bf16.mxu0 %v10880
        %11676 = vmatmul.mubr.bf16.gmra.mrb[0].mxu0 %v10879
        %v11677 = vpop.f32.mrb[0].mxu0
        %v11678 = vadd.f32 %v11517, %v11677
        %v11679 = vpop.f32.mrb[0].mxu0
        %v11680 = vpop.f32.mrb[0].mxu0
        %v11681 = vadd.f32 %v11520, %v11680
        %v11682 = vpop.f32.mrb[0].mxu0
        %11683 = vmatprep.mubr.bf16.mxu0 %v10887
        %11684 = vmatmul.mubr.bf16.gmra.mrb[0].mxu0 %v10886
        %v11685 = vpop.f32.mrb[0].mxu0
        %v11686 = vadd.f32 %v11525, %v11685
        %v11687 = vpop.f32.mrb[0].mxu0
        %v11688 = vpop.f32.mrb[0].mxu0
        %v11689 = vadd.f32 %v11528, %v11688
        %v11690 = vpop.f32.mrb[0].mxu0
        %11691 = vmatprep.mubr.bf16.mxu0 %v10894
        %11692 = vmatmul.mubr.bf16.gmra.mrb[0].mxu0 %v10893
        %v11693 = vpop.f32.mrb[0].mxu0
        %v11694 = vadd.f32 %v11533, %v11693
        %v11695 = vpop.f32.mrb[0].mxu0
        %v11696 = vpop.f32.mrb[0].mxu0
        %v11697 = vadd.f32 %v11536, %v11696
        %v11698 = vpop.f32.mrb[0].mxu0
        %11699 = vmatprep.mubr.bf16.mxu0 %v10901
        %11700 = vmatmul.mubr.bf16.gmra.mrb[0].mxu0 %v10900
        %v11701 = vpop.f32.mrb[0].mxu0
        %v11702 = vadd.f32 %v11541, %v11701
        %v11703 = vpop.f32.mrb[0].mxu0
        %v11704 = vpop.f32.mrb[0].mxu0
        %v11705 = vadd.f32 %v11544, %v11704
        %v11706 = vpop.f32.mrb[0].mxu0
        %11707 = vmatprep.mubr.bf16.mxu0 %v10908
        %11708 = vmatmul.mubr.bf16.gmra.mrb[0].mxu0 %v10907
        %v11709 = vpop.f32.mrb[0].mxu0
        %v11710 = vadd.f32 %v11549, %v11709
        %v11711 = vpop.f32.mrb[0].mxu0
        %v11712 = vpop.f32.mrb[0].mxu0
        %v11713 = vadd.f32 %v11552, %v11712
        %v11714 = vpop.f32.mrb[0].mxu0
        %11715 = vmatprep.mubr.bf16.mxu0 %v10915
        %11716 = vmatmul.mubr.bf16.gmra.mrb[0].mxu0 %v10914
        %v11717 = vpop.f32.mrb[0].mxu0
        %v11718 = vadd.f32 %v11557, %v11717
        %v11719 = vpop.f32.mrb[0].mxu0
        %v11720 = vpop.f32.mrb[0].mxu0
        %v11721 = vadd.f32 %v11560, %v11720
        %v11722 = vpop.f32.mrb[0].mxu0
        %11723 = vmatprep.mubr.bf16.mxu0 %v10922
        %11724 = vmatmul.mubr.bf16.gmra.mrb[0].mxu0 %v10921
        %v11725 = vpop.f32.mrb[0].mxu0
        %v11726 = vadd.f32 %v11565, %v11725
        %v11727 = vpop.f32.mrb[0].mxu0
        %v11728 = vpop.f32.mrb[0].mxu0
        %v11729 = vadd.f32 %v11568, %v11728
        %v11730 = vpop.f32.mrb[0].mxu0
        %11731 = vmatprep.mubr.bf16.mxu0 %v10929
        %11732 = vmatmul.mubr.bf16.gmra.mrb[0].mxu0 %v10928
        %v11733 = vpop.f32.mrb[0].mxu0
        %v11734 = vadd.f32 %v11573, %v11733
        %v11735 = vpop.f32.mrb[0].mxu0
        %v11736 = vpop.f32.mrb[0].mxu0
        %v11737 = vadd.f32 %v11576, %v11736
        %v11738 = vpop.f32.mrb[0].mxu0
        %11739 = vmatprep.mubr.bf16.mxu0 %v10936
        %11740 = vmatmul.mubr.bf16.gmra.mrb[0].mxu0 %v10935
        %v11741 = vpop.f32.mrb[0].mxu0
        %v11742 = vadd.f32 %v11581, %v11741
        %v11743 = vpop.f32.mrb[0].mxu0
        %v11744 = vpop.f32.mrb[0].mxu0
        %v11745 = vadd.f32 %v11584, %v11744
        %v11746 = vpop.f32.mrb[0].mxu0
        %11747 = vmatprep.mubr.bf16.mxu0 %v10943
        %11748 = vmatmul.mubr.bf16.gmra.mrb[0].mxu0 %v10942
        %v11749 = vpop.f32.mrb[0].mxu0
        %v11750 = vadd.f32 %v11589, %v11749
        %v11751 = vpop.f32.mrb[0].mxu0
        %v11752 = vpop.f32.mrb[0].mxu0
        %v11753 = vadd.f32 %v11592, %v11752
        %v11754 = vpop.f32.mrb[0].mxu0
        %11755 = vmatprep.mubr.bf16.mxu0 %v10950
        %11756 = vmatmul.mubr.bf16.gmra.mrb[0].mxu0 %v10949
        %v11757 = vpop.f32.mrb[0].mxu0
        %v11758 = vadd.f32 %v11597, %v11757
        %v11759 = vpop.f32.mrb[0].mxu0
        %v11760 = vpop.f32.mrb[0].mxu0
        %v11761 = vadd.f32 %v11600, %v11760
        %v11762 = vpop.f32.mrb[0].mxu0
        %11763 = vdwg.mxu0
        %11764 = vmatprep.subr.bf16.mxu0 0
        %11765 = vmatpush1.bf16.msra.mxu0 %v11317
        %11766 = vmatprep.subr.bf16.mxu0 0
        %11767 = vmatpush1.bf16.msra.mxu0 %v11318
        %11768 = vmatprep.subr.bf16.mxu0 0
        %11769 = vmatpush1.bf16.msra.mxu0 %v11319
        %11770 = vmatprep.subr.bf16.mxu0 0
        %11771 = vmatpush1.bf16.msra.mxu0 %v11320
        %11772 = vmatprep.subr.bf16.mxu0 0
        %11773 = vmatpush1.bf16.msra.mxu0 %v11321
        %11774 = vmatprep.subr.bf16.mxu0 0
        %11775 = vmatpush1.bf16.msra.mxu0 %v11322
        %11776 = vmatprep.subr.bf16.mxu0 0
        %11777 = vmatpush1.bf16.msra.mxu0 %v11323
        %11778 = vmatprep.subr.bf16.mxu0 0
        %11779 = vmatpush1.bf16.msra.mxu0 %v11324
        %11780 = vmatprep.subr.bf16.mxu0 0
        %11781 = vmatpush1.bf16.msra.mxu0 %v11325
        %11782 = vmatprep.subr.bf16.mxu0 0
        %11783 = vmatpush1.bf16.msra.mxu0 %v11326
        %11784 = vmatprep.subr.bf16.mxu0 0
        %11785 = vmatpush1.bf16.msra.mxu0 %v11327
        %11786 = vmatprep.subr.bf16.mxu0 0
        %11787 = vmatpush1.bf16.msra.mxu0 %v11328
        %11788 = vmatprep.subr.bf16.mxu0 0
        %11789 = vmatpush1.bf16.msra.mxu0 %v11329
        %11790 = vmatprep.subr.bf16.mxu0 0
        %11791 = vmatpush1.bf16.msra.mxu0 %v11330
        %11792 = vmatprep.subr.bf16.mxu0 0
        %11793 = vmatpush1.bf16.msra.mxu0 %v11331
        %11794 = vmatprep.subr.bf16.mxu0 0
        %11795 = vmatpush1.bf16.msra.mxu0 %v11332
        %11796 = vmatprep.mubr.bf16.mxu0 %v10847
        %11797 = vmatmul.mubr.bf16.gmra.mrb[0].mxu0 %v10846
        %v11798 = vpop.f32.mrb[0].mxu0
        %v11799 = vadd.f32 %v11638, %v11798
        %v11800 = vpop.f32.mrb[0].mxu0
        %v11801 = vpop.f32.mrb[0].mxu0
        %v11802 = vadd.f32 %v11641, %v11801
        %v11803 = vpop.f32.mrb[0].mxu0
        %11804 = vmatprep.mubr.bf16.mxu0 %v10854
        %11805 = vmatmul.mubr.bf16.gmra.mrb[0].mxu0 %v10853
        %v11806 = vpop.f32.mrb[0].mxu0
        %v11807 = vadd.f32 %v11646, %v11806
        %v11808 = vpop.f32.mrb[0].mxu0
        %v11809 = vpop.f32.mrb[0].mxu0
        %v11810 = vadd.f32 %v11649, %v11809
        %v11811 = vpop.f32.mrb[0].mxu0
        %11812 = vmatprep.mubr.bf16.mxu0 %v10861
        %11813 = vmatmul.mubr.bf16.gmra.mrb[0].mxu0 %v10860
        %v11814 = vpop.f32.mrb[0].mxu0
        %v11815 = vadd.f32 %v11654, %v11814
        %v11816 = vpop.f32.mrb[0].mxu0
        %v11817 = vpop.f32.mrb[0].mxu0
        %v11818 = vadd.f32 %v11657, %v11817
        %v11819 = vpop.f32.mrb[0].mxu0
        %11820 = vmatprep.mubr.bf16.mxu0 %v10868
        %11821 = vmatmul.mubr.bf16.gmra.mrb[0].mxu0 %v10867
        %v11822 = vpop.f32.mrb[0].mxu0
        %v11823 = vadd.f32 %v11662, %v11822
        %v11824 = vpop.f32.mrb[0].mxu0
        %v11825 = vpop.f32.mrb[0].mxu0
        %v11826 = vadd.f32 %v11665, %v11825
        %v11827 = vpop.f32.mrb[0].mxu0
        %11828 = vmatprep.mubr.bf16.mxu0 %v10875
        %11829 = vmatmul.mubr.bf16.gmra.mrb[0].mxu0 %v10874
        %v11830 = vpop.f32.mrb[0].mxu0
        %v11831 = vadd.f32 %v11670, %v11830
        %v11832 = vpop.f32.mrb[0].mxu0
        %v11833 = vpop.f32.mrb[0].mxu0
        %v11834 = vadd.f32 %v11673, %v11833
        %v11835 = vpop.f32.mrb[0].mxu0
        %11836 = vmatprep.mubr.bf16.mxu0 %v10882
        %11837 = vmatmul.mubr.bf16.gmra.mrb[0].mxu0 %v10881
        %v11838 = vpop.f32.mrb[0].mxu0
        %v11839 = vadd.f32 %v11678, %v11838
        %v11840 = vpop.f32.mrb[0].mxu0
        %v11841 = vpop.f32.mrb[0].mxu0
        %v11842 = vadd.f32 %v11681, %v11841
        %v11843 = vpop.f32.mrb[0].mxu0
        %11844 = vmatprep.mubr.bf16.mxu0 %v10889
        %11845 = vmatmul.mubr.bf16.gmra.mrb[0].mxu0 %v10888
        %v11846 = vpop.f32.mrb[0].mxu0
        %v11847 = vadd.f32 %v11686, %v11846
        %v11848 = vpop.f32.mrb[0].mxu0
        %v11849 = vpop.f32.mrb[0].mxu0
        %v11850 = vadd.f32 %v11689, %v11849
        %v11851 = vpop.f32.mrb[0].mxu0
        %11852 = vmatprep.mubr.bf16.mxu0 %v10896
        %11853 = vmatmul.mubr.bf16.gmra.mrb[0].mxu0 %v10895
        %v11854 = vpop.f32.mrb[0].mxu0
        %v11855 = vadd.f32 %v11694, %v11854
        %v11856 = vpop.f32.mrb[0].mxu0
        %v11857 = vpop.f32.mrb[0].mxu0
        %v11858 = vadd.f32 %v11697, %v11857
        %v11859 = vpop.f32.mrb[0].mxu0
        %11860 = vmatprep.mubr.bf16.mxu0 %v10903
        %11861 = vmatmul.mubr.bf16.gmra.mrb[0].mxu0 %v10902
        %v11862 = vpop.f32.mrb[0].mxu0
        %v11863 = vadd.f32 %v11702, %v11862
        %v11864 = vpop.f32.mrb[0].mxu0
        %v11865 = vpop.f32.mrb[0].mxu0
        %v11866 = vadd.f32 %v11705, %v11865
        %v11867 = vpop.f32.mrb[0].mxu0
        %11868 = vmatprep.mubr.bf16.mxu0 %v10910
        %11869 = vmatmul.mubr.bf16.gmra.mrb[0].mxu0 %v10909
        %v11870 = vpop.f32.mrb[0].mxu0
        %v11871 = vadd.f32 %v11710, %v11870
        %v11872 = vpop.f32.mrb[0].mxu0
        %v11873 = vpop.f32.mrb[0].mxu0
        %v11874 = vadd.f32 %v11713, %v11873
        %v11875 = vpop.f32.mrb[0].mxu0
        %11876 = vmatprep.mubr.bf16.mxu0 %v10917
        %11877 = vmatmul.mubr.bf16.gmra.mrb[0].mxu0 %v10916
        %v11878 = vpop.f32.mrb[0].mxu0
        %v11879 = vadd.f32 %v11718, %v11878
        %v11880 = vpop.f32.mrb[0].mxu0
        %v11881 = vpop.f32.mrb[0].mxu0
        %v11882 = vadd.f32 %v11721, %v11881
        %v11883 = vpop.f32.mrb[0].mxu0
        %11884 = vmatprep.mubr.bf16.mxu0 %v10924
        %11885 = vmatmul.mubr.bf16.gmra.mrb[0].mxu0 %v10923
        %v11886 = vpop.f32.mrb[0].mxu0
        %v11887 = vadd.f32 %v11726, %v11886
        %v11888 = vpop.f32.mrb[0].mxu0
        %v11889 = vpop.f32.mrb[0].mxu0
        %v11890 = vadd.f32 %v11729, %v11889
        %v11891 = vpop.f32.mrb[0].mxu0
        %11892 = vmatprep.mubr.bf16.mxu0 %v10931
        %11893 = vmatmul.mubr.bf16.gmra.mrb[0].mxu0 %v10930
        %v11894 = vpop.f32.mrb[0].mxu0
        %v11895 = vadd.f32 %v11734, %v11894
        %v11896 = vpop.f32.mrb[0].mxu0
        %v11897 = vpop.f32.mrb[0].mxu0
        %v11898 = vadd.f32 %v11737, %v11897
        %v11899 = vpop.f32.mrb[0].mxu0
        %11900 = vmatprep.mubr.bf16.mxu0 %v10938
        %11901 = vmatmul.mubr.bf16.gmra.mrb[0].mxu0 %v10937
        %v11902 = vpop.f32.mrb[0].mxu0
        %v11903 = vadd.f32 %v11742, %v11902
        %v11904 = vpop.f32.mrb[0].mxu0
        %v11905 = vpop.f32.mrb[0].mxu0
        %v11906 = vadd.f32 %v11745, %v11905
        %v11907 = vpop.f32.mrb[0].mxu0
        %11908 = vmatprep.mubr.bf16.mxu0 %v10945
        %11909 = vmatmul.mubr.bf16.gmra.mrb[0].mxu0 %v10944
        %v11910 = vpop.f32.mrb[0].mxu0
        %v11911 = vadd.f32 %v11750, %v11910
        %v11912 = vpop.f32.mrb[0].mxu0
        %v11913 = vpop.f32.mrb[0].mxu0
        %v11914 = vadd.f32 %v11753, %v11913
        %v11915 = vpop.f32.mrb[0].mxu0
        %11916 = vmatprep.mubr.bf16.mxu0 %v10952
        %11917 = vmatmul.mubr.bf16.gmra.mrb[0].mxu0 %v10951
        %v11918 = vpop.f32.mrb[0].mxu0
        %v11919 = vadd.f32 %v11758, %v11918
        %v11920 = vpop.f32.mrb[0].mxu0
        %v11921 = vpop.f32.mrb[0].mxu0
        %v11922 = vadd.f32 %v11761, %v11921
        %v11923 = vpop.f32.mrb[0].mxu0
        %11924 = vdwg.mxu0
        %11925 = vmatprep.subr.bf16.mxu0 0
        %11926 = vmatpush1.bf16.msra.mxu0 %v11333
        %11927 = vmatprep.subr.bf16.mxu0 0
        %11928 = vmatpush1.bf16.msra.mxu0 %v11334
        %11929 = vmatprep.subr.bf16.mxu0 0
        %11930 = vmatpush1.bf16.msra.mxu0 %v11335
        %11931 = vmatprep.subr.bf16.mxu0 0
        %11932 = vmatpush1.bf16.msra.mxu0 %v11336
        %11933 = vmatprep.subr.bf16.mxu0 0
        %11934 = vmatpush1.bf16.msra.mxu0 %v11337
        %11935 = vmatprep.subr.bf16.mxu0 0
        %11936 = vmatpush1.bf16.msra.mxu0 %v11338
        %11937 = vmatprep.subr.bf16.mxu0 0
        %11938 = vmatpush1.bf16.msra.mxu0 0
        %11939 = vmatprep.subr.bf16.mxu0 0
        %11940 = vmatpush1.bf16.msra.mxu0 0
        %11941 = vmatprep.subr.bf16.mxu0 0
        %11942 = vmatpush1.bf16.msra.mxu0 0
        %11943 = vmatprep.subr.bf16.mxu0 0
        %11944 = vmatpush1.bf16.msra.mxu0 0
        %11945 = vmatprep.subr.bf16.mxu0 0
        %11946 = vmatpush1.bf16.msra.mxu0 0
        %11947 = vmatprep.subr.bf16.mxu0 0
        %11948 = vmatpush1.bf16.msra.mxu0 0
        %11949 = vmatprep.subr.bf16.mxu0 0
        %11950 = vmatpush1.bf16.msra.mxu0 0
        %11951 = vmatprep.subr.bf16.mxu0 0
        %11952 = vmatpush1.bf16.msra.mxu0 0
        %11953 = vmatprep.subr.bf16.mxu0 0
        %11954 = vmatpush1.bf16.msra.mxu0 0
        %11955 = vmatprep.subr.bf16.mxu0 0
        %11956 = vmatpush1.bf16.msra.mxu0 0
        %11957 = vmatprep.mubr.bf16.mxu0 0
        %11958 = vmatmul.mubr.bf16.gmra.mrb[0].mxu0 %v11395
        %v11959 = vpop.f32.mrb[0].mxu0
        %v11960 = vadd.f32 %v11799, %v11959
        %v11961 = vpop.f32.mrb[0].mxu0
        %v11962 = vpop.f32.mrb[0].mxu0
        %v11963 = vadd.f32 %v11802, %v11962
        %v11964 = vpop.f32.mrb[0].mxu0
        %11965 = vmatprep.mubr.bf16.mxu0 0
        %11966 = vmatmul.mubr.bf16.gmra.mrb[0].mxu0 %v11398
        %v11967 = vpop.f32.mrb[0].mxu0
        %v11968 = vadd.f32 %v11807, %v11967
        %v11969 = vpop.f32.mrb[0].mxu0
        %v11970 = vpop.f32.mrb[0].mxu0
        %v11971 = vadd.f32 %v11810, %v11970
        %v11972 = vpop.f32.mrb[0].mxu0
        %11973 = vmatprep.mubr.bf16.mxu0 0
        %11974 = vmatmul.mubr.bf16.gmra.mrb[0].mxu0 %v11401
        %v11975 = vpop.f32.mrb[0].mxu0
        %v11976 = vadd.f32 %v11815, %v11975
        %v11977 = vpop.f32.mrb[0].mxu0
        %v11978 = vpop.f32.mrb[0].mxu0
        %v11979 = vadd.f32 %v11818, %v11978
        %v11980 = vpop.f32.mrb[0].mxu0
        %11981 = vmatprep.mubr.bf16.mxu0 0
        %11982 = vmatmul.mubr.bf16.gmra.mrb[0].mxu0 %v11404
        %v11983 = vpop.f32.mrb[0].mxu0
        %v11984 = vadd.f32 %v11823, %v11983
        %v11985 = vpop.f32.mrb[0].mxu0
        %v11986 = vpop.f32.mrb[0].mxu0
        %v11987 = vadd.f32 %v11826, %v11986
        %v11988 = vpop.f32.mrb[0].mxu0
        %11989 = vmatprep.mubr.bf16.mxu0 0
        %11990 = vmatmul.mubr.bf16.gmra.mrb[0].mxu0 %v11407
        %v11991 = vpop.f32.mrb[0].mxu0
        %v11992 = vadd.f32 %v11831, %v11991
        %v11993 = vpop.f32.mrb[0].mxu0
        %v11994 = vpop.f32.mrb[0].mxu0
        %v11995 = vadd.f32 %v11834, %v11994
        %v11996 = vpop.f32.mrb[0].mxu0
        %11997 = vmatprep.mubr.bf16.mxu0 0
        %11998 = vmatmul.mubr.bf16.gmra.mrb[0].mxu0 %v11410
        %v11999 = vpop.f32.mrb[0].mxu0
        %v12000 = vadd.f32 %v11839, %v11999
        %v12001 = vpop.f32.mrb[0].mxu0
        %v12002 = vpop.f32.mrb[0].mxu0
        %v12003 = vadd.f32 %v11842, %v12002
        %v12004 = vpop.f32.mrb[0].mxu0
        %12005 = vmatprep.mubr.bf16.mxu0 0
        %12006 = vmatmul.mubr.bf16.gmra.mrb[0].mxu0 %v11413
        %v12007 = vpop.f32.mrb[0].mxu0
        %v12008 = vadd.f32 %v11847, %v12007
        %v12009 = vpop.f32.mrb[0].mxu0
        %v12010 = vpop.f32.mrb[0].mxu0
        %v12011 = vadd.f32 %v11850, %v12010
        %v12012 = vpop.f32.mrb[0].mxu0
        %12013 = vmatprep.mubr.bf16.mxu0 0
        %12014 = vmatmul.mubr.bf16.gmra.mrb[0].mxu0 %v11416
        %v12015 = vpop.f32.mrb[0].mxu0
        %v12016 = vadd.f32 %v11855, %v12015
        %v12017 = vpop.f32.mrb[0].mxu0
        %v12018 = vpop.f32.mrb[0].mxu0
        %v12019 = vadd.f32 %v11858, %v12018
        %v12020 = vpop.f32.mrb[0].mxu0
        %12021 = vmatprep.mubr.bf16.mxu0 0
        %12022 = vmatmul.mubr.bf16.gmra.mrb[0].mxu0 %v11419
        %v12023 = vpop.f32.mrb[0].mxu0
        %v12024 = vadd.f32 %v11863, %v12023
        %v12025 = vpop.f32.mrb[0].mxu0
        %v12026 = vpop.f32.mrb[0].mxu0
        %v12027 = vadd.f32 %v11866, %v12026
        %v12028 = vpop.f32.mrb[0].mxu0
        %12029 = vmatprep.mubr.bf16.mxu0 0
        %12030 = vmatmul.mubr.bf16.gmra.mrb[0].mxu0 %v11422
        %v12031 = vpop.f32.mrb[0].mxu0
        %v12032 = vadd.f32 %v11871, %v12031
        %v12033 = vpop.f32.mrb[0].mxu0
        %v12034 = vpop.f32.mrb[0].mxu0
        %v12035 = vadd.f32 %v11874, %v12034
        %v12036 = vpop.f32.mrb[0].mxu0
        %12037 = vmatprep.mubr.bf16.mxu0 0
        %12038 = vmatmul.mubr.bf16.gmra.mrb[0].mxu0 %v11425
        %v12039 = vpop.f32.mrb[0].mxu0
        %v12040 = vadd.f32 %v11879, %v12039
        %v12041 = vpop.f32.mrb[0].mxu0
        %v12042 = vpop.f32.mrb[0].mxu0
        %v12043 = vadd.f32 %v11882, %v12042
        %v12044 = vpop.f32.mrb[0].mxu0
        %12045 = vmatprep.mubr.bf16.mxu0 0
        %12046 = vmatmul.mubr.bf16.gmra.mrb[0].mxu0 %v11428
        %v12047 = vpop.f32.mrb[0].mxu0
        %v12048 = vadd.f32 %v11887, %v12047
        %v12049 = vpop.f32.mrb[0].mxu0
        %v12050 = vpop.f32.mrb[0].mxu0
        %v12051 = vadd.f32 %v11890, %v12050
        %v12052 = vpop.f32.mrb[0].mxu0
        %12053 = vmatprep.mubr.bf16.mxu0 0
        %12054 = vmatmul.mubr.bf16.gmra.mrb[0].mxu0 %v11431
        %v12055 = vpop.f32.mrb[0].mxu0
        %v12056 = vadd.f32 %v11895, %v12055
        %v12057 = vpop.f32.mrb[0].mxu0
        %v12058 = vpop.f32.mrb[0].mxu0
        %v12059 = vadd.f32 %v11898, %v12058
        %v12060 = vpop.f32.mrb[0].mxu0
        %12061 = vmatprep.mubr.bf16.mxu0 0
        %12062 = vmatmul.mubr.bf16.gmra.mrb[0].mxu0 %v11434
        %v12063 = vpop.f32.mrb[0].mxu0
        %v12064 = vadd.f32 %v11903, %v12063
        %v12065 = vpop.f32.mrb[0].mxu0
        %v12066 = vpop.f32.mrb[0].mxu0
        %v12067 = vadd.f32 %v11906, %v12066
        %v12068 = vpop.f32.mrb[0].mxu0
        %12069 = vmatprep.mubr.bf16.mxu0 0
        %12070 = vmatmul.mubr.bf16.gmra.mrb[0].mxu0 %v11437
        %v12071 = vpop.f32.mrb[0].mxu0
        %v12072 = vadd.f32 %v11911, %v12071
        %v12073 = vpop.f32.mrb[0].mxu0
        %v12074 = vpop.f32.mrb[0].mxu0
        %v12075 = vadd.f32 %v11914, %v12074
        %v12076 = vpop.f32.mrb[0].mxu0
        %12077 = vmatprep.mubr.bf16.mxu0 0
        %12078 = vmatmul.mubr.bf16.gmra.mrb[0].mxu0 %v11440
        %v12079 = vpop.f32.mrb[0].mxu0
        %v12080 = vadd.f32 %v11919, %v12079
        %v12081 = vpop.f32.mrb[0].mxu0
        %v12082 = vpop.f32.mrb[0].mxu0
        %v12083 = vadd.f32 %v11922, %v12082
        %v12084 = vpop.f32.mrb[0].mxu0
        %12085 = vdwg.mxu0
        %12086 = vst.msk [vmem:[%s220] sm:$0xff] %vm1271, %v11960
        %12087 = vst.msk [vmem:[%s220 + $0x8] sm:$0xff] %vm1271, %v11963
        %12088 = vst.msk [vmem:[%s220 + $0x10] sm:$0xff] %vm1271, %v11968
        %12089 = vst.msk [vmem:[%s220 + $0x18] sm:$0xff] %vm1271, %v11971
        %12090 = vst.msk [vmem:[%s220 + $0x20] sm:$0xff] %vm1271, %v11976
        %12091 = vst.msk [vmem:[%s220 + $0x28] sm:$0xff] %vm1271, %v11979
        %12092 = vst.msk [vmem:[%s220 + $0x30] sm:$0xff] %vm1271, %v11984
        %12093 = vst.msk [vmem:[%s220 + $0x38] sm:$0xff] %vm1271, %v11987
        %12094 = vst.msk [vmem:[%s220 + $0x40] sm:$0xff] %vm1271, %v11992
        %12095 = vst.msk [vmem:[%s220 + $0x48] sm:$0xff] %vm1271, %v11995
        %12096 = vst.msk [vmem:[%s220 + $0x50] sm:$0xff] %vm1271, %v12000
        %12097 = vst.msk [vmem:[%s220 + $0x58] sm:$0xff] %vm1271, %v12003
        %12098 = vst.msk [vmem:[%s220 + $0x60] sm:$0xff] %vm1271, %v12008
        %12099 = vst.msk [vmem:[%s220 + $0x68] sm:$0xff] %vm1271, %v12011
        %12100 = vst.msk [vmem:[%s220 + $0x70] sm:$0xff] %vm1271, %v12016
        %12101 = vst.msk [vmem:[%s220 + $0x78] sm:$0xff] %vm1271, %v12019
        %12102 = vst.msk [vmem:[%s220 + $0x80] sm:$0xff] %vm1271, %v12024
        %12103 = vst.msk [vmem:[%s220 + $0x88] sm:$0xff] %vm1271, %v12027
        %12104 = vst.msk [vmem:[%s220 + $0x90] sm:$0xff] %vm1271, %v12032
        %12105 = vst.msk [vmem:[%s220 + $0x98] sm:$0xff] %vm1271, %v12035
        %12106 = vst.msk [vmem:[%s220 + $0xa0] sm:$0xff] %vm1271, %v12040
        %12107 = vst.msk [vmem:[%s220 + $0xa8] sm:$0xff] %vm1271, %v12043
        %12108 = vst.msk [vmem:[%s220 + $0xb0] sm:$0xff] %vm1271, %v12048
        %12109 = vst.msk [vmem:[%s220 + $0xb8] sm:$0xff] %vm1271, %v12051
        %12110 = vst.msk [vmem:[%s220 + $0xc0] sm:$0xff] %vm1271, %v12056
        %12111 = vst.msk [vmem:[%s220 + $0xc8] sm:$0xff] %vm1271, %v12059
        %12112 = vst.msk [vmem:[%s220 + $0xd0] sm:$0xff] %vm1271, %v12064
        %12113 = vst.msk [vmem:[%s220 + $0xd8] sm:$0xff] %vm1271, %v12067
        %12114 = vst.msk [vmem:[%s220 + $0xe0] sm:$0xff] %vm1271, %v12072
        %12115 = vst.msk [vmem:[%s220 + $0xe8] sm:$0xff] %vm1271, %v12075
        %12116 = vst.msk [vmem:[%s220 + $0xf0] sm:$0xff] %vm1271, %v12080
        %12117 = vst.msk [vmem:[%s220 + $0xf8] sm:$0xff] %vm1271, %v12083
        %s12118 = sand.u32 %s137, 1
        %s12119 = scalar_lea.sflag [#allocation5], %s12118
        %s12120 = sand.u32 %s137, 1
        %s12121 = smul.addr %s12120, 256
        %s12122 = scalar_lea.vmem [#allocation4], %s12121
        // Predicated region
        $region41: #{mdconv2d.1} parent=39 // pred_check
          %p12123 = pneg %p147
        $region42: #{mdconv2d.1} parent=39 // pred_check_branch
          %12125 = sbr.rel (%p12123) target = $region44
        $region43: #{mdconv2d.1} parent=39 // pred_region
          %s12127 = ssub.s32 4096, 4096
          %12128 = vsyncadd %s12119, %s12127
          %s12129 = smul.addr %s19, 32
          %s12130 = smul.addr %s12129, 128
          %s12131 = scalar_lea.hbm %s5, %s12130
          %s12132 = sshll.u32 %s12122, 4
          %s12133 = int_to_ptr.vmem [resolvable:$true] %s12132
          %12138 = dma.vmem_to_hbm [thread:$0]  %s12133, 4096, %s12131, %s12119, 128, 128, 8
        $region44: #{mdconv2d.1} parent=39 // pred_fallthru
          _
      $region40: #{mdconv2d.1} parent=5 // pred_fallthru
        _
      %p12139 = scmp.le.s32.totalorder 2, %s14
      // Predicated region
      $region45: #{mdconv2d.1} parent=5 // pred_check
        %p12140 = pneg %p12139
      $region46: #{mdconv2d.1} parent=5 // pred_check_branch
        %12142 = sbr.rel (%p12140) target = $region48
      $region47: #{mdconv2d.1} parent=5 // pred_region
        %s12143 = ssub.s32 %s14, 2
        // Predicated region
        $region49: #{mdconv2d.1} parent=47 // pred_check
          %p12144 = pneg %p153
        $region50: #{mdconv2d.1} parent=47 // pred_check_branch
          %12146 = sbr.rel (%p12144) target = $region52
        $region51: #{mdconv2d.1} parent=47 // pred_region
          %s12147 = sand.u32 %s138, 1
          %s12148 = scalar_lea.sflag [#allocation5], %s12147
          %s12149 = sand.u32 %s138, 1
          %s12150 = smul.addr %s12149, 256
          %s12151 = scalar_lea.vmem [#allocation4], %s12150
          %12152 = dma.done %s12148, 4096
        $region52: #{mdconv2d.1} parent=47 // pred_fallthru
          _
      $region48: #{mdconv2d.1} parent=5 // pred_fallthru
        _
    $region6: #{mdconv2d.1} parent=1 // loop_footer
      %s18 = sadd.s32 1, %s14
    $region7: #{mdconv2d.1} parent=1 // loop_footer_branch
      %13 = sbr.rel target = $region3
    $region8: #{mdconv2d.1} parent=1 // loop_exit
      _
    %12153 = vsyncpa [#allocation5], 1
    %s12154 = scalar_lea.sflag [#allocation5], 1
    %12155 = vsyncpa %s12154, 1

</llo_original>
